<compile_context>
chip_gen: v5e
topology: v5e:2x2
jax: 0.10.0
libtpu: 0.0.40
codegen_flags: <defaults>
</compile_context>

<pallas_src>
import jax
import jax.numpy as jnp
import numpy as np
from jax.experimental import pallas as pl
from jax.experimental.pallas import tpu as pltpu


# ----------------------------------------------------------------------------
# Fused forward kernel
# ----------------------------------------------------------------------------

def fused_forward_kernel(
    x_ref,                              # (N, 34, 96)  f32  row-padded input, lane = w*3 + ci
    B1_ref, B2_ref, B3_ref, B4_ref,     # (3, W*Cin, W*Cout) bf16 banded conv weights
    cbias_ref, gamma_ref, beta_ref,     # (4, 256) f32  per-layer params, tiled across w
    g8_ref, g16_ref,                    # (256, 256) f32  0/1 channel-group matrices
    rs2_ref, rs4_ref,                   # (2, R/2, R) f32 even/odd h-row selectors
    ws8_ref, ws16_ref,                  # (2, L, L/2) f32 even/odd w-group selectors
    w1h_ref,                            # (8, 128, 128) f32 fc1 blocks (flatten folded in)
    fb1_ref,                            # (1, 128) f32
    w2_ref,                             # (128, 10) f32
    fb2_ref,                            # (1, 10)  f32
    o_ref,                              # (N, 10)  f32
    pad2_ref,                           # (N, 34, 256) f32 scratch: row-padded conv2 input
    pad3_ref,                           # (N, 18, 128) f32 scratch: row-padded conv3 input
    pad4_ref,                           # (N, 18, 256) f32 scratch: row-padded conv4 input
):
    N = x_ref.shape[0]
    f32 = jnp.float32

    def conv(src_ref, H, B_ref):
        """Banded 3x3 conv: rows=(n,h), lanes=(w*Cin) -> f32 (N*H, W*Cout)."""
        Lin = src_ref.shape[-1]
        acc = None
        for dy in range(3):
            xs = src_ref[:, dy:dy + H, :].reshape(N * H, Lin).astype(jnp.bfloat16)
            part = jnp.dot(xs, B_ref[dy], preferred_element_type=f32)
            acc = part if acc is None else acc + part
        return acc

    def bn_relu(y, layer, gmat_ref, w_spatial):
        """conv bias + BatchNorm (batch stats, eps=1e-5) + ReLU, all lane-broadcast."""
        y = y + cbias_ref[layer:layer + 1, :]
        count = y.shape[0] * w_spatial                       # = N*H*W
        inv_cnt = 1.0 / count
        ssum = jnp.sum(y, axis=0, keepdims=True)             # (1, L)
        ssq = jnp.sum(y * y, axis=0, keepdims=True)          # (1, L)
        mean_b = jnp.dot(ssum, gmat_ref[...], preferred_element_type=f32) * inv_cnt
        ex2_b = jnp.dot(ssq, gmat_ref[...], preferred_element_type=f32) * inv_cnt
        var_b = ex2_b - mean_b * mean_b
        inv_std = jax.lax.rsqrt(var_b + 1e-5)
        scale = gamma_ref[layer:layer + 1, :] * inv_std
        shift = beta_ref[layer:layer + 1, :] - mean_b * scale
        return jnp.maximum(y * scale + shift, 0.0)

    def maxpool(y, rowsel_ref, lanesel_ref):
        """2x2 stride-2 maxpool on rows=(n,h), lanes=(w*C), via 0/1 selection matmuls."""
        even_h = jnp.dot(rowsel_ref[0], y, preferred_element_type=f32)   # (R/2, L)
        odd_h = jnp.dot(rowsel_ref[1], y, preferred_element_type=f32)
        a = jnp.maximum(even_h, odd_h)
        even_w = jnp.dot(a, lanesel_ref[0], preferred_element_type=f32)  # (R/2, L/2)
        odd_w = jnp.dot(a, lanesel_ref[1], preferred_element_type=f32)
        return jnp.maximum(even_w, odd_w)

    # ---- conv1 (3 -> 8), 32x32 ------------------------------------------------
    y1 = bn_relu(conv(x_ref, 32, B1_ref), 0, g8_ref, 32)           # (N*32, 256)

    # ---- conv2 (8 -> 8), 32x32, fused 2x2 maxpool -> 16x16 --------------------
    pad2_ref[:, 0:1, :] = jnp.zeros((N, 1, 256), f32)
    pad2_ref[:, 33:34, :] = jnp.zeros((N, 1, 256), f32)
    pad2_ref[:, 1:33, :] = y1.reshape(N, 32, 256)
    y2 = bn_relu(conv(pad2_ref, 32, B2_ref), 1, g8_ref, 32)        # (N*32, 256)
    p2 = maxpool(y2, rs2_ref, ws8_ref)                             # (N*16, 128)

    # ---- conv3 (8 -> 16), 16x16 -----------------------------------------------
    pad3_ref[:, 0:1, :] = jnp.zeros((N, 1, 128), f32)
    pad3_ref[:, 17:18, :] = jnp.zeros((N, 1, 128), f32)
    pad3_ref[:, 1:17, :] = p2.reshape(N, 16, 128)
    y3 = bn_relu(conv(pad3_ref, 16, B3_ref), 2, g16_ref, 16)       # (N*16, 256)

    # ---- conv4 (16 -> 16), 16x16, fused 2x2 maxpool -> 8x8 --------------------
    pad4_ref[:, 0:1, :] = jnp.zeros((N, 1, 256), f32)
    pad4_ref[:, 17:18, :] = jnp.zeros((N, 1, 256), f32)
    pad4_ref[:, 1:17, :] = y3.reshape(N, 16, 256)
    y4 = bn_relu(conv(pad4_ref, 16, B4_ref), 3, g16_ref, 16)       # (N*16, 256)
    p4 = maxpool(y4, rs4_ref, ws16_ref).reshape(N, 8, 128)         # (N, 8, 128)

    # ---- FC head (f32); PyTorch channel-major flatten folded into w1h ---------
    h = jnp.dot(p4[:, 0, :], w1h_ref[0], preferred_element_type=f32)
    for hp in range(1, 8):
        h = h + jnp.dot(p4[:, hp, :], w1h_ref[hp], preferred_element_type=f32)
    h = jnp.maximum(h + fb1_ref[...], 0.0)                         # (N, 128)
    o_ref[...] = jnp.dot(h, w2_ref[...], preferred_element_type=f32) + fb2_ref[...]


# ----------------------------------------------------------------------------
# Host-side parameter preparation (one-time, pure numpy)
# ----------------------------------------------------------------------------

def _banded_conv_weights(w_oihw, W):
    """(Cout,Cin,3,3) -> (3, W*Cin, W*Cout); B[dy, win*Cin+ci, wo*Cout+co] = w[co,ci,dy,dx]."""
    w = np.asarray(w_oihw)
    Cout, Cin = w.shape[0], w.shape[1]
    B = np.zeros((3, W * Cin, W * Cout), np.float32)
    for dy in range(3):
        for dx in range(3):
            tap = w[:, :, dy, dx].T                      # (Cin, Cout)
            for wo in range(W):
                win = wo + dx - 1
                if 0 <= win < W:                         # zero padding by omission
                    B[dy, win * Cin:(win + 1) * Cin, wo * Cout:(wo + 1) * Cout] = tap
    return B


def _channel_group_matrix(L, C):
    idx = np.arange(L)
    return (idx[:, None] % C == idx[None, :] % C).astype(np.float32)


def _pool_lane_selectors(W, C):
    L = W * C
    sel = np.zeros((2, L, L // 2), np.float32)
    for wo in range(W // 2):
        for c in range(C):
            sel[0, (2 * wo) * C + c, wo * C + c] = 1.0
            sel[1, (2 * wo + 1) * C + c, wo * C + c] = 1.0
    return sel


def _pool_row_selectors(N, H):
    R = N * H
    sel = np.zeros((2, R // 2, R), np.float32)
    for i in range(R // 2):
        n, ho = divmod(i, H // 2)
        sel[0, i, n * H + 2 * ho] = 1.0
        sel[1, i, n * H + 2 * ho + 1] = 1.0
    return sel


def _fc1_row_blocks(fc1_w, C=16, H=8, W=8):
    """Fold PyTorch channel-major flatten into fc1: (Fout, C*H*W) -> (H, W*C, Fout)."""
    w = np.asarray(fc1_w)
    fout = w.shape[0]
    blocks = np.zeros((H, W * C, fout), np.float32)
    for hp in range(H):
        for wo in range(W):
            for c in range(C):
                blocks[hp, wo * C + c, :] = w[:, c * H * W + hp * W + wo]
    return blocks


def prepare_kernel_params(P):
    kp = {}
    kp["B1"] = jnp.asarray(_banded_conv_weights(P["conv1_w"], 32), jnp.bfloat16)
    kp["B2"] = jnp.asarray(_banded_conv_weights(P["conv2_w"], 32), jnp.bfloat16)
    kp["B3"] = jnp.asarray(_banded_conv_weights(P["conv3_w"], 16), jnp.bfloat16)
    kp["B4"] = jnp.asarray(_banded_conv_weights(P["conv4_w"], 16), jnp.bfloat16)

    def tile_w(vec, W):
        return np.tile(np.asarray(vec), W)

    kp["cbias"] = jnp.asarray(np.stack([
        tile_w(P["conv1_b"], 32), tile_w(P["conv2_b"], 32),
        tile_w(P["conv3_b"], 16), tile_w(P["conv4_b"], 16)]), jnp.float32)
    kp["gamma"] = jnp.asarray(np.stack([
        tile_w(P["g1"], 32), tile_w(P["g2"], 32),
        tile_w(P["g3"], 16), tile_w(P["g4"], 16)]), jnp.float32)
    kp["beta"] = jnp.asarray(np.stack([
        tile_w(P["be1"], 32), tile_w(P["be2"], 32),
        tile_w(P["be3"], 16), tile_w(P["be4"], 16)]), jnp.float32)

    kp["g8"] = jnp.asarray(_channel_group_matrix(256, 8))
    kp["g16"] = jnp.asarray(_channel_group_matrix(256, 16))
    kp["ws8"] = jnp.asarray(_pool_lane_selectors(32, 8))
    kp["ws16"] = jnp.asarray(_pool_lane_selectors(16, 16))

    kp["w1h"] = jnp.asarray(_fc1_row_blocks(P["fc1_w"]))
    kp["fb1"] = jnp.asarray(P["fc1_b"]).reshape(1, -1)
    kp["w2"] = jnp.asarray(P["fc2_w"]).T
    kp["fb2"] = jnp.asarray(P["fc2_b"]).reshape(1, -1)
    return kp


# ----------------------------------------------------------------------------
# pallas_call wrapper (single fused launch, whole-array blocks)
# ----------------------------------------------------------------------------

def _full_spec(shape):
    n = len(shape)
    return pl.BlockSpec(shape, lambda *_: (0,) * n)


def forward_pallas(x_nchw, kp):
    N = x_nchw.shape[0]
    # NCHW -> rows=(n,h), lanes=(w*Cin); add the conv1 zero rows (h padding) here.
    x = jnp.transpose(x_nchw, (0, 2, 3, 1)).reshape(N, 32, 32 * 3)
    x = jnp.pad(x, ((0, 0), (1, 1), (0, 0)))

    rs2 = jnp.asarray(_pool_row_selectors(N, 32))
    rs4 = jnp.asarray(_pool_row_selectors(N, 16))

    args = (x, kp["B1"], kp["B2"], kp["B3"], kp["B4"],
            kp["cbias"], kp["gamma"], kp["beta"], kp["g8"], kp["g16"],
            rs2, rs4, kp["ws8"], kp["ws16"],
            kp["w1h"], kp["fb1"], kp["w2"], kp["fb2"])

    out_shape = (N, 10)
    return pl.pallas_call(
        fused_forward_kernel,
        grid=(1,),
        in_specs=[_full_spec(a.shape) for a in args],
        out_specs=_full_spec(out_shape),
        out_shape=jax.ShapeDtypeStruct(out_shape, jnp.float32),
        scratch_shapes=[
            pltpu.VMEM((N, 34, 256), jnp.float32),   # padded conv2 input
            pltpu.VMEM((N, 18, 128), jnp.float32),   # padded conv3 input
            pltpu.VMEM((N, 18, 256), jnp.float32),   # padded conv4 input
        ],
        compiler_params=pltpu.CompilerParams(
            dimension_semantics=("arbitrary",),
            vmem_limit_bytes=32 * 1024 * 1024,
        ),
    )(*args)


# ----------------------------------------------------------------------------
# Parameters (deterministic, PyTorch-default-style bounds) + plain-JAX reference
# ----------------------------------------------------------------------------

def init_params(key, scale_factor=1.0):
    c8 = int(scale_factor * 8)
    c16 = int(scale_factor * 16)
    ks = jax.random.split(key, 20)

    def conv_init(kw, kb, cin, cout):
        bound = 1.0 / np.sqrt(cin * 9)
        w = jax.random.uniform(kw, (cout, cin, 3, 3), jnp.float32, -bound, bound)
        b = jax.random.uniform(kb, (cout,), jnp.float32, -bound, bound)
        return w, b

    def bn_init(kg, kb, c):
        g = 1.0 + 0.1 * jax.random.normal(kg, (c,), jnp.float32)
        be = 0.1 * jax.random.normal(kb, (c,), jnp.float32)
        return g, be

    def fc_init(kw, kb, fin, fout):
        bound = 1.0 / np.sqrt(fin)
        w = jax.random.uniform(kw, (fout, fin), jnp.float32, -bound, bound)
        b = jax.random.uniform(kb, (fout,), jnp.float32, -bound, bound)
        return w, b

    P = {}
    P["conv1_w"], P["conv1_b"] = conv_init(ks[0], ks[1], 3, c8)
    P["g1"], P["be1"] = bn_init(ks[2], ks[3], c8)
    P["conv2_w"], P["conv2_b"] = conv_init(ks[4], ks[5], c8, c8)
    P["g2"], P["be2"] = bn_init(ks[6], ks[7], c8)
    P["conv3_w"], P["conv3_b"] = conv_init(ks[8], ks[9], c8, c16)
    P["g3"], P["be3"] = bn_init(ks[10], ks[11], c16)
    P["conv4_w"], P["conv4_b"] = conv_init(ks[12], ks[13], c16, c16)
    P["g4"], P["be4"] = bn_init(ks[14], ks[15], c16)
    P["fc1_w"], P["fc1_b"] = fc_init(ks[16], ks[17], c16 * 8 * 8, int(scale_factor * 128))
    P["fc2_w"], P["fc2_b"] = fc_init(ks[18], ks[19], int(scale_factor * 128), 10)
    return P


def forward_reference(x_nchw, P):
    hp = jax.lax.Precision.HIGHEST

    def cbr(x, w, b, g, be):
        y = jax.lax.conv_general_dilated(
            x, w, window_strides=(1, 1), padding=((1, 1), (1, 1)),
            dimension_numbers=("NCHW", "OIHW", "NCHW"), precision=hp)
        y = y + b[None, :, None, None]
        mean = jnp.mean(y, axis=(0, 2, 3), keepdims=True)
        var = jnp.mean((y - mean) ** 2, axis=(0, 2, 3), keepdims=True)
        y = (y - mean) * jax.lax.rsqrt(var + 1e-5)
        y = y * g[None, :, None, None] + be[None, :, None, None]
        return jnp.maximum(y, 0.0)

    def mp(x):
        N, C, H, W = x.shape
        return jnp.max(x.reshape(N, C, H // 2, 2, W // 2, 2), axis=(3, 5))

    x = cbr(x_nchw, P["conv1_w"], P["conv1_b"], P["g1"], P["be1"])
    x = cbr(x, P["conv2_w"], P["conv2_b"], P["g2"], P["be2"])
    x = mp(x)
    x = cbr(x, P["conv3_w"], P["conv3_b"], P["g3"], P["be3"])
    x = cbr(x, P["conv4_w"], P["conv4_b"], P["g4"], P["be4"])
    x = mp(x)
    x = x.reshape(x.shape[0], -1)
    h = jnp.maximum(jnp.dot(x, P["fc1_w"].T, precision=hp) + P["fc1_b"], 0.0)
    return jnp.dot(h, P["fc2_w"].T, precision=hp) + P["fc2_b"]


if __name__ == "__main__":
    key = jax.random.PRNGKey(0)
    k_params, k_x = jax.random.split(key)
    params = init_params(k_params, scale_factor=1.0)
    kparams = prepare_kernel_params(params)

    # CIFAR-shaped input (fc1 requires 32x32 spatial -> 16*8*8 features); batch=2.
    x = jax.random.normal(k_x, (2, 3, 32, 32), dtype=jnp.float32)

    out = jax.block_until_ready(forward_pallas(x, kparams))
    ref = jax.block_until_ready(forward_reference(x, params))

    assert out.shape == (2, 10), out.shape
    out_np, ref_np = np.asarray(out), np.asarray(ref)
    assert np.all(np.isfinite(out_np))
    # bf16 MXU inputs for the conv dots introduce ~1e-2-level differences vs the
    # all-f32 reference, so the tolerance is set to 2e-2.
    assert np.allclose(out_np, ref_np, rtol=2e-2, atol=2e-2), (
        float(np.max(np.abs(out_np - ref_np))))
    print("KERNEL_OK")
</pallas_src>

<mosaic_0001>
module attributes {stable_mosaic.version = 11 : i64} {
  func.func @fused_forward_kernel(%arg0: i32, %arg1: memref<2x34x96xf32, #tpu.memory_space<vmem>>, %arg2: memref<3x96x256xbf16, #tpu.memory_space<vmem>>, %arg3: memref<3x256x256xbf16, #tpu.memory_space<vmem>>, %arg4: memref<3x128x256xbf16, #tpu.memory_space<vmem>>, %arg5: memref<3x256x256xbf16, #tpu.memory_space<vmem>>, %arg6: memref<4x256xf32, #tpu.memory_space<vmem>>, %arg7: memref<4x256xf32, #tpu.memory_space<vmem>>, %arg8: memref<4x256xf32, #tpu.memory_space<vmem>>, %arg9: memref<256x256xf32, #tpu.memory_space<vmem>>, %arg10: memref<256x256xf32, #tpu.memory_space<vmem>>, %arg11: memref<2x32x64xf32, #tpu.memory_space<vmem>>, %arg12: memref<2x16x32xf32, #tpu.memory_space<vmem>>, %arg13: memref<2x256x128xf32, #tpu.memory_space<vmem>>, %arg14: memref<2x256x128xf32, #tpu.memory_space<vmem>>, %arg15: memref<8x128x128xf32, #tpu.memory_space<vmem>>, %arg16: memref<1x128xf32, #tpu.memory_space<vmem>>, %arg17: memref<128x10xf32, #tpu.memory_space<vmem>>, %arg18: memref<1x10xf32, #tpu.memory_space<vmem>>, %arg19: memref<2x10xf32, #tpu.memory_space<vmem>>, %arg20: memref<2x34x256xf32, #tpu.memory_space<vmem>>, %arg21: memref<2x18x128xf32, #tpu.memory_space<vmem>>, %arg22: memref<2x18x256xf32, #tpu.memory_space<vmem>>) attributes {dimension_semantics = [#tpu.dimension_semantics<arbitrary>], iteration_bounds = array<i64: 1>, scalar_prefetch = 0 : i64, scratch_operands = 3 : i64, tpu.core_type = #tpu.core_type<tc>, window_params = [{pipeline_mode = #tpu.pipeline_mode<synchronous>, transform_indices = @transform_0, window_bounds = array<i64: 2, 34, 96>}, {pipeline_mode = #tpu.pipeline_mode<synchronous>, transform_indices = @transform_1, window_bounds = array<i64: 3, 96, 256>}, {pipeline_mode = #tpu.pipeline_mode<synchronous>, transform_indices = @transform_2, window_bounds = array<i64: 3, 256, 256>}, {pipeline_mode = #tpu.pipeline_mode<synchronous>, transform_indices = @transform_3, window_bounds = array<i64: 3, 128, 256>}, {pipeline_mode = #tpu.pipeline_mode<synchronous>, transform_indices = @transform_4, window_bounds = array<i64: 3, 256, 256>}, {pipeline_mode = #tpu.pipeline_mode<synchronous>, transform_indices = @transform_5, window_bounds = array<i64: 4, 256>}, {pipeline_mode = #tpu.pipeline_mode<synchronous>, transform_indices = @transform_6, window_bounds = array<i64: 4, 256>}, {pipeline_mode = #tpu.pipeline_mode<synchronous>, transform_indices = @transform_7, window_bounds = array<i64: 4, 256>}, {pipeline_mode = #tpu.pipeline_mode<synchronous>, transform_indices = @transform_8, window_bounds = array<i64: 256, 256>}, {pipeline_mode = #tpu.pipeline_mode<synchronous>, transform_indices = @transform_9, window_bounds = array<i64: 256, 256>}, {pipeline_mode = #tpu.pipeline_mode<synchronous>, transform_indices = @transform_10, window_bounds = array<i64: 2, 32, 64>}, {pipeline_mode = #tpu.pipeline_mode<synchronous>, transform_indices = @transform_11, window_bounds = array<i64: 2, 16, 32>}, {pipeline_mode = #tpu.pipeline_mode<synchronous>, transform_indices = @transform_12, window_bounds = array<i64: 2, 256, 128>}, {pipeline_mode = #tpu.pipeline_mode<synchronous>, transform_indices = @transform_13, window_bounds = array<i64: 2, 256, 128>}, {pipeline_mode = #tpu.pipeline_mode<synchronous>, transform_indices = @transform_14, window_bounds = array<i64: 8, 128, 128>}, {pipeline_mode = #tpu.pipeline_mode<synchronous>, transform_indices = @transform_15, window_bounds = array<i64: 1, 128>}, {pipeline_mode = #tpu.pipeline_mode<synchronous>, transform_indices = @transform_16, window_bounds = array<i64: 128, 10>}, {pipeline_mode = #tpu.pipeline_mode<synchronous>, transform_indices = @transform_17, window_bounds = array<i64: 1, 10>}, {pipeline_mode = #tpu.pipeline_mode<synchronous>, transform_indices = @transform_18, window_bounds = array<i64: 2, 10>}]} {
    %c0 = arith.constant 0 : index
    %c0_0 = arith.constant 0 : index
    %c0_1 = arith.constant 0 : index
    %0 = vector.load %arg1[%c0, %c0_0, %c0_1] : memref<2x34x96xf32, #tpu.memory_space<vmem>>, vector<2x32x96xf32>
    %1 = vector.shape_cast %0 : vector<2x32x96xf32> to vector<64x96xf32>
    %2 = arith.truncf %1 : vector<64x96xf32> to vector<64x96xbf16>
    %c0_2 = arith.constant 0 : index
    %c0_3 = arith.constant 0 : index
    %c0_4 = arith.constant 0 : index
    %3 = vector.load %arg2[%c0_2, %c0_3, %c0_4] : memref<3x96x256xbf16, #tpu.memory_space<vmem>>, vector<1x96x256xbf16>
    %4 = vector.shape_cast %3 : vector<1x96x256xbf16> to vector<96x256xbf16>
    %cst = arith.constant dense<0.000000e+00> : vector<64x256xf32>
    %5 = tpu.matmul %2, %4, %cst {dimension_numbers = #tpu.dot_dimension_numbers<[1], [0], [0], [1], [0, 0, 1, 1], [], []>} : vector<64x96xbf16>, vector<96x256xbf16>, vector<64x256xf32> -> vector<64x256xf32>
    %c0_5 = arith.constant 0 : index
    %c1 = arith.constant 1 : index
    %c0_6 = arith.constant 0 : index
    %6 = vector.load %arg1[%c0_5, %c1, %c0_6] : memref<2x34x96xf32, #tpu.memory_space<vmem>>, vector<2x32x96xf32>
    %7 = vector.shape_cast %6 : vector<2x32x96xf32> to vector<64x96xf32>
    %8 = arith.truncf %7 : vector<64x96xf32> to vector<64x96xbf16>
    %c1_7 = arith.constant 1 : index
    %c0_8 = arith.constant 0 : index
    %c0_9 = arith.constant 0 : index
    %9 = vector.load %arg2[%c1_7, %c0_8, %c0_9] : memref<3x96x256xbf16, #tpu.memory_space<vmem>>, vector<1x96x256xbf16>
    %10 = vector.shape_cast %9 : vector<1x96x256xbf16> to vector<96x256xbf16>
    %cst_10 = arith.constant dense<0.000000e+00> : vector<64x256xf32>
    %11 = tpu.matmul %8, %10, %cst_10 {dimension_numbers = #tpu.dot_dimension_numbers<[1], [0], [0], [1], [0, 0, 1, 1], [], []>} : vector<64x96xbf16>, vector<96x256xbf16>, vector<64x256xf32> -> vector<64x256xf32>
    %12 = arith.addf %5, %11 : vector<64x256xf32>
    %c0_11 = arith.constant 0 : index
    %c2 = arith.constant 2 : index
    %c0_12 = arith.constant 0 : index
    %13 = vector.load %arg1[%c0_11, %c2, %c0_12] : memref<2x34x96xf32, #tpu.memory_space<vmem>>, vector<2x32x96xf32>
    %14 = vector.shape_cast %13 : vector<2x32x96xf32> to vector<64x96xf32>
    %15 = arith.truncf %14 : vector<64x96xf32> to vector<64x96xbf16>
    %c2_13 = arith.constant 2 : index
    %c0_14 = arith.constant 0 : index
    %c0_15 = arith.constant 0 : index
    %16 = vector.load %arg2[%c2_13, %c0_14, %c0_15] : memref<3x96x256xbf16, #tpu.memory_space<vmem>>, vector<1x96x256xbf16>
    %17 = vector.shape_cast %16 : vector<1x96x256xbf16> to vector<96x256xbf16>
    %cst_16 = arith.constant dense<0.000000e+00> : vector<64x256xf32>
    %18 = tpu.matmul %15, %17, %cst_16 {dimension_numbers = #tpu.dot_dimension_numbers<[1], [0], [0], [1], [0, 0, 1, 1], [], []>} : vector<64x96xbf16>, vector<96x256xbf16>, vector<64x256xf32> -> vector<64x256xf32>
    %19 = arith.addf %12, %18 : vector<64x256xf32>
    %c0_17 = arith.constant 0 : index
    %c0_18 = arith.constant 0 : index
    %20 = vector.load %arg6[%c0_17, %c0_18] : memref<4x256xf32, #tpu.memory_space<vmem>>, vector<1x256xf32>
    %21 = vector.broadcast %20 : vector<1x256xf32> to vector<64x256xf32>
    %22 = arith.addf %19, %21 : vector<64x256xf32>
    %cst_19 = arith.constant dense<0.000000e+00> : vector<256xf32>
    %23 = vector.multi_reduction <add>, %22, %cst_19 [0] : vector<64x256xf32> to vector<256xf32>
    %24 = vector.shape_cast %23 : vector<256xf32> to vector<1x256xf32>
    %25 = arith.mulf %22, %22 : vector<64x256xf32>
    %cst_20 = arith.constant dense<0.000000e+00> : vector<256xf32>
    %26 = vector.multi_reduction <add>, %25, %cst_20 [0] : vector<64x256xf32> to vector<256xf32>
    %27 = vector.shape_cast %26 : vector<256xf32> to vector<1x256xf32>
    %c0_21 = arith.constant 0 : index
    %c0_22 = arith.constant 0 : index
    %28 = vector.load %arg9[%c0_21, %c0_22] : memref<256x256xf32, #tpu.memory_space<vmem>>, vector<256x256xf32>
    %cst_23 = arith.constant dense<0.000000e+00> : vector<1x256xf32>
    %29 = tpu.matmul %24, %28, %cst_23 {dimension_numbers = #tpu.dot_dimension_numbers<[1], [0], [0], [1], [0, 0, 1, 1], [], []>} : vector<1x256xf32>, vector<256x256xf32>, vector<1x256xf32> -> vector<1x256xf32>
    %cst_24 = arith.constant 4.8828125E-4 : f32
    %30 = vector.broadcast %cst_24 : f32 to vector<1x256xf32>
    %31 = arith.mulf %29, %30 : vector<1x256xf32>
    %c0_25 = arith.constant 0 : index
    %c0_26 = arith.constant 0 : index
    %32 = vector.load %arg9[%c0_25, %c0_26] : memref<256x256xf32, #tpu.memory_space<vmem>>, vector<256x256xf32>
    %cst_27 = arith.constant dense<0.000000e+00> : vector<1x256xf32>
    %33 = tpu.matmul %27, %32, %cst_27 {dimension_numbers = #tpu.dot_dimension_numbers<[1], [0], [0], [1], [0, 0, 1, 1], [], []>} : vector<1x256xf32>, vector<256x256xf32>, vector<1x256xf32> -> vector<1x256xf32>
    %cst_28 = arith.constant 4.8828125E-4 : f32
    %34 = vector.broadcast %cst_28 : f32 to vector<1x256xf32>
    %35 = arith.mulf %33, %34 : vector<1x256xf32>
    %36 = arith.mulf %31, %31 : vector<1x256xf32>
    %37 = arith.subf %35, %36 : vector<1x256xf32>
    %cst_29 = arith.constant 9.99999974E-6 : f32
    %38 = vector.broadcast %cst_29 : f32 to vector<1x256xf32>
    %39 = arith.addf %37, %38 : vector<1x256xf32>
    %40 = math.rsqrt %39 : vector<1x256xf32>
    %c0_30 = arith.constant 0 : index
    %c0_31 = arith.constant 0 : index
    %41 = vector.load %arg7[%c0_30, %c0_31] : memref<4x256xf32, #tpu.memory_space<vmem>>, vector<1x256xf32>
    %42 = arith.mulf %41, %40 : vector<1x256xf32>
    %c0_32 = arith.constant 0 : index
    %c0_33 = arith.constant 0 : index
    %43 = vector.load %arg8[%c0_32, %c0_33] : memref<4x256xf32, #tpu.memory_space<vmem>>, vector<1x256xf32>
    %44 = arith.mulf %31, %42 : vector<1x256xf32>
    %45 = arith.subf %43, %44 : vector<1x256xf32>
    %46 = vector.broadcast %42 : vector<1x256xf32> to vector<64x256xf32>
    %47 = arith.mulf %22, %46 : vector<64x256xf32>
    %48 = vector.broadcast %45 : vector<1x256xf32> to vector<64x256xf32>
    %49 = arith.addf %47, %48 : vector<64x256xf32>
    %cst_34 = arith.constant 0.000000e+00 : f32
    %50 = vector.broadcast %cst_34 : f32 to vector<64x256xf32>
    %51 = arith.maximumf %49, %50 : vector<64x256xf32>
    %cst_35 = arith.constant 0.000000e+00 : f32
    %52 = vector.broadcast %cst_35 : f32 to vector<2x1x256xf32>
    %c0_36 = arith.constant 0 : index
    %c0_37 = arith.constant 0 : index
    %c0_38 = arith.constant 0 : index
    %53 = vector.load %arg20[%c0_36, %c0_37, %c0_38] : memref<2x34x256xf32, #tpu.memory_space<vmem>>, vector<2x1x256xf32>
    tpu.vector_store %arg20[%c0_36, %c0_37, %c0_38], %52 {strides = array<i32>} : memref<2x34x256xf32, #tpu.memory_space<vmem>>, vector<2x1x256xf32>,
    %cst_39 = arith.constant 0.000000e+00 : f32
    %54 = vector.broadcast %cst_39 : f32 to vector<2x1x256xf32>
    %c0_40 = arith.constant 0 : index
    %c33 = arith.constant 33 : index
    %c0_41 = arith.constant 0 : index
    %55 = vector.load %arg20[%c0_40, %c33, %c0_41] : memref<2x34x256xf32, #tpu.memory_space<vmem>>, vector<2x1x256xf32>
    tpu.vector_store %arg20[%c0_40, %c33, %c0_41], %54 {strides = array<i32>} : memref<2x34x256xf32, #tpu.memory_space<vmem>>, vector<2x1x256xf32>,
    %56 = vector.shape_cast %51 : vector<64x256xf32> to vector<2x32x256xf32>
    %c0_42 = arith.constant 0 : index
    %c1_43 = arith.constant 1 : index
    %c0_44 = arith.constant 0 : index
    %57 = vector.load %arg20[%c0_42, %c1_43, %c0_44] : memref<2x34x256xf32, #tpu.memory_space<vmem>>, vector<2x32x256xf32>
    tpu.vector_store %arg20[%c0_42, %c1_43, %c0_44], %56 {strides = array<i32>} : memref<2x34x256xf32, #tpu.memory_space<vmem>>, vector<2x32x256xf32>,
    %c0_45 = arith.constant 0 : index
    %c0_46 = arith.constant 0 : index
    %c0_47 = arith.constant 0 : index
    %58 = vector.load %arg20[%c0_45, %c0_46, %c0_47] : memref<2x34x256xf32, #tpu.memory_space<vmem>>, vector<2x32x256xf32>
    %59 = vector.shape_cast %58 : vector<2x32x256xf32> to vector<64x256xf32>
    %60 = arith.truncf %59 : vector<64x256xf32> to vector<64x256xbf16>
    %c0_48 = arith.constant 0 : index
    %c0_49 = arith.constant 0 : index
    %c0_50 = arith.constant 0 : index
    %61 = vector.load %arg3[%c0_48, %c0_49, %c0_50] : memref<3x256x256xbf16, #tpu.memory_space<vmem>>, vector<1x256x256xbf16>
    %62 = vector.shape_cast %61 : vector<1x256x256xbf16> to vector<256x256xbf16>
    %cst_51 = arith.constant dense<0.000000e+00> : vector<64x256xf32>
    %63 = tpu.matmul %60, %62, %cst_51 {dimension_numbers = #tpu.dot_dimension_numbers<[1], [0], [0], [1], [0, 0, 1, 1], [], []>} : vector<64x256xbf16>, vector<256x256xbf16>, vector<64x256xf32> -> vector<64x256xf32>
    %c0_52 = arith.constant 0 : index
    %c1_53 = arith.constant 1 : index
    %c0_54 = arith.constant 0 : index
    %64 = vector.load %arg20[%c0_52, %c1_53, %c0_54] : memref<2x34x256xf32, #tpu.memory_space<vmem>>, vector<2x32x256xf32>
    %65 = vector.shape_cast %64 : vector<2x32x256xf32> to vector<64x256xf32>
    %66 = arith.truncf %65 : vector<64x256xf32> to vector<64x256xbf16>
    %c1_55 = arith.constant 1 : index
    %c0_56 = arith.constant 0 : index
    %c0_57 = arith.constant 0 : index
    %67 = vector.load %arg3[%c1_55, %c0_56, %c0_57] : memref<3x256x256xbf16, #tpu.memory_space<vmem>>, vector<1x256x256xbf16>
    %68 = vector.shape_cast %67 : vector<1x256x256xbf16> to vector<256x256xbf16>
    %cst_58 = arith.constant dense<0.000000e+00> : vector<64x256xf32>
    %69 = tpu.matmul %66, %68, %cst_58 {dimension_numbers = #tpu.dot_dimension_numbers<[1], [0], [0], [1], [0, 0, 1, 1], [], []>} : vector<64x256xbf16>, vector<256x256xbf16>, vector<64x256xf32> -> vector<64x256xf32>
    %70 = arith.addf %63, %69 : vector<64x256xf32>
    %c0_59 = arith.constant 0 : index
    %c2_60 = arith.constant 2 : index
    %c0_61 = arith.constant 0 : index
    %71 = vector.load %arg20[%c0_59, %c2_60, %c0_61] : memref<2x34x256xf32, #tpu.memory_space<vmem>>, vector<2x32x256xf32>
    %72 = vector.shape_cast %71 : vector<2x32x256xf32> to vector<64x256xf32>
    %73 = arith.truncf %72 : vector<64x256xf32> to vector<64x256xbf16>
    %c2_62 = arith.constant 2 : index
    %c0_63 = arith.constant 0 : index
    %c0_64 = arith.constant 0 : index
    %74 = vector.load %arg3[%c2_62, %c0_63, %c0_64] : memref<3x256x256xbf16, #tpu.memory_space<vmem>>, vector<1x256x256xbf16>
    %75 = vector.shape_cast %74 : vector<1x256x256xbf16> to vector<256x256xbf16>
    %cst_65 = arith.constant dense<0.000000e+00> : vector<64x256xf32>
    %76 = tpu.matmul %73, %75, %cst_65 {dimension_numbers = #tpu.dot_dimension_numbers<[1], [0], [0], [1], [0, 0, 1, 1], [], []>} : vector<64x256xbf16>, vector<256x256xbf16>, vector<64x256xf32> -> vector<64x256xf32>
    %77 = arith.addf %70, %76 : vector<64x256xf32>
    %c1_66 = arith.constant 1 : index
    %c0_67 = arith.constant 0 : index
    %78 = vector.load %arg6[%c1_66, %c0_67] : memref<4x256xf32, #tpu.memory_space<vmem>>, vector<1x256xf32>
    %79 = vector.broadcast %78 : vector<1x256xf32> to vector<64x256xf32>
    %80 = arith.addf %77, %79 : vector<64x256xf32>
    %cst_68 = arith.constant dense<0.000000e+00> : vector<256xf32>
    %81 = vector.multi_reduction <add>, %80, %cst_68 [0] : vector<64x256xf32> to vector<256xf32>
    %82 = vector.shape_cast %81 : vector<256xf32> to vector<1x256xf32>
    %83 = arith.mulf %80, %80 : vector<64x256xf32>
    %cst_69 = arith.constant dense<0.000000e+00> : vector<256xf32>
    %84 = vector.multi_reduction <add>, %83, %cst_69 [0] : vector<64x256xf32> to vector<256xf32>
    %85 = vector.shape_cast %84 : vector<256xf32> to vector<1x256xf32>
    %c0_70 = arith.constant 0 : index
    %c0_71 = arith.constant 0 : index
    %86 = vector.load %arg9[%c0_70, %c0_71] : memref<256x256xf32, #tpu.memory_space<vmem>>, vector<256x256xf32>
    %cst_72 = arith.constant dense<0.000000e+00> : vector<1x256xf32>
    %87 = tpu.matmul %82, %86, %cst_72 {dimension_numbers = #tpu.dot_dimension_numbers<[1], [0], [0], [1], [0, 0, 1, 1], [], []>} : vector<1x256xf32>, vector<256x256xf32>, vector<1x256xf32> -> vector<1x256xf32>
    %cst_73 = arith.constant 4.8828125E-4 : f32
    %88 = vector.broadcast %cst_73 : f32 to vector<1x256xf32>
    %89 = arith.mulf %87, %88 : vector<1x256xf32>
    %c0_74 = arith.constant 0 : index
    %c0_75 = arith.constant 0 : index
    %90 = vector.load %arg9[%c0_74, %c0_75] : memref<256x256xf32, #tpu.memory_space<vmem>>, vector<256x256xf32>
    %cst_76 = arith.constant dense<0.000000e+00> : vector<1x256xf32>
    %91 = tpu.matmul %85, %90, %cst_76 {dimension_numbers = #tpu.dot_dimension_numbers<[1], [0], [0], [1], [0, 0, 1, 1], [], []>} : vector<1x256xf32>, vector<256x256xf32>, vector<1x256xf32> -> vector<1x256xf32>
    %cst_77 = arith.constant 4.8828125E-4 : f32
    %92 = vector.broadcast %cst_77 : f32 to vector<1x256xf32>
    %93 = arith.mulf %91, %92 : vector<1x256xf32>
    %94 = arith.mulf %89, %89 : vector<1x256xf32>
    %95 = arith.subf %93, %94 : vector<1x256xf32>
    %cst_78 = arith.constant 9.99999974E-6 : f32
    %96 = vector.broadcast %cst_78 : f32 to vector<1x256xf32>
    %97 = arith.addf %95, %96 : vector<1x256xf32>
    %98 = math.rsqrt %97 : vector<1x256xf32>
    %c1_79 = arith.constant 1 : index
    %c0_80 = arith.constant 0 : index
    %99 = vector.load %arg7[%c1_79, %c0_80] : memref<4x256xf32, #tpu.memory_space<vmem>>, vector<1x256xf32>
    %100 = arith.mulf %99, %98 : vector<1x256xf32>
    %c1_81 = arith.constant 1 : index
    %c0_82 = arith.constant 0 : index
    %101 = vector.load %arg8[%c1_81, %c0_82] : memref<4x256xf32, #tpu.memory_space<vmem>>, vector<1x256xf32>
    %102 = arith.mulf %89, %100 : vector<1x256xf32>
    %103 = arith.subf %101, %102 : vector<1x256xf32>
    %104 = vector.broadcast %100 : vector<1x256xf32> to vector<64x256xf32>
    %105 = arith.mulf %80, %104 : vector<64x256xf32>
    %106 = vector.broadcast %103 : vector<1x256xf32> to vector<64x256xf32>
    %107 = arith.addf %105, %106 : vector<64x256xf32>
    %cst_83 = arith.constant 0.000000e+00 : f32
    %108 = vector.broadcast %cst_83 : f32 to vector<64x256xf32>
    %109 = arith.maximumf %107, %108 : vector<64x256xf32>
    %c0_84 = arith.constant 0 : index
    %c0_85 = arith.constant 0 : index
    %c0_86 = arith.constant 0 : index
    %110 = vector.load %arg11[%c0_84, %c0_85, %c0_86] : memref<2x32x64xf32, #tpu.memory_space<vmem>>, vector<1x32x64xf32>
    %111 = vector.shape_cast %110 : vector<1x32x64xf32> to vector<32x64xf32>
    %cst_87 = arith.constant dense<0.000000e+00> : vector<32x256xf32>
    %112 = tpu.matmul %111, %109, %cst_87 {dimension_numbers = #tpu.dot_dimension_numbers<[1], [0], [0], [1], [0, 0, 1, 1], [], []>} : vector<32x64xf32>, vector<64x256xf32>, vector<32x256xf32> -> vector<32x256xf32>
    %c1_88 = arith.constant 1 : index
    %c0_89 = arith.constant 0 : index
    %c0_90 = arith.constant 0 : index
    %113 = vector.load %arg11[%c1_88, %c0_89, %c0_90] : memref<2x32x64xf32, #tpu.memory_space<vmem>>, vector<1x32x64xf32>
    %114 = vector.shape_cast %113 : vector<1x32x64xf32> to vector<32x64xf32>
    %cst_91 = arith.constant dense<0.000000e+00> : vector<32x256xf32>
    %115 = tpu.matmul %114, %109, %cst_91 {dimension_numbers = #tpu.dot_dimension_numbers<[1], [0], [0], [1], [0, 0, 1, 1], [], []>} : vector<32x64xf32>, vector<64x256xf32>, vector<32x256xf32> -> vector<32x256xf32>
    %116 = arith.maximumf %112, %115 : vector<32x256xf32>
    %c0_92 = arith.constant 0 : index
    %c0_93 = arith.constant 0 : index
    %c0_94 = arith.constant 0 : index
    %117 = vector.load %arg13[%c0_92, %c0_93, %c0_94] : memref<2x256x128xf32, #tpu.memory_space<vmem>>, vector<1x256x128xf32>
    %118 = vector.shape_cast %117 : vector<1x256x128xf32> to vector<256x128xf32>
    %cst_95 = arith.constant dense<0.000000e+00> : vector<32x128xf32>
    %119 = tpu.matmul %116, %118, %cst_95 {dimension_numbers = #tpu.dot_dimension_numbers<[1], [0], [0], [1], [0, 0, 1, 1], [], []>} : vector<32x256xf32>, vector<256x128xf32>, vector<32x128xf32> -> vector<32x128xf32>
    %c1_96 = arith.constant 1 : index
    %c0_97 = arith.constant 0 : index
    %c0_98 = arith.constant 0 : index
    %120 = vector.load %arg13[%c1_96, %c0_97, %c0_98] : memref<2x256x128xf32, #tpu.memory_space<vmem>>, vector<1x256x128xf32>
    %121 = vector.shape_cast %120 : vector<1x256x128xf32> to vector<256x128xf32>
    %cst_99 = arith.constant dense<0.000000e+00> : vector<32x128xf32>
    %122 = tpu.matmul %116, %121, %cst_99 {dimension_numbers = #tpu.dot_dimension_numbers<[1], [0], [0], [1], [0, 0, 1, 1], [], []>} : vector<32x256xf32>, vector<256x128xf32>, vector<32x128xf32> -> vector<32x128xf32>
    %123 = arith.maximumf %119, %122 : vector<32x128xf32>
    %cst_100 = arith.constant 0.000000e+00 : f32
    %124 = vector.broadcast %cst_100 : f32 to vector<2x1x128xf32>
    %c0_101 = arith.constant 0 : index
    %c0_102 = arith.constant 0 : index
    %c0_103 = arith.constant 0 : index
    %125 = vector.load %arg21[%c0_101, %c0_102, %c0_103] : memref<2x18x128xf32, #tpu.memory_space<vmem>>, vector<2x1x128xf32>
    tpu.vector_store %arg21[%c0_101, %c0_102, %c0_103], %124 {strides = array<i32>} : memref<2x18x128xf32, #tpu.memory_space<vmem>>, vector<2x1x128xf32>,
    %cst_104 = arith.constant 0.000000e+00 : f32
    %126 = vector.broadcast %cst_104 : f32 to vector<2x1x128xf32>
    %c0_105 = arith.constant 0 : index
    %c17 = arith.constant 17 : index
    %c0_106 = arith.constant 0 : index
    %127 = vector.load %arg21[%c0_105, %c17, %c0_106] : memref<2x18x128xf32, #tpu.memory_space<vmem>>, vector<2x1x128xf32>
    tpu.vector_store %arg21[%c0_105, %c17, %c0_106], %126 {strides = array<i32>} : memref<2x18x128xf32, #tpu.memory_space<vmem>>, vector<2x1x128xf32>,
    %128 = vector.shape_cast %123 : vector<32x128xf32> to vector<2x16x128xf32>
    %c0_107 = arith.constant 0 : index
    %c1_108 = arith.constant 1 : index
    %c0_109 = arith.constant 0 : index
    %129 = vector.load %arg21[%c0_107, %c1_108, %c0_109] : memref<2x18x128xf32, #tpu.memory_space<vmem>>, vector<2x16x128xf32>
    tpu.vector_store %arg21[%c0_107, %c1_108, %c0_109], %128 {strides = array<i32>} : memref<2x18x128xf32, #tpu.memory_space<vmem>>, vector<2x16x128xf32>,
    %c0_110 = arith.constant 0 : index
    %c0_111 = arith.constant 0 : index
    %c0_112 = arith.constant 0 : index
    %130 = vector.load %arg21[%c0_110, %c0_111, %c0_112] : memref<2x18x128xf32, #tpu.memory_space<vmem>>, vector<2x16x128xf32>
    %131 = vector.shape_cast %130 : vector<2x16x128xf32> to vector<32x128xf32>
    %132 = arith.truncf %131 : vector<32x128xf32> to vector<32x128xbf16>
    %c0_113 = arith.constant 0 : index
    %c0_114 = arith.constant 0 : index
    %c0_115 = arith.constant 0 : index
    %133 = vector.load %arg4[%c0_113, %c0_114, %c0_115] : memref<3x128x256xbf16, #tpu.memory_space<vmem>>, vector<1x128x256xbf16>
    %134 = vector.shape_cast %133 : vector<1x128x256xbf16> to vector<128x256xbf16>
    %cst_116 = arith.constant dense<0.000000e+00> : vector<32x256xf32>
    %135 = tpu.matmul %132, %134, %cst_116 {dimension_numbers = #tpu.dot_dimension_numbers<[1], [0], [0], [1], [0, 0, 1, 1], [], []>} : vector<32x128xbf16>, vector<128x256xbf16>, vector<32x256xf32> -> vector<32x256xf32>
    %c0_117 = arith.constant 0 : index
    %c1_118 = arith.constant 1 : index
    %c0_119 = arith.constant 0 : index
    %136 = vector.load %arg21[%c0_117, %c1_118, %c0_119] : memref<2x18x128xf32, #tpu.memory_space<vmem>>, vector<2x16x128xf32>
    %137 = vector.shape_cast %136 : vector<2x16x128xf32> to vector<32x128xf32>
    %138 = arith.truncf %137 : vector<32x128xf32> to vector<32x128xbf16>
    %c1_120 = arith.constant 1 : index
    %c0_121 = arith.constant 0 : index
    %c0_122 = arith.constant 0 : index
    %139 = vector.load %arg4[%c1_120, %c0_121, %c0_122] : memref<3x128x256xbf16, #tpu.memory_space<vmem>>, vector<1x128x256xbf16>
    %140 = vector.shape_cast %139 : vector<1x128x256xbf16> to vector<128x256xbf16>
    %cst_123 = arith.constant dense<0.000000e+00> : vector<32x256xf32>
    %141 = tpu.matmul %138, %140, %cst_123 {dimension_numbers = #tpu.dot_dimension_numbers<[1], [0], [0], [1], [0, 0, 1, 1], [], []>} : vector<32x128xbf16>, vector<128x256xbf16>, vector<32x256xf32> -> vector<32x256xf32>
    %142 = arith.addf %135, %141 : vector<32x256xf32>
    %c0_124 = arith.constant 0 : index
    %c2_125 = arith.constant 2 : index
    %c0_126 = arith.constant 0 : index
    %143 = vector.load %arg21[%c0_124, %c2_125, %c0_126] : memref<2x18x128xf32, #tpu.memory_space<vmem>>, vector<2x16x128xf32>
    %144 = vector.shape_cast %143 : vector<2x16x128xf32> to vector<32x128xf32>
    %145 = arith.truncf %144 : vector<32x128xf32> to vector<32x128xbf16>
    %c2_127 = arith.constant 2 : index
    %c0_128 = arith.constant 0 : index
    %c0_129 = arith.constant 0 : index
    %146 = vector.load %arg4[%c2_127, %c0_128, %c0_129] : memref<3x128x256xbf16, #tpu.memory_space<vmem>>, vector<1x128x256xbf16>
    %147 = vector.shape_cast %146 : vector<1x128x256xbf16> to vector<128x256xbf16>
    %cst_130 = arith.constant dense<0.000000e+00> : vector<32x256xf32>
    %148 = tpu.matmul %145, %147, %cst_130 {dimension_numbers = #tpu.dot_dimension_numbers<[1], [0], [0], [1], [0, 0, 1, 1], [], []>} : vector<32x128xbf16>, vector<128x256xbf16>, vector<32x256xf32> -> vector<32x256xf32>
    %149 = arith.addf %142, %148 : vector<32x256xf32>
    %c2_131 = arith.constant 2 : index
    %c0_132 = arith.constant 0 : index
    %150 = vector.load %arg6[%c2_131, %c0_132] : memref<4x256xf32, #tpu.memory_space<vmem>>, vector<1x256xf32>
    %151 = vector.broadcast %150 : vector<1x256xf32> to vector<32x256xf32>
    %152 = arith.addf %149, %151 : vector<32x256xf32>
    %cst_133 = arith.constant dense<0.000000e+00> : vector<256xf32>
    %153 = vector.multi_reduction <add>, %152, %cst_133 [0] : vector<32x256xf32> to vector<256xf32>
    %154 = vector.shape_cast %153 : vector<256xf32> to vector<1x256xf32>
    %155 = arith.mulf %152, %152 : vector<32x256xf32>
    %cst_134 = arith.constant dense<0.000000e+00> : vector<256xf32>
    %156 = vector.multi_reduction <add>, %155, %cst_134 [0] : vector<32x256xf32> to vector<256xf32>
    %157 = vector.shape_cast %156 : vector<256xf32> to vector<1x256xf32>
    %c0_135 = arith.constant 0 : index
    %c0_136 = arith.constant 0 : index
    %158 = vector.load %arg10[%c0_135, %c0_136] : memref<256x256xf32, #tpu.memory_space<vmem>>, vector<256x256xf32>
    %cst_137 = arith.constant dense<0.000000e+00> : vector<1x256xf32>
    %159 = tpu.matmul %154, %158, %cst_137 {dimension_numbers = #tpu.dot_dimension_numbers<[1], [0], [0], [1], [0, 0, 1, 1], [], []>} : vector<1x256xf32>, vector<256x256xf32>, vector<1x256xf32> -> vector<1x256xf32>
    %cst_138 = arith.constant 0.001953125 : f32
    %160 = vector.broadcast %cst_138 : f32 to vector<1x256xf32>
    %161 = arith.mulf %159, %160 : vector<1x256xf32>
    %c0_139 = arith.constant 0 : index
    %c0_140 = arith.constant 0 : index
    %162 = vector.load %arg10[%c0_139, %c0_140] : memref<256x256xf32, #tpu.memory_space<vmem>>, vector<256x256xf32>
    %cst_141 = arith.constant dense<0.000000e+00> : vector<1x256xf32>
    %163 = tpu.matmul %157, %162, %cst_141 {dimension_numbers = #tpu.dot_dimension_numbers<[1], [0], [0], [1], [0, 0, 1, 1], [], []>} : vector<1x256xf32>, vector<256x256xf32>, vector<1x256xf32> -> vector<1x256xf32>
    %cst_142 = arith.constant 0.001953125 : f32
    %164 = vector.broadcast %cst_142 : f32 to vector<1x256xf32>
    %165 = arith.mulf %163, %164 : vector<1x256xf32>
    %166 = arith.mulf %161, %161 : vector<1x256xf32>
    %167 = arith.subf %165, %166 : vector<1x256xf32>
    %cst_143 = arith.constant 9.99999974E-6 : f32
    %168 = vector.broadcast %cst_143 : f32 to vector<1x256xf32>
    %169 = arith.addf %167, %168 : vector<1x256xf32>
    %170 = math.rsqrt %169 : vector<1x256xf32>
    %c2_144 = arith.constant 2 : index
    %c0_145 = arith.constant 0 : index
    %171 = vector.load %arg7[%c2_144, %c0_145] : memref<4x256xf32, #tpu.memory_space<vmem>>, vector<1x256xf32>
    %172 = arith.mulf %171, %170 : vector<1x256xf32>
    %c2_146 = arith.constant 2 : index
    %c0_147 = arith.constant 0 : index
    %173 = vector.load %arg8[%c2_146, %c0_147] : memref<4x256xf32, #tpu.memory_space<vmem>>, vector<1x256xf32>
    %174 = arith.mulf %161, %172 : vector<1x256xf32>
    %175 = arith.subf %173, %174 : vector<1x256xf32>
    %176 = vector.broadcast %172 : vector<1x256xf32> to vector<32x256xf32>
    %177 = arith.mulf %152, %176 : vector<32x256xf32>
    %178 = vector.broadcast %175 : vector<1x256xf32> to vector<32x256xf32>
    %179 = arith.addf %177, %178 : vector<32x256xf32>
    %cst_148 = arith.constant 0.000000e+00 : f32
    %180 = vector.broadcast %cst_148 : f32 to vector<32x256xf32>
    %181 = arith.maximumf %179, %180 : vector<32x256xf32>
    %cst_149 = arith.constant 0.000000e+00 : f32
    %182 = vector.broadcast %cst_149 : f32 to vector<2x1x256xf32>
    %c0_150 = arith.constant 0 : index
    %c0_151 = arith.constant 0 : index
    %c0_152 = arith.constant 0 : index
    %183 = vector.load %arg22[%c0_150, %c0_151, %c0_152] : memref<2x18x256xf32, #tpu.memory_space<vmem>>, vector<2x1x256xf32>
    tpu.vector_store %arg22[%c0_150, %c0_151, %c0_152], %182 {strides = array<i32>} : memref<2x18x256xf32, #tpu.memory_space<vmem>>, vector<2x1x256xf32>,
    %cst_153 = arith.constant 0.000000e+00 : f32
    %184 = vector.broadcast %cst_153 : f32 to vector<2x1x256xf32>
    %c0_154 = arith.constant 0 : index
    %c17_155 = arith.constant 17 : index
    %c0_156 = arith.constant 0 : index
    %185 = vector.load %arg22[%c0_154, %c17_155, %c0_156] : memref<2x18x256xf32, #tpu.memory_space<vmem>>, vector<2x1x256xf32>
    tpu.vector_store %arg22[%c0_154, %c17_155, %c0_156], %184 {strides = array<i32>} : memref<2x18x256xf32, #tpu.memory_space<vmem>>, vector<2x1x256xf32>,
    %186 = vector.shape_cast %181 : vector<32x256xf32> to vector<2x16x256xf32>
    %c0_157 = arith.constant 0 : index
    %c1_158 = arith.constant 1 : index
    %c0_159 = arith.constant 0 : index
    %187 = vector.load %arg22[%c0_157, %c1_158, %c0_159] : memref<2x18x256xf32, #tpu.memory_space<vmem>>, vector<2x16x256xf32>
    tpu.vector_store %arg22[%c0_157, %c1_158, %c0_159], %186 {strides = array<i32>} : memref<2x18x256xf32, #tpu.memory_space<vmem>>, vector<2x16x256xf32>,
    %c0_160 = arith.constant 0 : index
    %c0_161 = arith.constant 0 : index
    %c0_162 = arith.constant 0 : index
    %188 = vector.load %arg22[%c0_160, %c0_161, %c0_162] : memref<2x18x256xf32, #tpu.memory_space<vmem>>, vector<2x16x256xf32>
    %189 = vector.shape_cast %188 : vector<2x16x256xf32> to vector<32x256xf32>
    %190 = arith.truncf %189 : vector<32x256xf32> to vector<32x256xbf16>
    %c0_163 = arith.constant 0 : index
    %c0_164 = arith.constant 0 : index
    %c0_165 = arith.constant 0 : index
    %191 = vector.load %arg5[%c0_163, %c0_164, %c0_165] : memref<3x256x256xbf16, #tpu.memory_space<vmem>>, vector<1x256x256xbf16>
    %192 = vector.shape_cast %191 : vector<1x256x256xbf16> to vector<256x256xbf16>
    %cst_166 = arith.constant dense<0.000000e+00> : vector<32x256xf32>
    %193 = tpu.matmul %190, %192, %cst_166 {dimension_numbers = #tpu.dot_dimension_numbers<[1], [0], [0], [1], [0, 0, 1, 1], [], []>} : vector<32x256xbf16>, vector<256x256xbf16>, vector<32x256xf32> -> vector<32x256xf32>
    %c0_167 = arith.constant 0 : index
    %c1_168 = arith.constant 1 : index
    %c0_169 = arith.constant 0 : index
    %194 = vector.load %arg22[%c0_167, %c1_168, %c0_169] : memref<2x18x256xf32, #tpu.memory_space<vmem>>, vector<2x16x256xf32>
    %195 = vector.shape_cast %194 : vector<2x16x256xf32> to vector<32x256xf32>
    %196 = arith.truncf %195 : vector<32x256xf32> to vector<32x256xbf16>
    %c1_170 = arith.constant 1 : index
    %c0_171 = arith.constant 0 : index
    %c0_172 = arith.constant 0 : index
    %197 = vector.load %arg5[%c1_170, %c0_171, %c0_172] : memref<3x256x256xbf16, #tpu.memory_space<vmem>>, vector<1x256x256xbf16>
    %198 = vector.shape_cast %197 : vector<1x256x256xbf16> to vector<256x256xbf16>
    %cst_173 = arith.constant dense<0.000000e+00> : vector<32x256xf32>
    %199 = tpu.matmul %196, %198, %cst_173 {dimension_numbers = #tpu.dot_dimension_numbers<[1], [0], [0], [1], [0, 0, 1, 1], [], []>} : vector<32x256xbf16>, vector<256x256xbf16>, vector<32x256xf32> -> vector<32x256xf32>
    %200 = arith.addf %193, %199 : vector<32x256xf32>
    %c0_174 = arith.constant 0 : index
    %c2_175 = arith.constant 2 : index
    %c0_176 = arith.constant 0 : index
    %201 = vector.load %arg22[%c0_174, %c2_175, %c0_176] : memref<2x18x256xf32, #tpu.memory_space<vmem>>, vector<2x16x256xf32>
    %202 = vector.shape_cast %201 : vector<2x16x256xf32> to vector<32x256xf32>
    %203 = arith.truncf %202 : vector<32x256xf32> to vector<32x256xbf16>
    %c2_177 = arith.constant 2 : index
    %c0_178 = arith.constant 0 : index
    %c0_179 = arith.constant 0 : index
    %204 = vector.load %arg5[%c2_177, %c0_178, %c0_179] : memref<3x256x256xbf16, #tpu.memory_space<vmem>>, vector<1x256x256xbf16>
    %205 = vector.shape_cast %204 : vector<1x256x256xbf16> to vector<256x256xbf16>
    %cst_180 = arith.constant dense<0.000000e+00> : vector<32x256xf32>
    %206 = tpu.matmul %203, %205, %cst_180 {dimension_numbers = #tpu.dot_dimension_numbers<[1], [0], [0], [1], [0, 0, 1, 1], [], []>} : vector<32x256xbf16>, vector<256x256xbf16>, vector<32x256xf32> -> vector<32x256xf32>
    %207 = arith.addf %200, %206 : vector<32x256xf32>
    %c3 = arith.constant 3 : index
    %c0_181 = arith.constant 0 : index
    %208 = vector.load %arg6[%c3, %c0_181] : memref<4x256xf32, #tpu.memory_space<vmem>>, vector<1x256xf32>
    %209 = vector.broadcast %208 : vector<1x256xf32> to vector<32x256xf32>
    %210 = arith.addf %207, %209 : vector<32x256xf32>
    %cst_182 = arith.constant dense<0.000000e+00> : vector<256xf32>
    %211 = vector.multi_reduction <add>, %210, %cst_182 [0] : vector<32x256xf32> to vector<256xf32>
    %212 = vector.shape_cast %211 : vector<256xf32> to vector<1x256xf32>
    %213 = arith.mulf %210, %210 : vector<32x256xf32>
    %cst_183 = arith.constant dense<0.000000e+00> : vector<256xf32>
    %214 = vector.multi_reduction <add>, %213, %cst_183 [0] : vector<32x256xf32> to vector<256xf32>
    %215 = vector.shape_cast %214 : vector<256xf32> to vector<1x256xf32>
    %c0_184 = arith.constant 0 : index
    %c0_185 = arith.constant 0 : index
    %216 = vector.load %arg10[%c0_184, %c0_185] : memref<256x256xf32, #tpu.memory_space<vmem>>, vector<256x256xf32>
    %cst_186 = arith.constant dense<0.000000e+00> : vector<1x256xf32>
    %217 = tpu.matmul %212, %216, %cst_186 {dimension_numbers = #tpu.dot_dimension_numbers<[1], [0], [0], [1], [0, 0, 1, 1], [], []>} : vector<1x256xf32>, vector<256x256xf32>, vector<1x256xf32> -> vector<1x256xf32>
    %cst_187 = arith.constant 0.001953125 : f32
    %218 = vector.broadcast %cst_187 : f32 to vector<1x256xf32>
    %219 = arith.mulf %217, %218 : vector<1x256xf32>
    %c0_188 = arith.constant 0 : index
    %c0_189 = arith.constant 0 : index
    %220 = vector.load %arg10[%c0_188, %c0_189] : memref<256x256xf32, #tpu.memory_space<vmem>>, vector<256x256xf32>
    %cst_190 = arith.constant dense<0.000000e+00> : vector<1x256xf32>
    %221 = tpu.matmul %215, %220, %cst_190 {dimension_numbers = #tpu.dot_dimension_numbers<[1], [0], [0], [1], [0, 0, 1, 1], [], []>} : vector<1x256xf32>, vector<256x256xf32>, vector<1x256xf32> -> vector<1x256xf32>
    %cst_191 = arith.constant 0.001953125 : f32
    %222 = vector.broadcast %cst_191 : f32 to vector<1x256xf32>
    %223 = arith.mulf %221, %222 : vector<1x256xf32>
    %224 = arith.mulf %219, %219 : vector<1x256xf32>
    %225 = arith.subf %223, %224 : vector<1x256xf32>
    %cst_192 = arith.constant 9.99999974E-6 : f32
    %226 = vector.broadcast %cst_192 : f32 to vector<1x256xf32>
    %227 = arith.addf %225, %226 : vector<1x256xf32>
    %228 = math.rsqrt %227 : vector<1x256xf32>
    %c3_193 = arith.constant 3 : index
    %c0_194 = arith.constant 0 : index
    %229 = vector.load %arg7[%c3_193, %c0_194] : memref<4x256xf32, #tpu.memory_space<vmem>>, vector<1x256xf32>
    %230 = arith.mulf %229, %228 : vector<1x256xf32>
    %c3_195 = arith.constant 3 : index
    %c0_196 = arith.constant 0 : index
    %231 = vector.load %arg8[%c3_195, %c0_196] : memref<4x256xf32, #tpu.memory_space<vmem>>, vector<1x256xf32>
    %232 = arith.mulf %219, %230 : vector<1x256xf32>
    %233 = arith.subf %231, %232 : vector<1x256xf32>
    %234 = vector.broadcast %230 : vector<1x256xf32> to vector<32x256xf32>
    %235 = arith.mulf %210, %234 : vector<32x256xf32>
    %236 = vector.broadcast %233 : vector<1x256xf32> to vector<32x256xf32>
    %237 = arith.addf %235, %236 : vector<32x256xf32>
    %cst_197 = arith.constant 0.000000e+00 : f32
    %238 = vector.broadcast %cst_197 : f32 to vector<32x256xf32>
    %239 = arith.maximumf %237, %238 : vector<32x256xf32>
    %c0_198 = arith.constant 0 : index
    %c0_199 = arith.constant 0 : index
    %c0_200 = arith.constant 0 : index
    %240 = vector.load %arg12[%c0_198, %c0_199, %c0_200] : memref<2x16x32xf32, #tpu.memory_space<vmem>>, vector<1x16x32xf32>
    %241 = vector.shape_cast %240 : vector<1x16x32xf32> to vector<16x32xf32>
    %cst_201 = arith.constant dense<0.000000e+00> : vector<16x256xf32>
    %242 = tpu.matmul %241, %239, %cst_201 {dimension_numbers = #tpu.dot_dimension_numbers<[1], [0], [0], [1], [0, 0, 1, 1], [], []>} : vector<16x32xf32>, vector<32x256xf32>, vector<16x256xf32> -> vector<16x256xf32>
    %c1_202 = arith.constant 1 : index
    %c0_203 = arith.constant 0 : index
    %c0_204 = arith.constant 0 : index
    %243 = vector.load %arg12[%c1_202, %c0_203, %c0_204] : memref<2x16x32xf32, #tpu.memory_space<vmem>>, vector<1x16x32xf32>
    %244 = vector.shape_cast %243 : vector<1x16x32xf32> to vector<16x32xf32>
    %cst_205 = arith.constant dense<0.000000e+00> : vector<16x256xf32>
    %245 = tpu.matmul %244, %239, %cst_205 {dimension_numbers = #tpu.dot_dimension_numbers<[1], [0], [0], [1], [0, 0, 1, 1], [], []>} : vector<16x32xf32>, vector<32x256xf32>, vector<16x256xf32> -> vector<16x256xf32>
    %246 = arith.maximumf %242, %245 : vector<16x256xf32>
    %c0_206 = arith.constant 0 : index
    %c0_207 = arith.constant 0 : index
    %c0_208 = arith.constant 0 : index
    %247 = vector.load %arg14[%c0_206, %c0_207, %c0_208] : memref<2x256x128xf32, #tpu.memory_space<vmem>>, vector<1x256x128xf32>
    %248 = vector.shape_cast %247 : vector<1x256x128xf32> to vector<256x128xf32>
    %cst_209 = arith.constant dense<0.000000e+00> : vector<16x128xf32>
    %249 = tpu.matmul %246, %248, %cst_209 {dimension_numbers = #tpu.dot_dimension_numbers<[1], [0], [0], [1], [0, 0, 1, 1], [], []>} : vector<16x256xf32>, vector<256x128xf32>, vector<16x128xf32> -> vector<16x128xf32>
    %c1_210 = arith.constant 1 : index
    %c0_211 = arith.constant 0 : index
    %c0_212 = arith.constant 0 : index
    %250 = vector.load %arg14[%c1_210, %c0_211, %c0_212] : memref<2x256x128xf32, #tpu.memory_space<vmem>>, vector<1x256x128xf32>
    %251 = vector.shape_cast %250 : vector<1x256x128xf32> to vector<256x128xf32>
    %cst_213 = arith.constant dense<0.000000e+00> : vector<16x128xf32>
    %252 = tpu.matmul %246, %251, %cst_213 {dimension_numbers = #tpu.dot_dimension_numbers<[1], [0], [0], [1], [0, 0, 1, 1], [], []>} : vector<16x256xf32>, vector<256x128xf32>, vector<16x128xf32> -> vector<16x128xf32>
    %253 = arith.maximumf %249, %252 : vector<16x128xf32>
    %254 = vector.shape_cast %253 : vector<16x128xf32> to vector<2x8x128xf32>
    %255 = vector.extract_strided_slice %254 {offsets = [0, 0, 0], sizes = [2, 1, 128], strides = [1, 1, 1]} : vector<2x8x128xf32> to vector<2x1x128xf32>
    %256 = vector.shape_cast %255 : vector<2x1x128xf32> to vector<2x128xf32>
    %c0_214 = arith.constant 0 : index
    %c0_215 = arith.constant 0 : index
    %c0_216 = arith.constant 0 : index
    %257 = vector.load %arg15[%c0_214, %c0_215, %c0_216] : memref<8x128x128xf32, #tpu.memory_space<vmem>>, vector<1x128x128xf32>
    %258 = vector.shape_cast %257 : vector<1x128x128xf32> to vector<128x128xf32>
    %cst_217 = arith.constant dense<0.000000e+00> : vector<2x128xf32>
    %259 = tpu.matmul %256, %258, %cst_217 {dimension_numbers = #tpu.dot_dimension_numbers<[1], [0], [0], [1], [0, 0, 1, 1], [], []>} : vector<2x128xf32>, vector<128x128xf32>, vector<2x128xf32> -> vector<2x128xf32>
    %260 = vector.extract_strided_slice %254 {offsets = [0, 1, 0], sizes = [2, 1, 128], strides = [1, 1, 1]} : vector<2x8x128xf32> to vector<2x1x128xf32>
    %261 = vector.shape_cast %260 : vector<2x1x128xf32> to vector<2x128xf32>
    %c1_218 = arith.constant 1 : index
    %c0_219 = arith.constant 0 : index
    %c0_220 = arith.constant 0 : index
    %262 = vector.load %arg15[%c1_218, %c0_219, %c0_220] : memref<8x128x128xf32, #tpu.memory_space<vmem>>, vector<1x128x128xf32>
    %263 = vector.shape_cast %262 : vector<1x128x128xf32> to vector<128x128xf32>
    %cst_221 = arith.constant dense<0.000000e+00> : vector<2x128xf32>
    %264 = tpu.matmul %261, %263, %cst_221 {dimension_numbers = #tpu.dot_dimension_numbers<[1], [0], [0], [1], [0, 0, 1, 1], [], []>} : vector<2x128xf32>, vector<128x128xf32>, vector<2x128xf32> -> vector<2x128xf32>
    %265 = arith.addf %259, %264 : vector<2x128xf32>
    %266 = vector.extract_strided_slice %254 {offsets = [0, 2, 0], sizes = [2, 1, 128], strides = [1, 1, 1]} : vector<2x8x128xf32> to vector<2x1x128xf32>
    %267 = vector.shape_cast %266 : vector<2x1x128xf32> to vector<2x128xf32>
    %c2_222 = arith.constant 2 : index
    %c0_223 = arith.constant 0 : index
    %c0_224 = arith.constant 0 : index
    %268 = vector.load %arg15[%c2_222, %c0_223, %c0_224] : memref<8x128x128xf32, #tpu.memory_space<vmem>>, vector<1x128x128xf32>
    %269 = vector.shape_cast %268 : vector<1x128x128xf32> to vector<128x128xf32>
    %cst_225 = arith.constant dense<0.000000e+00> : vector<2x128xf32>
    %270 = tpu.matmul %267, %269, %cst_225 {dimension_numbers = #tpu.dot_dimension_numbers<[1], [0], [0], [1], [0, 0, 1, 1], [], []>} : vector<2x128xf32>, vector<128x128xf32>, vector<2x128xf32> -> vector<2x128xf32>
    %271 = arith.addf %265, %270 : vector<2x128xf32>
    %272 = vector.extract_strided_slice %254 {offsets = [0, 3, 0], sizes = [2, 1, 128], strides = [1, 1, 1]} : vector<2x8x128xf32> to vector<2x1x128xf32>
    %273 = vector.shape_cast %272 : vector<2x1x128xf32> to vector<2x128xf32>
    %c3_226 = arith.constant 3 : index
    %c0_227 = arith.constant 0 : index
    %c0_228 = arith.constant 0 : index
    %274 = vector.load %arg15[%c3_226, %c0_227, %c0_228] : memref<8x128x128xf32, #tpu.memory_space<vmem>>, vector<1x128x128xf32>
    %275 = vector.shape_cast %274 : vector<1x128x128xf32> to vector<128x128xf32>
    %cst_229 = arith.constant dense<0.000000e+00> : vector<2x128xf32>
    %276 = tpu.matmul %273, %275, %cst_229 {dimension_numbers = #tpu.dot_dimension_numbers<[1], [0], [0], [1], [0, 0, 1, 1], [], []>} : vector<2x128xf32>, vector<128x128xf32>, vector<2x128xf32> -> vector<2x128xf32>
    %277 = arith.addf %271, %276 : vector<2x128xf32>
    %278 = vector.extract_strided_slice %254 {offsets = [0, 4, 0], sizes = [2, 1, 128], strides = [1, 1, 1]} : vector<2x8x128xf32> to vector<2x1x128xf32>
    %279 = vector.shape_cast %278 : vector<2x1x128xf32> to vector<2x128xf32>
    %c4 = arith.constant 4 : index
    %c0_230 = arith.constant 0 : index
    %c0_231 = arith.constant 0 : index
    %280 = vector.load %arg15[%c4, %c0_230, %c0_231] : memref<8x128x128xf32, #tpu.memory_space<vmem>>, vector<1x128x128xf32>
    %281 = vector.shape_cast %280 : vector<1x128x128xf32> to vector<128x128xf32>
    %cst_232 = arith.constant dense<0.000000e+00> : vector<2x128xf32>
    %282 = tpu.matmul %279, %281, %cst_232 {dimension_numbers = #tpu.dot_dimension_numbers<[1], [0], [0], [1], [0, 0, 1, 1], [], []>} : vector<2x128xf32>, vector<128x128xf32>, vector<2x128xf32> -> vector<2x128xf32>
    %283 = arith.addf %277, %282 : vector<2x128xf32>
    %284 = vector.extract_strided_slice %254 {offsets = [0, 5, 0], sizes = [2, 1, 128], strides = [1, 1, 1]} : vector<2x8x128xf32> to vector<2x1x128xf32>
    %285 = vector.shape_cast %284 : vector<2x1x128xf32> to vector<2x128xf32>
    %c5 = arith.constant 5 : index
    %c0_233 = arith.constant 0 : index
    %c0_234 = arith.constant 0 : index
    %286 = vector.load %arg15[%c5, %c0_233, %c0_234] : memref<8x128x128xf32, #tpu.memory_space<vmem>>, vector<1x128x128xf32>
    %287 = vector.shape_cast %286 : vector<1x128x128xf32> to vector<128x128xf32>
    %cst_235 = arith.constant dense<0.000000e+00> : vector<2x128xf32>
    %288 = tpu.matmul %285, %287, %cst_235 {dimension_numbers = #tpu.dot_dimension_numbers<[1], [0], [0], [1], [0, 0, 1, 1], [], []>} : vector<2x128xf32>, vector<128x128xf32>, vector<2x128xf32> -> vector<2x128xf32>
    %289 = arith.addf %283, %288 : vector<2x128xf32>
    %290 = vector.extract_strided_slice %254 {offsets = [0, 6, 0], sizes = [2, 1, 128], strides = [1, 1, 1]} : vector<2x8x128xf32> to vector<2x1x128xf32>
    %291 = vector.shape_cast %290 : vector<2x1x128xf32> to vector<2x128xf32>
    %c6 = arith.constant 6 : index
    %c0_236 = arith.constant 0 : index
    %c0_237 = arith.constant 0 : index
    %292 = vector.load %arg15[%c6, %c0_236, %c0_237] : memref<8x128x128xf32, #tpu.memory_space<vmem>>, vector<1x128x128xf32>
    %293 = vector.shape_cast %292 : vector<1x128x128xf32> to vector<128x128xf32>
    %cst_238 = arith.constant dense<0.000000e+00> : vector<2x128xf32>
    %294 = tpu.matmul %291, %293, %cst_238 {dimension_numbers = #tpu.dot_dimension_numbers<[1], [0], [0], [1], [0, 0, 1, 1], [], []>} : vector<2x128xf32>, vector<128x128xf32>, vector<2x128xf32> -> vector<2x128xf32>
    %295 = arith.addf %289, %294 : vector<2x128xf32>
    %296 = vector.extract_strided_slice %254 {offsets = [0, 7, 0], sizes = [2, 1, 128], strides = [1, 1, 1]} : vector<2x8x128xf32> to vector<2x1x128xf32>
    %297 = vector.shape_cast %296 : vector<2x1x128xf32> to vector<2x128xf32>
    %c7 = arith.constant 7 : index
    %c0_239 = arith.constant 0 : index
    %c0_240 = arith.constant 0 : index
    %298 = vector.load %arg15[%c7, %c0_239, %c0_240] : memref<8x128x128xf32, #tpu.memory_space<vmem>>, vector<1x128x128xf32>
    %299 = vector.shape_cast %298 : vector<1x128x128xf32> to vector<128x128xf32>
    %cst_241 = arith.constant dense<0.000000e+00> : vector<2x128xf32>
    %300 = tpu.matmul %297, %299, %cst_241 {dimension_numbers = #tpu.dot_dimension_numbers<[1], [0], [0], [1], [0, 0, 1, 1], [], []>} : vector<2x128xf32>, vector<128x128xf32>, vector<2x128xf32> -> vector<2x128xf32>
    %301 = arith.addf %295, %300 : vector<2x128xf32>
    %c0_242 = arith.constant 0 : index
    %c0_243 = arith.constant 0 : index
    %302 = vector.load %arg16[%c0_242, %c0_243] : memref<1x128xf32, #tpu.memory_space<vmem>>, vector<1x128xf32>
    %303 = vector.broadcast %302 : vector<1x128xf32> to vector<2x128xf32>
    %304 = arith.addf %301, %303 : vector<2x128xf32>
    %cst_244 = arith.constant 0.000000e+00 : f32
    %305 = vector.broadcast %cst_244 : f32 to vector<2x128xf32>
    %306 = arith.maximumf %304, %305 : vector<2x128xf32>
    %c0_245 = arith.constant 0 : index
    %c0_246 = arith.constant 0 : index
    %307 = vector.load %arg17[%c0_245, %c0_246] : memref<128x10xf32, #tpu.memory_space<vmem>>, vector<128x10xf32>
    %cst_247 = arith.constant dense<0.000000e+00> : vector<2x10xf32>
    %308 = tpu.matmul %306, %307, %cst_247 {dimension_numbers = #tpu.dot_dimension_numbers<[1], [0], [0], [1], [0, 0, 1, 1], [], []>} : vector<2x128xf32>, vector<128x10xf32>, vector<2x10xf32> -> vector<2x10xf32>
    %c0_248 = arith.constant 0 : index
    %c0_249 = arith.constant 0 : index
    %309 = vector.load %arg18[%c0_248, %c0_249] : memref<1x10xf32, #tpu.memory_space<vmem>>, vector<1x10xf32>
    %310 = vector.broadcast %309 : vector<1x10xf32> to vector<2x10xf32>
    %311 = arith.addf %308, %310 : vector<2x10xf32>
    %c0_250 = arith.constant 0 : index
    %c0_251 = arith.constant 0 : index
    %312 = vector.load %arg19[%c0_250, %c0_251] : memref<2x10xf32, #tpu.memory_space<vmem>>, vector<2x10xf32>
    tpu.vector_store %arg19[%c0_250, %c0_251], %311 {strides = array<i32>} : memref<2x10xf32, #tpu.memory_space<vmem>>, vector<2x10xf32>,
    return
  }
  func.func @transform_0(%arg0: i32) -> (i32, i32, i32) {
    %c0_i32 = arith.constant 0 : i32
    %c0_i32_0 = arith.constant 0 : i32
    %c0_i32_1 = arith.constant 0 : i32
    %c0_i32_2 = arith.constant 0 : i32
    return %c0_i32, %c0_i32_0, %c0_i32_1 : i32, i32, i32
  }
  func.func @transform_1(%arg0: i32) -> (i32, i32, i32) {
    %c0_i32 = arith.constant 0 : i32
    %c0_i32_0 = arith.constant 0 : i32
    %c0_i32_1 = arith.constant 0 : i32
    %c0_i32_2 = arith.constant 0 : i32
    return %c0_i32, %c0_i32_0, %c0_i32_1 : i32, i32, i32
  }
  func.func @transform_2(%arg0: i32) -> (i32, i32, i32) {
    %c0_i32 = arith.constant 0 : i32
    %c0_i32_0 = arith.constant 0 : i32
    %c0_i32_1 = arith.constant 0 : i32
    %c0_i32_2 = arith.constant 0 : i32
    return %c0_i32, %c0_i32_0, %c0_i32_1 : i32, i32, i32
  }
  func.func @transform_3(%arg0: i32) -> (i32, i32, i32) {
    %c0_i32 = arith.constant 0 : i32
    %c0_i32_0 = arith.constant 0 : i32
    %c0_i32_1 = arith.constant 0 : i32
    %c0_i32_2 = arith.constant 0 : i32
    return %c0_i32, %c0_i32_0, %c0_i32_1 : i32, i32, i32
  }
  func.func @transform_4(%arg0: i32) -> (i32, i32, i32) {
    %c0_i32 = arith.constant 0 : i32
    %c0_i32_0 = arith.constant 0 : i32
    %c0_i32_1 = arith.constant 0 : i32
    %c0_i32_2 = arith.constant 0 : i32
    return %c0_i32, %c0_i32_0, %c0_i32_1 : i32, i32, i32
  }
  func.func @transform_5(%arg0: i32) -> (i32, i32) {
    %c0_i32 = arith.constant 0 : i32
    %c0_i32_0 = arith.constant 0 : i32
    %c0_i32_1 = arith.constant 0 : i32
    return %c0_i32, %c0_i32_0 : i32, i32
  }
  func.func @transform_6(%arg0: i32) -> (i32, i32) {
    %c0_i32 = arith.constant 0 : i32
    %c0_i32_0 = arith.constant 0 : i32
    %c0_i32_1 = arith.constant 0 : i32
    return %c0_i32, %c0_i32_0 : i32, i32
  }
  func.func @transform_7(%arg0: i32) -> (i32, i32) {
    %c0_i32 = arith.constant 0 : i32
    %c0_i32_0 = arith.constant 0 : i32
    %c0_i32_1 = arith.constant 0 : i32
    return %c0_i32, %c0_i32_0 : i32, i32
  }
  func.func @transform_8(%arg0: i32) -> (i32, i32) {
    %c0_i32 = arith.constant 0 : i32
    %c0_i32_0 = arith.constant 0 : i32
    %c0_i32_1 = arith.constant 0 : i32
    return %c0_i32, %c0_i32_0 : i32, i32
  }
  func.func @transform_9(%arg0: i32) -> (i32, i32) {
    %c0_i32 = arith.constant 0 : i32
    %c0_i32_0 = arith.constant 0 : i32
    %c0_i32_1 = arith.constant 0 : i32
    return %c0_i32, %c0_i32_0 : i32, i32
  }
  func.func @transform_10(%arg0: i32) -> (i32, i32, i32) {
    %c0_i32 = arith.constant 0 : i32
    %c0_i32_0 = arith.constant 0 : i32
    %c0_i32_1 = arith.constant 0 : i32
    %c0_i32_2 = arith.constant 0 : i32
    return %c0_i32, %c0_i32_0, %c0_i32_1 : i32, i32, i32
  }
  func.func @transform_11(%arg0: i32) -> (i32, i32, i32) {
    %c0_i32 = arith.constant 0 : i32
    %c0_i32_0 = arith.constant 0 : i32
    %c0_i32_1 = arith.constant 0 : i32
    %c0_i32_2 = arith.constant 0 : i32
    return %c0_i32, %c0_i32_0, %c0_i32_1 : i32, i32, i32
  }
  func.func @transform_12(%arg0: i32) -> (i32, i32, i32) {
    %c0_i32 = arith.constant 0 : i32
    %c0_i32_0 = arith.constant 0 : i32
    %c0_i32_1 = arith.constant 0 : i32
    %c0_i32_2 = arith.constant 0 : i32
    return %c0_i32, %c0_i32_0, %c0_i32_1 : i32, i32, i32
  }
  func.func @transform_13(%arg0: i32) -> (i32, i32, i32) {
    %c0_i32 = arith.constant 0 : i32
    %c0_i32_0 = arith.constant 0 : i32
    %c0_i32_1 = arith.constant 0 : i32
    %c0_i32_2 = arith.constant 0 : i32
    return %c0_i32, %c0_i32_0, %c0_i32_1 : i32, i32, i32
  }
  func.func @transform_14(%arg0: i32) -> (i32, i32, i32) {
    %c0_i32 = arith.constant 0 : i32
    %c0_i32_0 = arith.constant 0 : i32
    %c0_i32_1 = arith.constant 0 : i32
    %c0_i32_2 = arith.constant 0 : i32
    return %c0_i32, %c0_i32_0, %c0_i32_1 : i32, i32, i32
  }
  func.func @transform_15(%arg0: i32) -> (i32, i32) {
    %c0_i32 = arith.constant 0 : i32
    %c0_i32_0 = arith.constant 0 : i32
    %c0_i32_1 = arith.constant 0 : i32
    return %c0_i32, %c0_i32_0 : i32, i32
  }
  func.func @transform_16(%arg0: i32) -> (i32, i32) {
    %c0_i32 = arith.constant 0 : i32
    %c0_i32_0 = arith.constant 0 : i32
    %c0_i32_1 = arith.constant 0 : i32
    return %c0_i32, %c0_i32_0 : i32, i32
  }
  func.func @transform_17(%arg0: i32) -> (i32, i32) {
    %c0_i32 = arith.constant 0 : i32
    %c0_i32_0 = arith.constant 0 : i32
    %c0_i32_1 = arith.constant 0 : i32
    return %c0_i32, %c0_i32_0 : i32, i32
  }
  func.func @transform_18(%arg0: i32) -> (i32, i32) {
    %c0_i32 = arith.constant 0 : i32
    %c0_i32_0 = arith.constant 0 : i32
    %c0_i32_1 = arith.constant 0 : i32
    return %c0_i32, %c0_i32_0 : i32, i32
  }
}

</mosaic_0001>

<llo_original>
// kernel: tpu_custom_call.1
$region0: #{tpu_custom_call.1}
  #allocation0 [shape = 'u32[]', space=smem, size = 0x4, offset = 0x4, fixed_abs, tag = 'smem constant byte address 0x4 - core index']
  #allocation1 [shape = 'u32[72,128]{1,0:T(1,128)}', space=vmem, size = 0x9000, scoped, tag = 'internal scratch']
  #allocation2 [shape = 'f32[2,34,256]{2,1,0:T(8,128)}', space=vmem, size = 0x14000, scoped, tag = 'scratch operand']
  #allocation3 [shape = 'f32[2,18,128]{2,1,0:T(8,128)}', space=vmem, size = 0x6000, scoped, tag = 'scratch operand']
  #allocation4 [shape = 'f32[2,18,256]{2,1,0:T(8,128)}', space=vmem, size = 0xc000, scoped, tag = 'scratch operand']
  %s0 = inlined_call_operand.vmem [shape: f32[2,34,96], index: 0, kind: input, shape index: {}]
  %s1 = inlined_call_operand.hbm [shape: bf16[3,96,256], index: 1, kind: input, shape index: {}]
  %s2 = inlined_call_operand.hbm [shape: bf16[3,256,256], index: 2, kind: input, shape index: {}]
  %s3 = inlined_call_operand.hbm [shape: bf16[3,128,256], index: 3, kind: input, shape index: {}]
  %s4 = inlined_call_operand.hbm [shape: bf16[3,256,256], index: 4, kind: input, shape index: {}]
  %s5 = inlined_call_operand.vmem [shape: f32[4,256], index: 5, kind: input, shape index: {}]
  %s6 = inlined_call_operand.vmem [shape: f32[4,256], index: 6, kind: input, shape index: {}]
  %s7 = inlined_call_operand.vmem [shape: f32[4,256], index: 7, kind: input, shape index: {}]
  %s8 = inlined_call_operand.hbm [shape: f32[256,256], index: 8, kind: input, shape index: {}]
  %s9 = inlined_call_operand.hbm [shape: f32[256,256], index: 9, kind: input, shape index: {}]
  %s10 = inlined_call_operand.vmem [shape: f32[2,32,64], index: 10, kind: input, shape index: {}]
  %s11 = inlined_call_operand.vmem [shape: f32[2,16,32], index: 11, kind: input, shape index: {}]
  %s12 = inlined_call_operand.hbm [shape: f32[2,256,128], index: 12, kind: input, shape index: {}]
  %s13 = inlined_call_operand.hbm [shape: f32[2,256,128], index: 13, kind: input, shape index: {}]
  %s14 = inlined_call_operand.hbm [shape: f32[8,128,128], index: 14, kind: input, shape index: {}]
  %s15 = inlined_call_operand.vmem [shape: f32[1,128], index: 15, kind: input, shape index: {}]
  %s16 = inlined_call_operand.vmem [shape: f32[128,10], index: 16, kind: input, shape index: {}]
  %s17 = inlined_call_operand.vmem [shape: f32[1,10], index: 17, kind: input, shape index: {}]
  %s18 = inlined_call_operand.hbm [shape: f32[2,10], index: 18, kind: output, shape index: {}]
  %s19 = sld [smem:[#allocation0]]
  $region118: #{tpu_custom_call.1} parent=0
    _
  %s21 = ssub.s32 1, %s19
  %s22 = scalar_select 0, %s21, %s19
  $region1: #{tpu_custom_call.1} parent=0
    #allocation5 [shape = 'u8[147456]{0}', space=vmem, size = 0x24000, scoped, tag = 'input window, operand 1, single buffered']
    #allocation6 [shape = 's32[1]{0}', space=sflag, size = 0x4, scoped, tag = 'scoped memory for tpu_custom_call.1']
    #allocation7 [shape = 's32[1]{0}', space=sflag, size = 0x4, scoped, tag = 'scoped memory for tpu_custom_call.1']
    #allocation8 [shape = 'u8[393216]{0}', space=vmem, size = 0x60000, scoped, tag = 'input window, operand 2, single buffered']
    #allocation9 [shape = 's32[1]{0}', space=sflag, size = 0x4, scoped, tag = 'scoped memory for tpu_custom_call.1']
    #allocation10 [shape = 'u8[196608]{0}', space=vmem, size = 0x30000, scoped, tag = 'input window, operand 3, single buffered']
    #allocation11 [shape = 'u8[393216]{0}', space=vmem, size = 0x60000, scoped, tag = 'input window, operand 4, single buffered']
    #allocation12 [shape = 's32[1]{0}', space=sflag, size = 0x4, scoped, tag = 'scoped memory for tpu_custom_call.1']
    #allocation13 [shape = 'u8[262144]{0}', space=vmem, size = 0x40000, scoped, tag = 'input window, operand 8, single buffered']
    #allocation14 [shape = 'u8[262144]{0}', space=vmem, size = 0x40000, scoped, tag = 'input window, operand 9, single buffered']
    #allocation15 [shape = 's32[1]{0}', space=sflag, size = 0x4, scoped, tag = 'scoped memory for tpu_custom_call.1']
    #allocation16 [shape = 'u8[262144]{0}', space=vmem, size = 0x40000, scoped, tag = 'input window, operand 12, single buffered']
    #allocation17 [shape = 'u8[262144]{0}', space=vmem, size = 0x40000, scoped, tag = 'input window, operand 13, single buffered']
    #allocation18 [shape = 's32[1]{0}', space=sflag, size = 0x4, scoped, tag = 'scoped memory for tpu_custom_call.1']
    #allocation19 [shape = 'u8[524288]{0}', space=vmem, size = 0x80000, scoped, tag = 'input window, operand 14, single buffered']
    #allocation20 [shape = 'u8[1024]{0}', space=vmem, size = 0x400, scoped, tag = 'output window, operand 0, single buffered']
    %23 = vsyncpa [#allocation6], 0
    %24 = vsyncpa [#allocation9], 0
    %25 = vsyncpa [#allocation12], 0
    %26 = vsyncpa [#allocation15], 0
    %27 = vsyncpa [#allocation18], 0
    %28 = vsyncpa [#allocation7], 0
    // Predicated region
    $region2: #{tpu_custom_call.1} parent=1 // pred_check
      _
    $region3: #{tpu_custom_call.1} parent=1 // pred_check_branch
      %30 = sbr.rel (0) target = $region5
    $region4: #{tpu_custom_call.1} parent=1 // pred_region
      _
    $region5: #{tpu_custom_call.1} parent=1 // pred_fallthru
      _
    // Predicated region
    $region6: #{tpu_custom_call.1} parent=1 // pred_check
      _
    $region7: #{tpu_custom_call.1} parent=1 // pred_check_branch
      %32 = sbr.rel (0) target = $region9
    $region8: #{tpu_custom_call.1} parent=1 // pred_region
      %34 = vsyncadd [#allocation6], 0
      %s35 = sshll.u32 %s1, 4
      %s36 = int_to_ptr.hbm [resolvable:$true] %s35
      %s37 = sshll.u32 [#allocation5], 4
      %s38 = int_to_ptr.vmem [resolvable:$true] %s37
      %43 = dma.hbm_to_vmem [thread:$0]  %s36, 4608, %s38, [#allocation6], 128, 128, 8
    $region9: #{tpu_custom_call.1} parent=1 // pred_fallthru
      _
    // Predicated region
    $region10: #{tpu_custom_call.1} parent=1 // pred_check
      _
    $region11: #{tpu_custom_call.1} parent=1 // pred_check_branch
      %45 = sbr.rel (0) target = $region13
    $region12: #{tpu_custom_call.1} parent=1 // pred_region
      %47 = vsyncadd [#allocation9], 0
      %s48 = sshll.u32 %s2, 4
      %s49 = int_to_ptr.hbm [resolvable:$true] %s48
      %s50 = sshll.u32 [#allocation8], 4
      %s51 = int_to_ptr.vmem [resolvable:$true] %s50
      %56 = dma.hbm_to_vmem [thread:$0]  %s49, 12288, %s51, [#allocation9], 128, 128, 8
    $region13: #{tpu_custom_call.1} parent=1 // pred_fallthru
      _
    // Predicated region
    $region14: #{tpu_custom_call.1} parent=1 // pred_check
      _
    $region15: #{tpu_custom_call.1} parent=1 // pred_check_branch
      %58 = sbr.rel (0) target = $region17
    $region16: #{tpu_custom_call.1} parent=1 // pred_region
      %60 = vsyncadd [#allocation9], 0
      %s61 = sshll.u32 %s3, 4
      %s62 = int_to_ptr.hbm [resolvable:$true] %s61
      %s63 = sshll.u32 [#allocation10], 4
      %s64 = int_to_ptr.vmem [resolvable:$true] %s63
      %69 = dma.hbm_to_vmem [thread:$0]  %s62, 6144, %s64, [#allocation9], 128, 128, 8
    $region17: #{tpu_custom_call.1} parent=1 // pred_fallthru
      _
    // Predicated region
    $region18: #{tpu_custom_call.1} parent=1 // pred_check
      _
    $region19: #{tpu_custom_call.1} parent=1 // pred_check_branch
      %71 = sbr.rel (0) target = $region21
    $region20: #{tpu_custom_call.1} parent=1 // pred_region
      %73 = vsyncadd [#allocation12], 0
      %s74 = sshll.u32 %s4, 4
      %s75 = int_to_ptr.hbm [resolvable:$true] %s74
      %s76 = sshll.u32 [#allocation11], 4
      %s77 = int_to_ptr.vmem [resolvable:$true] %s76
      %82 = dma.hbm_to_vmem [thread:$0]  %s75, 12288, %s77, [#allocation12], 128, 128, 8
    $region21: #{tpu_custom_call.1} parent=1 // pred_fallthru
      _
    // Predicated region
    $region22: #{tpu_custom_call.1} parent=1 // pred_check
      _
    $region23: #{tpu_custom_call.1} parent=1 // pred_check_branch
      %84 = sbr.rel (0) target = $region25
    $region24: #{tpu_custom_call.1} parent=1 // pred_region
      _
    $region25: #{tpu_custom_call.1} parent=1 // pred_fallthru
      _
    // Predicated region
    $region26: #{tpu_custom_call.1} parent=1 // pred_check
      _
    $region27: #{tpu_custom_call.1} parent=1 // pred_check_branch
      %86 = sbr.rel (0) target = $region29
    $region28: #{tpu_custom_call.1} parent=1 // pred_region
      _
    $region29: #{tpu_custom_call.1} parent=1 // pred_fallthru
      _
    // Predicated region
    $region30: #{tpu_custom_call.1} parent=1 // pred_check
      _
    $region31: #{tpu_custom_call.1} parent=1 // pred_check_branch
      %88 = sbr.rel (0) target = $region33
    $region32: #{tpu_custom_call.1} parent=1 // pred_region
      _
    $region33: #{tpu_custom_call.1} parent=1 // pred_fallthru
      _
    // Predicated region
    $region34: #{tpu_custom_call.1} parent=1 // pred_check
      _
    $region35: #{tpu_custom_call.1} parent=1 // pred_check_branch
      %90 = sbr.rel (0) target = $region37
    $region36: #{tpu_custom_call.1} parent=1 // pred_region
      %92 = vsyncadd [#allocation12], 0
      %s93 = sshll.u32 %s8, 4
      %s94 = int_to_ptr.hbm [resolvable:$true] %s93
      %s95 = sshll.u32 [#allocation13], 4
      %s96 = int_to_ptr.vmem [resolvable:$true] %s95
      %101 = dma.hbm_to_vmem [thread:$0]  %s94, 8192, %s96, [#allocation12], 256, 256, 16
    $region37: #{tpu_custom_call.1} parent=1 // pred_fallthru
      _
    // Predicated region
    $region38: #{tpu_custom_call.1} parent=1 // pred_check
      _
    $region39: #{tpu_custom_call.1} parent=1 // pred_check_branch
      %103 = sbr.rel (0) target = $region41
    $region40: #{tpu_custom_call.1} parent=1 // pred_region
      %105 = vsyncadd [#allocation15], 0
      %s106 = sshll.u32 %s9, 4
      %s107 = int_to_ptr.hbm [resolvable:$true] %s106
      %s108 = sshll.u32 [#allocation14], 4
      %s109 = int_to_ptr.vmem [resolvable:$true] %s108
      %114 = dma.hbm_to_vmem [thread:$0]  %s107, 8192, %s109, [#allocation15], 256, 256, 16
    $region41: #{tpu_custom_call.1} parent=1 // pred_fallthru
      _
    // Predicated region
    $region42: #{tpu_custom_call.1} parent=1 // pred_check
      _
    $region43: #{tpu_custom_call.1} parent=1 // pred_check_branch
      %116 = sbr.rel (0) target = $region45
    $region44: #{tpu_custom_call.1} parent=1 // pred_region
      _
    $region45: #{tpu_custom_call.1} parent=1 // pred_fallthru
      _
    // Predicated region
    $region46: #{tpu_custom_call.1} parent=1 // pred_check
      _
    $region47: #{tpu_custom_call.1} parent=1 // pred_check_branch
      %118 = sbr.rel (0) target = $region49
    $region48: #{tpu_custom_call.1} parent=1 // pred_region
      _
    $region49: #{tpu_custom_call.1} parent=1 // pred_fallthru
      _
    // Predicated region
    $region50: #{tpu_custom_call.1} parent=1 // pred_check
      _
    $region51: #{tpu_custom_call.1} parent=1 // pred_check_branch
      %120 = sbr.rel (0) target = $region53
    $region52: #{tpu_custom_call.1} parent=1 // pred_region
      %122 = vsyncadd [#allocation15], 0
      %s123 = sshll.u32 %s12, 4
      %s124 = int_to_ptr.hbm [resolvable:$true] %s123
      %s125 = sshll.u32 [#allocation16], 4
      %s126 = int_to_ptr.vmem [resolvable:$true] %s125
      %131 = dma.hbm_to_vmem [thread:$0]  %s124, 8192, %s126, [#allocation15], 128, 128, 8
    $region53: #{tpu_custom_call.1} parent=1 // pred_fallthru
      _
    // Predicated region
    $region54: #{tpu_custom_call.1} parent=1 // pred_check
      _
    $region55: #{tpu_custom_call.1} parent=1 // pred_check_branch
      %133 = sbr.rel (0) target = $region57
    $region56: #{tpu_custom_call.1} parent=1 // pred_region
      %135 = vsyncadd [#allocation18], 0
      %s136 = sshll.u32 %s13, 4
      %s137 = int_to_ptr.hbm [resolvable:$true] %s136
      %s138 = sshll.u32 [#allocation17], 4
      %s139 = int_to_ptr.vmem [resolvable:$true] %s138
      %144 = dma.hbm_to_vmem [thread:$0]  %s137, 8192, %s139, [#allocation18], 128, 128, 8
    $region57: #{tpu_custom_call.1} parent=1 // pred_fallthru
      _
    // Predicated region
    $region58: #{tpu_custom_call.1} parent=1 // pred_check
      _
    $region59: #{tpu_custom_call.1} parent=1 // pred_check_branch
      %146 = sbr.rel (0) target = $region61
    $region60: #{tpu_custom_call.1} parent=1 // pred_region
      %148 = vsyncadd [#allocation18], 0
      %s149 = sshll.u32 %s14, 4
      %s150 = int_to_ptr.hbm [resolvable:$true] %s149
      %s151 = sshll.u32 [#allocation19], 4
      %s152 = int_to_ptr.vmem [resolvable:$true] %s151
      %157 = dma.hbm_to_vmem [thread:$0]  %s150, 16384, %s152, [#allocation18], 128, 128, 8
    $region61: #{tpu_custom_call.1} parent=1 // pred_fallthru
      _
    // Predicated region
    $region62: #{tpu_custom_call.1} parent=1 // pred_check
      _
    $region63: #{tpu_custom_call.1} parent=1 // pred_check_branch
      %159 = sbr.rel (0) target = $region65
    $region64: #{tpu_custom_call.1} parent=1 // pred_region
      _
    $region65: #{tpu_custom_call.1} parent=1 // pred_fallthru
      _
    // Predicated region
    $region66: #{tpu_custom_call.1} parent=1 // pred_check
      _
    $region67: #{tpu_custom_call.1} parent=1 // pred_check_branch
      %161 = sbr.rel (0) target = $region69
    $region68: #{tpu_custom_call.1} parent=1 // pred_region
      _
    $region69: #{tpu_custom_call.1} parent=1 // pred_fallthru
      _
    // Predicated region
    $region70: #{tpu_custom_call.1} parent=1 // pred_check
      _
    $region71: #{tpu_custom_call.1} parent=1 // pred_check_branch
      %163 = sbr.rel (0) target = $region73
    $region72: #{tpu_custom_call.1} parent=1 // pred_region
      _
    $region73: #{tpu_custom_call.1} parent=1 // pred_fallthru
      _
    // Predicated region
    $region74: #{tpu_custom_call.1} parent=1 // pred_check
      _
    $region75: #{tpu_custom_call.1} parent=1 // pred_check_branch
      %165 = sbr.rel (0) target = $region77
    $region76: #{tpu_custom_call.1} parent=1 // pred_region
      %167 = dma.done [#allocation6], 4608
    $region77: #{tpu_custom_call.1} parent=1 // pred_fallthru
      _
    // Predicated region
    $region78: #{tpu_custom_call.1} parent=1 // pred_check
      _
    $region79: #{tpu_custom_call.1} parent=1 // pred_check_branch
      %169 = sbr.rel (0) target = $region81
    $region80: #{tpu_custom_call.1} parent=1 // pred_region
      %171 = dma.done [#allocation9], 12288
    $region81: #{tpu_custom_call.1} parent=1 // pred_fallthru
      _
    // Predicated region
    $region82: #{tpu_custom_call.1} parent=1 // pred_check
      _
    $region83: #{tpu_custom_call.1} parent=1 // pred_check_branch
      %173 = sbr.rel (0) target = $region85
    $region84: #{tpu_custom_call.1} parent=1 // pred_region
      %175 = dma.done [#allocation9], 6144
    $region85: #{tpu_custom_call.1} parent=1 // pred_fallthru
      _
    // Predicated region
    $region86: #{tpu_custom_call.1} parent=1 // pred_check
      _
    $region87: #{tpu_custom_call.1} parent=1 // pred_check_branch
      %177 = sbr.rel (0) target = $region89
    $region88: #{tpu_custom_call.1} parent=1 // pred_region
      %179 = dma.done [#allocation12], 12288
    $region89: #{tpu_custom_call.1} parent=1 // pred_fallthru
      _
    // Predicated region
    $region90: #{tpu_custom_call.1} parent=1 // pred_check
      _
    $region91: #{tpu_custom_call.1} parent=1 // pred_check_branch
      %181 = sbr.rel (0) target = $region93
    $region92: #{tpu_custom_call.1} parent=1 // pred_region
      %183 = dma.done [#allocation12], 8192
    $region93: #{tpu_custom_call.1} parent=1 // pred_fallthru
      _
    // Predicated region
    $region94: #{tpu_custom_call.1} parent=1 // pred_check
      _
    $region95: #{tpu_custom_call.1} parent=1 // pred_check_branch
      %185 = sbr.rel (0) target = $region97
    $region96: #{tpu_custom_call.1} parent=1 // pred_region
      %187 = dma.done [#allocation15], 8192
    $region97: #{tpu_custom_call.1} parent=1 // pred_fallthru
      _
    // Predicated region
    $region98: #{tpu_custom_call.1} parent=1 // pred_check
      _
    $region99: #{tpu_custom_call.1} parent=1 // pred_check_branch
      %189 = sbr.rel (0) target = $region101
    $region100: #{tpu_custom_call.1} parent=1 // pred_region
      %191 = dma.done [#allocation15], 8192
    $region101: #{tpu_custom_call.1} parent=1 // pred_fallthru
      _
    // Predicated region
    $region102: #{tpu_custom_call.1} parent=1 // pred_check
      _
    $region103: #{tpu_custom_call.1} parent=1 // pred_check_branch
      %193 = sbr.rel (0) target = $region105
    $region104: #{tpu_custom_call.1} parent=1 // pred_region
      %195 = dma.done [#allocation18], 8192
    $region105: #{tpu_custom_call.1} parent=1 // pred_fallthru
      _
    // Predicated region
    $region106: #{tpu_custom_call.1} parent=1 // pred_check
      _
    $region107: #{tpu_custom_call.1} parent=1 // pred_check_branch
      %197 = sbr.rel (0) target = $region109
    $region108: #{tpu_custom_call.1} parent=1 // pred_region
      %199 = dma.done [#allocation18], 16384
    $region109: #{tpu_custom_call.1} parent=1 // pred_fallthru
      _
    %v201 = vld [vmem:[%s0] sm:$0xff]
    %v202 = vld [vmem:[%s0 + $0x8] sm:$0xff]
    %v203 = vld [vmem:[%s0 + $0x10] sm:$0xff]
    %v204 = vld [vmem:[%s0 + $0x18] sm:$0xff]
    %v205 = vld [vmem:[%s0 + $0x28] sm:$0xff]
    %v206 = vld [vmem:[%s0 + $0x30] sm:$0xff]
    %v207 = vld [vmem:[%s0 + $0x38] sm:$0xff]
    %v208 = vld [vmem:[%s0 + $0x40] sm:$0xff]
    %v209 = vpack.c.bf16 %v202, %v201
    %v210 = vpack.c.bf16 %v204, %v203
    %v211 = vpack.c.bf16 %v206, %v205
    %v212 = vpack.c.bf16 %v208, %v207
    %v213 = vld [vmem:[#allocation5] sm:$0xff]
    %v214 = vld [vmem:[#allocation5 + $0x8] sm:$0xff]
    %v215 = vld [vmem:[#allocation5 + $0x10] sm:$0xff]
    %v216 = vld [vmem:[#allocation5 + $0x18] sm:$0xff]
    %v217 = vld [vmem:[#allocation5 + $0x20] sm:$0xff]
    %v218 = vld [vmem:[#allocation5 + $0x28] sm:$0xff]
    %v219 = vld [vmem:[#allocation5 + $0x30] sm:$0xff]
    %v220 = vld [vmem:[#allocation5 + $0x38] sm:$0xff]
    %v221 = vld [vmem:[#allocation5 + $0x40] sm:$0xff]
    %v222 = vld [vmem:[#allocation5 + $0x48] sm:$0xff]
    %v223 = vld [vmem:[#allocation5 + $0x50] sm:$0xff]
    %v224 = vld [vmem:[#allocation5 + $0x58] sm:$0xff]
    %v225 = vld [vmem:[%s0 + $0x1] sm:$0xff]
    %v226 = vld [vmem:[%s0 + $0x9] sm:$0xff]
    %v227 = vld [vmem:[%s0 + $0x11] sm:$0xff]
    %v228 = vld [vmem:[%s0 + $0x19] sm:$0xff]
    %v229 = vld [vmem:[%s0 + $0x29] sm:$0xff]
    %v230 = vld [vmem:[%s0 + $0x31] sm:$0xff]
    %v231 = vld [vmem:[%s0 + $0x39] sm:$0xff]
    %v232 = vld [vmem:[%s0 + $0x41] sm:$0xff]
    %v233 = vpack.c.bf16 %v226, %v225
    %v234 = vpack.c.bf16 %v228, %v227
    %v235 = vpack.c.bf16 %v230, %v229
    %v236 = vpack.c.bf16 %v232, %v231
    %s237 = scalar_lea.vmem [#allocation5], 96
    %v238 = vld [vmem:[%s237] sm:$0xff]
    %v239 = vld [vmem:[%s237 + $0x8] sm:$0xff]
    %v240 = vld [vmem:[%s237 + $0x10] sm:$0xff]
    %v241 = vld [vmem:[%s237 + $0x18] sm:$0xff]
    %v242 = vld [vmem:[%s237 + $0x20] sm:$0xff]
    %v243 = vld [vmem:[%s237 + $0x28] sm:$0xff]
    %v244 = vld [vmem:[%s237 + $0x30] sm:$0xff]
    %v245 = vld [vmem:[%s237 + $0x38] sm:$0xff]
    %v246 = vld [vmem:[%s237 + $0x40] sm:$0xff]
    %v247 = vld [vmem:[%s237 + $0x48] sm:$0xff]
    %v248 = vld [vmem:[%s237 + $0x50] sm:$0xff]
    %v249 = vld [vmem:[%s237 + $0x58] sm:$0xff]
    %v262 = vunpack.c.l.b16 %v238
    %v263 = vunpack.c.h.b16 %v238
    %v264 = vunpack.c.l.b16 %v239
    %v265 = vunpack.c.h.b16 %v239
    %v266 = vunpack.c.l.b16 %v240
    %v267 = vunpack.c.h.b16 %v240
    %v268 = vunpack.c.l.b16 %v241
    %v269 = vunpack.c.h.b16 %v241
    %v270 = vunpack.c.l.b16 %v242
    %v271 = vunpack.c.h.b16 %v242
    %v272 = vunpack.c.l.b16 %v243
    %v273 = vunpack.c.h.b16 %v243
    %v274 = vunpack.c.l.b16 %v244
    %v275 = vunpack.c.h.b16 %v244
    %v276 = vunpack.c.l.b16 %v245
    %v277 = vunpack.c.h.b16 %v245
    %v278 = vunpack.c.l.b16 %v246
    %v279 = vunpack.c.h.b16 %v246
    %v280 = vunpack.c.l.b16 %v247
    %v281 = vunpack.c.h.b16 %v247
    %v282 = vunpack.c.l.b16 %v248
    %v283 = vunpack.c.h.b16 %v248
    %v284 = vunpack.c.l.b16 %v249
    %v285 = vunpack.c.h.b16 %v249
    %v286 = vpack.c.b16 %v264, %v262
    %v287 = vpack.c.b16 %v265, %v263
    %v288 = vpack.c.b16 %v268, %v266
    %v289 = vpack.c.b16 %v269, %v267
    %v290 = vpack.c.b16 %v272, %v270
    %v291 = vpack.c.b16 %v273, %v271
    %v292 = vpack.c.b16 %v276, %v274
    %v293 = vpack.c.b16 %v277, %v275
    %v294 = vpack.c.b16 %v280, %v278
    %v295 = vpack.c.b16 %v281, %v279
    %v296 = vpack.c.b16 %v284, %v282
    %v297 = vpack.c.b16 %v285, %v283
    %vm310 = vcmask 785408
    %v312 = vsel %vm310, %v233, 0
    %v315 = vsel %vm310, %v234, 0
    %v318 = vsel %vm310, %v235, 0
    %v321 = vsel %vm310, %v236, 0
    %323 = vmatpush.bf16.msra.mxu0 0
    %324 = vmatpush.bf16.msra.mxu0 0
    %325 = vmatpush.bf16.msra.mxu0 %v296
    %326 = vmatpush.bf16.msra.mxu0 %v294
    %327 = vmatpush.bf16.msra.mxu0 %v292
    %328 = vmatpush.bf16.msra.mxu0 %v290
    %329 = vmatpush.bf16.msra.mxu0 %v288
    %330 = vmatpush.bf16.msra.mxu0 %v286
    %331 = vmatmul.bf16.gmra.mxu0 %v312
    %v332 = vpop.f32.mrf.mxu0
    %v333 = vadd.f32 0.0, %v332
    %v334 = vpop.f32.mrf.mxu0
    %v335 = vadd.f32 0.0, %v334
    %336 = vmatmul.bf16.gmra.mxu0 %v315
    %v337 = vpop.f32.mrf.mxu0
    %v338 = vadd.f32 0.0, %v337
    %v339 = vpop.f32.mrf.mxu0
    %v340 = vadd.f32 0.0, %v339
    %341 = vmatmul.bf16.gmra.mxu0 %v318
    %v342 = vpop.f32.mrf.mxu0
    %v343 = vadd.f32 0.0, %v342
    %v344 = vpop.f32.mrf.mxu0
    %v345 = vadd.f32 0.0, %v344
    %346 = vmatmul.bf16.gmra.mxu0 %v321
    %v347 = vpop.f32.mrf.mxu0
    %v348 = vadd.f32 0.0, %v347
    %v349 = vpop.f32.mrf.mxu0
    %v350 = vadd.f32 0.0, %v349
    %351 = vdwg.mxu0
    %352 = vmatpush.bf16.msra.mxu0 0
    %353 = vmatpush.bf16.msra.mxu0 0
    %354 = vmatpush.bf16.msra.mxu0 %v297
    %355 = vmatpush.bf16.msra.mxu0 %v295
    %356 = vmatpush.bf16.msra.mxu0 %v293
    %357 = vmatpush.bf16.msra.mxu0 %v291
    %358 = vmatpush.bf16.msra.mxu0 %v289
    %359 = vmatpush.bf16.msra.mxu0 %v287
    %360 = vmatmul.bf16.gmra.mxu0 %v312
    %v361 = vpop.f32.mrf.mxu0
    %v362 = vadd.f32 0.0, %v361
    %v363 = vpop.f32.mrf.mxu0
    %v364 = vadd.f32 0.0, %v363
    %365 = vmatmul.bf16.gmra.mxu0 %v315
    %v366 = vpop.f32.mrf.mxu0
    %v367 = vadd.f32 0.0, %v366
    %v368 = vpop.f32.mrf.mxu0
    %v369 = vadd.f32 0.0, %v368
    %370 = vmatmul.bf16.gmra.mxu0 %v318
    %v371 = vpop.f32.mrf.mxu0
    %v372 = vadd.f32 0.0, %v371
    %v373 = vpop.f32.mrf.mxu0
    %v374 = vadd.f32 0.0, %v373
    %375 = vmatmul.bf16.gmra.mxu0 %v321
    %v376 = vpop.f32.mrf.mxu0
    %v377 = vadd.f32 0.0, %v376
    %v378 = vpop.f32.mrf.mxu0
    %v379 = vadd.f32 0.0, %v378
    %380 = vdwg.mxu0
    %v393 = vunpack.c.l.b16 %v213
    %v394 = vunpack.c.h.b16 %v213
    %v395 = vunpack.c.l.b16 %v214
    %v396 = vunpack.c.h.b16 %v214
    %v397 = vunpack.c.l.b16 %v215
    %v398 = vunpack.c.h.b16 %v215
    %v399 = vunpack.c.l.b16 %v216
    %v400 = vunpack.c.h.b16 %v216
    %v401 = vunpack.c.l.b16 %v217
    %v402 = vunpack.c.h.b16 %v217
    %v403 = vunpack.c.l.b16 %v218
    %v404 = vunpack.c.h.b16 %v218
    %v405 = vunpack.c.l.b16 %v219
    %v406 = vunpack.c.h.b16 %v219
    %v407 = vunpack.c.l.b16 %v220
    %v408 = vunpack.c.h.b16 %v220
    %v409 = vunpack.c.l.b16 %v221
    %v410 = vunpack.c.h.b16 %v221
    %v411 = vunpack.c.l.b16 %v222
    %v412 = vunpack.c.h.b16 %v222
    %v413 = vunpack.c.l.b16 %v223
    %v414 = vunpack.c.h.b16 %v223
    %v415 = vunpack.c.l.b16 %v224
    %v416 = vunpack.c.h.b16 %v224
    %v417 = vpack.c.b16 %v395, %v393
    %v418 = vpack.c.b16 %v396, %v394
    %v419 = vpack.c.b16 %v399, %v397
    %v420 = vpack.c.b16 %v400, %v398
    %v421 = vpack.c.b16 %v403, %v401
    %v422 = vpack.c.b16 %v404, %v402
    %v423 = vpack.c.b16 %v407, %v405
    %v424 = vpack.c.b16 %v408, %v406
    %v425 = vpack.c.b16 %v411, %v409
    %v426 = vpack.c.b16 %v412, %v410
    %v427 = vpack.c.b16 %v415, %v413
    %v428 = vpack.c.b16 %v416, %v414
    %v442 = vsel %vm310, %v209, 0
    %v445 = vsel %vm310, %v210, 0
    %v448 = vsel %vm310, %v211, 0
    %v451 = vsel %vm310, %v212, 0
    %453 = vmatpush.bf16.msra.mxu0 0
    %454 = vmatpush.bf16.msra.mxu0 0
    %455 = vmatpush.bf16.msra.mxu0 %v427
    %456 = vmatpush.bf16.msra.mxu0 %v425
    %457 = vmatpush.bf16.msra.mxu0 %v423
    %458 = vmatpush.bf16.msra.mxu0 %v421
    %459 = vmatpush.bf16.msra.mxu0 %v419
    %460 = vmatpush.bf16.msra.mxu0 %v417
    %461 = vmatmul.bf16.gmra.mxu0 %v442
    %v462 = vpop.f32.mrf.mxu0
    %v463 = vadd.f32 %v333, %v462
    %v464 = vpop.f32.mrf.mxu0
    %v465 = vadd.f32 %v335, %v464
    %466 = vmatmul.bf16.gmra.mxu0 %v445
    %v467 = vpop.f32.mrf.mxu0
    %v468 = vadd.f32 %v338, %v467
    %v469 = vpop.f32.mrf.mxu0
    %v470 = vadd.f32 %v340, %v469
    %471 = vmatmul.bf16.gmra.mxu0 %v448
    %v472 = vpop.f32.mrf.mxu0
    %v473 = vadd.f32 %v343, %v472
    %v474 = vpop.f32.mrf.mxu0
    %v475 = vadd.f32 %v345, %v474
    %476 = vmatmul.bf16.gmra.mxu0 %v451
    %v477 = vpop.f32.mrf.mxu0
    %v478 = vadd.f32 %v348, %v477
    %v479 = vpop.f32.mrf.mxu0
    %v480 = vadd.f32 %v350, %v479
    %481 = vdwg.mxu0
    %482 = vmatpush.bf16.msra.mxu0 0
    %483 = vmatpush.bf16.msra.mxu0 0
    %484 = vmatpush.bf16.msra.mxu0 %v428
    %485 = vmatpush.bf16.msra.mxu0 %v426
    %486 = vmatpush.bf16.msra.mxu0 %v424
    %487 = vmatpush.bf16.msra.mxu0 %v422
    %488 = vmatpush.bf16.msra.mxu0 %v420
    %489 = vmatpush.bf16.msra.mxu0 %v418
    %490 = vmatmul.bf16.gmra.mxu0 %v442
    %v491 = vpop.f32.mrf.mxu0
    %v492 = vadd.f32 %v362, %v491
    %v493 = vpop.f32.mrf.mxu0
    %v494 = vadd.f32 %v364, %v493
    %495 = vmatmul.bf16.gmra.mxu0 %v445
    %v496 = vpop.f32.mrf.mxu0
    %v497 = vadd.f32 %v367, %v496
    %v498 = vpop.f32.mrf.mxu0
    %v499 = vadd.f32 %v369, %v498
    %500 = vmatmul.bf16.gmra.mxu0 %v448
    %v501 = vpop.f32.mrf.mxu0
    %v502 = vadd.f32 %v372, %v501
    %v503 = vpop.f32.mrf.mxu0
    %v504 = vadd.f32 %v374, %v503
    %505 = vmatmul.bf16.gmra.mxu0 %v451
    %v506 = vpop.f32.mrf.mxu0
    %v507 = vadd.f32 %v377, %v506
    %v508 = vpop.f32.mrf.mxu0
    %v509 = vadd.f32 %v379, %v508
    %510 = vdwg.mxu0
    %v511 = vld [vmem:[%s0 + $0x2] sm:$0xff]
    %v512 = vld [vmem:[%s0 + $0xa] sm:$0xff]
    %v513 = vld [vmem:[%s0 + $0x12] sm:$0xff]
    %v514 = vld [vmem:[%s0 + $0x1a] sm:$0xff]
    %v515 = vld [vmem:[%s0 + $0x2a] sm:$0xff]
    %v516 = vld [vmem:[%s0 + $0x32] sm:$0xff]
    %v517 = vld [vmem:[%s0 + $0x3a] sm:$0xff]
    %v518 = vld [vmem:[%s0 + $0x42] sm:$0xff]
    %v519 = vpack.c.bf16 %v512, %v511
    %v520 = vpack.c.bf16 %v514, %v513
    %v521 = vpack.c.bf16 %v516, %v515
    %v522 = vpack.c.bf16 %v518, %v517
    %s523 = scalar_lea.vmem [#allocation5], 192
    %v524 = vld [vmem:[%s523] sm:$0xff]
    %v525 = vld [vmem:[%s523 + $0x8] sm:$0xff]
    %v526 = vld [vmem:[%s523 + $0x10] sm:$0xff]
    %v527 = vld [vmem:[%s523 + $0x18] sm:$0xff]
    %v528 = vld [vmem:[%s523 + $0x20] sm:$0xff]
    %v529 = vld [vmem:[%s523 + $0x28] sm:$0xff]
    %v530 = vld [vmem:[%s523 + $0x30] sm:$0xff]
    %v531 = vld [vmem:[%s523 + $0x38] sm:$0xff]
    %v532 = vld [vmem:[%s523 + $0x40] sm:$0xff]
    %v533 = vld [vmem:[%s523 + $0x48] sm:$0xff]
    %v534 = vld [vmem:[%s523 + $0x50] sm:$0xff]
    %v535 = vld [vmem:[%s523 + $0x58] sm:$0xff]
    %v548 = vunpack.c.l.b16 %v524
    %v549 = vunpack.c.h.b16 %v524
    %v550 = vunpack.c.l.b16 %v525
    %v551 = vunpack.c.h.b16 %v525
    %v552 = vunpack.c.l.b16 %v526
    %v553 = vunpack.c.h.b16 %v526
    %v554 = vunpack.c.l.b16 %v527
    %v555 = vunpack.c.h.b16 %v527
    %v556 = vunpack.c.l.b16 %v528
    %v557 = vunpack.c.h.b16 %v528
    %v558 = vunpack.c.l.b16 %v529
    %v559 = vunpack.c.h.b16 %v529
    %v560 = vunpack.c.l.b16 %v530
    %v561 = vunpack.c.h.b16 %v530
    %v562 = vunpack.c.l.b16 %v531
    %v563 = vunpack.c.h.b16 %v531
    %v564 = vunpack.c.l.b16 %v532
    %v565 = vunpack.c.h.b16 %v532
    %v566 = vunpack.c.l.b16 %v533
    %v567 = vunpack.c.h.b16 %v533
    %v568 = vunpack.c.l.b16 %v534
    %v569 = vunpack.c.h.b16 %v534
    %v570 = vunpack.c.l.b16 %v535
    %v571 = vunpack.c.h.b16 %v535
    %v572 = vpack.c.b16 %v550, %v548
    %v573 = vpack.c.b16 %v551, %v549
    %v574 = vpack.c.b16 %v554, %v552
    %v575 = vpack.c.b16 %v555, %v553
    %v576 = vpack.c.b16 %v558, %v556
    %v577 = vpack.c.b16 %v559, %v557
    %v578 = vpack.c.b16 %v562, %v560
    %v579 = vpack.c.b16 %v563, %v561
    %v580 = vpack.c.b16 %v566, %v564
    %v581 = vpack.c.b16 %v567, %v565
    %v582 = vpack.c.b16 %v570, %v568
    %v583 = vpack.c.b16 %v571, %v569
    %v597 = vsel %vm310, %v519, 0
    %v600 = vsel %vm310, %v520, 0
    %v603 = vsel %vm310, %v521, 0
    %v606 = vsel %vm310, %v522, 0
    %608 = vmatpush.bf16.msra.mxu0 0
    %609 = vmatpush.bf16.msra.mxu0 0
    %610 = vmatpush.bf16.msra.mxu0 %v582
    %611 = vmatpush.bf16.msra.mxu0 %v580
    %612 = vmatpush.bf16.msra.mxu0 %v578
    %613 = vmatpush.bf16.msra.mxu0 %v576
    %614 = vmatpush.bf16.msra.mxu0 %v574
    %615 = vmatpush.bf16.msra.mxu0 %v572
    %616 = vmatmul.bf16.gmra.mxu0 %v597
    %v617 = vpop.f32.mrf.mxu0
    %v618 = vadd.f32 0.0, %v617
    %v619 = vpop.f32.mrf.mxu0
    %v620 = vadd.f32 0.0, %v619
    %621 = vmatmul.bf16.gmra.mxu0 %v600
    %v622 = vpop.f32.mrf.mxu0
    %v623 = vadd.f32 0.0, %v622
    %v624 = vpop.f32.mrf.mxu0
    %v625 = vadd.f32 0.0, %v624
    %626 = vmatmul.bf16.gmra.mxu0 %v603
    %v627 = vpop.f32.mrf.mxu0
    %v628 = vadd.f32 0.0, %v627
    %v629 = vpop.f32.mrf.mxu0
    %v630 = vadd.f32 0.0, %v629
    %631 = vmatmul.bf16.gmra.mxu0 %v606
    %v632 = vpop.f32.mrf.mxu0
    %v633 = vadd.f32 0.0, %v632
    %v634 = vpop.f32.mrf.mxu0
    %v635 = vadd.f32 0.0, %v634
    %636 = vdwg.mxu0
    %637 = vmatpush.bf16.msra.mxu0 0
    %638 = vmatpush.bf16.msra.mxu0 0
    %639 = vmatpush.bf16.msra.mxu0 %v583
    %640 = vmatpush.bf16.msra.mxu0 %v581
    %641 = vmatpush.bf16.msra.mxu0 %v579
    %642 = vmatpush.bf16.msra.mxu0 %v577
    %643 = vmatpush.bf16.msra.mxu0 %v575
    %644 = vmatpush.bf16.msra.mxu0 %v573
    %645 = vmatmul.bf16.gmra.mxu0 %v597
    %v646 = vpop.f32.mrf.mxu0
    %v647 = vadd.f32 0.0, %v646
    %v648 = vpop.f32.mrf.mxu0
    %v649 = vadd.f32 0.0, %v648
    %650 = vmatmul.bf16.gmra.mxu0 %v600
    %v651 = vpop.f32.mrf.mxu0
    %v652 = vadd.f32 0.0, %v651
    %v653 = vpop.f32.mrf.mxu0
    %v654 = vadd.f32 0.0, %v653
    %655 = vmatmul.bf16.gmra.mxu0 %v603
    %v656 = vpop.f32.mrf.mxu0
    %v657 = vadd.f32 0.0, %v656
    %v658 = vpop.f32.mrf.mxu0
    %v659 = vadd.f32 0.0, %v658
    %660 = vmatmul.bf16.gmra.mxu0 %v606
    %v661 = vpop.f32.mrf.mxu0
    %v662 = vadd.f32 0.0, %v661
    %v663 = vpop.f32.mrf.mxu0
    %v664 = vadd.f32 0.0, %v663
    %665 = vdwg.mxu0
    %v666 = vadd.f32 %v463, %v618
    %v667 = vadd.f32 %v492, %v647
    %v668 = vadd.f32 %v465, %v620
    %v669 = vadd.f32 %v494, %v649
    %v670 = vadd.f32 %v468, %v623
    %v671 = vadd.f32 %v497, %v652
    %v672 = vadd.f32 %v470, %v625
    %v673 = vadd.f32 %v499, %v654
    %v674 = vadd.f32 %v473, %v628
    %v675 = vadd.f32 %v502, %v657
    %v676 = vadd.f32 %v475, %v630
    %v677 = vadd.f32 %v504, %v659
    %v678 = vadd.f32 %v478, %v633
    %v679 = vadd.f32 %v507, %v662
    %v680 = vadd.f32 %v480, %v635
    %v681 = vadd.f32 %v509, %v664
    %v682 = vld [vmem:[%s5] ss:$4 sm:$0x3]
    %v684 = vperm.slane %v682, 0
    %v685 = vperm.slane %v682, 1
    %v688 = vadd.f32 %v666, %v684
    %v689 = vadd.f32 %v667, %v685
    %v690 = vadd.f32 %v668, %v684
    %v691 = vadd.f32 %v669, %v685
    %v692 = vadd.f32 %v670, %v684
    %v693 = vadd.f32 %v671, %v685
    %v694 = vadd.f32 %v672, %v684
    %v695 = vadd.f32 %v673, %v685
    %v696 = vadd.f32 %v674, %v684
    %v697 = vadd.f32 %v675, %v685
    %v698 = vadd.f32 %v676, %v684
    %v699 = vadd.f32 %v677, %v685
    %v700 = vadd.f32 %v678, %v684
    %v701 = vadd.f32 %v679, %v685
    %v702 = vadd.f32 %v680, %v684
    %v703 = vadd.f32 %v681, %v685
    %v704 = vadd.f32 %v688, %v690
    %v705 = vadd.f32 %v704, %v692
    %v706 = vadd.f32 %v705, %v694
    %v707 = vadd.f32 %v706, %v696
    %v708 = vadd.f32 %v707, %v698
    %v709 = vadd.f32 %v708, %v700
    %v710 = vadd.f32 %v709, %v702
    %v711 = vrot.slane %v710, 4
    %v712 = vadd.f32 %v710, %v711
    %v713 = vrot.slane %v712, 2
    %v714 = vadd.f32 %v712, %v713
    %v715 = vrot.slane %v714, 1
    %v716 = vadd.f32 %v714, %v715
    %v717 = vadd.f32 %v689, %v691
    %v718 = vadd.f32 %v717, %v693
    %v719 = vadd.f32 %v718, %v695
    %v720 = vadd.f32 %v719, %v697
    %v721 = vadd.f32 %v720, %v699
    %v722 = vadd.f32 %v721, %v701
    %v723 = vadd.f32 %v722, %v703
    %v724 = vrot.slane %v723, 4
    %v725 = vadd.f32 %v723, %v724
    %v726 = vrot.slane %v725, 2
    %v727 = vadd.f32 %v725, %v726
    %v728 = vrot.slane %v727, 1
    %v729 = vadd.f32 %v727, %v728
    %v730 = vmul.f32 %v688, %v688
    %v731 = vmul.f32 %v689, %v689
    %v732 = vmul.f32 %v690, %v690
    %v733 = vmul.f32 %v691, %v691
    %v734 = vmul.f32 %v692, %v692
    %v735 = vmul.f32 %v693, %v693
    %v736 = vmul.f32 %v694, %v694
    %v737 = vmul.f32 %v695, %v695
    %v738 = vmul.f32 %v696, %v696
    %v739 = vmul.f32 %v697, %v697
    %v740 = vmul.f32 %v698, %v698
    %v741 = vmul.f32 %v699, %v699
    %v742 = vmul.f32 %v700, %v700
    %v743 = vmul.f32 %v701, %v701
    %v744 = vmul.f32 %v702, %v702
    %v745 = vmul.f32 %v703, %v703
    %v746 = vadd.f32 %v730, %v732
    %v747 = vadd.f32 %v746, %v734
    %v748 = vadd.f32 %v747, %v736
    %v749 = vadd.f32 %v748, %v738
    %v750 = vadd.f32 %v749, %v740
    %v751 = vadd.f32 %v750, %v742
    %v752 = vadd.f32 %v751, %v744
    %v753 = vrot.slane %v752, 4
    %v754 = vadd.f32 %v752, %v753
    %v755 = vrot.slane %v754, 2
    %v756 = vadd.f32 %v754, %v755
    %v757 = vrot.slane %v756, 1
    %v758 = vadd.f32 %v756, %v757
    %v759 = vadd.f32 %v731, %v733
    %v760 = vadd.f32 %v759, %v735
    %v761 = vadd.f32 %v760, %v737
    %v762 = vadd.f32 %v761, %v739
    %v763 = vadd.f32 %v762, %v741
    %v764 = vadd.f32 %v763, %v743
    %v765 = vadd.f32 %v764, %v745
    %v766 = vrot.slane %v765, 4
    %v767 = vadd.f32 %v765, %v766
    %v768 = vrot.slane %v767, 2
    %v769 = vadd.f32 %v767, %v768
    %v770 = vrot.slane %v769, 1
    %v771 = vadd.f32 %v769, %v770
    %v772 = vld [vmem:[#allocation13] sm:$0xff]
    %v773 = vld [vmem:[#allocation13 + $0x8] sm:$0xff]
    %v774 = vld [vmem:[#allocation13 + $0x10] sm:$0xff]
    %v775 = vld [vmem:[#allocation13 + $0x18] sm:$0xff]
    %v776 = vld [vmem:[#allocation13 + $0x20] sm:$0xff]
    %v777 = vld [vmem:[#allocation13 + $0x28] sm:$0xff]
    %v778 = vld [vmem:[#allocation13 + $0x30] sm:$0xff]
    %v779 = vld [vmem:[#allocation13 + $0x38] sm:$0xff]
    %v780 = vld [vmem:[#allocation13 + $0x40] sm:$0xff]
    %v781 = vld [vmem:[#allocation13 + $0x48] sm:$0xff]
    %v782 = vld [vmem:[#allocation13 + $0x50] sm:$0xff]
    %v783 = vld [vmem:[#allocation13 + $0x58] sm:$0xff]
    %v784 = vld [vmem:[#allocation13 + $0x60] sm:$0xff]
    %v785 = vld [vmem:[#allocation13 + $0x68] sm:$0xff]
    %v786 = vld [vmem:[#allocation13 + $0x70] sm:$0xff]
    %v787 = vld [vmem:[#allocation13 + $0x78] sm:$0xff]
    %v788 = vld [vmem:[#allocation13 + $0x80] sm:$0xff]
    %v789 = vld [vmem:[#allocation13 + $0x88] sm:$0xff]
    %v790 = vld [vmem:[#allocation13 + $0x90] sm:$0xff]
    %v791 = vld [vmem:[#allocation13 + $0x98] sm:$0xff]
    %v792 = vld [vmem:[#allocation13 + $0xa0] sm:$0xff]
    %v793 = vld [vmem:[#allocation13 + $0xa8] sm:$0xff]
    %v794 = vld [vmem:[#allocation13 + $0xb0] sm:$0xff]
    %v795 = vld [vmem:[#allocation13 + $0xb8] sm:$0xff]
    %v796 = vld [vmem:[#allocation13 + $0xc0] sm:$0xff]
    %v797 = vld [vmem:[#allocation13 + $0xc8] sm:$0xff]
    %v798 = vld [vmem:[#allocation13 + $0xd0] sm:$0xff]
    %v799 = vld [vmem:[#allocation13 + $0xd8] sm:$0xff]
    %v800 = vld [vmem:[#allocation13 + $0xe0] sm:$0xff]
    %v801 = vld [vmem:[#allocation13 + $0xe8] sm:$0xff]
    %v802 = vld [vmem:[#allocation13 + $0xf0] sm:$0xff]
    %v803 = vld [vmem:[#allocation13 + $0xf8] sm:$0xff]
    %v804 = vld [vmem:[#allocation13 + $0x100] sm:$0xff]
    %v805 = vld [vmem:[#allocation13 + $0x108] sm:$0xff]
    %v806 = vld [vmem:[#allocation13 + $0x110] sm:$0xff]
    %v807 = vld [vmem:[#allocation13 + $0x118] sm:$0xff]
    %v808 = vld [vmem:[#allocation13 + $0x120] sm:$0xff]
    %v809 = vld [vmem:[#allocation13 + $0x128] sm:$0xff]
    %v810 = vld [vmem:[#allocation13 + $0x130] sm:$0xff]
    %v811 = vld [vmem:[#allocation13 + $0x138] sm:$0xff]
    %v812 = vld [vmem:[#allocation13 + $0x140] sm:$0xff]
    %v813 = vld [vmem:[#allocation13 + $0x148] sm:$0xff]
    %v814 = vld [vmem:[#allocation13 + $0x150] sm:$0xff]
    %v815 = vld [vmem:[#allocation13 + $0x158] sm:$0xff]
    %v816 = vld [vmem:[#allocation13 + $0x160] sm:$0xff]
    %v817 = vld [vmem:[#allocation13 + $0x168] sm:$0xff]
    %v818 = vld [vmem:[#allocation13 + $0x170] sm:$0xff]
    %v819 = vld [vmem:[#allocation13 + $0x178] sm:$0xff]
    %v820 = vld [vmem:[#allocation13 + $0x180] sm:$0xff]
    %v821 = vld [vmem:[#allocation13 + $0x188] sm:$0xff]
    %v822 = vld [vmem:[#allocation13 + $0x190] sm:$0xff]
    %v823 = vld [vmem:[#allocation13 + $0x198] sm:$0xff]
    %v824 = vld [vmem:[#allocation13 + $0x1a0] sm:$0xff]
    %v825 = vld [vmem:[#allocation13 + $0x1a8] sm:$0xff]
    %v826 = vld [vmem:[#allocation13 + $0x1b0] sm:$0xff]
    %v827 = vld [vmem:[#allocation13 + $0x1b8] sm:$0xff]
    %v828 = vld [vmem:[#allocation13 + $0x1c0] sm:$0xff]
    %v829 = vld [vmem:[#allocation13 + $0x1c8] sm:$0xff]
    %v830 = vld [vmem:[#allocation13 + $0x1d0] sm:$0xff]
    %v831 = vld [vmem:[#allocation13 + $0x1d8] sm:$0xff]
    %v832 = vld [vmem:[#allocation13 + $0x1e0] sm:$0xff]
    %v833 = vld [vmem:[#allocation13 + $0x1e8] sm:$0xff]
    %v834 = vld [vmem:[#allocation13 + $0x1f0] sm:$0xff]
    %v835 = vld [vmem:[#allocation13 + $0x1f8] sm:$0xff]
    %836 = vmatpush.msra.mxu0 %v802
    %837 = vmatpush.msra.mxu0 %v800
    %838 = vmatpush.msra.mxu0 %v798
    %839 = vmatpush.msra.mxu0 %v796
    %840 = vmatpush.msra.mxu0 %v794
    %841 = vmatpush.msra.mxu0 %v792
    %842 = vmatpush.msra.mxu0 %v790
    %843 = vmatpush.msra.mxu0 %v788
    %844 = vmatpush.msra.mxu0 %v786
    %845 = vmatpush.msra.mxu0 %v784
    %846 = vmatpush.msra.mxu0 %v782
    %847 = vmatpush.msra.mxu0 %v780
    %848 = vmatpush.msra.mxu0 %v778
    %849 = vmatpush.msra.mxu0 %v776
    %850 = vmatpush.msra.mxu0 %v774
    %851 = vmatpush.msra.mxu0 %v772
    %852 = vmatmul.f32.gmra.mxu0 %v716
    %v853 = vpop.f32.mrf.mxu0
    %v854 = vadd.f32 0.0, %v853
    %855 = vdwg.mxu0
    %856 = vmatpush.msra.mxu0 %v834
    %857 = vmatpush.msra.mxu0 %v832
    %858 = vmatpush.msra.mxu0 %v830
    %859 = vmatpush.msra.mxu0 %v828
    %860 = vmatpush.msra.mxu0 %v826
    %861 = vmatpush.msra.mxu0 %v824
    %862 = vmatpush.msra.mxu0 %v822
    %863 = vmatpush.msra.mxu0 %v820
    %864 = vmatpush.msra.mxu0 %v818
    %865 = vmatpush.msra.mxu0 %v816
    %866 = vmatpush.msra.mxu0 %v814
    %867 = vmatpush.msra.mxu0 %v812
    %868 = vmatpush.msra.mxu0 %v810
    %869 = vmatpush.msra.mxu0 %v808
    %870 = vmatpush.msra.mxu0 %v806
    %871 = vmatpush.msra.mxu0 %v804
    %872 = vmatmul.f32.gmra.mxu0 %v729
    %v873 = vpop.f32.mrf.mxu0
    %v874 = vadd.f32 %v854, %v873
    %875 = vdwg.mxu0
    %876 = vmatpush.msra.mxu0 %v803
    %877 = vmatpush.msra.mxu0 %v801
    %878 = vmatpush.msra.mxu0 %v799
    %879 = vmatpush.msra.mxu0 %v797
    %880 = vmatpush.msra.mxu0 %v795
    %881 = vmatpush.msra.mxu0 %v793
    %882 = vmatpush.msra.mxu0 %v791
    %883 = vmatpush.msra.mxu0 %v789
    %884 = vmatpush.msra.mxu0 %v787
    %885 = vmatpush.msra.mxu0 %v785
    %886 = vmatpush.msra.mxu0 %v783
    %887 = vmatpush.msra.mxu0 %v781
    %888 = vmatpush.msra.mxu0 %v779
    %889 = vmatpush.msra.mxu0 %v777
    %890 = vmatpush.msra.mxu0 %v775
    %891 = vmatpush.msra.mxu0 %v773
    %892 = vmatmul.f32.gmra.mxu0 %v716
    %v893 = vpop.f32.mrf.mxu0
    %v894 = vadd.f32 0.0, %v893
    %895 = vdwg.mxu0
    %896 = vmatpush.msra.mxu0 %v835
    %897 = vmatpush.msra.mxu0 %v833
    %898 = vmatpush.msra.mxu0 %v831
    %899 = vmatpush.msra.mxu0 %v829
    %900 = vmatpush.msra.mxu0 %v827
    %901 = vmatpush.msra.mxu0 %v825
    %902 = vmatpush.msra.mxu0 %v823
    %903 = vmatpush.msra.mxu0 %v821
    %904 = vmatpush.msra.mxu0 %v819
    %905 = vmatpush.msra.mxu0 %v817
    %906 = vmatpush.msra.mxu0 %v815
    %907 = vmatpush.msra.mxu0 %v813
    %908 = vmatpush.msra.mxu0 %v811
    %909 = vmatpush.msra.mxu0 %v809
    %910 = vmatpush.msra.mxu0 %v807
    %911 = vmatpush.msra.mxu0 %v805
    %912 = vmatmul.f32.gmra.mxu0 %v729
    %v913 = vpop.f32.mrf.mxu0
    %v914 = vadd.f32 %v894, %v913
    %915 = vdwg.mxu0
    %v916 = vmul.f32 %v874, 0.00048828125
    %v917 = vmul.f32 %v914, 0.00048828125
    %918 = vmatpush.msra.mxu0 %v802
    %919 = vmatpush.msra.mxu0 %v800
    %920 = vmatpush.msra.mxu0 %v798
    %921 = vmatpush.msra.mxu0 %v796
    %922 = vmatpush.msra.mxu0 %v794
    %923 = vmatpush.msra.mxu0 %v792
    %924 = vmatpush.msra.mxu0 %v790
    %925 = vmatpush.msra.mxu0 %v788
    %926 = vmatpush.msra.mxu0 %v786
    %927 = vmatpush.msra.mxu0 %v784
    %928 = vmatpush.msra.mxu0 %v782
    %929 = vmatpush.msra.mxu0 %v780
    %930 = vmatpush.msra.mxu0 %v778
    %931 = vmatpush.msra.mxu0 %v776
    %932 = vmatpush.msra.mxu0 %v774
    %933 = vmatpush.msra.mxu0 %v772
    %934 = vmatmul.f32.gmra.mxu0 %v758
    %v935 = vpop.f32.mrf.mxu0
    %v936 = vadd.f32 0.0, %v935
    %937 = vdwg.mxu0
    %938 = vmatpush.msra.mxu0 %v834
    %939 = vmatpush.msra.mxu0 %v832
    %940 = vmatpush.msra.mxu0 %v830
    %941 = vmatpush.msra.mxu0 %v828
    %942 = vmatpush.msra.mxu0 %v826
    %943 = vmatpush.msra.mxu0 %v824
    %944 = vmatpush.msra.mxu0 %v822
    %945 = vmatpush.msra.mxu0 %v820
    %946 = vmatpush.msra.mxu0 %v818
    %947 = vmatpush.msra.mxu0 %v816
    %948 = vmatpush.msra.mxu0 %v814
    %949 = vmatpush.msra.mxu0 %v812
    %950 = vmatpush.msra.mxu0 %v810
    %951 = vmatpush.msra.mxu0 %v808
    %952 = vmatpush.msra.mxu0 %v806
    %953 = vmatpush.msra.mxu0 %v804
    %954 = vmatmul.f32.gmra.mxu0 %v771
    %v955 = vpop.f32.mrf.mxu0
    %v956 = vadd.f32 %v936, %v955
    %957 = vdwg.mxu0
    %958 = vmatpush.msra.mxu0 %v803
    %959 = vmatpush.msra.mxu0 %v801
    %960 = vmatpush.msra.mxu0 %v799
    %961 = vmatpush.msra.mxu0 %v797
    %962 = vmatpush.msra.mxu0 %v795
    %963 = vmatpush.msra.mxu0 %v793
    %964 = vmatpush.msra.mxu0 %v791
    %965 = vmatpush.msra.mxu0 %v789
    %966 = vmatpush.msra.mxu0 %v787
    %967 = vmatpush.msra.mxu0 %v785
    %968 = vmatpush.msra.mxu0 %v783
    %969 = vmatpush.msra.mxu0 %v781
    %970 = vmatpush.msra.mxu0 %v779
    %971 = vmatpush.msra.mxu0 %v777
    %972 = vmatpush.msra.mxu0 %v775
    %973 = vmatpush.msra.mxu0 %v773
    %974 = vmatmul.f32.gmra.mxu0 %v758
    %v975 = vpop.f32.mrf.mxu0
    %v976 = vadd.f32 0.0, %v975
    %977 = vdwg.mxu0
    %978 = vmatpush.msra.mxu0 %v835
    %979 = vmatpush.msra.mxu0 %v833
    %980 = vmatpush.msra.mxu0 %v831
    %981 = vmatpush.msra.mxu0 %v829
    %982 = vmatpush.msra.mxu0 %v827
    %983 = vmatpush.msra.mxu0 %v825
    %984 = vmatpush.msra.mxu0 %v823
    %985 = vmatpush.msra.mxu0 %v821
    %986 = vmatpush.msra.mxu0 %v819
    %987 = vmatpush.msra.mxu0 %v817
    %988 = vmatpush.msra.mxu0 %v815
    %989 = vmatpush.msra.mxu0 %v813
    %990 = vmatpush.msra.mxu0 %v811
    %991 = vmatpush.msra.mxu0 %v809
    %992 = vmatpush.msra.mxu0 %v807
    %993 = vmatpush.msra.mxu0 %v805
    %994 = vmatmul.f32.gmra.mxu0 %v771
    %v995 = vpop.f32.mrf.mxu0
    %v996 = vadd.f32 %v976, %v995
    %997 = vdwg.mxu0
    %v998 = vmul.f32 %v956, 0.00048828125
    %v999 = vmul.f32 %v996, 0.00048828125
    %v1000 = vmul.f32 %v916, %v916
    %v1001 = vmul.f32 %v917, %v917
    %v1002 = vsub.f32 %v998, %v1000
    %v1003 = vsub.f32 %v999, %v1001
    %v1004 = vadd.f32 %v1002, 1e-05
    %v1005 = vadd.f32 %v1003, 1e-05
    %v1006 = vrsqrt.pop %v1004
    %v1007 = vmul.f32 %v1006, %v1004
    %v1008 = vmul.f32 %v1007, %v1006
    %v1009 = vmul.f32 0.5, %v1008
    %v1010 = vsub.f32 1.5, %v1009
    %v1011 = vmul.f32 %v1006, %v1010
    %vm1012 = vweird.f32 %v1004
    %vm1013 = vweird.f32 %v1006
    %vm1014 = vmor %vm1012, %vm1013
    %v1015 = vsel %vm1014, %v1006, %v1011
    %v1016 = vrsqrt.pop %v1005
    %v1017 = vmul.f32 %v1016, %v1005
    %v1018 = vmul.f32 %v1017, %v1016
    %v1019 = vmul.f32 0.5, %v1018
    %v1020 = vsub.f32 1.5, %v1019
    %v1021 = vmul.f32 %v1016, %v1020
    %vm1022 = vweird.f32 %v1005
    %vm1023 = vweird.f32 %v1016
    %vm1024 = vmor %vm1022, %vm1023
    %v1025 = vsel %vm1024, %v1016, %v1021
    %v1026 = vld [vmem:[%s6] ss:$4 sm:$0x3]
    %v1029 = vrot.slane %v1025, 7
    %vm1030 = vcmask 1040384
    %v1031 = vsel %vm1030, %v1015, %v1029
    %v1033 = vmul.f32 %v1026, %v1031
    %v1034 = vld [vmem:[%s7] ss:$4 sm:$0x3]
    %v1036 = vperm.slane %v1033, 0
    %v1037 = vperm.slane %v1033, 1
    %v1040 = vmul.f32 %v916, %v1036
    %v1041 = vmul.f32 %v917, %v1037
    %v1044 = vrot.slane %v1041, 7
    %v1045 = vsel %vm1030, %v1040, %v1044
    %v1047 = vsub.f32 %v1034, %v1045
    %v1048 = vmul.f32 %v688, %v1036
    %v1049 = vmul.f32 %v689, %v1037
    %v1050 = vmul.f32 %v690, %v1036
    %v1051 = vmul.f32 %v691, %v1037
    %v1052 = vmul.f32 %v692, %v1036
    %v1053 = vmul.f32 %v693, %v1037
    %v1054 = vmul.f32 %v694, %v1036
    %v1055 = vmul.f32 %v695, %v1037
    %v1056 = vmul.f32 %v696, %v1036
    %v1057 = vmul.f32 %v697, %v1037
    %v1058 = vmul.f32 %v698, %v1036
    %v1059 = vmul.f32 %v699, %v1037
    %v1060 = vmul.f32 %v700, %v1036
    %v1061 = vmul.f32 %v701, %v1037
    %v1062 = vmul.f32 %v702, %v1036
    %v1063 = vmul.f32 %v703, %v1037
    %v1065 = vperm.slane %v1047, 0
    %v1066 = vperm.slane %v1047, 1
    %v1069 = vadd.f32 %v1048, %v1065
    %v1070 = vadd.f32 %v1049, %v1066
    %v1071 = vadd.f32 %v1050, %v1065
    %v1072 = vadd.f32 %v1051, %v1066
    %v1073 = vadd.f32 %v1052, %v1065
    %v1074 = vadd.f32 %v1053, %v1066
    %v1075 = vadd.f32 %v1054, %v1065
    %v1076 = vadd.f32 %v1055, %v1066
    %v1077 = vadd.f32 %v1056, %v1065
    %v1078 = vadd.f32 %v1057, %v1066
    %v1079 = vadd.f32 %v1058, %v1065
    %v1080 = vadd.f32 %v1059, %v1066
    %v1081 = vadd.f32 %v1060, %v1065
    %v1082 = vadd.f32 %v1061, %v1066
    %v1083 = vadd.f32 %v1062, %v1065
    %v1084 = vadd.f32 %v1063, %v1066
    %v1085 = vmax.f32 %v1069, 0.0
    %v1086 = vmax.f32 %v1070, 0.0
    %v1087 = vmax.f32 %v1071, 0.0
    %v1088 = vmax.f32 %v1072, 0.0
    %v1089 = vmax.f32 %v1073, 0.0
    %v1090 = vmax.f32 %v1074, 0.0
    %v1091 = vmax.f32 %v1075, 0.0
    %v1092 = vmax.f32 %v1076, 0.0
    %v1093 = vmax.f32 %v1077, 0.0
    %v1094 = vmax.f32 %v1078, 0.0
    %v1095 = vmax.f32 %v1079, 0.0
    %v1096 = vmax.f32 %v1080, 0.0
    %v1097 = vmax.f32 %v1081, 0.0
    %v1098 = vmax.f32 %v1082, 0.0
    %v1099 = vmax.f32 %v1083, 0.0
    %v1100 = vmax.f32 %v1084, 0.0
    %v1101 = vlaneseq
    %vm1102 = vcmp.ge.s32.totalorder %v1101, 0
    %vm1103 = vcmp.lt.s32.totalorder %v1101, 256
    %vm1104 = vmand %vm1102, %vm1103
    %1105 = vst.msk [vmem:[#allocation2] ss:$8 sm:$0x3] %vm1104, 0.0
    %1106 = vst.msk [vmem:[#allocation2] ss:$8 sm:$0x0] %vm1104, 0.0
    %s1107 = scalar_lea.vmem [#allocation2], 80
    %1108 = vst.msk [vmem:[%s1107] ss:$8 sm:$0x3] %vm1104, 0.0
    %1109 = vst.msk [vmem:[%s1107] ss:$8 sm:$0x0] %vm1104, 0.0
    %s1110 = scalar_lea.vmem [#allocation2], 65
    %1111 = vst.msk [vmem:[%s1110] ss:$8 sm:$0x3] %vm1104, 0.0
    %1112 = vst.msk [vmem:[%s1110] ss:$8 sm:$0x0] %vm1104, 0.0
    %s1113 = scalar_lea.vmem [#allocation2], 145
    %1114 = vst.msk [vmem:[%s1113] ss:$8 sm:$0x3] %vm1104, 0.0
    %1115 = vst.msk [vmem:[%s1113] ss:$8 sm:$0x0] %vm1104, 0.0
    %v1132 = vrot.slane %v1085, 7
    %v1133 = vrot.slane %v1086, 7
    %v1134 = vrot.slane %v1087, 7
    %v1135 = vsel %vm1030, %v1132, %v1134
    %v1136 = vrot.slane %v1088, 7
    %v1137 = vsel %vm1030, %v1133, %v1136
    %v1138 = vrot.slane %v1089, 7
    %v1139 = vsel %vm1030, %v1134, %v1138
    %v1140 = vrot.slane %v1090, 7
    %v1141 = vsel %vm1030, %v1136, %v1140
    %v1142 = vrot.slane %v1091, 7
    %v1143 = vsel %vm1030, %v1138, %v1142
    %v1144 = vrot.slane %v1092, 7
    %v1145 = vsel %vm1030, %v1140, %v1144
    %v1146 = vrot.slane %v1093, 7
    %v1147 = vrot.slane %v1094, 7
    %v1148 = vrot.slane %v1095, 7
    %v1149 = vsel %vm1030, %v1146, %v1148
    %v1150 = vrot.slane %v1096, 7
    %v1151 = vsel %vm1030, %v1147, %v1150
    %v1152 = vrot.slane %v1097, 7
    %v1153 = vsel %vm1030, %v1148, %v1152
    %v1154 = vrot.slane %v1098, 7
    %v1155 = vsel %vm1030, %v1150, %v1154
    %v1156 = vrot.slane %v1099, 7
    %v1157 = vsel %vm1030, %v1152, %v1156
    %v1158 = vrot.slane %v1100, 7
    %v1159 = vsel %vm1030, %v1154, %v1158
    %1180 = vst [vmem:[#allocation2] sm:$0xfe] %v1132
    %1181 = vst [vmem:[#allocation2 + $0x8] sm:$0xfe] %v1133
    %1182 = vst [vmem:[#allocation2 + $0x10] sm:$0xff] %v1135
    %1183 = vst [vmem:[#allocation2 + $0x18] sm:$0xff] %v1137
    %1184 = vst [vmem:[#allocation2 + $0x20] sm:$0xff] %v1139
    %1185 = vst [vmem:[#allocation2 + $0x28] sm:$0xff] %v1141
    %1186 = vst [vmem:[#allocation2 + $0x30] sm:$0xff] %v1143
    %1187 = vst [vmem:[#allocation2 + $0x38] sm:$0xff] %v1145
    %1188 = vst [vmem:[#allocation2 + $0x40] sm:$0x1] %v1142
    %1189 = vst [vmem:[#allocation2 + $0x48] sm:$0x1] %v1144
    %1190 = vst [vmem:[#allocation2 + $0x50] sm:$0xfe] %v1146
    %1191 = vst [vmem:[#allocation2 + $0x58] sm:$0xfe] %v1147
    %1192 = vst [vmem:[#allocation2 + $0x60] sm:$0xff] %v1149
    %1193 = vst [vmem:[#allocation2 + $0x68] sm:$0xff] %v1151
    %1194 = vst [vmem:[#allocation2 + $0x70] sm:$0xff] %v1153
    %1195 = vst [vmem:[#allocation2 + $0x78] sm:$0xff] %v1155
    %1196 = vst [vmem:[#allocation2 + $0x80] sm:$0xff] %v1157
    %1197 = vst [vmem:[#allocation2 + $0x88] sm:$0xff] %v1159
    %1198 = vst [vmem:[#allocation2 + $0x90] sm:$0x1] %v1156
    %1199 = vst [vmem:[#allocation2 + $0x98] sm:$0x1] %v1158
    %v1200 = vld [vmem:[#allocation2] sm:$0xff]
    %v1201 = vld [vmem:[#allocation2 + $0x8] sm:$0xff]
    %v1202 = vld [vmem:[#allocation2 + $0x10] sm:$0xff]
    %v1203 = vld [vmem:[#allocation2 + $0x18] sm:$0xff]
    %v1204 = vld [vmem:[#allocation2 + $0x20] sm:$0xff]
    %v1205 = vld [vmem:[#allocation2 + $0x28] sm:$0xff]
    %v1206 = vld [vmem:[#allocation2 + $0x30] sm:$0xff]
    %v1207 = vld [vmem:[#allocation2 + $0x38] sm:$0xff]
    %v1208 = vld [vmem:[#allocation2 + $0x50] sm:$0xff]
    %v1209 = vld [vmem:[#allocation2 + $0x58] sm:$0xff]
    %v1210 = vld [vmem:[#allocation2 + $0x60] sm:$0xff]
    %v1211 = vld [vmem:[#allocation2 + $0x68] sm:$0xff]
    %v1212 = vld [vmem:[#allocation2 + $0x70] sm:$0xff]
    %v1213 = vld [vmem:[#allocation2 + $0x78] sm:$0xff]
    %v1214 = vld [vmem:[#allocation2 + $0x80] sm:$0xff]
    %v1215 = vld [vmem:[#allocation2 + $0x88] sm:$0xff]
    %v1216 = vpack.c.bf16 %v1202, %v1200
    %v1217 = vpack.c.bf16 %v1203, %v1201
    %v1218 = vpack.c.bf16 %v1206, %v1204
    %v1219 = vpack.c.bf16 %v1207, %v1205
    %v1220 = vpack.c.bf16 %v1210, %v1208
    %v1221 = vpack.c.bf16 %v1211, %v1209
    %v1222 = vpack.c.bf16 %v1214, %v1212
    %v1223 = vpack.c.bf16 %v1215, %v1213
    %v1224 = vld [vmem:[#allocation8] sm:$0xff]
    %v1225 = vld [vmem:[#allocation8 + $0x8] sm:$0xff]
    %v1226 = vld [vmem:[#allocation8 + $0x10] sm:$0xff]
    %v1227 = vld [vmem:[#allocation8 + $0x18] sm:$0xff]
    %v1228 = vld [vmem:[#allocation8 + $0x20] sm:$0xff]
    %v1229 = vld [vmem:[#allocation8 + $0x28] sm:$0xff]
    %v1230 = vld [vmem:[#allocation8 + $0x30] sm:$0xff]
    %v1231 = vld [vmem:[#allocation8 + $0x38] sm:$0xff]
    %v1232 = vld [vmem:[#allocation8 + $0x40] sm:$0xff]
    %v1233 = vld [vmem:[#allocation8 + $0x48] sm:$0xff]
    %v1234 = vld [vmem:[#allocation8 + $0x50] sm:$0xff]
    %v1235 = vld [vmem:[#allocation8 + $0x58] sm:$0xff]
    %v1236 = vld [vmem:[#allocation8 + $0x60] sm:$0xff]
    %v1237 = vld [vmem:[#allocation8 + $0x68] sm:$0xff]
    %v1238 = vld [vmem:[#allocation8 + $0x70] sm:$0xff]
    %v1239 = vld [vmem:[#allocation8 + $0x78] sm:$0xff]
    %v1240 = vld [vmem:[#allocation8 + $0x80] sm:$0xff]
    %v1241 = vld [vmem:[#allocation8 + $0x88] sm:$0xff]
    %v1242 = vld [vmem:[#allocation8 + $0x90] sm:$0xff]
    %v1243 = vld [vmem:[#allocation8 + $0x98] sm:$0xff]
    %v1244 = vld [vmem:[#allocation8 + $0xa0] sm:$0xff]
    %v1245 = vld [vmem:[#allocation8 + $0xa8] sm:$0xff]
    %v1246 = vld [vmem:[#allocation8 + $0xb0] sm:$0xff]
    %v1247 = vld [vmem:[#allocation8 + $0xb8] sm:$0xff]
    %v1248 = vld [vmem:[#allocation8 + $0xc0] sm:$0xff]
    %v1249 = vld [vmem:[#allocation8 + $0xc8] sm:$0xff]
    %v1250 = vld [vmem:[#allocation8 + $0xd0] sm:$0xff]
    %v1251 = vld [vmem:[#allocation8 + $0xd8] sm:$0xff]
    %v1252 = vld [vmem:[#allocation8 + $0xe0] sm:$0xff]
    %v1253 = vld [vmem:[#allocation8 + $0xe8] sm:$0xff]
    %v1254 = vld [vmem:[#allocation8 + $0xf0] sm:$0xff]
    %v1255 = vld [vmem:[#allocation8 + $0xf8] sm:$0xff]
    %v1256 = vld [vmem:[#allocation2] sm:$0xfe]
    %v1257 = vld [vmem:[#allocation2 + $0x8] sm:$0xfe]
    %v1258 = vld [vmem:[#allocation2 + $0x40] sm:$0x1]
    %v1259 = vld [vmem:[#allocation2 + $0x48] sm:$0x1]
    %v1260 = vld [vmem:[#allocation2 + $0x50] sm:$0xfe]
    %v1261 = vld [vmem:[#allocation2 + $0x58] sm:$0xfe]
    %v1262 = vld [vmem:[#allocation2 + $0x90] sm:$0x1]
    %v1263 = vld [vmem:[#allocation2 + $0x98] sm:$0x1]
    %vm1284 = vcmask 1046528
    %v1285 = vrot.slane %v1256, 1
    %v1286 = vrot.slane %v1202, 1
    %v1287 = vsel %vm1284, %v1285, %v1286
    %v1288 = vrot.slane %v1257, 1
    %v1289 = vrot.slane %v1203, 1
    %v1290 = vsel %vm1284, %v1288, %v1289
    %v1291 = vrot.slane %v1204, 1
    %v1292 = vsel %vm1284, %v1286, %v1291
    %v1293 = vrot.slane %v1205, 1
    %v1294 = vsel %vm1284, %v1289, %v1293
    %v1295 = vrot.slane %v1206, 1
    %v1296 = vsel %vm1284, %v1291, %v1295
    %v1297 = vrot.slane %v1207, 1
    %v1298 = vsel %vm1284, %v1293, %v1297
    %v1299 = vrot.slane %v1258, 1
    %v1300 = vsel %vm1284, %v1295, %v1299
    %v1301 = vrot.slane %v1259, 1
    %v1302 = vsel %vm1284, %v1297, %v1301
    %v1303 = vrot.slane %v1260, 1
    %v1304 = vrot.slane %v1210, 1
    %v1305 = vsel %vm1284, %v1303, %v1304
    %v1306 = vrot.slane %v1261, 1
    %v1307 = vrot.slane %v1211, 1
    %v1308 = vsel %vm1284, %v1306, %v1307
    %v1309 = vrot.slane %v1212, 1
    %v1310 = vsel %vm1284, %v1304, %v1309
    %v1311 = vrot.slane %v1213, 1
    %v1312 = vsel %vm1284, %v1307, %v1311
    %v1313 = vrot.slane %v1214, 1
    %v1314 = vsel %vm1284, %v1309, %v1313
    %v1315 = vrot.slane %v1215, 1
    %v1316 = vsel %vm1284, %v1311, %v1315
    %v1317 = vrot.slane %v1262, 1
    %v1318 = vsel %vm1284, %v1313, %v1317
    %v1319 = vrot.slane %v1263, 1
    %v1320 = vsel %vm1284, %v1315, %v1319
    %v1337 = vpack.c.bf16 %v1292, %v1287
    %v1338 = vpack.c.bf16 %v1294, %v1290
    %v1339 = vpack.c.bf16 %v1300, %v1296
    %v1340 = vpack.c.bf16 %v1302, %v1298
    %v1341 = vpack.c.bf16 %v1310, %v1305
    %v1342 = vpack.c.bf16 %v1312, %v1308
    %v1343 = vpack.c.bf16 %v1318, %v1314
    %v1344 = vpack.c.bf16 %v1320, %v1316
    %s1345 = scalar_lea.vmem [#allocation8], 256
    %v1346 = vld [vmem:[%s1345] sm:$0xff]
    %v1347 = vld [vmem:[%s1345 + $0x8] sm:$0xff]
    %v1348 = vld [vmem:[%s1345 + $0x10] sm:$0xff]
    %v1349 = vld [vmem:[%s1345 + $0x18] sm:$0xff]
    %v1350 = vld [vmem:[%s1345 + $0x20] sm:$0xff]
    %v1351 = vld [vmem:[%s1345 + $0x28] sm:$0xff]
    %v1352 = vld [vmem:[%s1345 + $0x30] sm:$0xff]
    %v1353 = vld [vmem:[%s1345 + $0x38] sm:$0xff]
    %v1354 = vld [vmem:[%s1345 + $0x40] sm:$0xff]
    %v1355 = vld [vmem:[%s1345 + $0x48] sm:$0xff]
    %v1356 = vld [vmem:[%s1345 + $0x50] sm:$0xff]
    %v1357 = vld [vmem:[%s1345 + $0x58] sm:$0xff]
    %v1358 = vld [vmem:[%s1345 + $0x60] sm:$0xff]
    %v1359 = vld [vmem:[%s1345 + $0x68] sm:$0xff]
    %v1360 = vld [vmem:[%s1345 + $0x70] sm:$0xff]
    %v1361 = vld [vmem:[%s1345 + $0x78] sm:$0xff]
    %v1362 = vld [vmem:[%s1345 + $0x80] sm:$0xff]
    %v1363 = vld [vmem:[%s1345 + $0x88] sm:$0xff]
    %v1364 = vld [vmem:[%s1345 + $0x90] sm:$0xff]
    %v1365 = vld [vmem:[%s1345 + $0x98] sm:$0xff]
    %v1366 = vld [vmem:[%s1345 + $0xa0] sm:$0xff]
    %v1367 = vld [vmem:[%s1345 + $0xa8] sm:$0xff]
    %v1368 = vld [vmem:[%s1345 + $0xb0] sm:$0xff]
    %v1369 = vld [vmem:[%s1345 + $0xb8] sm:$0xff]
    %v1370 = vld [vmem:[%s1345 + $0xc0] sm:$0xff]
    %v1371 = vld [vmem:[%s1345 + $0xc8] sm:$0xff]
    %v1372 = vld [vmem:[%s1345 + $0xd0] sm:$0xff]
    %v1373 = vld [vmem:[%s1345 + $0xd8] sm:$0xff]
    %v1374 = vld [vmem:[%s1345 + $0xe0] sm:$0xff]
    %v1375 = vld [vmem:[%s1345 + $0xe8] sm:$0xff]
    %v1376 = vld [vmem:[%s1345 + $0xf0] sm:$0xff]
    %v1377 = vld [vmem:[%s1345 + $0xf8] sm:$0xff]
    %v1410 = vunpack.c.l.b16 %v1346
    %v1411 = vunpack.c.h.b16 %v1346
    %v1412 = vunpack.c.l.b16 %v1347
    %v1413 = vunpack.c.h.b16 %v1347
    %v1414 = vunpack.c.l.b16 %v1348
    %v1415 = vunpack.c.h.b16 %v1348
    %v1416 = vunpack.c.l.b16 %v1349
    %v1417 = vunpack.c.h.b16 %v1349
    %v1418 = vunpack.c.l.b16 %v1350
    %v1419 = vunpack.c.h.b16 %v1350
    %v1420 = vunpack.c.l.b16 %v1351
    %v1421 = vunpack.c.h.b16 %v1351
    %v1422 = vunpack.c.l.b16 %v1352
    %v1423 = vunpack.c.h.b16 %v1352
    %v1424 = vunpack.c.l.b16 %v1353
    %v1425 = vunpack.c.h.b16 %v1353
    %v1426 = vunpack.c.l.b16 %v1354
    %v1427 = vunpack.c.h.b16 %v1354
    %v1428 = vunpack.c.l.b16 %v1355
    %v1429 = vunpack.c.h.b16 %v1355
    %v1430 = vunpack.c.l.b16 %v1356
    %v1431 = vunpack.c.h.b16 %v1356
    %v1432 = vunpack.c.l.b16 %v1357
    %v1433 = vunpack.c.h.b16 %v1357
    %v1434 = vunpack.c.l.b16 %v1358
    %v1435 = vunpack.c.h.b16 %v1358
    %v1436 = vunpack.c.l.b16 %v1359
    %v1437 = vunpack.c.h.b16 %v1359
    %v1438 = vunpack.c.l.b16 %v1360
    %v1439 = vunpack.c.h.b16 %v1360
    %v1440 = vunpack.c.l.b16 %v1361
    %v1441 = vunpack.c.h.b16 %v1361
    %v1442 = vunpack.c.l.b16 %v1362
    %v1443 = vunpack.c.h.b16 %v1362
    %v1444 = vunpack.c.l.b16 %v1363
    %v1445 = vunpack.c.h.b16 %v1363
    %v1446 = vunpack.c.l.b16 %v1364
    %v1447 = vunpack.c.h.b16 %v1364
    %v1448 = vunpack.c.l.b16 %v1365
    %v1449 = vunpack.c.h.b16 %v1365
    %v1450 = vunpack.c.l.b16 %v1366
    %v1451 = vunpack.c.h.b16 %v1366
    %v1452 = vunpack.c.l.b16 %v1367
    %v1453 = vunpack.c.h.b16 %v1367
    %v1454 = vunpack.c.l.b16 %v1368
    %v1455 = vunpack.c.h.b16 %v1368
    %v1456 = vunpack.c.l.b16 %v1369
    %v1457 = vunpack.c.h.b16 %v1369
    %v1458 = vunpack.c.l.b16 %v1370
    %v1459 = vunpack.c.h.b16 %v1370
    %v1460 = vunpack.c.l.b16 %v1371
    %v1461 = vunpack.c.h.b16 %v1371
    %v1462 = vunpack.c.l.b16 %v1372
    %v1463 = vunpack.c.h.b16 %v1372
    %v1464 = vunpack.c.l.b16 %v1373
    %v1465 = vunpack.c.h.b16 %v1373
    %v1466 = vunpack.c.l.b16 %v1374
    %v1467 = vunpack.c.h.b16 %v1374
    %v1468 = vunpack.c.l.b16 %v1375
    %v1469 = vunpack.c.h.b16 %v1375
    %v1470 = vunpack.c.l.b16 %v1376
    %v1471 = vunpack.c.h.b16 %v1376
    %v1472 = vunpack.c.l.b16 %v1377
    %v1473 = vunpack.c.h.b16 %v1377
    %v1474 = vpack.c.b16 %v1412, %v1410
    %v1475 = vpack.c.b16 %v1413, %v1411
    %v1476 = vpack.c.b16 %v1416, %v1414
    %v1477 = vpack.c.b16 %v1417, %v1415
    %v1478 = vpack.c.b16 %v1420, %v1418
    %v1479 = vpack.c.b16 %v1421, %v1419
    %v1480 = vpack.c.b16 %v1424, %v1422
    %v1481 = vpack.c.b16 %v1425, %v1423
    %v1482 = vpack.c.b16 %v1428, %v1426
    %v1483 = vpack.c.b16 %v1429, %v1427
    %v1484 = vpack.c.b16 %v1432, %v1430
    %v1485 = vpack.c.b16 %v1433, %v1431
    %v1486 = vpack.c.b16 %v1436, %v1434
    %v1487 = vpack.c.b16 %v1437, %v1435
    %v1488 = vpack.c.b16 %v1440, %v1438
    %v1489 = vpack.c.b16 %v1441, %v1439
    %v1490 = vpack.c.b16 %v1444, %v1442
    %v1491 = vpack.c.b16 %v1445, %v1443
    %v1492 = vpack.c.b16 %v1448, %v1446
    %v1493 = vpack.c.b16 %v1449, %v1447
    %v1494 = vpack.c.b16 %v1452, %v1450
    %v1495 = vpack.c.b16 %v1453, %v1451
    %v1496 = vpack.c.b16 %v1456, %v1454
    %v1497 = vpack.c.b16 %v1457, %v1455
    %v1498 = vpack.c.b16 %v1460, %v1458
    %v1499 = vpack.c.b16 %v1461, %v1459
    %v1500 = vpack.c.b16 %v1464, %v1462
    %v1501 = vpack.c.b16 %v1465, %v1463
    %v1502 = vpack.c.b16 %v1468, %v1466
    %v1503 = vpack.c.b16 %v1469, %v1467
    %v1504 = vpack.c.b16 %v1472, %v1470
    %v1505 = vpack.c.b16 %v1473, %v1471
    %1538 = vmatpush.bf16.msra.mxu0 %v1488
    %1539 = vmatpush.bf16.msra.mxu0 %v1486
    %1540 = vmatpush.bf16.msra.mxu0 %v1484
    %1541 = vmatpush.bf16.msra.mxu0 %v1482
    %1542 = vmatpush.bf16.msra.mxu0 %v1480
    %1543 = vmatpush.bf16.msra.mxu0 %v1478
    %1544 = vmatpush.bf16.msra.mxu0 %v1476
    %1545 = vmatpush.bf16.msra.mxu0 %v1474
    %1546 = vmatmul.bf16.gmra.mxu0 %v1337
    %v1547 = vpop.f32.mrf.mxu0
    %v1548 = vadd.f32 0.0, %v1547
    %v1549 = vpop.f32.mrf.mxu0
    %v1550 = vadd.f32 0.0, %v1549
    %1551 = vmatmul.bf16.gmra.mxu0 %v1339
    %v1552 = vpop.f32.mrf.mxu0
    %v1553 = vadd.f32 0.0, %v1552
    %v1554 = vpop.f32.mrf.mxu0
    %v1555 = vadd.f32 0.0, %v1554
    %1556 = vmatmul.bf16.gmra.mxu0 %v1341
    %v1557 = vpop.f32.mrf.mxu0
    %v1558 = vadd.f32 0.0, %v1557
    %v1559 = vpop.f32.mrf.mxu0
    %v1560 = vadd.f32 0.0, %v1559
    %1561 = vmatmul.bf16.gmra.mxu0 %v1343
    %v1562 = vpop.f32.mrf.mxu0
    %v1563 = vadd.f32 0.0, %v1562
    %v1564 = vpop.f32.mrf.mxu0
    %v1565 = vadd.f32 0.0, %v1564
    %1566 = vdwg.mxu0
    %1567 = vmatpush.bf16.msra.mxu0 %v1504
    %1568 = vmatpush.bf16.msra.mxu0 %v1502
    %1569 = vmatpush.bf16.msra.mxu0 %v1500
    %1570 = vmatpush.bf16.msra.mxu0 %v1498
    %1571 = vmatpush.bf16.msra.mxu0 %v1496
    %1572 = vmatpush.bf16.msra.mxu0 %v1494
    %1573 = vmatpush.bf16.msra.mxu0 %v1492
    %1574 = vmatpush.bf16.msra.mxu0 %v1490
    %1575 = vmatmul.bf16.gmra.mxu0 %v1338
    %v1576 = vpop.f32.mrf.mxu0
    %v1577 = vadd.f32 %v1548, %v1576
    %v1578 = vpop.f32.mrf.mxu0
    %v1579 = vadd.f32 %v1550, %v1578
    %1580 = vmatmul.bf16.gmra.mxu0 %v1340
    %v1581 = vpop.f32.mrf.mxu0
    %v1582 = vadd.f32 %v1553, %v1581
    %v1583 = vpop.f32.mrf.mxu0
    %v1584 = vadd.f32 %v1555, %v1583
    %1585 = vmatmul.bf16.gmra.mxu0 %v1342
    %v1586 = vpop.f32.mrf.mxu0
    %v1587 = vadd.f32 %v1558, %v1586
    %v1588 = vpop.f32.mrf.mxu0
    %v1589 = vadd.f32 %v1560, %v1588
    %1590 = vmatmul.bf16.gmra.mxu0 %v1344
    %v1591 = vpop.f32.mrf.mxu0
    %v1592 = vadd.f32 %v1563, %v1591
    %v1593 = vpop.f32.mrf.mxu0
    %v1594 = vadd.f32 %v1565, %v1593
    %1595 = vdwg.mxu0
    %1596 = vmatpush.bf16.msra.mxu0 %v1489
    %1597 = vmatpush.bf16.msra.mxu0 %v1487
    %1598 = vmatpush.bf16.msra.mxu0 %v1485
    %1599 = vmatpush.bf16.msra.mxu0 %v1483
    %1600 = vmatpush.bf16.msra.mxu0 %v1481
    %1601 = vmatpush.bf16.msra.mxu0 %v1479
    %1602 = vmatpush.bf16.msra.mxu0 %v1477
    %1603 = vmatpush.bf16.msra.mxu0 %v1475
    %1604 = vmatmul.bf16.gmra.mxu0 %v1337
    %v1605 = vpop.f32.mrf.mxu0
    %v1606 = vadd.f32 0.0, %v1605
    %v1607 = vpop.f32.mrf.mxu0
    %v1608 = vadd.f32 0.0, %v1607
    %1609 = vmatmul.bf16.gmra.mxu0 %v1339
    %v1610 = vpop.f32.mrf.mxu0
    %v1611 = vadd.f32 0.0, %v1610
    %v1612 = vpop.f32.mrf.mxu0
    %v1613 = vadd.f32 0.0, %v1612
    %1614 = vmatmul.bf16.gmra.mxu0 %v1341
    %v1615 = vpop.f32.mrf.mxu0
    %v1616 = vadd.f32 0.0, %v1615
    %v1617 = vpop.f32.mrf.mxu0
    %v1618 = vadd.f32 0.0, %v1617
    %1619 = vmatmul.bf16.gmra.mxu0 %v1343
    %v1620 = vpop.f32.mrf.mxu0
    %v1621 = vadd.f32 0.0, %v1620
    %v1622 = vpop.f32.mrf.mxu0
    %v1623 = vadd.f32 0.0, %v1622
    %1624 = vdwg.mxu0
    %1625 = vmatpush.bf16.msra.mxu0 %v1505
    %1626 = vmatpush.bf16.msra.mxu0 %v1503
    %1627 = vmatpush.bf16.msra.mxu0 %v1501
    %1628 = vmatpush.bf16.msra.mxu0 %v1499
    %1629 = vmatpush.bf16.msra.mxu0 %v1497
    %1630 = vmatpush.bf16.msra.mxu0 %v1495
    %1631 = vmatpush.bf16.msra.mxu0 %v1493
    %1632 = vmatpush.bf16.msra.mxu0 %v1491
    %1633 = vmatmul.bf16.gmra.mxu0 %v1338
    %v1634 = vpop.f32.mrf.mxu0
    %v1635 = vadd.f32 %v1606, %v1634
    %v1636 = vpop.f32.mrf.mxu0
    %v1637 = vadd.f32 %v1608, %v1636
    %1638 = vmatmul.bf16.gmra.mxu0 %v1340
    %v1639 = vpop.f32.mrf.mxu0
    %v1640 = vadd.f32 %v1611, %v1639
    %v1641 = vpop.f32.mrf.mxu0
    %v1642 = vadd.f32 %v1613, %v1641
    %1643 = vmatmul.bf16.gmra.mxu0 %v1342
    %v1644 = vpop.f32.mrf.mxu0
    %v1645 = vadd.f32 %v1616, %v1644
    %v1646 = vpop.f32.mrf.mxu0
    %v1647 = vadd.f32 %v1618, %v1646
    %1648 = vmatmul.bf16.gmra.mxu0 %v1344
    %v1649 = vpop.f32.mrf.mxu0
    %v1650 = vadd.f32 %v1621, %v1649
    %v1651 = vpop.f32.mrf.mxu0
    %v1652 = vadd.f32 %v1623, %v1651
    %1653 = vdwg.mxu0
    %v1686 = vunpack.c.l.b16 %v1224
    %v1687 = vunpack.c.h.b16 %v1224
    %v1688 = vunpack.c.l.b16 %v1225
    %v1689 = vunpack.c.h.b16 %v1225
    %v1690 = vunpack.c.l.b16 %v1226
    %v1691 = vunpack.c.h.b16 %v1226
    %v1692 = vunpack.c.l.b16 %v1227
    %v1693 = vunpack.c.h.b16 %v1227
    %v1694 = vunpack.c.l.b16 %v1228
    %v1695 = vunpack.c.h.b16 %v1228
    %v1696 = vunpack.c.l.b16 %v1229
    %v1697 = vunpack.c.h.b16 %v1229
    %v1698 = vunpack.c.l.b16 %v1230
    %v1699 = vunpack.c.h.b16 %v1230
    %v1700 = vunpack.c.l.b16 %v1231
    %v1701 = vunpack.c.h.b16 %v1231
    %v1702 = vunpack.c.l.b16 %v1232
    %v1703 = vunpack.c.h.b16 %v1232
    %v1704 = vunpack.c.l.b16 %v1233
    %v1705 = vunpack.c.h.b16 %v1233
    %v1706 = vunpack.c.l.b16 %v1234
    %v1707 = vunpack.c.h.b16 %v1234
    %v1708 = vunpack.c.l.b16 %v1235
    %v1709 = vunpack.c.h.b16 %v1235
    %v1710 = vunpack.c.l.b16 %v1236
    %v1711 = vunpack.c.h.b16 %v1236
    %v1712 = vunpack.c.l.b16 %v1237
    %v1713 = vunpack.c.h.b16 %v1237
    %v1714 = vunpack.c.l.b16 %v1238
    %v1715 = vunpack.c.h.b16 %v1238
    %v1716 = vunpack.c.l.b16 %v1239
    %v1717 = vunpack.c.h.b16 %v1239
    %v1718 = vunpack.c.l.b16 %v1240
    %v1719 = vunpack.c.h.b16 %v1240
    %v1720 = vunpack.c.l.b16 %v1241
    %v1721 = vunpack.c.h.b16 %v1241
    %v1722 = vunpack.c.l.b16 %v1242
    %v1723 = vunpack.c.h.b16 %v1242
    %v1724 = vunpack.c.l.b16 %v1243
    %v1725 = vunpack.c.h.b16 %v1243
    %v1726 = vunpack.c.l.b16 %v1244
    %v1727 = vunpack.c.h.b16 %v1244
    %v1728 = vunpack.c.l.b16 %v1245
    %v1729 = vunpack.c.h.b16 %v1245
    %v1730 = vunpack.c.l.b16 %v1246
    %v1731 = vunpack.c.h.b16 %v1246
    %v1732 = vunpack.c.l.b16 %v1247
    %v1733 = vunpack.c.h.b16 %v1247
    %v1734 = vunpack.c.l.b16 %v1248
    %v1735 = vunpack.c.h.b16 %v1248
    %v1736 = vunpack.c.l.b16 %v1249
    %v1737 = vunpack.c.h.b16 %v1249
    %v1738 = vunpack.c.l.b16 %v1250
    %v1739 = vunpack.c.h.b16 %v1250
    %v1740 = vunpack.c.l.b16 %v1251
    %v1741 = vunpack.c.h.b16 %v1251
    %v1742 = vunpack.c.l.b16 %v1252
    %v1743 = vunpack.c.h.b16 %v1252
    %v1744 = vunpack.c.l.b16 %v1253
    %v1745 = vunpack.c.h.b16 %v1253
    %v1746 = vunpack.c.l.b16 %v1254
    %v1747 = vunpack.c.h.b16 %v1254
    %v1748 = vunpack.c.l.b16 %v1255
    %v1749 = vunpack.c.h.b16 %v1255
    %v1750 = vpack.c.b16 %v1688, %v1686
    %v1751 = vpack.c.b16 %v1689, %v1687
    %v1752 = vpack.c.b16 %v1692, %v1690
    %v1753 = vpack.c.b16 %v1693, %v1691
    %v1754 = vpack.c.b16 %v1696, %v1694
    %v1755 = vpack.c.b16 %v1697, %v1695
    %v1756 = vpack.c.b16 %v1700, %v1698
    %v1757 = vpack.c.b16 %v1701, %v1699
    %v1758 = vpack.c.b16 %v1704, %v1702
    %v1759 = vpack.c.b16 %v1705, %v1703
    %v1760 = vpack.c.b16 %v1708, %v1706
    %v1761 = vpack.c.b16 %v1709, %v1707
    %v1762 = vpack.c.b16 %v1712, %v1710
    %v1763 = vpack.c.b16 %v1713, %v1711
    %v1764 = vpack.c.b16 %v1716, %v1714
    %v1765 = vpack.c.b16 %v1717, %v1715
    %v1766 = vpack.c.b16 %v1720, %v1718
    %v1767 = vpack.c.b16 %v1721, %v1719
    %v1768 = vpack.c.b16 %v1724, %v1722
    %v1769 = vpack.c.b16 %v1725, %v1723
    %v1770 = vpack.c.b16 %v1728, %v1726
    %v1771 = vpack.c.b16 %v1729, %v1727
    %v1772 = vpack.c.b16 %v1732, %v1730
    %v1773 = vpack.c.b16 %v1733, %v1731
    %v1774 = vpack.c.b16 %v1736, %v1734
    %v1775 = vpack.c.b16 %v1737, %v1735
    %v1776 = vpack.c.b16 %v1740, %v1738
    %v1777 = vpack.c.b16 %v1741, %v1739
    %v1778 = vpack.c.b16 %v1744, %v1742
    %v1779 = vpack.c.b16 %v1745, %v1743
    %v1780 = vpack.c.b16 %v1748, %v1746
    %v1781 = vpack.c.b16 %v1749, %v1747
    %1814 = vmatpush.bf16.msra.mxu0 %v1764
    %1815 = vmatpush.bf16.msra.mxu0 %v1762
    %1816 = vmatpush.bf16.msra.mxu0 %v1760
    %1817 = vmatpush.bf16.msra.mxu0 %v1758
    %1818 = vmatpush.bf16.msra.mxu0 %v1756
    %1819 = vmatpush.bf16.msra.mxu0 %v1754
    %1820 = vmatpush.bf16.msra.mxu0 %v1752
    %1821 = vmatpush.bf16.msra.mxu0 %v1750
    %1822 = vmatmul.bf16.gmra.mxu0 %v1216
    %v1823 = vpop.f32.mrf.mxu0
    %v1824 = vadd.f32 %v1577, %v1823
    %v1825 = vpop.f32.mrf.mxu0
    %v1826 = vadd.f32 %v1579, %v1825
    %1827 = vmatmul.bf16.gmra.mxu0 %v1218
    %v1828 = vpop.f32.mrf.mxu0
    %v1829 = vadd.f32 %v1582, %v1828
    %v1830 = vpop.f32.mrf.mxu0
    %v1831 = vadd.f32 %v1584, %v1830
    %1832 = vmatmul.bf16.gmra.mxu0 %v1220
    %v1833 = vpop.f32.mrf.mxu0
    %v1834 = vadd.f32 %v1587, %v1833
    %v1835 = vpop.f32.mrf.mxu0
    %v1836 = vadd.f32 %v1589, %v1835
    %1837 = vmatmul.bf16.gmra.mxu0 %v1222
    %v1838 = vpop.f32.mrf.mxu0
    %v1839 = vadd.f32 %v1592, %v1838
    %v1840 = vpop.f32.mrf.mxu0
    %v1841 = vadd.f32 %v1594, %v1840
    %1842 = vdwg.mxu0
    %1843 = vmatpush.bf16.msra.mxu0 %v1780
    %1844 = vmatpush.bf16.msra.mxu0 %v1778
    %1845 = vmatpush.bf16.msra.mxu0 %v1776
    %1846 = vmatpush.bf16.msra.mxu0 %v1774
    %1847 = vmatpush.bf16.msra.mxu0 %v1772
    %1848 = vmatpush.bf16.msra.mxu0 %v1770
    %1849 = vmatpush.bf16.msra.mxu0 %v1768
    %1850 = vmatpush.bf16.msra.mxu0 %v1766
    %1851 = vmatmul.bf16.gmra.mxu0 %v1217
    %v1852 = vpop.f32.mrf.mxu0
    %v1853 = vadd.f32 %v1824, %v1852
    %v1854 = vpop.f32.mrf.mxu0
    %v1855 = vadd.f32 %v1826, %v1854
    %1856 = vmatmul.bf16.gmra.mxu0 %v1219
    %v1857 = vpop.f32.mrf.mxu0
    %v1858 = vadd.f32 %v1829, %v1857
    %v1859 = vpop.f32.mrf.mxu0
    %v1860 = vadd.f32 %v1831, %v1859
    %1861 = vmatmul.bf16.gmra.mxu0 %v1221
    %v1862 = vpop.f32.mrf.mxu0
    %v1863 = vadd.f32 %v1834, %v1862
    %v1864 = vpop.f32.mrf.mxu0
    %v1865 = vadd.f32 %v1836, %v1864
    %1866 = vmatmul.bf16.gmra.mxu0 %v1223
    %v1867 = vpop.f32.mrf.mxu0
    %v1868 = vadd.f32 %v1839, %v1867
    %v1869 = vpop.f32.mrf.mxu0
    %v1870 = vadd.f32 %v1841, %v1869
    %1871 = vdwg.mxu0
    %1872 = vmatpush.bf16.msra.mxu0 %v1765
    %1873 = vmatpush.bf16.msra.mxu0 %v1763
    %1874 = vmatpush.bf16.msra.mxu0 %v1761
    %1875 = vmatpush.bf16.msra.mxu0 %v1759
    %1876 = vmatpush.bf16.msra.mxu0 %v1757
    %1877 = vmatpush.bf16.msra.mxu0 %v1755
    %1878 = vmatpush.bf16.msra.mxu0 %v1753
    %1879 = vmatpush.bf16.msra.mxu0 %v1751
    %1880 = vmatmul.bf16.gmra.mxu0 %v1216
    %v1881 = vpop.f32.mrf.mxu0
    %v1882 = vadd.f32 %v1635, %v1881
    %v1883 = vpop.f32.mrf.mxu0
    %v1884 = vadd.f32 %v1637, %v1883
    %1885 = vmatmul.bf16.gmra.mxu0 %v1218
    %v1886 = vpop.f32.mrf.mxu0
    %v1887 = vadd.f32 %v1640, %v1886
    %v1888 = vpop.f32.mrf.mxu0
    %v1889 = vadd.f32 %v1642, %v1888
    %1890 = vmatmul.bf16.gmra.mxu0 %v1220
    %v1891 = vpop.f32.mrf.mxu0
    %v1892 = vadd.f32 %v1645, %v1891
    %v1893 = vpop.f32.mrf.mxu0
    %v1894 = vadd.f32 %v1647, %v1893
    %1895 = vmatmul.bf16.gmra.mxu0 %v1222
    %v1896 = vpop.f32.mrf.mxu0
    %v1897 = vadd.f32 %v1650, %v1896
    %v1898 = vpop.f32.mrf.mxu0
    %v1899 = vadd.f32 %v1652, %v1898
    %1900 = vdwg.mxu0
    %1901 = vmatpush.bf16.msra.mxu0 %v1781
    %1902 = vmatpush.bf16.msra.mxu0 %v1779
    %1903 = vmatpush.bf16.msra.mxu0 %v1777
    %1904 = vmatpush.bf16.msra.mxu0 %v1775
    %1905 = vmatpush.bf16.msra.mxu0 %v1773
    %1906 = vmatpush.bf16.msra.mxu0 %v1771
    %1907 = vmatpush.bf16.msra.mxu0 %v1769
    %1908 = vmatpush.bf16.msra.mxu0 %v1767
    %1909 = vmatmul.bf16.gmra.mxu0 %v1217
    %v1910 = vpop.f32.mrf.mxu0
    %v1911 = vadd.f32 %v1882, %v1910
    %v1912 = vpop.f32.mrf.mxu0
    %v1913 = vadd.f32 %v1884, %v1912
    %1914 = vmatmul.bf16.gmra.mxu0 %v1219
    %v1915 = vpop.f32.mrf.mxu0
    %v1916 = vadd.f32 %v1887, %v1915
    %v1917 = vpop.f32.mrf.mxu0
    %v1918 = vadd.f32 %v1889, %v1917
    %1919 = vmatmul.bf16.gmra.mxu0 %v1221
    %v1920 = vpop.f32.mrf.mxu0
    %v1921 = vadd.f32 %v1892, %v1920
    %v1922 = vpop.f32.mrf.mxu0
    %v1923 = vadd.f32 %v1894, %v1922
    %1924 = vmatmul.bf16.gmra.mxu0 %v1223
    %v1925 = vpop.f32.mrf.mxu0
    %v1926 = vadd.f32 %v1897, %v1925
    %v1927 = vpop.f32.mrf.mxu0
    %v1928 = vadd.f32 %v1899, %v1927
    %1929 = vdwg.mxu0
    %v1930 = vld [vmem:[#allocation2] sm:$0xfc]
    %v1931 = vld [vmem:[#allocation2 + $0x8] sm:$0xfc]
    %v1932 = vld [vmem:[#allocation2 + $0x40] sm:$0x3]
    %v1933 = vld [vmem:[#allocation2 + $0x48] sm:$0x3]
    %v1934 = vld [vmem:[#allocation2 + $0x50] sm:$0xfc]
    %v1935 = vld [vmem:[#allocation2 + $0x58] sm:$0xfc]
    %v1936 = vld [vmem:[#allocation2 + $0x90] sm:$0x3]
    %v1937 = vld [vmem:[#allocation2 + $0x98] sm:$0x3]
    %vm1946 = vcmask 1045504
    %v1947 = vrot.slane %v1930, 2
    %v1948 = vrot.slane %v1202, 2
    %v1949 = vsel %vm1946, %v1947, %v1948
    %v1950 = vrot.slane %v1931, 2
    %v1951 = vrot.slane %v1203, 2
    %v1952 = vsel %vm1946, %v1950, %v1951
    %v1953 = vrot.slane %v1204, 2
    %v1954 = vsel %vm1946, %v1948, %v1953
    %v1955 = vrot.slane %v1205, 2
    %v1956 = vsel %vm1946, %v1951, %v1955
    %v1957 = vrot.slane %v1206, 2
    %v1958 = vsel %vm1946, %v1953, %v1957
    %v1959 = vrot.slane %v1207, 2
    %v1960 = vsel %vm1946, %v1955, %v1959
    %v1961 = vrot.slane %v1932, 2
    %v1962 = vsel %vm1946, %v1957, %v1961
    %v1963 = vrot.slane %v1933, 2
    %v1964 = vsel %vm1946, %v1959, %v1963
    %v1965 = vrot.slane %v1934, 2
    %v1966 = vrot.slane %v1210, 2
    %v1967 = vsel %vm1946, %v1965, %v1966
    %v1968 = vrot.slane %v1935, 2
    %v1969 = vrot.slane %v1211, 2
    %v1970 = vsel %vm1946, %v1968, %v1969
    %v1971 = vrot.slane %v1212, 2
    %v1972 = vsel %vm1946, %v1966, %v1971
    %v1973 = vrot.slane %v1213, 2
    %v1974 = vsel %vm1946, %v1969, %v1973
    %v1975 = vrot.slane %v1214, 2
    %v1976 = vsel %vm1946, %v1971, %v1975
    %v1977 = vrot.slane %v1215, 2
    %v1978 = vsel %vm1946, %v1973, %v1977
    %v1979 = vrot.slane %v1936, 2
    %v1980 = vsel %vm1946, %v1975, %v1979
    %v1981 = vrot.slane %v1937, 2
    %v1982 = vsel %vm1946, %v1977, %v1981
    %v1999 = vpack.c.bf16 %v1954, %v1949
    %v2000 = vpack.c.bf16 %v1956, %v1952
    %v2001 = vpack.c.bf16 %v1962, %v1958
    %v2002 = vpack.c.bf16 %v1964, %v1960
    %v2003 = vpack.c.bf16 %v1972, %v1967
    %v2004 = vpack.c.bf16 %v1974, %v1970
    %v2005 = vpack.c.bf16 %v1980, %v1976
    %v2006 = vpack.c.bf16 %v1982, %v1978
    %s2007 = scalar_lea.vmem [#allocation8], 512
    %v2008 = vld [vmem:[%s2007] sm:$0xff]
    %v2009 = vld [vmem:[%s2007 + $0x8] sm:$0xff]
    %v2010 = vld [vmem:[%s2007 + $0x10] sm:$0xff]
    %v2011 = vld [vmem:[%s2007 + $0x18] sm:$0xff]
    %v2012 = vld [vmem:[%s2007 + $0x20] sm:$0xff]
    %v2013 = vld [vmem:[%s2007 + $0x28] sm:$0xff]
    %v2014 = vld [vmem:[%s2007 + $0x30] sm:$0xff]
    %v2015 = vld [vmem:[%s2007 + $0x38] sm:$0xff]
    %v2016 = vld [vmem:[%s2007 + $0x40] sm:$0xff]
    %v2017 = vld [vmem:[%s2007 + $0x48] sm:$0xff]
    %v2018 = vld [vmem:[%s2007 + $0x50] sm:$0xff]
    %v2019 = vld [vmem:[%s2007 + $0x58] sm:$0xff]
    %v2020 = vld [vmem:[%s2007 + $0x60] sm:$0xff]
    %v2021 = vld [vmem:[%s2007 + $0x68] sm:$0xff]
    %v2022 = vld [vmem:[%s2007 + $0x70] sm:$0xff]
    %v2023 = vld [vmem:[%s2007 + $0x78] sm:$0xff]
    %v2024 = vld [vmem:[%s2007 + $0x80] sm:$0xff]
    %v2025 = vld [vmem:[%s2007 + $0x88] sm:$0xff]
    %v2026 = vld [vmem:[%s2007 + $0x90] sm:$0xff]
    %v2027 = vld [vmem:[%s2007 + $0x98] sm:$0xff]
    %v2028 = vld [vmem:[%s2007 + $0xa0] sm:$0xff]
    %v2029 = vld [vmem:[%s2007 + $0xa8] sm:$0xff]
    %v2030 = vld [vmem:[%s2007 + $0xb0] sm:$0xff]
    %v2031 = vld [vmem:[%s2007 + $0xb8] sm:$0xff]
    %v2032 = vld [vmem:[%s2007 + $0xc0] sm:$0xff]
    %v2033 = vld [vmem:[%s2007 + $0xc8] sm:$0xff]
    %v2034 = vld [vmem:[%s2007 + $0xd0] sm:$0xff]
    %v2035 = vld [vmem:[%s2007 + $0xd8] sm:$0xff]
    %v2036 = vld [vmem:[%s2007 + $0xe0] sm:$0xff]
    %v2037 = vld [vmem:[%s2007 + $0xe8] sm:$0xff]
    %v2038 = vld [vmem:[%s2007 + $0xf0] sm:$0xff]
    %v2039 = vld [vmem:[%s2007 + $0xf8] sm:$0xff]
    %v2072 = vunpack.c.l.b16 %v2008
    %v2073 = vunpack.c.h.b16 %v2008
    %v2074 = vunpack.c.l.b16 %v2009
    %v2075 = vunpack.c.h.b16 %v2009
    %v2076 = vunpack.c.l.b16 %v2010
    %v2077 = vunpack.c.h.b16 %v2010
    %v2078 = vunpack.c.l.b16 %v2011
    %v2079 = vunpack.c.h.b16 %v2011
    %v2080 = vunpack.c.l.b16 %v2012
    %v2081 = vunpack.c.h.b16 %v2012
    %v2082 = vunpack.c.l.b16 %v2013
    %v2083 = vunpack.c.h.b16 %v2013
    %v2084 = vunpack.c.l.b16 %v2014
    %v2085 = vunpack.c.h.b16 %v2014
    %v2086 = vunpack.c.l.b16 %v2015
    %v2087 = vunpack.c.h.b16 %v2015
    %v2088 = vunpack.c.l.b16 %v2016
    %v2089 = vunpack.c.h.b16 %v2016
    %v2090 = vunpack.c.l.b16 %v2017
    %v2091 = vunpack.c.h.b16 %v2017
    %v2092 = vunpack.c.l.b16 %v2018
    %v2093 = vunpack.c.h.b16 %v2018
    %v2094 = vunpack.c.l.b16 %v2019
    %v2095 = vunpack.c.h.b16 %v2019
    %v2096 = vunpack.c.l.b16 %v2020
    %v2097 = vunpack.c.h.b16 %v2020
    %v2098 = vunpack.c.l.b16 %v2021
    %v2099 = vunpack.c.h.b16 %v2021
    %v2100 = vunpack.c.l.b16 %v2022
    %v2101 = vunpack.c.h.b16 %v2022
    %v2102 = vunpack.c.l.b16 %v2023
    %v2103 = vunpack.c.h.b16 %v2023
    %v2104 = vunpack.c.l.b16 %v2024
    %v2105 = vunpack.c.h.b16 %v2024
    %v2106 = vunpack.c.l.b16 %v2025
    %v2107 = vunpack.c.h.b16 %v2025
    %v2108 = vunpack.c.l.b16 %v2026
    %v2109 = vunpack.c.h.b16 %v2026
    %v2110 = vunpack.c.l.b16 %v2027
    %v2111 = vunpack.c.h.b16 %v2027
    %v2112 = vunpack.c.l.b16 %v2028
    %v2113 = vunpack.c.h.b16 %v2028
    %v2114 = vunpack.c.l.b16 %v2029
    %v2115 = vunpack.c.h.b16 %v2029
    %v2116 = vunpack.c.l.b16 %v2030
    %v2117 = vunpack.c.h.b16 %v2030
    %v2118 = vunpack.c.l.b16 %v2031
    %v2119 = vunpack.c.h.b16 %v2031
    %v2120 = vunpack.c.l.b16 %v2032
    %v2121 = vunpack.c.h.b16 %v2032
    %v2122 = vunpack.c.l.b16 %v2033
    %v2123 = vunpack.c.h.b16 %v2033
    %v2124 = vunpack.c.l.b16 %v2034
    %v2125 = vunpack.c.h.b16 %v2034
    %v2126 = vunpack.c.l.b16 %v2035
    %v2127 = vunpack.c.h.b16 %v2035
    %v2128 = vunpack.c.l.b16 %v2036
    %v2129 = vunpack.c.h.b16 %v2036
    %v2130 = vunpack.c.l.b16 %v2037
    %v2131 = vunpack.c.h.b16 %v2037
    %v2132 = vunpack.c.l.b16 %v2038
    %v2133 = vunpack.c.h.b16 %v2038
    %v2134 = vunpack.c.l.b16 %v2039
    %v2135 = vunpack.c.h.b16 %v2039
    %v2136 = vpack.c.b16 %v2074, %v2072
    %v2137 = vpack.c.b16 %v2075, %v2073
    %v2138 = vpack.c.b16 %v2078, %v2076
    %v2139 = vpack.c.b16 %v2079, %v2077
    %v2140 = vpack.c.b16 %v2082, %v2080
    %v2141 = vpack.c.b16 %v2083, %v2081
    %v2142 = vpack.c.b16 %v2086, %v2084
    %v2143 = vpack.c.b16 %v2087, %v2085
    %v2144 = vpack.c.b16 %v2090, %v2088
    %v2145 = vpack.c.b16 %v2091, %v2089
    %v2146 = vpack.c.b16 %v2094, %v2092
    %v2147 = vpack.c.b16 %v2095, %v2093
    %v2148 = vpack.c.b16 %v2098, %v2096
    %v2149 = vpack.c.b16 %v2099, %v2097
    %v2150 = vpack.c.b16 %v2102, %v2100
    %v2151 = vpack.c.b16 %v2103, %v2101
    %v2152 = vpack.c.b16 %v2106, %v2104
    %v2153 = vpack.c.b16 %v2107, %v2105
    %v2154 = vpack.c.b16 %v2110, %v2108
    %v2155 = vpack.c.b16 %v2111, %v2109
    %v2156 = vpack.c.b16 %v2114, %v2112
    %v2157 = vpack.c.b16 %v2115, %v2113
    %v2158 = vpack.c.b16 %v2118, %v2116
    %v2159 = vpack.c.b16 %v2119, %v2117
    %v2160 = vpack.c.b16 %v2122, %v2120
    %v2161 = vpack.c.b16 %v2123, %v2121
    %v2162 = vpack.c.b16 %v2126, %v2124
    %v2163 = vpack.c.b16 %v2127, %v2125
    %v2164 = vpack.c.b16 %v2130, %v2128
    %v2165 = vpack.c.b16 %v2131, %v2129
    %v2166 = vpack.c.b16 %v2134, %v2132
    %v2167 = vpack.c.b16 %v2135, %v2133
    %2200 = vmatpush.bf16.msra.mxu0 %v2150
    %2201 = vmatpush.bf16.msra.mxu0 %v2148
    %2202 = vmatpush.bf16.msra.mxu0 %v2146
    %2203 = vmatpush.bf16.msra.mxu0 %v2144
    %2204 = vmatpush.bf16.msra.mxu0 %v2142
    %2205 = vmatpush.bf16.msra.mxu0 %v2140
    %2206 = vmatpush.bf16.msra.mxu0 %v2138
    %2207 = vmatpush.bf16.msra.mxu0 %v2136
    %2208 = vmatmul.bf16.gmra.mxu0 %v1999
    %v2209 = vpop.f32.mrf.mxu0
    %v2210 = vadd.f32 0.0, %v2209
    %v2211 = vpop.f32.mrf.mxu0
    %v2212 = vadd.f32 0.0, %v2211
    %2213 = vmatmul.bf16.gmra.mxu0 %v2001
    %v2214 = vpop.f32.mrf.mxu0
    %v2215 = vadd.f32 0.0, %v2214
    %v2216 = vpop.f32.mrf.mxu0
    %v2217 = vadd.f32 0.0, %v2216
    %2218 = vmatmul.bf16.gmra.mxu0 %v2003
    %v2219 = vpop.f32.mrf.mxu0
    %v2220 = vadd.f32 0.0, %v2219
    %v2221 = vpop.f32.mrf.mxu0
    %v2222 = vadd.f32 0.0, %v2221
    %2223 = vmatmul.bf16.gmra.mxu0 %v2005
    %v2224 = vpop.f32.mrf.mxu0
    %v2225 = vadd.f32 0.0, %v2224
    %v2226 = vpop.f32.mrf.mxu0
    %v2227 = vadd.f32 0.0, %v2226
    %2228 = vdwg.mxu0
    %2229 = vmatpush.bf16.msra.mxu0 %v2166
    %2230 = vmatpush.bf16.msra.mxu0 %v2164
    %2231 = vmatpush.bf16.msra.mxu0 %v2162
    %2232 = vmatpush.bf16.msra.mxu0 %v2160
    %2233 = vmatpush.bf16.msra.mxu0 %v2158
    %2234 = vmatpush.bf16.msra.mxu0 %v2156
    %2235 = vmatpush.bf16.msra.mxu0 %v2154
    %2236 = vmatpush.bf16.msra.mxu0 %v2152
    %2237 = vmatmul.bf16.gmra.mxu0 %v2000
    %v2238 = vpop.f32.mrf.mxu0
    %v2239 = vadd.f32 %v2210, %v2238
    %v2240 = vpop.f32.mrf.mxu0
    %v2241 = vadd.f32 %v2212, %v2240
    %2242 = vmatmul.bf16.gmra.mxu0 %v2002
    %v2243 = vpop.f32.mrf.mxu0
    %v2244 = vadd.f32 %v2215, %v2243
    %v2245 = vpop.f32.mrf.mxu0
    %v2246 = vadd.f32 %v2217, %v2245
    %2247 = vmatmul.bf16.gmra.mxu0 %v2004
    %v2248 = vpop.f32.mrf.mxu0
    %v2249 = vadd.f32 %v2220, %v2248
    %v2250 = vpop.f32.mrf.mxu0
    %v2251 = vadd.f32 %v2222, %v2250
    %2252 = vmatmul.bf16.gmra.mxu0 %v2006
    %v2253 = vpop.f32.mrf.mxu0
    %v2254 = vadd.f32 %v2225, %v2253
    %v2255 = vpop.f32.mrf.mxu0
    %v2256 = vadd.f32 %v2227, %v2255
    %2257 = vdwg.mxu0
    %2258 = vmatpush.bf16.msra.mxu0 %v2151
    %2259 = vmatpush.bf16.msra.mxu0 %v2149
    %2260 = vmatpush.bf16.msra.mxu0 %v2147
    %2261 = vmatpush.bf16.msra.mxu0 %v2145
    %2262 = vmatpush.bf16.msra.mxu0 %v2143
    %2263 = vmatpush.bf16.msra.mxu0 %v2141
    %2264 = vmatpush.bf16.msra.mxu0 %v2139
    %2265 = vmatpush.bf16.msra.mxu0 %v2137
    %2266 = vmatmul.bf16.gmra.mxu0 %v1999
    %v2267 = vpop.f32.mrf.mxu0
    %v2268 = vadd.f32 0.0, %v2267
    %v2269 = vpop.f32.mrf.mxu0
    %v2270 = vadd.f32 0.0, %v2269
    %2271 = vmatmul.bf16.gmra.mxu0 %v2001
    %v2272 = vpop.f32.mrf.mxu0
    %v2273 = vadd.f32 0.0, %v2272
    %v2274 = vpop.f32.mrf.mxu0
    %v2275 = vadd.f32 0.0, %v2274
    %2276 = vmatmul.bf16.gmra.mxu0 %v2003
    %v2277 = vpop.f32.mrf.mxu0
    %v2278 = vadd.f32 0.0, %v2277
    %v2279 = vpop.f32.mrf.mxu0
    %v2280 = vadd.f32 0.0, %v2279
    %2281 = vmatmul.bf16.gmra.mxu0 %v2005
    %v2282 = vpop.f32.mrf.mxu0
    %v2283 = vadd.f32 0.0, %v2282
    %v2284 = vpop.f32.mrf.mxu0
    %v2285 = vadd.f32 0.0, %v2284
    %2286 = vdwg.mxu0
    %2287 = vmatpush.bf16.msra.mxu0 %v2167
    %2288 = vmatpush.bf16.msra.mxu0 %v2165
    %2289 = vmatpush.bf16.msra.mxu0 %v2163
    %2290 = vmatpush.bf16.msra.mxu0 %v2161
    %2291 = vmatpush.bf16.msra.mxu0 %v2159
    %2292 = vmatpush.bf16.msra.mxu0 %v2157
    %2293 = vmatpush.bf16.msra.mxu0 %v2155
    %2294 = vmatpush.bf16.msra.mxu0 %v2153
    %2295 = vmatmul.bf16.gmra.mxu0 %v2000
    %v2296 = vpop.f32.mrf.mxu0
    %v2297 = vadd.f32 %v2268, %v2296
    %v2298 = vpop.f32.mrf.mxu0
    %v2299 = vadd.f32 %v2270, %v2298
    %2300 = vmatmul.bf16.gmra.mxu0 %v2002
    %v2301 = vpop.f32.mrf.mxu0
    %v2302 = vadd.f32 %v2273, %v2301
    %v2303 = vpop.f32.mrf.mxu0
    %v2304 = vadd.f32 %v2275, %v2303
    %2305 = vmatmul.bf16.gmra.mxu0 %v2004
    %v2306 = vpop.f32.mrf.mxu0
    %v2307 = vadd.f32 %v2278, %v2306
    %v2308 = vpop.f32.mrf.mxu0
    %v2309 = vadd.f32 %v2280, %v2308
    %2310 = vmatmul.bf16.gmra.mxu0 %v2006
    %v2311 = vpop.f32.mrf.mxu0
    %v2312 = vadd.f32 %v2283, %v2311
    %v2313 = vpop.f32.mrf.mxu0
    %v2314 = vadd.f32 %v2285, %v2313
    %2315 = vdwg.mxu0
    %v2316 = vadd.f32 %v1853, %v2239
    %v2317 = vadd.f32 %v1911, %v2297
    %v2318 = vadd.f32 %v1855, %v2241
    %v2319 = vadd.f32 %v1913, %v2299
    %v2320 = vadd.f32 %v1858, %v2244
    %v2321 = vadd.f32 %v1916, %v2302
    %v2322 = vadd.f32 %v1860, %v2246
    %v2323 = vadd.f32 %v1918, %v2304
    %v2324 = vadd.f32 %v1863, %v2249
    %v2325 = vadd.f32 %v1921, %v2307
    %v2326 = vadd.f32 %v1865, %v2251
    %v2327 = vadd.f32 %v1923, %v2309
    %v2328 = vadd.f32 %v1868, %v2254
    %v2329 = vadd.f32 %v1926, %v2312
    %v2330 = vadd.f32 %v1870, %v2256
    %v2331 = vadd.f32 %v1928, %v2314
    %s2332 = scalar_lea.vmem %s5, 1
    %v2333 = vld [vmem:[%s2332] ss:$4 sm:$0x3]
    %v2335 = vperm.slane %v2333, 0
    %v2336 = vperm.slane %v2333, 1
    %v2339 = vadd.f32 %v2316, %v2335
    %v2340 = vadd.f32 %v2317, %v2336
    %v2341 = vadd.f32 %v2318, %v2335
    %v2342 = vadd.f32 %v2319, %v2336
    %v2343 = vadd.f32 %v2320, %v2335
    %v2344 = vadd.f32 %v2321, %v2336
    %v2345 = vadd.f32 %v2322, %v2335
    %v2346 = vadd.f32 %v2323, %v2336
    %v2347 = vadd.f32 %v2324, %v2335
    %v2348 = vadd.f32 %v2325, %v2336
    %v2349 = vadd.f32 %v2326, %v2335
    %v2350 = vadd.f32 %v2327, %v2336
    %v2351 = vadd.f32 %v2328, %v2335
    %v2352 = vadd.f32 %v2329, %v2336
    %v2353 = vadd.f32 %v2330, %v2335
    %v2354 = vadd.f32 %v2331, %v2336
    %v2355 = vadd.f32 %v2339, %v2341
    %v2356 = vadd.f32 %v2355, %v2343
    %v2357 = vadd.f32 %v2356, %v2345
    %v2358 = vadd.f32 %v2357, %v2347
    %v2359 = vadd.f32 %v2358, %v2349
    %v2360 = vadd.f32 %v2359, %v2351
    %v2361 = vadd.f32 %v2360, %v2353
    %v2362 = vrot.slane %v2361, 4
    %v2363 = vadd.f32 %v2361, %v2362
    %v2364 = vrot.slane %v2363, 2
    %v2365 = vadd.f32 %v2363, %v2364
    %v2366 = vrot.slane %v2365, 1
    %v2367 = vadd.f32 %v2365, %v2366
    %v2368 = vadd.f32 %v2340, %v2342
    %v2369 = vadd.f32 %v2368, %v2344
    %v2370 = vadd.f32 %v2369, %v2346
    %v2371 = vadd.f32 %v2370, %v2348
    %v2372 = vadd.f32 %v2371, %v2350
    %v2373 = vadd.f32 %v2372, %v2352
    %v2374 = vadd.f32 %v2373, %v2354
    %v2375 = vrot.slane %v2374, 4
    %v2376 = vadd.f32 %v2374, %v2375
    %v2377 = vrot.slane %v2376, 2
    %v2378 = vadd.f32 %v2376, %v2377
    %v2379 = vrot.slane %v2378, 1
    %v2380 = vadd.f32 %v2378, %v2379
    %v2381 = vmul.f32 %v2339, %v2339
    %v2382 = vmul.f32 %v2340, %v2340
    %v2383 = vmul.f32 %v2341, %v2341
    %v2384 = vmul.f32 %v2342, %v2342
    %v2385 = vmul.f32 %v2343, %v2343
    %v2386 = vmul.f32 %v2344, %v2344
    %v2387 = vmul.f32 %v2345, %v2345
    %v2388 = vmul.f32 %v2346, %v2346
    %v2389 = vmul.f32 %v2347, %v2347
    %v2390 = vmul.f32 %v2348, %v2348
    %v2391 = vmul.f32 %v2349, %v2349
    %v2392 = vmul.f32 %v2350, %v2350
    %v2393 = vmul.f32 %v2351, %v2351
    %v2394 = vmul.f32 %v2352, %v2352
    %v2395 = vmul.f32 %v2353, %v2353
    %v2396 = vmul.f32 %v2354, %v2354
    %v2397 = vadd.f32 %v2381, %v2383
    %v2398 = vadd.f32 %v2397, %v2385
    %v2399 = vadd.f32 %v2398, %v2387
    %v2400 = vadd.f32 %v2399, %v2389
    %v2401 = vadd.f32 %v2400, %v2391
    %v2402 = vadd.f32 %v2401, %v2393
    %v2403 = vadd.f32 %v2402, %v2395
    %v2404 = vrot.slane %v2403, 4
    %v2405 = vadd.f32 %v2403, %v2404
    %v2406 = vrot.slane %v2405, 2
    %v2407 = vadd.f32 %v2405, %v2406
    %v2408 = vrot.slane %v2407, 1
    %v2409 = vadd.f32 %v2407, %v2408
    %v2410 = vadd.f32 %v2382, %v2384
    %v2411 = vadd.f32 %v2410, %v2386
    %v2412 = vadd.f32 %v2411, %v2388
    %v2413 = vadd.f32 %v2412, %v2390
    %v2414 = vadd.f32 %v2413, %v2392
    %v2415 = vadd.f32 %v2414, %v2394
    %v2416 = vadd.f32 %v2415, %v2396
    %v2417 = vrot.slane %v2416, 4
    %v2418 = vadd.f32 %v2416, %v2417
    %v2419 = vrot.slane %v2418, 2
    %v2420 = vadd.f32 %v2418, %v2419
    %v2421 = vrot.slane %v2420, 1
    %v2422 = vadd.f32 %v2420, %v2421
    %v2423 = vld [vmem:[#allocation13] sm:$0xff]
    %v2424 = vld [vmem:[#allocation13 + $0x8] sm:$0xff]
    %v2425 = vld [vmem:[#allocation13 + $0x10] sm:$0xff]
    %v2426 = vld [vmem:[#allocation13 + $0x18] sm:$0xff]
    %v2427 = vld [vmem:[#allocation13 + $0x20] sm:$0xff]
    %v2428 = vld [vmem:[#allocation13 + $0x28] sm:$0xff]
    %v2429 = vld [vmem:[#allocation13 + $0x30] sm:$0xff]
    %v2430 = vld [vmem:[#allocation13 + $0x38] sm:$0xff]
    %v2431 = vld [vmem:[#allocation13 + $0x40] sm:$0xff]
    %v2432 = vld [vmem:[#allocation13 + $0x48] sm:$0xff]
    %v2433 = vld [vmem:[#allocation13 + $0x50] sm:$0xff]
    %v2434 = vld [vmem:[#allocation13 + $0x58] sm:$0xff]
    %v2435 = vld [vmem:[#allocation13 + $0x60] sm:$0xff]
    %v2436 = vld [vmem:[#allocation13 + $0x68] sm:$0xff]
    %v2437 = vld [vmem:[#allocation13 + $0x70] sm:$0xff]
    %v2438 = vld [vmem:[#allocation13 + $0x78] sm:$0xff]
    %v2439 = vld [vmem:[#allocation13 + $0x80] sm:$0xff]
    %v2440 = vld [vmem:[#allocation13 + $0x88] sm:$0xff]
    %v2441 = vld [vmem:[#allocation13 + $0x90] sm:$0xff]
    %v2442 = vld [vmem:[#allocation13 + $0x98] sm:$0xff]
    %v2443 = vld [vmem:[#allocation13 + $0xa0] sm:$0xff]
    %v2444 = vld [vmem:[#allocation13 + $0xa8] sm:$0xff]
    %v2445 = vld [vmem:[#allocation13 + $0xb0] sm:$0xff]
    %v2446 = vld [vmem:[#allocation13 + $0xb8] sm:$0xff]
    %v2447 = vld [vmem:[#allocation13 + $0xc0] sm:$0xff]
    %v2448 = vld [vmem:[#allocation13 + $0xc8] sm:$0xff]
    %v2449 = vld [vmem:[#allocation13 + $0xd0] sm:$0xff]
    %v2450 = vld [vmem:[#allocation13 + $0xd8] sm:$0xff]
    %v2451 = vld [vmem:[#allocation13 + $0xe0] sm:$0xff]
    %v2452 = vld [vmem:[#allocation13 + $0xe8] sm:$0xff]
    %v2453 = vld [vmem:[#allocation13 + $0xf0] sm:$0xff]
    %v2454 = vld [vmem:[#allocation13 + $0xf8] sm:$0xff]
    %v2455 = vld [vmem:[#allocation13 + $0x100] sm:$0xff]
    %v2456 = vld [vmem:[#allocation13 + $0x108] sm:$0xff]
    %v2457 = vld [vmem:[#allocation13 + $0x110] sm:$0xff]
    %v2458 = vld [vmem:[#allocation13 + $0x118] sm:$0xff]
    %v2459 = vld [vmem:[#allocation13 + $0x120] sm:$0xff]
    %v2460 = vld [vmem:[#allocation13 + $0x128] sm:$0xff]
    %v2461 = vld [vmem:[#allocation13 + $0x130] sm:$0xff]
    %v2462 = vld [vmem:[#allocation13 + $0x138] sm:$0xff]
    %v2463 = vld [vmem:[#allocation13 + $0x140] sm:$0xff]
    %v2464 = vld [vmem:[#allocation13 + $0x148] sm:$0xff]
    %v2465 = vld [vmem:[#allocation13 + $0x150] sm:$0xff]
    %v2466 = vld [vmem:[#allocation13 + $0x158] sm:$0xff]
    %v2467 = vld [vmem:[#allocation13 + $0x160] sm:$0xff]
    %v2468 = vld [vmem:[#allocation13 + $0x168] sm:$0xff]
    %v2469 = vld [vmem:[#allocation13 + $0x170] sm:$0xff]
    %v2470 = vld [vmem:[#allocation13 + $0x178] sm:$0xff]
    %v2471 = vld [vmem:[#allocation13 + $0x180] sm:$0xff]
    %v2472 = vld [vmem:[#allocation13 + $0x188] sm:$0xff]
    %v2473 = vld [vmem:[#allocation13 + $0x190] sm:$0xff]
    %v2474 = vld [vmem:[#allocation13 + $0x198] sm:$0xff]
    %v2475 = vld [vmem:[#allocation13 + $0x1a0] sm:$0xff]
    %v2476 = vld [vmem:[#allocation13 + $0x1a8] sm:$0xff]
    %v2477 = vld [vmem:[#allocation13 + $0x1b0] sm:$0xff]
    %v2478 = vld [vmem:[#allocation13 + $0x1b8] sm:$0xff]
    %v2479 = vld [vmem:[#allocation13 + $0x1c0] sm:$0xff]
    %v2480 = vld [vmem:[#allocation13 + $0x1c8] sm:$0xff]
    %v2481 = vld [vmem:[#allocation13 + $0x1d0] sm:$0xff]
    %v2482 = vld [vmem:[#allocation13 + $0x1d8] sm:$0xff]
    %v2483 = vld [vmem:[#allocation13 + $0x1e0] sm:$0xff]
    %v2484 = vld [vmem:[#allocation13 + $0x1e8] sm:$0xff]
    %v2485 = vld [vmem:[#allocation13 + $0x1f0] sm:$0xff]
    %v2486 = vld [vmem:[#allocation13 + $0x1f8] sm:$0xff]
    %2487 = vmatpush.msra.mxu0 %v2453
    %2488 = vmatpush.msra.mxu0 %v2451
    %2489 = vmatpush.msra.mxu0 %v2449
    %2490 = vmatpush.msra.mxu0 %v2447
    %2491 = vmatpush.msra.mxu0 %v2445
    %2492 = vmatpush.msra.mxu0 %v2443
    %2493 = vmatpush.msra.mxu0 %v2441
    %2494 = vmatpush.msra.mxu0 %v2439
    %2495 = vmatpush.msra.mxu0 %v2437
    %2496 = vmatpush.msra.mxu0 %v2435
    %2497 = vmatpush.msra.mxu0 %v2433
    %2498 = vmatpush.msra.mxu0 %v2431
    %2499 = vmatpush.msra.mxu0 %v2429
    %2500 = vmatpush.msra.mxu0 %v2427
    %2501 = vmatpush.msra.mxu0 %v2425
    %2502 = vmatpush.msra.mxu0 %v2423
    %2503 = vmatmul.f32.gmra.mxu0 %v2367
    %v2504 = vpop.f32.mrf.mxu0
    %v2505 = vadd.f32 0.0, %v2504
    %2506 = vdwg.mxu0
    %2507 = vmatpush.msra.mxu0 %v2485
    %2508 = vmatpush.msra.mxu0 %v2483
    %2509 = vmatpush.msra.mxu0 %v2481
    %2510 = vmatpush.msra.mxu0 %v2479
    %2511 = vmatpush.msra.mxu0 %v2477
    %2512 = vmatpush.msra.mxu0 %v2475
    %2513 = vmatpush.msra.mxu0 %v2473
    %2514 = vmatpush.msra.mxu0 %v2471
    %2515 = vmatpush.msra.mxu0 %v2469
    %2516 = vmatpush.msra.mxu0 %v2467
    %2517 = vmatpush.msra.mxu0 %v2465
    %2518 = vmatpush.msra.mxu0 %v2463
    %2519 = vmatpush.msra.mxu0 %v2461
    %2520 = vmatpush.msra.mxu0 %v2459
    %2521 = vmatpush.msra.mxu0 %v2457
    %2522 = vmatpush.msra.mxu0 %v2455
    %2523 = vmatmul.f32.gmra.mxu0 %v2380
    %v2524 = vpop.f32.mrf.mxu0
    %v2525 = vadd.f32 %v2505, %v2524
    %2526 = vdwg.mxu0
    %2527 = vmatpush.msra.mxu0 %v2454
    %2528 = vmatpush.msra.mxu0 %v2452
    %2529 = vmatpush.msra.mxu0 %v2450
    %2530 = vmatpush.msra.mxu0 %v2448
    %2531 = vmatpush.msra.mxu0 %v2446
    %2532 = vmatpush.msra.mxu0 %v2444
    %2533 = vmatpush.msra.mxu0 %v2442
    %2534 = vmatpush.msra.mxu0 %v2440
    %2535 = vmatpush.msra.mxu0 %v2438
    %2536 = vmatpush.msra.mxu0 %v2436
    %2537 = vmatpush.msra.mxu0 %v2434
    %2538 = vmatpush.msra.mxu0 %v2432
    %2539 = vmatpush.msra.mxu0 %v2430
    %2540 = vmatpush.msra.mxu0 %v2428
    %2541 = vmatpush.msra.mxu0 %v2426
    %2542 = vmatpush.msra.mxu0 %v2424
    %2543 = vmatmul.f32.gmra.mxu0 %v2367
    %v2544 = vpop.f32.mrf.mxu0
    %v2545 = vadd.f32 0.0, %v2544
    %2546 = vdwg.mxu0
    %2547 = vmatpush.msra.mxu0 %v2486
    %2548 = vmatpush.msra.mxu0 %v2484
    %2549 = vmatpush.msra.mxu0 %v2482
    %2550 = vmatpush.msra.mxu0 %v2480
    %2551 = vmatpush.msra.mxu0 %v2478
    %2552 = vmatpush.msra.mxu0 %v2476
    %2553 = vmatpush.msra.mxu0 %v2474
    %2554 = vmatpush.msra.mxu0 %v2472
    %2555 = vmatpush.msra.mxu0 %v2470
    %2556 = vmatpush.msra.mxu0 %v2468
    %2557 = vmatpush.msra.mxu0 %v2466
    %2558 = vmatpush.msra.mxu0 %v2464
    %2559 = vmatpush.msra.mxu0 %v2462
    %2560 = vmatpush.msra.mxu0 %v2460
    %2561 = vmatpush.msra.mxu0 %v2458
    %2562 = vmatpush.msra.mxu0 %v2456
    %2563 = vmatmul.f32.gmra.mxu0 %v2380
    %v2564 = vpop.f32.mrf.mxu0
    %v2565 = vadd.f32 %v2545, %v2564
    %2566 = vdwg.mxu0
    %v2567 = vmul.f32 %v2525, 0.00048828125
    %v2568 = vmul.f32 %v2565, 0.00048828125
    %2569 = vmatpush.msra.mxu0 %v2453
    %2570 = vmatpush.msra.mxu0 %v2451
    %2571 = vmatpush.msra.mxu0 %v2449
    %2572 = vmatpush.msra.mxu0 %v2447
    %2573 = vmatpush.msra.mxu0 %v2445
    %2574 = vmatpush.msra.mxu0 %v2443
    %2575 = vmatpush.msra.mxu0 %v2441
    %2576 = vmatpush.msra.mxu0 %v2439
    %2577 = vmatpush.msra.mxu0 %v2437
    %2578 = vmatpush.msra.mxu0 %v2435
    %2579 = vmatpush.msra.mxu0 %v2433
    %2580 = vmatpush.msra.mxu0 %v2431
    %2581 = vmatpush.msra.mxu0 %v2429
    %2582 = vmatpush.msra.mxu0 %v2427
    %2583 = vmatpush.msra.mxu0 %v2425
    %2584 = vmatpush.msra.mxu0 %v2423
    %2585 = vmatmul.f32.gmra.mxu0 %v2409
    %v2586 = vpop.f32.mrf.mxu0
    %v2587 = vadd.f32 0.0, %v2586
    %2588 = vdwg.mxu0
    %2589 = vmatpush.msra.mxu0 %v2485
    %2590 = vmatpush.msra.mxu0 %v2483
    %2591 = vmatpush.msra.mxu0 %v2481
    %2592 = vmatpush.msra.mxu0 %v2479
    %2593 = vmatpush.msra.mxu0 %v2477
    %2594 = vmatpush.msra.mxu0 %v2475
    %2595 = vmatpush.msra.mxu0 %v2473
    %2596 = vmatpush.msra.mxu0 %v2471
    %2597 = vmatpush.msra.mxu0 %v2469
    %2598 = vmatpush.msra.mxu0 %v2467
    %2599 = vmatpush.msra.mxu0 %v2465
    %2600 = vmatpush.msra.mxu0 %v2463
    %2601 = vmatpush.msra.mxu0 %v2461
    %2602 = vmatpush.msra.mxu0 %v2459
    %2603 = vmatpush.msra.mxu0 %v2457
    %2604 = vmatpush.msra.mxu0 %v2455
    %2605 = vmatmul.f32.gmra.mxu0 %v2422
    %v2606 = vpop.f32.mrf.mxu0
    %v2607 = vadd.f32 %v2587, %v2606
    %2608 = vdwg.mxu0
    %2609 = vmatpush.msra.mxu0 %v2454
    %2610 = vmatpush.msra.mxu0 %v2452
    %2611 = vmatpush.msra.mxu0 %v2450
    %2612 = vmatpush.msra.mxu0 %v2448
    %2613 = vmatpush.msra.mxu0 %v2446
    %2614 = vmatpush.msra.mxu0 %v2444
    %2615 = vmatpush.msra.mxu0 %v2442
    %2616 = vmatpush.msra.mxu0 %v2440
    %2617 = vmatpush.msra.mxu0 %v2438
    %2618 = vmatpush.msra.mxu0 %v2436
    %2619 = vmatpush.msra.mxu0 %v2434
    %2620 = vmatpush.msra.mxu0 %v2432
    %2621 = vmatpush.msra.mxu0 %v2430
    %2622 = vmatpush.msra.mxu0 %v2428
    %2623 = vmatpush.msra.mxu0 %v2426
    %2624 = vmatpush.msra.mxu0 %v2424
    %2625 = vmatmul.f32.gmra.mxu0 %v2409
    %v2626 = vpop.f32.mrf.mxu0
    %v2627 = vadd.f32 0.0, %v2626
    %2628 = vdwg.mxu0
    %2629 = vmatpush.msra.mxu0 %v2486
    %2630 = vmatpush.msra.mxu0 %v2484
    %2631 = vmatpush.msra.mxu0 %v2482
    %2632 = vmatpush.msra.mxu0 %v2480
    %2633 = vmatpush.msra.mxu0 %v2478
    %2634 = vmatpush.msra.mxu0 %v2476
    %2635 = vmatpush.msra.mxu0 %v2474
    %2636 = vmatpush.msra.mxu0 %v2472
    %2637 = vmatpush.msra.mxu0 %v2470
    %2638 = vmatpush.msra.mxu0 %v2468
    %2639 = vmatpush.msra.mxu0 %v2466
    %2640 = vmatpush.msra.mxu0 %v2464
    %2641 = vmatpush.msra.mxu0 %v2462
    %2642 = vmatpush.msra.mxu0 %v2460
    %2643 = vmatpush.msra.mxu0 %v2458
    %2644 = vmatpush.msra.mxu0 %v2456
    %2645 = vmatmul.f32.gmra.mxu0 %v2422
    %v2646 = vpop.f32.mrf.mxu0
    %v2647 = vadd.f32 %v2627, %v2646
    %2648 = vdwg.mxu0
    %v2649 = vmul.f32 %v2607, 0.00048828125
    %v2650 = vmul.f32 %v2647, 0.00048828125
    %v2651 = vmul.f32 %v2567, %v2567
    %v2652 = vmul.f32 %v2568, %v2568
    %v2653 = vsub.f32 %v2649, %v2651
    %v2654 = vsub.f32 %v2650, %v2652
    %v2655 = vadd.f32 %v2653, 1e-05
    %v2656 = vadd.f32 %v2654, 1e-05
    %v2657 = vrsqrt.pop %v2655
    %v2658 = vmul.f32 %v2657, %v2655
    %v2659 = vmul.f32 %v2658, %v2657
    %v2660 = vmul.f32 0.5, %v2659
    %v2661 = vsub.f32 1.5, %v2660
    %v2662 = vmul.f32 %v2657, %v2661
    %vm2663 = vweird.f32 %v2655
    %vm2664 = vweird.f32 %v2657
    %vm2665 = vmor %vm2663, %vm2664
    %v2666 = vsel %vm2665, %v2657, %v2662
    %v2667 = vrsqrt.pop %v2656
    %v2668 = vmul.f32 %v2667, %v2656
    %v2669 = vmul.f32 %v2668, %v2667
    %v2670 = vmul.f32 0.5, %v2669
    %v2671 = vsub.f32 1.5, %v2670
    %v2672 = vmul.f32 %v2667, %v2671
    %vm2673 = vweird.f32 %v2656
    %vm2674 = vweird.f32 %v2667
    %vm2675 = vmor %vm2673, %vm2674
    %v2676 = vsel %vm2675, %v2667, %v2672
    %s2677 = scalar_lea.vmem %s6, 1
    %v2678 = vld [vmem:[%s2677] ss:$4 sm:$0x3]
    %v2681 = vrot.slane %v2676, 7
    %v2682 = vsel %vm1030, %v2666, %v2681
    %v2684 = vmul.f32 %v2678, %v2682
    %s2685 = scalar_lea.vmem %s7, 1
    %v2686 = vld [vmem:[%s2685] ss:$4 sm:$0x3]
    %v2688 = vperm.slane %v2684, 0
    %v2689 = vperm.slane %v2684, 1
    %v2692 = vmul.f32 %v2567, %v2688
    %v2693 = vmul.f32 %v2568, %v2689
    %v2696 = vrot.slane %v2693, 7
    %v2697 = vsel %vm1030, %v2692, %v2696
    %v2699 = vsub.f32 %v2686, %v2697
    %v2700 = vmul.f32 %v2339, %v2688
    %v2701 = vmul.f32 %v2340, %v2689
    %v2702 = vmul.f32 %v2341, %v2688
    %v2703 = vmul.f32 %v2342, %v2689
    %v2704 = vmul.f32 %v2343, %v2688
    %v2705 = vmul.f32 %v2344, %v2689
    %v2706 = vmul.f32 %v2345, %v2688
    %v2707 = vmul.f32 %v2346, %v2689
    %v2708 = vmul.f32 %v2347, %v2688
    %v2709 = vmul.f32 %v2348, %v2689
    %v2710 = vmul.f32 %v2349, %v2688
    %v2711 = vmul.f32 %v2350, %v2689
    %v2712 = vmul.f32 %v2351, %v2688
    %v2713 = vmul.f32 %v2352, %v2689
    %v2714 = vmul.f32 %v2353, %v2688
    %v2715 = vmul.f32 %v2354, %v2689
    %v2717 = vperm.slane %v2699, 0
    %v2718 = vperm.slane %v2699, 1
    %v2721 = vadd.f32 %v2700, %v2717
    %v2722 = vadd.f32 %v2701, %v2718
    %v2723 = vadd.f32 %v2702, %v2717
    %v2724 = vadd.f32 %v2703, %v2718
    %v2725 = vadd.f32 %v2704, %v2717
    %v2726 = vadd.f32 %v2705, %v2718
    %v2727 = vadd.f32 %v2706, %v2717
    %v2728 = vadd.f32 %v2707, %v2718
    %v2729 = vadd.f32 %v2708, %v2717
    %v2730 = vadd.f32 %v2709, %v2718
    %v2731 = vadd.f32 %v2710, %v2717
    %v2732 = vadd.f32 %v2711, %v2718
    %v2733 = vadd.f32 %v2712, %v2717
    %v2734 = vadd.f32 %v2713, %v2718
    %v2735 = vadd.f32 %v2714, %v2717
    %v2736 = vadd.f32 %v2715, %v2718
    %v2737 = vmax.f32 %v2721, 0.0
    %v2738 = vmax.f32 %v2722, 0.0
    %v2739 = vmax.f32 %v2723, 0.0
    %v2740 = vmax.f32 %v2724, 0.0
    %v2741 = vmax.f32 %v2725, 0.0
    %v2742 = vmax.f32 %v2726, 0.0
    %v2743 = vmax.f32 %v2727, 0.0
    %v2744 = vmax.f32 %v2728, 0.0
    %v2745 = vmax.f32 %v2729, 0.0
    %v2746 = vmax.f32 %v2730, 0.0
    %v2747 = vmax.f32 %v2731, 0.0
    %v2748 = vmax.f32 %v2732, 0.0
    %v2749 = vmax.f32 %v2733, 0.0
    %v2750 = vmax.f32 %v2734, 0.0
    %v2751 = vmax.f32 %v2735, 0.0
    %v2752 = vmax.f32 %v2736, 0.0
    %v2753 = vld [vmem:[%s10] sm:$0xff]
    %v2754 = vld [vmem:[%s10 + $0x8] sm:$0xff]
    %v2755 = vld [vmem:[%s10 + $0x10] sm:$0xff]
    %v2756 = vld [vmem:[%s10 + $0x18] sm:$0xff]
    %vm2757 = vcmask 523264
    %v2759 = vsel %vm2757, %v2753, 0
    %v2762 = vsel %vm2757, %v2754, 0
    %v2765 = vsel %vm2757, %v2755, 0
    %v2768 = vsel %vm2757, %v2756, 0
    %2770 = vmatpush.msra.mxu0 0.0
    %2771 = vmatpush.msra.mxu0 0.0
    %2772 = vmatpush.msra.mxu0 0.0
    %2773 = vmatpush.msra.mxu0 0.0
    %2774 = vmatpush.msra.mxu0 0.0
    %2775 = vmatpush.msra.mxu0 0.0
    %2776 = vmatpush.msra.mxu0 0.0
    %2777 = vmatpush.msra.mxu0 0.0
    %2778 = vmatpush.msra.mxu0 %v2751
    %2779 = vmatpush.msra.mxu0 %v2749
    %2780 = vmatpush.msra.mxu0 %v2747
    %2781 = vmatpush.msra.mxu0 %v2745
    %2782 = vmatpush.msra.mxu0 %v2743
    %2783 = vmatpush.msra.mxu0 %v2741
    %2784 = vmatpush.msra.mxu0 %v2739
    %2785 = vmatpush.msra.mxu0 %v2737
    %2786 = vmatmul.f32.gmra.mxu0 %v2759
    %v2787 = vpop.f32.mrf.mxu0
    %v2788 = vadd.f32 0.0, %v2787
    %2789 = vmatmul.f32.gmra.mxu0 %v2762
    %v2790 = vpop.f32.mrf.mxu0
    %v2791 = vadd.f32 0.0, %v2790
    %2792 = vmatmul.f32.gmra.mxu0 %v2765
    %v2793 = vpop.f32.mrf.mxu0
    %v2794 = vadd.f32 0.0, %v2793
    %2795 = vmatmul.f32.gmra.mxu0 %v2768
    %v2796 = vpop.f32.mrf.mxu0
    %v2797 = vadd.f32 0.0, %v2796
    %2798 = vdwg.mxu0
    %2799 = vmatpush.msra.mxu0 0.0
    %2800 = vmatpush.msra.mxu0 0.0
    %2801 = vmatpush.msra.mxu0 0.0
    %2802 = vmatpush.msra.mxu0 0.0
    %2803 = vmatpush.msra.mxu0 0.0
    %2804 = vmatpush.msra.mxu0 0.0
    %2805 = vmatpush.msra.mxu0 0.0
    %2806 = vmatpush.msra.mxu0 0.0
    %2807 = vmatpush.msra.mxu0 %v2752
    %2808 = vmatpush.msra.mxu0 %v2750
    %2809 = vmatpush.msra.mxu0 %v2748
    %2810 = vmatpush.msra.mxu0 %v2746
    %2811 = vmatpush.msra.mxu0 %v2744
    %2812 = vmatpush.msra.mxu0 %v2742
    %2813 = vmatpush.msra.mxu0 %v2740
    %2814 = vmatpush.msra.mxu0 %v2738
    %2815 = vmatmul.f32.gmra.mxu0 %v2759
    %v2816 = vpop.f32.mrf.mxu0
    %v2817 = vadd.f32 0.0, %v2816
    %2818 = vmatmul.f32.gmra.mxu0 %v2762
    %v2819 = vpop.f32.mrf.mxu0
    %v2820 = vadd.f32 0.0, %v2819
    %2821 = vmatmul.f32.gmra.mxu0 %v2765
    %v2822 = vpop.f32.mrf.mxu0
    %v2823 = vadd.f32 0.0, %v2822
    %2824 = vmatmul.f32.gmra.mxu0 %v2768
    %v2825 = vpop.f32.mrf.mxu0
    %v2826 = vadd.f32 0.0, %v2825
    %2827 = vdwg.mxu0
    %s2828 = scalar_lea.vmem %s10, 32
    %v2829 = vld [vmem:[%s2828] sm:$0xff]
    %v2830 = vld [vmem:[%s2828 + $0x8] sm:$0xff]
    %v2831 = vld [vmem:[%s2828 + $0x10] sm:$0xff]
    %v2832 = vld [vmem:[%s2828 + $0x18] sm:$0xff]
    %v2834 = vsel %vm2757, %v2829, 0
    %v2837 = vsel %vm2757, %v2830, 0
    %v2840 = vsel %vm2757, %v2831, 0
    %v2843 = vsel %vm2757, %v2832, 0
    %2845 = vmatpush.msra.mxu0 0.0
    %2846 = vmatpush.msra.mxu0 0.0
    %2847 = vmatpush.msra.mxu0 0.0
    %2848 = vmatpush.msra.mxu0 0.0
    %2849 = vmatpush.msra.mxu0 0.0
    %2850 = vmatpush.msra.mxu0 0.0
    %2851 = vmatpush.msra.mxu0 0.0
    %2852 = vmatpush.msra.mxu0 0.0
    %2853 = vmatpush.msra.mxu0 %v2751
    %2854 = vmatpush.msra.mxu0 %v2749
    %2855 = vmatpush.msra.mxu0 %v2747
    %2856 = vmatpush.msra.mxu0 %v2745
    %2857 = vmatpush.msra.mxu0 %v2743
    %2858 = vmatpush.msra.mxu0 %v2741
    %2859 = vmatpush.msra.mxu0 %v2739
    %2860 = vmatpush.msra.mxu0 %v2737
    %2861 = vmatmul.f32.gmra.mxu0 %v2834
    %v2862 = vpop.f32.mrf.mxu0
    %v2863 = vadd.f32 0.0, %v2862
    %2864 = vmatmul.f32.gmra.mxu0 %v2837
    %v2865 = vpop.f32.mrf.mxu0
    %v2866 = vadd.f32 0.0, %v2865
    %2867 = vmatmul.f32.gmra.mxu0 %v2840
    %v2868 = vpop.f32.mrf.mxu0
    %v2869 = vadd.f32 0.0, %v2868
    %2870 = vmatmul.f32.gmra.mxu0 %v2843
    %v2871 = vpop.f32.mrf.mxu0
    %v2872 = vadd.f32 0.0, %v2871
    %2873 = vdwg.mxu0
    %2874 = vmatpush.msra.mxu0 0.0
    %2875 = vmatpush.msra.mxu0 0.0
    %2876 = vmatpush.msra.mxu0 0.0
    %2877 = vmatpush.msra.mxu0 0.0
    %2878 = vmatpush.msra.mxu0 0.0
    %2879 = vmatpush.msra.mxu0 0.0
    %2880 = vmatpush.msra.mxu0 0.0
    %2881 = vmatpush.msra.mxu0 0.0
    %2882 = vmatpush.msra.mxu0 %v2752
    %2883 = vmatpush.msra.mxu0 %v2750
    %2884 = vmatpush.msra.mxu0 %v2748
    %2885 = vmatpush.msra.mxu0 %v2746
    %2886 = vmatpush.msra.mxu0 %v2744
    %2887 = vmatpush.msra.mxu0 %v2742
    %2888 = vmatpush.msra.mxu0 %v2740
    %2889 = vmatpush.msra.mxu0 %v2738
    %2890 = vmatmul.f32.gmra.mxu0 %v2834
    %v2891 = vpop.f32.mrf.mxu0
    %v2892 = vadd.f32 0.0, %v2891
    %2893 = vmatmul.f32.gmra.mxu0 %v2837
    %v2894 = vpop.f32.mrf.mxu0
    %v2895 = vadd.f32 0.0, %v2894
    %2896 = vmatmul.f32.gmra.mxu0 %v2840
    %v2897 = vpop.f32.mrf.mxu0
    %v2898 = vadd.f32 0.0, %v2897
    %2899 = vmatmul.f32.gmra.mxu0 %v2843
    %v2900 = vpop.f32.mrf.mxu0
    %v2901 = vadd.f32 0.0, %v2900
    %2902 = vdwg.mxu0
    %v2903 = vmax.f32 %v2788, %v2863
    %v2904 = vmax.f32 %v2817, %v2892
    %v2905 = vmax.f32 %v2791, %v2866
    %v2906 = vmax.f32 %v2820, %v2895
    %v2907 = vmax.f32 %v2794, %v2869
    %v2908 = vmax.f32 %v2823, %v2898
    %v2909 = vmax.f32 %v2797, %v2872
    %v2910 = vmax.f32 %v2826, %v2901
    %v2911 = vld [vmem:[#allocation16] sm:$0xff]
    %v2912 = vld [vmem:[#allocation16 + $0x8] sm:$0xff]
    %v2913 = vld [vmem:[#allocation16 + $0x10] sm:$0xff]
    %v2914 = vld [vmem:[#allocation16 + $0x18] sm:$0xff]
    %v2915 = vld [vmem:[#allocation16 + $0x20] sm:$0xff]
    %v2916 = vld [vmem:[#allocation16 + $0x28] sm:$0xff]
    %v2917 = vld [vmem:[#allocation16 + $0x30] sm:$0xff]
    %v2918 = vld [vmem:[#allocation16 + $0x38] sm:$0xff]
    %v2919 = vld [vmem:[#allocation16 + $0x40] sm:$0xff]
    %v2920 = vld [vmem:[#allocation16 + $0x48] sm:$0xff]
    %v2921 = vld [vmem:[#allocation16 + $0x50] sm:$0xff]
    %v2922 = vld [vmem:[#allocation16 + $0x58] sm:$0xff]
    %v2923 = vld [vmem:[#allocation16 + $0x60] sm:$0xff]
    %v2924 = vld [vmem:[#allocation16 + $0x68] sm:$0xff]
    %v2925 = vld [vmem:[#allocation16 + $0x70] sm:$0xff]
    %v2926 = vld [vmem:[#allocation16 + $0x78] sm:$0xff]
    %v2927 = vld [vmem:[#allocation16 + $0x80] sm:$0xff]
    %v2928 = vld [vmem:[#allocation16 + $0x88] sm:$0xff]
    %v2929 = vld [vmem:[#allocation16 + $0x90] sm:$0xff]
    %v2930 = vld [vmem:[#allocation16 + $0x98] sm:$0xff]
    %v2931 = vld [vmem:[#allocation16 + $0xa0] sm:$0xff]
    %v2932 = vld [vmem:[#allocation16 + $0xa8] sm:$0xff]
    %v2933 = vld [vmem:[#allocation16 + $0xb0] sm:$0xff]
    %v2934 = vld [vmem:[#allocation16 + $0xb8] sm:$0xff]
    %v2935 = vld [vmem:[#allocation16 + $0xc0] sm:$0xff]
    %v2936 = vld [vmem:[#allocation16 + $0xc8] sm:$0xff]
    %v2937 = vld [vmem:[#allocation16 + $0xd0] sm:$0xff]
    %v2938 = vld [vmem:[#allocation16 + $0xd8] sm:$0xff]
    %v2939 = vld [vmem:[#allocation16 + $0xe0] sm:$0xff]
    %v2940 = vld [vmem:[#allocation16 + $0xe8] sm:$0xff]
    %v2941 = vld [vmem:[#allocation16 + $0xf0] sm:$0xff]
    %v2942 = vld [vmem:[#allocation16 + $0xf8] sm:$0xff]
    %2943 = vmatpush.msra.mxu0 %v2926
    %2944 = vmatpush.msra.mxu0 %v2925
    %2945 = vmatpush.msra.mxu0 %v2924
    %2946 = vmatpush.msra.mxu0 %v2923
    %2947 = vmatpush.msra.mxu0 %v2922
    %2948 = vmatpush.msra.mxu0 %v2921
    %2949 = vmatpush.msra.mxu0 %v2920
    %2950 = vmatpush.msra.mxu0 %v2919
    %2951 = vmatpush.msra.mxu0 %v2918
    %2952 = vmatpush.msra.mxu0 %v2917
    %2953 = vmatpush.msra.mxu0 %v2916
    %2954 = vmatpush.msra.mxu0 %v2915
    %2955 = vmatpush.msra.mxu0 %v2914
    %2956 = vmatpush.msra.mxu0 %v2913
    %2957 = vmatpush.msra.mxu0 %v2912
    %2958 = vmatpush.msra.mxu0 %v2911
    %2959 = vmatmul.f32.gmra.mxu0 %v2903
    %v2960 = vpop.f32.mrf.mxu0
    %v2961 = vadd.f32 0.0, %v2960
    %2962 = vmatmul.f32.gmra.mxu0 %v2905
    %v2963 = vpop.f32.mrf.mxu0
    %v2964 = vadd.f32 0.0, %v2963
    %2965 = vmatmul.f32.gmra.mxu0 %v2907
    %v2966 = vpop.f32.mrf.mxu0
    %v2967 = vadd.f32 0.0, %v2966
    %2968 = vmatmul.f32.gmra.mxu0 %v2909
    %v2969 = vpop.f32.mrf.mxu0
    %v2970 = vadd.f32 0.0, %v2969
    %2971 = vdwg.mxu0
    %2972 = vmatpush.msra.mxu0 %v2942
    %2973 = vmatpush.msra.mxu0 %v2941
    %2974 = vmatpush.msra.mxu0 %v2940
    %2975 = vmatpush.msra.mxu0 %v2939
    %2976 = vmatpush.msra.mxu0 %v2938
    %2977 = vmatpush.msra.mxu0 %v2937
    %2978 = vmatpush.msra.mxu0 %v2936
    %2979 = vmatpush.msra.mxu0 %v2935
    %2980 = vmatpush.msra.mxu0 %v2934
    %2981 = vmatpush.msra.mxu0 %v2933
    %2982 = vmatpush.msra.mxu0 %v2932
    %2983 = vmatpush.msra.mxu0 %v2931
    %2984 = vmatpush.msra.mxu0 %v2930
    %2985 = vmatpush.msra.mxu0 %v2929
    %2986 = vmatpush.msra.mxu0 %v2928
    %2987 = vmatpush.msra.mxu0 %v2927
    %2988 = vmatmul.f32.gmra.mxu0 %v2904
    %v2989 = vpop.f32.mrf.mxu0
    %v2990 = vadd.f32 %v2961, %v2989
    %2991 = vmatmul.f32.gmra.mxu0 %v2906
    %v2992 = vpop.f32.mrf.mxu0
    %v2993 = vadd.f32 %v2964, %v2992
    %2994 = vmatmul.f32.gmra.mxu0 %v2908
    %v2995 = vpop.f32.mrf.mxu0
    %v2996 = vadd.f32 %v2967, %v2995
    %2997 = vmatmul.f32.gmra.mxu0 %v2910
    %v2998 = vpop.f32.mrf.mxu0
    %v2999 = vadd.f32 %v2970, %v2998
    %3000 = vdwg.mxu0
    %s3001 = scalar_lea.vmem [#allocation16], 256
    %v3002 = vld [vmem:[%s3001] sm:$0xff]
    %v3003 = vld [vmem:[%s3001 + $0x8] sm:$0xff]
    %v3004 = vld [vmem:[%s3001 + $0x10] sm:$0xff]
    %v3005 = vld [vmem:[%s3001 + $0x18] sm:$0xff]
    %v3006 = vld [vmem:[%s3001 + $0x20] sm:$0xff]
    %v3007 = vld [vmem:[%s3001 + $0x28] sm:$0xff]
    %v3008 = vld [vmem:[%s3001 + $0x30] sm:$0xff]
    %v3009 = vld [vmem:[%s3001 + $0x38] sm:$0xff]
    %v3010 = vld [vmem:[%s3001 + $0x40] sm:$0xff]
    %v3011 = vld [vmem:[%s3001 + $0x48] sm:$0xff]
    %v3012 = vld [vmem:[%s3001 + $0x50] sm:$0xff]
    %v3013 = vld [vmem:[%s3001 + $0x58] sm:$0xff]
    %v3014 = vld [vmem:[%s3001 + $0x60] sm:$0xff]
    %v3015 = vld [vmem:[%s3001 + $0x68] sm:$0xff]
    %v3016 = vld [vmem:[%s3001 + $0x70] sm:$0xff]
    %v3017 = vld [vmem:[%s3001 + $0x78] sm:$0xff]
    %v3018 = vld [vmem:[%s3001 + $0x80] sm:$0xff]
    %v3019 = vld [vmem:[%s3001 + $0x88] sm:$0xff]
    %v3020 = vld [vmem:[%s3001 + $0x90] sm:$0xff]
    %v3021 = vld [vmem:[%s3001 + $0x98] sm:$0xff]
    %v3022 = vld [vmem:[%s3001 + $0xa0] sm:$0xff]
    %v3023 = vld [vmem:[%s3001 + $0xa8] sm:$0xff]
    %v3024 = vld [vmem:[%s3001 + $0xb0] sm:$0xff]
    %v3025 = vld [vmem:[%s3001 + $0xb8] sm:$0xff]
    %v3026 = vld [vmem:[%s3001 + $0xc0] sm:$0xff]
    %v3027 = vld [vmem:[%s3001 + $0xc8] sm:$0xff]
    %v3028 = vld [vmem:[%s3001 + $0xd0] sm:$0xff]
    %v3029 = vld [vmem:[%s3001 + $0xd8] sm:$0xff]
    %v3030 = vld [vmem:[%s3001 + $0xe0] sm:$0xff]
    %v3031 = vld [vmem:[%s3001 + $0xe8] sm:$0xff]
    %v3032 = vld [vmem:[%s3001 + $0xf0] sm:$0xff]
    %v3033 = vld [vmem:[%s3001 + $0xf8] sm:$0xff]
    %3034 = vmatpush.msra.mxu0 %v3017
    %3035 = vmatpush.msra.mxu0 %v3016
    %3036 = vmatpush.msra.mxu0 %v3015
    %3037 = vmatpush.msra.mxu0 %v3014
    %3038 = vmatpush.msra.mxu0 %v3013
    %3039 = vmatpush.msra.mxu0 %v3012
    %3040 = vmatpush.msra.mxu0 %v3011
    %3041 = vmatpush.msra.mxu0 %v3010
    %3042 = vmatpush.msra.mxu0 %v3009
    %3043 = vmatpush.msra.mxu0 %v3008
    %3044 = vmatpush.msra.mxu0 %v3007
    %3045 = vmatpush.msra.mxu0 %v3006
    %3046 = vmatpush.msra.mxu0 %v3005
    %3047 = vmatpush.msra.mxu0 %v3004
    %3048 = vmatpush.msra.mxu0 %v3003
    %3049 = vmatpush.msra.mxu0 %v3002
    %3050 = vmatmul.f32.gmra.mxu0 %v2903
    %v3051 = vpop.f32.mrf.mxu0
    %v3052 = vadd.f32 0.0, %v3051
    %3053 = vmatmul.f32.gmra.mxu0 %v2905
    %v3054 = vpop.f32.mrf.mxu0
    %v3055 = vadd.f32 0.0, %v3054
    %3056 = vmatmul.f32.gmra.mxu0 %v2907
    %v3057 = vpop.f32.mrf.mxu0
    %v3058 = vadd.f32 0.0, %v3057
    %3059 = vmatmul.f32.gmra.mxu0 %v2909
    %v3060 = vpop.f32.mrf.mxu0
    %v3061 = vadd.f32 0.0, %v3060
    %3062 = vdwg.mxu0
    %3063 = vmatpush.msra.mxu0 %v3033
    %3064 = vmatpush.msra.mxu0 %v3032
    %3065 = vmatpush.msra.mxu0 %v3031
    %3066 = vmatpush.msra.mxu0 %v3030
    %3067 = vmatpush.msra.mxu0 %v3029
    %3068 = vmatpush.msra.mxu0 %v3028
    %3069 = vmatpush.msra.mxu0 %v3027
    %3070 = vmatpush.msra.mxu0 %v3026
    %3071 = vmatpush.msra.mxu0 %v3025
    %3072 = vmatpush.msra.mxu0 %v3024
    %3073 = vmatpush.msra.mxu0 %v3023
    %3074 = vmatpush.msra.mxu0 %v3022
    %3075 = vmatpush.msra.mxu0 %v3021
    %3076 = vmatpush.msra.mxu0 %v3020
    %3077 = vmatpush.msra.mxu0 %v3019
    %3078 = vmatpush.msra.mxu0 %v3018
    %3079 = vmatmul.f32.gmra.mxu0 %v2904
    %v3080 = vpop.f32.mrf.mxu0
    %v3081 = vadd.f32 %v3052, %v3080
    %3082 = vmatmul.f32.gmra.mxu0 %v2906
    %v3083 = vpop.f32.mrf.mxu0
    %v3084 = vadd.f32 %v3055, %v3083
    %3085 = vmatmul.f32.gmra.mxu0 %v2908
    %v3086 = vpop.f32.mrf.mxu0
    %v3087 = vadd.f32 %v3058, %v3086
    %3088 = vmatmul.f32.gmra.mxu0 %v2910
    %v3089 = vpop.f32.mrf.mxu0
    %v3090 = vadd.f32 %v3061, %v3089
    %3091 = vdwg.mxu0
    %v3092 = vmax.f32 %v2990, %v3081
    %v3093 = vmax.f32 %v2993, %v3084
    %v3094 = vmax.f32 %v2996, %v3087
    %v3095 = vmax.f32 %v2999, %v3090
    %3096 = vst [vmem:[#allocation3] sm:$0x1] 0.0
    %3097 = vst [vmem:[#allocation3 + $0x18] sm:$0x1] 0.0
    %3098 = vst [vmem:[#allocation3 + $0x11] sm:$0x1] 0.0
    %3099 = vst [vmem:[#allocation3 + $0x29] sm:$0x1] 0.0
    %3100 = vst [vmem:[#allocation3 + $0x1] sm:$0xff] %v3092
    %3101 = vst [vmem:[#allocation3 + $0x9] sm:$0xff] %v3093
    %3102 = vst [vmem:[#allocation3 + $0x19] sm:$0xff] %v3094
    %3103 = vst [vmem:[#allocation3 + $0x21] sm:$0xff] %v3095
    %v3104 = vld [vmem:[#allocation3] sm:$0xff]
    %v3105 = vld [vmem:[#allocation3 + $0x8] sm:$0xff]
    %v3106 = vld [vmem:[#allocation3 + $0x18] sm:$0xff]
    %v3107 = vld [vmem:[#allocation3 + $0x20] sm:$0xff]
    %v3108 = vpack.c.bf16 %v3105, %v3104
    %v3109 = vpack.c.bf16 %v3107, %v3106
    %v3110 = vld [vmem:[#allocation10] sm:$0xff]
    %v3111 = vld [vmem:[#allocation10 + $0x8] sm:$0xff]
    %v3112 = vld [vmem:[#allocation10 + $0x10] sm:$0xff]
    %v3113 = vld [vmem:[#allocation10 + $0x18] sm:$0xff]
    %v3114 = vld [vmem:[#allocation10 + $0x20] sm:$0xff]
    %v3115 = vld [vmem:[#allocation10 + $0x28] sm:$0xff]
    %v3116 = vld [vmem:[#allocation10 + $0x30] sm:$0xff]
    %v3117 = vld [vmem:[#allocation10 + $0x38] sm:$0xff]
    %v3118 = vld [vmem:[#allocation10 + $0x40] sm:$0xff]
    %v3119 = vld [vmem:[#allocation10 + $0x48] sm:$0xff]
    %v3120 = vld [vmem:[#allocation10 + $0x50] sm:$0xff]
    %v3121 = vld [vmem:[#allocation10 + $0x58] sm:$0xff]
    %v3122 = vld [vmem:[#allocation10 + $0x60] sm:$0xff]
    %v3123 = vld [vmem:[#allocation10 + $0x68] sm:$0xff]
    %v3124 = vld [vmem:[#allocation10 + $0x70] sm:$0xff]
    %v3125 = vld [vmem:[#allocation10 + $0x78] sm:$0xff]
    %v3126 = vld [vmem:[#allocation3 + $0x1] sm:$0xff]
    %v3127 = vld [vmem:[#allocation3 + $0x9] sm:$0xff]
    %v3128 = vld [vmem:[#allocation3 + $0x19] sm:$0xff]
    %v3129 = vld [vmem:[#allocation3 + $0x21] sm:$0xff]
    %v3130 = vpack.c.bf16 %v3127, %v3126
    %v3131 = vpack.c.bf16 %v3129, %v3128
    %s3132 = scalar_lea.vmem [#allocation10], 128
    %v3133 = vld [vmem:[%s3132] sm:$0xff]
    %v3134 = vld [vmem:[%s3132 + $0x8] sm:$0xff]
    %v3135 = vld [vmem:[%s3132 + $0x10] sm:$0xff]
    %v3136 = vld [vmem:[%s3132 + $0x18] sm:$0xff]
    %v3137 = vld [vmem:[%s3132 + $0x20] sm:$0xff]
    %v3138 = vld [vmem:[%s3132 + $0x28] sm:$0xff]
    %v3139 = vld [vmem:[%s3132 + $0x30] sm:$0xff]
    %v3140 = vld [vmem:[%s3132 + $0x38] sm:$0xff]
    %v3141 = vld [vmem:[%s3132 + $0x40] sm:$0xff]
    %v3142 = vld [vmem:[%s3132 + $0x48] sm:$0xff]
    %v3143 = vld [vmem:[%s3132 + $0x50] sm:$0xff]
    %v3144 = vld [vmem:[%s3132 + $0x58] sm:$0xff]
    %v3145 = vld [vmem:[%s3132 + $0x60] sm:$0xff]
    %v3146 = vld [vmem:[%s3132 + $0x68] sm:$0xff]
    %v3147 = vld [vmem:[%s3132 + $0x70] sm:$0xff]
    %v3148 = vld [vmem:[%s3132 + $0x78] sm:$0xff]
    %v3165 = vunpack.c.l.b16 %v3133
    %v3166 = vunpack.c.h.b16 %v3133
    %v3167 = vunpack.c.l.b16 %v3134
    %v3168 = vunpack.c.h.b16 %v3134
    %v3169 = vunpack.c.l.b16 %v3135
    %v3170 = vunpack.c.h.b16 %v3135
    %v3171 = vunpack.c.l.b16 %v3136
    %v3172 = vunpack.c.h.b16 %v3136
    %v3173 = vunpack.c.l.b16 %v3137
    %v3174 = vunpack.c.h.b16 %v3137
    %v3175 = vunpack.c.l.b16 %v3138
    %v3176 = vunpack.c.h.b16 %v3138
    %v3177 = vunpack.c.l.b16 %v3139
    %v3178 = vunpack.c.h.b16 %v3139
    %v3179 = vunpack.c.l.b16 %v3140
    %v3180 = vunpack.c.h.b16 %v3140
    %v3181 = vunpack.c.l.b16 %v3141
    %v3182 = vunpack.c.h.b16 %v3141
    %v3183 = vunpack.c.l.b16 %v3142
    %v3184 = vunpack.c.h.b16 %v3142
    %v3185 = vunpack.c.l.b16 %v3143
    %v3186 = vunpack.c.h.b16 %v3143
    %v3187 = vunpack.c.l.b16 %v3144
    %v3188 = vunpack.c.h.b16 %v3144
    %v3189 = vunpack.c.l.b16 %v3145
    %v3190 = vunpack.c.h.b16 %v3145
    %v3191 = vunpack.c.l.b16 %v3146
    %v3192 = vunpack.c.h.b16 %v3146
    %v3193 = vunpack.c.l.b16 %v3147
    %v3194 = vunpack.c.h.b16 %v3147
    %v3195 = vunpack.c.l.b16 %v3148
    %v3196 = vunpack.c.h.b16 %v3148
    %v3197 = vpack.c.b16 %v3167, %v3165
    %v3198 = vpack.c.b16 %v3168, %v3166
    %v3199 = vpack.c.b16 %v3171, %v3169
    %v3200 = vpack.c.b16 %v3172, %v3170
    %v3201 = vpack.c.b16 %v3175, %v3173
    %v3202 = vpack.c.b16 %v3176, %v3174
    %v3203 = vpack.c.b16 %v3179, %v3177
    %v3204 = vpack.c.b16 %v3180, %v3178
    %v3205 = vpack.c.b16 %v3183, %v3181
    %v3206 = vpack.c.b16 %v3184, %v3182
    %v3207 = vpack.c.b16 %v3187, %v3185
    %v3208 = vpack.c.b16 %v3188, %v3186
    %v3209 = vpack.c.b16 %v3191, %v3189
    %v3210 = vpack.c.b16 %v3192, %v3190
    %v3211 = vpack.c.b16 %v3195, %v3193
    %v3212 = vpack.c.b16 %v3196, %v3194
    %3229 = vmatpush.bf16.msra.mxu0 %v3211
    %3230 = vmatpush.bf16.msra.mxu0 %v3209
    %3231 = vmatpush.bf16.msra.mxu0 %v3207
    %3232 = vmatpush.bf16.msra.mxu0 %v3205
    %3233 = vmatpush.bf16.msra.mxu0 %v3203
    %3234 = vmatpush.bf16.msra.mxu0 %v3201
    %3235 = vmatpush.bf16.msra.mxu0 %v3199
    %3236 = vmatpush.bf16.msra.mxu0 %v3197
    %3237 = vmatmul.bf16.gmra.mxu0 %v3130
    %v3238 = vpop.f32.mrf.mxu0
    %v3239 = vadd.f32 0.0, %v3238
    %v3240 = vpop.f32.mrf.mxu0
    %v3241 = vadd.f32 0.0, %v3240
    %3242 = vmatmul.bf16.gmra.mxu0 %v3131
    %v3243 = vpop.f32.mrf.mxu0
    %v3244 = vadd.f32 0.0, %v3243
    %v3245 = vpop.f32.mrf.mxu0
    %v3246 = vadd.f32 0.0, %v3245
    %3247 = vdwg.mxu0
    %3248 = vmatpush.bf16.msra.mxu0 %v3212
    %3249 = vmatpush.bf16.msra.mxu0 %v3210
    %3250 = vmatpush.bf16.msra.mxu0 %v3208
    %3251 = vmatpush.bf16.msra.mxu0 %v3206
    %3252 = vmatpush.bf16.msra.mxu0 %v3204
    %3253 = vmatpush.bf16.msra.mxu0 %v3202
    %3254 = vmatpush.bf16.msra.mxu0 %v3200
    %3255 = vmatpush.bf16.msra.mxu0 %v3198
    %3256 = vmatmul.bf16.gmra.mxu0 %v3130
    %v3257 = vpop.f32.mrf.mxu0
    %v3258 = vadd.f32 0.0, %v3257
    %v3259 = vpop.f32.mrf.mxu0
    %v3260 = vadd.f32 0.0, %v3259
    %3261 = vmatmul.bf16.gmra.mxu0 %v3131
    %v3262 = vpop.f32.mrf.mxu0
    %v3263 = vadd.f32 0.0, %v3262
    %v3264 = vpop.f32.mrf.mxu0
    %v3265 = vadd.f32 0.0, %v3264
    %3266 = vdwg.mxu0
    %v3283 = vunpack.c.l.b16 %v3110
    %v3284 = vunpack.c.h.b16 %v3110
    %v3285 = vunpack.c.l.b16 %v3111
    %v3286 = vunpack.c.h.b16 %v3111
    %v3287 = vunpack.c.l.b16 %v3112
    %v3288 = vunpack.c.h.b16 %v3112
    %v3289 = vunpack.c.l.b16 %v3113
    %v3290 = vunpack.c.h.b16 %v3113
    %v3291 = vunpack.c.l.b16 %v3114
    %v3292 = vunpack.c.h.b16 %v3114
    %v3293 = vunpack.c.l.b16 %v3115
    %v3294 = vunpack.c.h.b16 %v3115
    %v3295 = vunpack.c.l.b16 %v3116
    %v3296 = vunpack.c.h.b16 %v3116
    %v3297 = vunpack.c.l.b16 %v3117
    %v3298 = vunpack.c.h.b16 %v3117
    %v3299 = vunpack.c.l.b16 %v3118
    %v3300 = vunpack.c.h.b16 %v3118
    %v3301 = vunpack.c.l.b16 %v3119
    %v3302 = vunpack.c.h.b16 %v3119
    %v3303 = vunpack.c.l.b16 %v3120
    %v3304 = vunpack.c.h.b16 %v3120
    %v3305 = vunpack.c.l.b16 %v3121
    %v3306 = vunpack.c.h.b16 %v3121
    %v3307 = vunpack.c.l.b16 %v3122
    %v3308 = vunpack.c.h.b16 %v3122
    %v3309 = vunpack.c.l.b16 %v3123
    %v3310 = vunpack.c.h.b16 %v3123
    %v3311 = vunpack.c.l.b16 %v3124
    %v3312 = vunpack.c.h.b16 %v3124
    %v3313 = vunpack.c.l.b16 %v3125
    %v3314 = vunpack.c.h.b16 %v3125
    %v3315 = vpack.c.b16 %v3285, %v3283
    %v3316 = vpack.c.b16 %v3286, %v3284
    %v3317 = vpack.c.b16 %v3289, %v3287
    %v3318 = vpack.c.b16 %v3290, %v3288
    %v3319 = vpack.c.b16 %v3293, %v3291
    %v3320 = vpack.c.b16 %v3294, %v3292
    %v3321 = vpack.c.b16 %v3297, %v3295
    %v3322 = vpack.c.b16 %v3298, %v3296
    %v3323 = vpack.c.b16 %v3301, %v3299
    %v3324 = vpack.c.b16 %v3302, %v3300
    %v3325 = vpack.c.b16 %v3305, %v3303
    %v3326 = vpack.c.b16 %v3306, %v3304
    %v3327 = vpack.c.b16 %v3309, %v3307
    %v3328 = vpack.c.b16 %v3310, %v3308
    %v3329 = vpack.c.b16 %v3313, %v3311
    %v3330 = vpack.c.b16 %v3314, %v3312
    %3347 = vmatpush.bf16.msra.mxu0 %v3329
    %3348 = vmatpush.bf16.msra.mxu0 %v3327
    %3349 = vmatpush.bf16.msra.mxu0 %v3325
    %3350 = vmatpush.bf16.msra.mxu0 %v3323
    %3351 = vmatpush.bf16.msra.mxu0 %v3321
    %3352 = vmatpush.bf16.msra.mxu0 %v3319
    %3353 = vmatpush.bf16.msra.mxu0 %v3317
    %3354 = vmatpush.bf16.msra.mxu0 %v3315
    %3355 = vmatmul.bf16.gmra.mxu0 %v3108
    %v3356 = vpop.f32.mrf.mxu0
    %v3357 = vadd.f32 %v3239, %v3356
    %v3358 = vpop.f32.mrf.mxu0
    %v3359 = vadd.f32 %v3241, %v3358
    %3360 = vmatmul.bf16.gmra.mxu0 %v3109
    %v3361 = vpop.f32.mrf.mxu0
    %v3362 = vadd.f32 %v3244, %v3361
    %v3363 = vpop.f32.mrf.mxu0
    %v3364 = vadd.f32 %v3246, %v3363
    %3365 = vdwg.mxu0
    %3366 = vmatpush.bf16.msra.mxu0 %v3330
    %3367 = vmatpush.bf16.msra.mxu0 %v3328
    %3368 = vmatpush.bf16.msra.mxu0 %v3326
    %3369 = vmatpush.bf16.msra.mxu0 %v3324
    %3370 = vmatpush.bf16.msra.mxu0 %v3322
    %3371 = vmatpush.bf16.msra.mxu0 %v3320
    %3372 = vmatpush.bf16.msra.mxu0 %v3318
    %3373 = vmatpush.bf16.msra.mxu0 %v3316
    %3374 = vmatmul.bf16.gmra.mxu0 %v3108
    %v3375 = vpop.f32.mrf.mxu0
    %v3376 = vadd.f32 %v3258, %v3375
    %v3377 = vpop.f32.mrf.mxu0
    %v3378 = vadd.f32 %v3260, %v3377
    %3379 = vmatmul.bf16.gmra.mxu0 %v3109
    %v3380 = vpop.f32.mrf.mxu0
    %v3381 = vadd.f32 %v3263, %v3380
    %v3382 = vpop.f32.mrf.mxu0
    %v3383 = vadd.f32 %v3265, %v3382
    %3384 = vdwg.mxu0
    %v3385 = vld [vmem:[#allocation3 + $0x2] sm:$0xff]
    %v3386 = vld [vmem:[#allocation3 + $0xa] sm:$0xff]
    %v3387 = vld [vmem:[#allocation3 + $0x1a] sm:$0xff]
    %v3388 = vld [vmem:[#allocation3 + $0x22] sm:$0xff]
    %v3389 = vpack.c.bf16 %v3386, %v3385
    %v3390 = vpack.c.bf16 %v3388, %v3387
    %s3391 = scalar_lea.vmem [#allocation10], 256
    %v3392 = vld [vmem:[%s3391] sm:$0xff]
    %v3393 = vld [vmem:[%s3391 + $0x8] sm:$0xff]
    %v3394 = vld [vmem:[%s3391 + $0x10] sm:$0xff]
    %v3395 = vld [vmem:[%s3391 + $0x18] sm:$0xff]
    %v3396 = vld [vmem:[%s3391 + $0x20] sm:$0xff]
    %v3397 = vld [vmem:[%s3391 + $0x28] sm:$0xff]
    %v3398 = vld [vmem:[%s3391 + $0x30] sm:$0xff]
    %v3399 = vld [vmem:[%s3391 + $0x38] sm:$0xff]
    %v3400 = vld [vmem:[%s3391 + $0x40] sm:$0xff]
    %v3401 = vld [vmem:[%s3391 + $0x48] sm:$0xff]
    %v3402 = vld [vmem:[%s3391 + $0x50] sm:$0xff]
    %v3403 = vld [vmem:[%s3391 + $0x58] sm:$0xff]
    %v3404 = vld [vmem:[%s3391 + $0x60] sm:$0xff]
    %v3405 = vld [vmem:[%s3391 + $0x68] sm:$0xff]
    %v3406 = vld [vmem:[%s3391 + $0x70] sm:$0xff]
    %v3407 = vld [vmem:[%s3391 + $0x78] sm:$0xff]
    %v3424 = vunpack.c.l.b16 %v3392
    %v3425 = vunpack.c.h.b16 %v3392
    %v3426 = vunpack.c.l.b16 %v3393
    %v3427 = vunpack.c.h.b16 %v3393
    %v3428 = vunpack.c.l.b16 %v3394
    %v3429 = vunpack.c.h.b16 %v3394
    %v3430 = vunpack.c.l.b16 %v3395
    %v3431 = vunpack.c.h.b16 %v3395
    %v3432 = vunpack.c.l.b16 %v3396
    %v3433 = vunpack.c.h.b16 %v3396
    %v3434 = vunpack.c.l.b16 %v3397
    %v3435 = vunpack.c.h.b16 %v3397
    %v3436 = vunpack.c.l.b16 %v3398
    %v3437 = vunpack.c.h.b16 %v3398
    %v3438 = vunpack.c.l.b16 %v3399
    %v3439 = vunpack.c.h.b16 %v3399
    %v3440 = vunpack.c.l.b16 %v3400
    %v3441 = vunpack.c.h.b16 %v3400
    %v3442 = vunpack.c.l.b16 %v3401
    %v3443 = vunpack.c.h.b16 %v3401
    %v3444 = vunpack.c.l.b16 %v3402
    %v3445 = vunpack.c.h.b16 %v3402
    %v3446 = vunpack.c.l.b16 %v3403
    %v3447 = vunpack.c.h.b16 %v3403
    %v3448 = vunpack.c.l.b16 %v3404
    %v3449 = vunpack.c.h.b16 %v3404
    %v3450 = vunpack.c.l.b16 %v3405
    %v3451 = vunpack.c.h.b16 %v3405
    %v3452 = vunpack.c.l.b16 %v3406
    %v3453 = vunpack.c.h.b16 %v3406
    %v3454 = vunpack.c.l.b16 %v3407
    %v3455 = vunpack.c.h.b16 %v3407
    %v3456 = vpack.c.b16 %v3426, %v3424
    %v3457 = vpack.c.b16 %v3427, %v3425
    %v3458 = vpack.c.b16 %v3430, %v3428
    %v3459 = vpack.c.b16 %v3431, %v3429
    %v3460 = vpack.c.b16 %v3434, %v3432
    %v3461 = vpack.c.b16 %v3435, %v3433
    %v3462 = vpack.c.b16 %v3438, %v3436
    %v3463 = vpack.c.b16 %v3439, %v3437
    %v3464 = vpack.c.b16 %v3442, %v3440
    %v3465 = vpack.c.b16 %v3443, %v3441
    %v3466 = vpack.c.b16 %v3446, %v3444
    %v3467 = vpack.c.b16 %v3447, %v3445
    %v3468 = vpack.c.b16 %v3450, %v3448
    %v3469 = vpack.c.b16 %v3451, %v3449
    %v3470 = vpack.c.b16 %v3454, %v3452
    %v3471 = vpack.c.b16 %v3455, %v3453
    %3488 = vmatpush.bf16.msra.mxu0 %v3470
    %3489 = vmatpush.bf16.msra.mxu0 %v3468
    %3490 = vmatpush.bf16.msra.mxu0 %v3466
    %3491 = vmatpush.bf16.msra.mxu0 %v3464
    %3492 = vmatpush.bf16.msra.mxu0 %v3462
    %3493 = vmatpush.bf16.msra.mxu0 %v3460
    %3494 = vmatpush.bf16.msra.mxu0 %v3458
    %3495 = vmatpush.bf16.msra.mxu0 %v3456
    %3496 = vmatmul.bf16.gmra.mxu0 %v3389
    %v3497 = vpop.f32.mrf.mxu0
    %v3498 = vadd.f32 0.0, %v3497
    %v3499 = vpop.f32.mrf.mxu0
    %v3500 = vadd.f32 0.0, %v3499
    %3501 = vmatmul.bf16.gmra.mxu0 %v3390
    %v3502 = vpop.f32.mrf.mxu0
    %v3503 = vadd.f32 0.0, %v3502
    %v3504 = vpop.f32.mrf.mxu0
    %v3505 = vadd.f32 0.0, %v3504
    %3506 = vdwg.mxu0
    %3507 = vmatpush.bf16.msra.mxu0 %v3471
    %3508 = vmatpush.bf16.msra.mxu0 %v3469
    %3509 = vmatpush.bf16.msra.mxu0 %v3467
    %3510 = vmatpush.bf16.msra.mxu0 %v3465
    %3511 = vmatpush.bf16.msra.mxu0 %v3463
    %3512 = vmatpush.bf16.msra.mxu0 %v3461
    %3513 = vmatpush.bf16.msra.mxu0 %v3459
    %3514 = vmatpush.bf16.msra.mxu0 %v3457
    %3515 = vmatmul.bf16.gmra.mxu0 %v3389
    %v3516 = vpop.f32.mrf.mxu0
    %v3517 = vadd.f32 0.0, %v3516
    %v3518 = vpop.f32.mrf.mxu0
    %v3519 = vadd.f32 0.0, %v3518
    %3520 = vmatmul.bf16.gmra.mxu0 %v3390
    %v3521 = vpop.f32.mrf.mxu0
    %v3522 = vadd.f32 0.0, %v3521
    %v3523 = vpop.f32.mrf.mxu0
    %v3524 = vadd.f32 0.0, %v3523
    %3525 = vdwg.mxu0
    %v3526 = vadd.f32 %v3357, %v3498
    %v3527 = vadd.f32 %v3376, %v3517
    %v3528 = vadd.f32 %v3359, %v3500
    %v3529 = vadd.f32 %v3378, %v3519
    %v3530 = vadd.f32 %v3362, %v3503
    %v3531 = vadd.f32 %v3381, %v3522
    %v3532 = vadd.f32 %v3364, %v3505
    %v3533 = vadd.f32 %v3383, %v3524
    %s3534 = scalar_lea.vmem %s5, 2
    %v3535 = vld [vmem:[%s3534] ss:$4 sm:$0x3]
    %v3537 = vperm.slane %v3535, 0
    %v3538 = vperm.slane %v3535, 1
    %v3541 = vadd.f32 %v3526, %v3537
    %v3542 = vadd.f32 %v3527, %v3538
    %v3543 = vadd.f32 %v3528, %v3537
    %v3544 = vadd.f32 %v3529, %v3538
    %v3545 = vadd.f32 %v3530, %v3537
    %v3546 = vadd.f32 %v3531, %v3538
    %v3547 = vadd.f32 %v3532, %v3537
    %v3548 = vadd.f32 %v3533, %v3538
    %v3549 = vadd.f32 %v3541, %v3543
    %v3550 = vadd.f32 %v3549, %v3545
    %v3551 = vadd.f32 %v3550, %v3547
    %v3552 = vrot.slane %v3551, 4
    %v3553 = vadd.f32 %v3551, %v3552
    %v3554 = vrot.slane %v3553, 2
    %v3555 = vadd.f32 %v3553, %v3554
    %v3556 = vrot.slane %v3555, 1
    %v3557 = vadd.f32 %v3555, %v3556
    %v3558 = vadd.f32 %v3542, %v3544
    %v3559 = vadd.f32 %v3558, %v3546
    %v3560 = vadd.f32 %v3559, %v3548
    %v3561 = vrot.slane %v3560, 4
    %v3562 = vadd.f32 %v3560, %v3561
    %v3563 = vrot.slane %v3562, 2
    %v3564 = vadd.f32 %v3562, %v3563
    %v3565 = vrot.slane %v3564, 1
    %v3566 = vadd.f32 %v3564, %v3565
    %v3567 = vmul.f32 %v3541, %v3541
    %v3568 = vmul.f32 %v3542, %v3542
    %v3569 = vmul.f32 %v3543, %v3543
    %v3570 = vmul.f32 %v3544, %v3544
    %v3571 = vmul.f32 %v3545, %v3545
    %v3572 = vmul.f32 %v3546, %v3546
    %v3573 = vmul.f32 %v3547, %v3547
    %v3574 = vmul.f32 %v3548, %v3548
    %v3575 = vadd.f32 %v3567, %v3569
    %v3576 = vadd.f32 %v3575, %v3571
    %v3577 = vadd.f32 %v3576, %v3573
    %v3578 = vrot.slane %v3577, 4
    %v3579 = vadd.f32 %v3577, %v3578
    %v3580 = vrot.slane %v3579, 2
    %v3581 = vadd.f32 %v3579, %v3580
    %v3582 = vrot.slane %v3581, 1
    %v3583 = vadd.f32 %v3581, %v3582
    %v3584 = vadd.f32 %v3568, %v3570
    %v3585 = vadd.f32 %v3584, %v3572
    %v3586 = vadd.f32 %v3585, %v3574
    %v3587 = vrot.slane %v3586, 4
    %v3588 = vadd.f32 %v3586, %v3587
    %v3589 = vrot.slane %v3588, 2
    %v3590 = vadd.f32 %v3588, %v3589
    %v3591 = vrot.slane %v3590, 1
    %v3592 = vadd.f32 %v3590, %v3591
    %v3593 = vld [vmem:[#allocation14] sm:$0xff]
    %v3594 = vld [vmem:[#allocation14 + $0x8] sm:$0xff]
    %v3595 = vld [vmem:[#allocation14 + $0x10] sm:$0xff]
    %v3596 = vld [vmem:[#allocation14 + $0x18] sm:$0xff]
    %v3597 = vld [vmem:[#allocation14 + $0x20] sm:$0xff]
    %v3598 = vld [vmem:[#allocation14 + $0x28] sm:$0xff]
    %v3599 = vld [vmem:[#allocation14 + $0x30] sm:$0xff]
    %v3600 = vld [vmem:[#allocation14 + $0x38] sm:$0xff]
    %v3601 = vld [vmem:[#allocation14 + $0x40] sm:$0xff]
    %v3602 = vld [vmem:[#allocation14 + $0x48] sm:$0xff]
    %v3603 = vld [vmem:[#allocation14 + $0x50] sm:$0xff]
    %v3604 = vld [vmem:[#allocation14 + $0x58] sm:$0xff]
    %v3605 = vld [vmem:[#allocation14 + $0x60] sm:$0xff]
    %v3606 = vld [vmem:[#allocation14 + $0x68] sm:$0xff]
    %v3607 = vld [vmem:[#allocation14 + $0x70] sm:$0xff]
    %v3608 = vld [vmem:[#allocation14 + $0x78] sm:$0xff]
    %v3609 = vld [vmem:[#allocation14 + $0x80] sm:$0xff]
    %v3610 = vld [vmem:[#allocation14 + $0x88] sm:$0xff]
    %v3611 = vld [vmem:[#allocation14 + $0x90] sm:$0xff]
    %v3612 = vld [vmem:[#allocation14 + $0x98] sm:$0xff]
    %v3613 = vld [vmem:[#allocation14 + $0xa0] sm:$0xff]
    %v3614 = vld [vmem:[#allocation14 + $0xa8] sm:$0xff]
    %v3615 = vld [vmem:[#allocation14 + $0xb0] sm:$0xff]
    %v3616 = vld [vmem:[#allocation14 + $0xb8] sm:$0xff]
    %v3617 = vld [vmem:[#allocation14 + $0xc0] sm:$0xff]
    %v3618 = vld [vmem:[#allocation14 + $0xc8] sm:$0xff]
    %v3619 = vld [vmem:[#allocation14 + $0xd0] sm:$0xff]
    %v3620 = vld [vmem:[#allocation14 + $0xd8] sm:$0xff]
    %v3621 = vld [vmem:[#allocation14 + $0xe0] sm:$0xff]
    %v3622 = vld [vmem:[#allocation14 + $0xe8] sm:$0xff]
    %v3623 = vld [vmem:[#allocation14 + $0xf0] sm:$0xff]
    %v3624 = vld [vmem:[#allocation14 + $0xf8] sm:$0xff]
    %v3625 = vld [vmem:[#allocation14 + $0x100] sm:$0xff]
    %v3626 = vld [vmem:[#allocation14 + $0x108] sm:$0xff]
    %v3627 = vld [vmem:[#allocation14 + $0x110] sm:$0xff]
    %v3628 = vld [vmem:[#allocation14 + $0x118] sm:$0xff]
    %v3629 = vld [vmem:[#allocation14 + $0x120] sm:$0xff]
    %v3630 = vld [vmem:[#allocation14 + $0x128] sm:$0xff]
    %v3631 = vld [vmem:[#allocation14 + $0x130] sm:$0xff]
    %v3632 = vld [vmem:[#allocation14 + $0x138] sm:$0xff]
    %v3633 = vld [vmem:[#allocation14 + $0x140] sm:$0xff]
    %v3634 = vld [vmem:[#allocation14 + $0x148] sm:$0xff]
    %v3635 = vld [vmem:[#allocation14 + $0x150] sm:$0xff]
    %v3636 = vld [vmem:[#allocation14 + $0x158] sm:$0xff]
    %v3637 = vld [vmem:[#allocation14 + $0x160] sm:$0xff]
    %v3638 = vld [vmem:[#allocation14 + $0x168] sm:$0xff]
    %v3639 = vld [vmem:[#allocation14 + $0x170] sm:$0xff]
    %v3640 = vld [vmem:[#allocation14 + $0x178] sm:$0xff]
    %v3641 = vld [vmem:[#allocation14 + $0x180] sm:$0xff]
    %v3642 = vld [vmem:[#allocation14 + $0x188] sm:$0xff]
    %v3643 = vld [vmem:[#allocation14 + $0x190] sm:$0xff]
    %v3644 = vld [vmem:[#allocation14 + $0x198] sm:$0xff]
    %v3645 = vld [vmem:[#allocation14 + $0x1a0] sm:$0xff]
    %v3646 = vld [vmem:[#allocation14 + $0x1a8] sm:$0xff]
    %v3647 = vld [vmem:[#allocation14 + $0x1b0] sm:$0xff]
    %v3648 = vld [vmem:[#allocation14 + $0x1b8] sm:$0xff]
    %v3649 = vld [vmem:[#allocation14 + $0x1c0] sm:$0xff]
    %v3650 = vld [vmem:[#allocation14 + $0x1c8] sm:$0xff]
    %v3651 = vld [vmem:[#allocation14 + $0x1d0] sm:$0xff]
    %v3652 = vld [vmem:[#allocation14 + $0x1d8] sm:$0xff]
    %v3653 = vld [vmem:[#allocation14 + $0x1e0] sm:$0xff]
    %v3654 = vld [vmem:[#allocation14 + $0x1e8] sm:$0xff]
    %v3655 = vld [vmem:[#allocation14 + $0x1f0] sm:$0xff]
    %v3656 = vld [vmem:[#allocation14 + $0x1f8] sm:$0xff]
    %3657 = vmatpush.msra.mxu0 %v3623
    %3658 = vmatpush.msra.mxu0 %v3621
    %3659 = vmatpush.msra.mxu0 %v3619
    %3660 = vmatpush.msra.mxu0 %v3617
    %3661 = vmatpush.msra.mxu0 %v3615
    %3662 = vmatpush.msra.mxu0 %v3613
    %3663 = vmatpush.msra.mxu0 %v3611
    %3664 = vmatpush.msra.mxu0 %v3609
    %3665 = vmatpush.msra.mxu0 %v3607
    %3666 = vmatpush.msra.mxu0 %v3605
    %3667 = vmatpush.msra.mxu0 %v3603
    %3668 = vmatpush.msra.mxu0 %v3601
    %3669 = vmatpush.msra.mxu0 %v3599
    %3670 = vmatpush.msra.mxu0 %v3597
    %3671 = vmatpush.msra.mxu0 %v3595
    %3672 = vmatpush.msra.mxu0 %v3593
    %3673 = vmatmul.f32.gmra.mxu0 %v3557
    %v3674 = vpop.f32.mrf.mxu0
    %v3675 = vadd.f32 0.0, %v3674
    %3676 = vdwg.mxu0
    %3677 = vmatpush.msra.mxu0 %v3655
    %3678 = vmatpush.msra.mxu0 %v3653
    %3679 = vmatpush.msra.mxu0 %v3651
    %3680 = vmatpush.msra.mxu0 %v3649
    %3681 = vmatpush.msra.mxu0 %v3647
    %3682 = vmatpush.msra.mxu0 %v3645
    %3683 = vmatpush.msra.mxu0 %v3643
    %3684 = vmatpush.msra.mxu0 %v3641
    %3685 = vmatpush.msra.mxu0 %v3639
    %3686 = vmatpush.msra.mxu0 %v3637
    %3687 = vmatpush.msra.mxu0 %v3635
    %3688 = vmatpush.msra.mxu0 %v3633
    %3689 = vmatpush.msra.mxu0 %v3631
    %3690 = vmatpush.msra.mxu0 %v3629
    %3691 = vmatpush.msra.mxu0 %v3627
    %3692 = vmatpush.msra.mxu0 %v3625
    %3693 = vmatmul.f32.gmra.mxu0 %v3566
    %v3694 = vpop.f32.mrf.mxu0
    %v3695 = vadd.f32 %v3675, %v3694
    %3696 = vdwg.mxu0
    %3697 = vmatpush.msra.mxu0 %v3624
    %3698 = vmatpush.msra.mxu0 %v3622
    %3699 = vmatpush.msra.mxu0 %v3620
    %3700 = vmatpush.msra.mxu0 %v3618
    %3701 = vmatpush.msra.mxu0 %v3616
    %3702 = vmatpush.msra.mxu0 %v3614
    %3703 = vmatpush.msra.mxu0 %v3612
    %3704 = vmatpush.msra.mxu0 %v3610
    %3705 = vmatpush.msra.mxu0 %v3608
    %3706 = vmatpush.msra.mxu0 %v3606
    %3707 = vmatpush.msra.mxu0 %v3604
    %3708 = vmatpush.msra.mxu0 %v3602
    %3709 = vmatpush.msra.mxu0 %v3600
    %3710 = vmatpush.msra.mxu0 %v3598
    %3711 = vmatpush.msra.mxu0 %v3596
    %3712 = vmatpush.msra.mxu0 %v3594
    %3713 = vmatmul.f32.gmra.mxu0 %v3557
    %v3714 = vpop.f32.mrf.mxu0
    %v3715 = vadd.f32 0.0, %v3714
    %3716 = vdwg.mxu0
    %3717 = vmatpush.msra.mxu0 %v3656
    %3718 = vmatpush.msra.mxu0 %v3654
    %3719 = vmatpush.msra.mxu0 %v3652
    %3720 = vmatpush.msra.mxu0 %v3650
    %3721 = vmatpush.msra.mxu0 %v3648
    %3722 = vmatpush.msra.mxu0 %v3646
    %3723 = vmatpush.msra.mxu0 %v3644
    %3724 = vmatpush.msra.mxu0 %v3642
    %3725 = vmatpush.msra.mxu0 %v3640
    %3726 = vmatpush.msra.mxu0 %v3638
    %3727 = vmatpush.msra.mxu0 %v3636
    %3728 = vmatpush.msra.mxu0 %v3634
    %3729 = vmatpush.msra.mxu0 %v3632
    %3730 = vmatpush.msra.mxu0 %v3630
    %3731 = vmatpush.msra.mxu0 %v3628
    %3732 = vmatpush.msra.mxu0 %v3626
    %3733 = vmatmul.f32.gmra.mxu0 %v3566
    %v3734 = vpop.f32.mrf.mxu0
    %v3735 = vadd.f32 %v3715, %v3734
    %3736 = vdwg.mxu0
    %v3737 = vmul.f32 %v3695, 0.001953125
    %v3738 = vmul.f32 %v3735, 0.001953125
    %3739 = vmatpush.msra.mxu0 %v3623
    %3740 = vmatpush.msra.mxu0 %v3621
    %3741 = vmatpush.msra.mxu0 %v3619
    %3742 = vmatpush.msra.mxu0 %v3617
    %3743 = vmatpush.msra.mxu0 %v3615
    %3744 = vmatpush.msra.mxu0 %v3613
    %3745 = vmatpush.msra.mxu0 %v3611
    %3746 = vmatpush.msra.mxu0 %v3609
    %3747 = vmatpush.msra.mxu0 %v3607
    %3748 = vmatpush.msra.mxu0 %v3605
    %3749 = vmatpush.msra.mxu0 %v3603
    %3750 = vmatpush.msra.mxu0 %v3601
    %3751 = vmatpush.msra.mxu0 %v3599
    %3752 = vmatpush.msra.mxu0 %v3597
    %3753 = vmatpush.msra.mxu0 %v3595
    %3754 = vmatpush.msra.mxu0 %v3593
    %3755 = vmatmul.f32.gmra.mxu0 %v3583
    %v3756 = vpop.f32.mrf.mxu0
    %v3757 = vadd.f32 0.0, %v3756
    %3758 = vdwg.mxu0
    %3759 = vmatpush.msra.mxu0 %v3655
    %3760 = vmatpush.msra.mxu0 %v3653
    %3761 = vmatpush.msra.mxu0 %v3651
    %3762 = vmatpush.msra.mxu0 %v3649
    %3763 = vmatpush.msra.mxu0 %v3647
    %3764 = vmatpush.msra.mxu0 %v3645
    %3765 = vmatpush.msra.mxu0 %v3643
    %3766 = vmatpush.msra.mxu0 %v3641
    %3767 = vmatpush.msra.mxu0 %v3639
    %3768 = vmatpush.msra.mxu0 %v3637
    %3769 = vmatpush.msra.mxu0 %v3635
    %3770 = vmatpush.msra.mxu0 %v3633
    %3771 = vmatpush.msra.mxu0 %v3631
    %3772 = vmatpush.msra.mxu0 %v3629
    %3773 = vmatpush.msra.mxu0 %v3627
    %3774 = vmatpush.msra.mxu0 %v3625
    %3775 = vmatmul.f32.gmra.mxu0 %v3592
    %v3776 = vpop.f32.mrf.mxu0
    %v3777 = vadd.f32 %v3757, %v3776
    %3778 = vdwg.mxu0
    %3779 = vmatpush.msra.mxu0 %v3624
    %3780 = vmatpush.msra.mxu0 %v3622
    %3781 = vmatpush.msra.mxu0 %v3620
    %3782 = vmatpush.msra.mxu0 %v3618
    %3783 = vmatpush.msra.mxu0 %v3616
    %3784 = vmatpush.msra.mxu0 %v3614
    %3785 = vmatpush.msra.mxu0 %v3612
    %3786 = vmatpush.msra.mxu0 %v3610
    %3787 = vmatpush.msra.mxu0 %v3608
    %3788 = vmatpush.msra.mxu0 %v3606
    %3789 = vmatpush.msra.mxu0 %v3604
    %3790 = vmatpush.msra.mxu0 %v3602
    %3791 = vmatpush.msra.mxu0 %v3600
    %3792 = vmatpush.msra.mxu0 %v3598
    %3793 = vmatpush.msra.mxu0 %v3596
    %3794 = vmatpush.msra.mxu0 %v3594
    %3795 = vmatmul.f32.gmra.mxu0 %v3583
    %v3796 = vpop.f32.mrf.mxu0
    %v3797 = vadd.f32 0.0, %v3796
    %3798 = vdwg.mxu0
    %3799 = vmatpush.msra.mxu0 %v3656
    %3800 = vmatpush.msra.mxu0 %v3654
    %3801 = vmatpush.msra.mxu0 %v3652
    %3802 = vmatpush.msra.mxu0 %v3650
    %3803 = vmatpush.msra.mxu0 %v3648
    %3804 = vmatpush.msra.mxu0 %v3646
    %3805 = vmatpush.msra.mxu0 %v3644
    %3806 = vmatpush.msra.mxu0 %v3642
    %3807 = vmatpush.msra.mxu0 %v3640
    %3808 = vmatpush.msra.mxu0 %v3638
    %3809 = vmatpush.msra.mxu0 %v3636
    %3810 = vmatpush.msra.mxu0 %v3634
    %3811 = vmatpush.msra.mxu0 %v3632
    %3812 = vmatpush.msra.mxu0 %v3630
    %3813 = vmatpush.msra.mxu0 %v3628
    %3814 = vmatpush.msra.mxu0 %v3626
    %3815 = vmatmul.f32.gmra.mxu0 %v3592
    %v3816 = vpop.f32.mrf.mxu0
    %v3817 = vadd.f32 %v3797, %v3816
    %3818 = vdwg.mxu0
    %v3819 = vmul.f32 %v3777, 0.001953125
    %v3820 = vmul.f32 %v3817, 0.001953125
    %v3821 = vmul.f32 %v3737, %v3737
    %v3822 = vmul.f32 %v3738, %v3738
    %v3823 = vsub.f32 %v3819, %v3821
    %v3824 = vsub.f32 %v3820, %v3822
    %v3825 = vadd.f32 %v3823, 1e-05
    %v3826 = vadd.f32 %v3824, 1e-05
    %v3827 = vrsqrt.pop %v3825
    %v3828 = vmul.f32 %v3827, %v3825
    %v3829 = vmul.f32 %v3828, %v3827
    %v3830 = vmul.f32 0.5, %v3829
    %v3831 = vsub.f32 1.5, %v3830
    %v3832 = vmul.f32 %v3827, %v3831
    %vm3833 = vweird.f32 %v3825
    %vm3834 = vweird.f32 %v3827
    %vm3835 = vmor %vm3833, %vm3834
    %v3836 = vsel %vm3835, %v3827, %v3832
    %v3837 = vrsqrt.pop %v3826
    %v3838 = vmul.f32 %v3837, %v3826
    %v3839 = vmul.f32 %v3838, %v3837
    %v3840 = vmul.f32 0.5, %v3839
    %v3841 = vsub.f32 1.5, %v3840
    %v3842 = vmul.f32 %v3837, %v3841
    %vm3843 = vweird.f32 %v3826
    %vm3844 = vweird.f32 %v3837
    %vm3845 = vmor %vm3843, %vm3844
    %v3846 = vsel %vm3845, %v3837, %v3842
    %s3847 = scalar_lea.vmem %s6, 2
    %v3848 = vld [vmem:[%s3847] ss:$4 sm:$0x3]
    %v3851 = vrot.slane %v3846, 7
    %v3852 = vsel %vm1030, %v3836, %v3851
    %v3854 = vmul.f32 %v3848, %v3852
    %s3855 = scalar_lea.vmem %s7, 2
    %v3856 = vld [vmem:[%s3855] ss:$4 sm:$0x3]
    %v3858 = vperm.slane %v3854, 0
    %v3859 = vperm.slane %v3854, 1
    %v3862 = vmul.f32 %v3737, %v3858
    %v3863 = vmul.f32 %v3738, %v3859
    %v3866 = vrot.slane %v3863, 7
    %v3867 = vsel %vm1030, %v3862, %v3866
    %v3869 = vsub.f32 %v3856, %v3867
    %v3870 = vmul.f32 %v3541, %v3858
    %v3871 = vmul.f32 %v3542, %v3859
    %v3872 = vmul.f32 %v3543, %v3858
    %v3873 = vmul.f32 %v3544, %v3859
    %v3874 = vmul.f32 %v3545, %v3858
    %v3875 = vmul.f32 %v3546, %v3859
    %v3876 = vmul.f32 %v3547, %v3858
    %v3877 = vmul.f32 %v3548, %v3859
    %v3879 = vperm.slane %v3869, 0
    %v3880 = vperm.slane %v3869, 1
    %v3883 = vadd.f32 %v3870, %v3879
    %v3884 = vadd.f32 %v3871, %v3880
    %v3885 = vadd.f32 %v3872, %v3879
    %v3886 = vadd.f32 %v3873, %v3880
    %v3887 = vadd.f32 %v3874, %v3879
    %v3888 = vadd.f32 %v3875, %v3880
    %v3889 = vadd.f32 %v3876, %v3879
    %v3890 = vadd.f32 %v3877, %v3880
    %v3891 = vmax.f32 %v3883, 0.0
    %v3892 = vmax.f32 %v3884, 0.0
    %v3893 = vmax.f32 %v3885, 0.0
    %v3894 = vmax.f32 %v3886, 0.0
    %v3895 = vmax.f32 %v3887, 0.0
    %v3896 = vmax.f32 %v3888, 0.0
    %v3897 = vmax.f32 %v3889, 0.0
    %v3898 = vmax.f32 %v3890, 0.0
    %3899 = vst.msk [vmem:[#allocation4] ss:$8 sm:$0x3] %vm1104, 0.0
    %3900 = vst.msk [vmem:[#allocation4] ss:$8 sm:$0x0] %vm1104, 0.0
    %s3901 = scalar_lea.vmem [#allocation4], 48
    %3902 = vst.msk [vmem:[%s3901] ss:$8 sm:$0x3] %vm1104, 0.0
    %3903 = vst.msk [vmem:[%s3901] ss:$8 sm:$0x0] %vm1104, 0.0
    %s3904 = scalar_lea.vmem [#allocation4], 33
    %3905 = vst.msk [vmem:[%s3904] ss:$8 sm:$0x3] %vm1104, 0.0
    %3906 = vst.msk [vmem:[%s3904] ss:$8 sm:$0x0] %vm1104, 0.0
    %s3907 = scalar_lea.vmem [#allocation4], 81
    %3908 = vst.msk [vmem:[%s3907] ss:$8 sm:$0x3] %vm1104, 0.0
    %3909 = vst.msk [vmem:[%s3907] ss:$8 sm:$0x0] %vm1104, 0.0
    %v3918 = vrot.slane %v3891, 7
    %v3919 = vrot.slane %v3892, 7
    %v3920 = vrot.slane %v3893, 7
    %v3921 = vsel %vm1030, %v3918, %v3920
    %v3922 = vrot.slane %v3894, 7
    %v3923 = vsel %vm1030, %v3919, %v3922
    %v3924 = vrot.slane %v3895, 7
    %v3925 = vrot.slane %v3896, 7
    %v3926 = vrot.slane %v3897, 7
    %v3927 = vsel %vm1030, %v3924, %v3926
    %v3928 = vrot.slane %v3898, 7
    %v3929 = vsel %vm1030, %v3925, %v3928
    %3942 = vst [vmem:[#allocation4] sm:$0xfe] %v3918
    %3943 = vst [vmem:[#allocation4 + $0x8] sm:$0xfe] %v3919
    %3944 = vst [vmem:[#allocation4 + $0x10] sm:$0xff] %v3921
    %3945 = vst [vmem:[#allocation4 + $0x18] sm:$0xff] %v3923
    %3946 = vst [vmem:[#allocation4 + $0x20] sm:$0x1] %v3920
    %3947 = vst [vmem:[#allocation4 + $0x28] sm:$0x1] %v3922
    %3948 = vst [vmem:[#allocation4 + $0x30] sm:$0xfe] %v3924
    %3949 = vst [vmem:[#allocation4 + $0x38] sm:$0xfe] %v3925
    %3950 = vst [vmem:[#allocation4 + $0x40] sm:$0xff] %v3927
    %3951 = vst [vmem:[#allocation4 + $0x48] sm:$0xff] %v3929
    %3952 = vst [vmem:[#allocation4 + $0x50] sm:$0x1] %v3926
    %3953 = vst [vmem:[#allocation4 + $0x58] sm:$0x1] %v3928
    %v3954 = vld [vmem:[#allocation4] sm:$0xff]
    %v3955 = vld [vmem:[#allocation4 + $0x8] sm:$0xff]
    %v3956 = vld [vmem:[#allocation4 + $0x10] sm:$0xff]
    %v3957 = vld [vmem:[#allocation4 + $0x18] sm:$0xff]
    %v3958 = vld [vmem:[#allocation4 + $0x30] sm:$0xff]
    %v3959 = vld [vmem:[#allocation4 + $0x38] sm:$0xff]
    %v3960 = vld [vmem:[#allocation4 + $0x40] sm:$0xff]
    %v3961 = vld [vmem:[#allocation4 + $0x48] sm:$0xff]
    %v3962 = vpack.c.bf16 %v3956, %v3954
    %v3963 = vpack.c.bf16 %v3957, %v3955
    %v3964 = vpack.c.bf16 %v3960, %v3958
    %v3965 = vpack.c.bf16 %v3961, %v3959
    %v3966 = vld [vmem:[#allocation11] sm:$0xff]
    %v3967 = vld [vmem:[#allocation11 + $0x8] sm:$0xff]
    %v3968 = vld [vmem:[#allocation11 + $0x10] sm:$0xff]
    %v3969 = vld [vmem:[#allocation11 + $0x18] sm:$0xff]
    %v3970 = vld [vmem:[#allocation11 + $0x20] sm:$0xff]
    %v3971 = vld [vmem:[#allocation11 + $0x28] sm:$0xff]
    %v3972 = vld [vmem:[#allocation11 + $0x30] sm:$0xff]
    %v3973 = vld [vmem:[#allocation11 + $0x38] sm:$0xff]
    %v3974 = vld [vmem:[#allocation11 + $0x40] sm:$0xff]
    %v3975 = vld [vmem:[#allocation11 + $0x48] sm:$0xff]
    %v3976 = vld [vmem:[#allocation11 + $0x50] sm:$0xff]
    %v3977 = vld [vmem:[#allocation11 + $0x58] sm:$0xff]
    %v3978 = vld [vmem:[#allocation11 + $0x60] sm:$0xff]
    %v3979 = vld [vmem:[#allocation11 + $0x68] sm:$0xff]
    %v3980 = vld [vmem:[#allocation11 + $0x70] sm:$0xff]
    %v3981 = vld [vmem:[#allocation11 + $0x78] sm:$0xff]
    %v3982 = vld [vmem:[#allocation11 + $0x80] sm:$0xff]
    %v3983 = vld [vmem:[#allocation11 + $0x88] sm:$0xff]
    %v3984 = vld [vmem:[#allocation11 + $0x90] sm:$0xff]
    %v3985 = vld [vmem:[#allocation11 + $0x98] sm:$0xff]
    %v3986 = vld [vmem:[#allocation11 + $0xa0] sm:$0xff]
    %v3987 = vld [vmem:[#allocation11 + $0xa8] sm:$0xff]
    %v3988 = vld [vmem:[#allocation11 + $0xb0] sm:$0xff]
    %v3989 = vld [vmem:[#allocation11 + $0xb8] sm:$0xff]
    %v3990 = vld [vmem:[#allocation11 + $0xc0] sm:$0xff]
    %v3991 = vld [vmem:[#allocation11 + $0xc8] sm:$0xff]
    %v3992 = vld [vmem:[#allocation11 + $0xd0] sm:$0xff]
    %v3993 = vld [vmem:[#allocation11 + $0xd8] sm:$0xff]
    %v3994 = vld [vmem:[#allocation11 + $0xe0] sm:$0xff]
    %v3995 = vld [vmem:[#allocation11 + $0xe8] sm:$0xff]
    %v3996 = vld [vmem:[#allocation11 + $0xf0] sm:$0xff]
    %v3997 = vld [vmem:[#allocation11 + $0xf8] sm:$0xff]
    %v3998 = vld [vmem:[#allocation4] sm:$0xfe]
    %v3999 = vld [vmem:[#allocation4 + $0x8] sm:$0xfe]
    %v4000 = vld [vmem:[#allocation4 + $0x20] sm:$0x1]
    %v4001 = vld [vmem:[#allocation4 + $0x28] sm:$0x1]
    %v4002 = vld [vmem:[#allocation4 + $0x30] sm:$0xfe]
    %v4003 = vld [vmem:[#allocation4 + $0x38] sm:$0xfe]
    %v4004 = vld [vmem:[#allocation4 + $0x50] sm:$0x1]
    %v4005 = vld [vmem:[#allocation4 + $0x58] sm:$0x1]
    %v4018 = vrot.slane %v3998, 1
    %v4019 = vrot.slane %v3956, 1
    %v4020 = vsel %vm1284, %v4018, %v4019
    %v4021 = vrot.slane %v3999, 1
    %v4022 = vrot.slane %v3957, 1
    %v4023 = vsel %vm1284, %v4021, %v4022
    %v4024 = vrot.slane %v4000, 1
    %v4025 = vsel %vm1284, %v4019, %v4024
    %v4026 = vrot.slane %v4001, 1
    %v4027 = vsel %vm1284, %v4022, %v4026
    %v4028 = vrot.slane %v4002, 1
    %v4029 = vrot.slane %v3960, 1
    %v4030 = vsel %vm1284, %v4028, %v4029
    %v4031 = vrot.slane %v4003, 1
    %v4032 = vrot.slane %v3961, 1
    %v4033 = vsel %vm1284, %v4031, %v4032
    %v4034 = vrot.slane %v4004, 1
    %v4035 = vsel %vm1284, %v4029, %v4034
    %v4036 = vrot.slane %v4005, 1
    %v4037 = vsel %vm1284, %v4032, %v4036
    %v4046 = vpack.c.bf16 %v4025, %v4020
    %v4047 = vpack.c.bf16 %v4027, %v4023
    %v4048 = vpack.c.bf16 %v4035, %v4030
    %v4049 = vpack.c.bf16 %v4037, %v4033
    %s4050 = scalar_lea.vmem [#allocation11], 256
    %v4051 = vld [vmem:[%s4050] sm:$0xff]
    %v4052 = vld [vmem:[%s4050 + $0x8] sm:$0xff]
    %v4053 = vld [vmem:[%s4050 + $0x10] sm:$0xff]
    %v4054 = vld [vmem:[%s4050 + $0x18] sm:$0xff]
    %v4055 = vld [vmem:[%s4050 + $0x20] sm:$0xff]
    %v4056 = vld [vmem:[%s4050 + $0x28] sm:$0xff]
    %v4057 = vld [vmem:[%s4050 + $0x30] sm:$0xff]
    %v4058 = vld [vmem:[%s4050 + $0x38] sm:$0xff]
    %v4059 = vld [vmem:[%s4050 + $0x40] sm:$0xff]
    %v4060 = vld [vmem:[%s4050 + $0x48] sm:$0xff]
    %v4061 = vld [vmem:[%s4050 + $0x50] sm:$0xff]
    %v4062 = vld [vmem:[%s4050 + $0x58] sm:$0xff]
    %v4063 = vld [vmem:[%s4050 + $0x60] sm:$0xff]
    %v4064 = vld [vmem:[%s4050 + $0x68] sm:$0xff]
    %v4065 = vld [vmem:[%s4050 + $0x70] sm:$0xff]
    %v4066 = vld [vmem:[%s4050 + $0x78] sm:$0xff]
    %v4067 = vld [vmem:[%s4050 + $0x80] sm:$0xff]
    %v4068 = vld [vmem:[%s4050 + $0x88] sm:$0xff]
    %v4069 = vld [vmem:[%s4050 + $0x90] sm:$0xff]
    %v4070 = vld [vmem:[%s4050 + $0x98] sm:$0xff]
    %v4071 = vld [vmem:[%s4050 + $0xa0] sm:$0xff]
    %v4072 = vld [vmem:[%s4050 + $0xa8] sm:$0xff]
    %v4073 = vld [vmem:[%s4050 + $0xb0] sm:$0xff]
    %v4074 = vld [vmem:[%s4050 + $0xb8] sm:$0xff]
    %v4075 = vld [vmem:[%s4050 + $0xc0] sm:$0xff]
    %v4076 = vld [vmem:[%s4050 + $0xc8] sm:$0xff]
    %v4077 = vld [vmem:[%s4050 + $0xd0] sm:$0xff]
    %v4078 = vld [vmem:[%s4050 + $0xd8] sm:$0xff]
    %v4079 = vld [vmem:[%s4050 + $0xe0] sm:$0xff]
    %v4080 = vld [vmem:[%s4050 + $0xe8] sm:$0xff]
    %v4081 = vld [vmem:[%s4050 + $0xf0] sm:$0xff]
    %v4082 = vld [vmem:[%s4050 + $0xf8] sm:$0xff]
    %v4115 = vunpack.c.l.b16 %v4051
    %v4116 = vunpack.c.h.b16 %v4051
    %v4117 = vunpack.c.l.b16 %v4052
    %v4118 = vunpack.c.h.b16 %v4052
    %v4119 = vunpack.c.l.b16 %v4053
    %v4120 = vunpack.c.h.b16 %v4053
    %v4121 = vunpack.c.l.b16 %v4054
    %v4122 = vunpack.c.h.b16 %v4054
    %v4123 = vunpack.c.l.b16 %v4055
    %v4124 = vunpack.c.h.b16 %v4055
    %v4125 = vunpack.c.l.b16 %v4056
    %v4126 = vunpack.c.h.b16 %v4056
    %v4127 = vunpack.c.l.b16 %v4057
    %v4128 = vunpack.c.h.b16 %v4057
    %v4129 = vunpack.c.l.b16 %v4058
    %v4130 = vunpack.c.h.b16 %v4058
    %v4131 = vunpack.c.l.b16 %v4059
    %v4132 = vunpack.c.h.b16 %v4059
    %v4133 = vunpack.c.l.b16 %v4060
    %v4134 = vunpack.c.h.b16 %v4060
    %v4135 = vunpack.c.l.b16 %v4061
    %v4136 = vunpack.c.h.b16 %v4061
    %v4137 = vunpack.c.l.b16 %v4062
    %v4138 = vunpack.c.h.b16 %v4062
    %v4139 = vunpack.c.l.b16 %v4063
    %v4140 = vunpack.c.h.b16 %v4063
    %v4141 = vunpack.c.l.b16 %v4064
    %v4142 = vunpack.c.h.b16 %v4064
    %v4143 = vunpack.c.l.b16 %v4065
    %v4144 = vunpack.c.h.b16 %v4065
    %v4145 = vunpack.c.l.b16 %v4066
    %v4146 = vunpack.c.h.b16 %v4066
    %v4147 = vunpack.c.l.b16 %v4067
    %v4148 = vunpack.c.h.b16 %v4067
    %v4149 = vunpack.c.l.b16 %v4068
    %v4150 = vunpack.c.h.b16 %v4068
    %v4151 = vunpack.c.l.b16 %v4069
    %v4152 = vunpack.c.h.b16 %v4069
    %v4153 = vunpack.c.l.b16 %v4070
    %v4154 = vunpack.c.h.b16 %v4070
    %v4155 = vunpack.c.l.b16 %v4071
    %v4156 = vunpack.c.h.b16 %v4071
    %v4157 = vunpack.c.l.b16 %v4072
    %v4158 = vunpack.c.h.b16 %v4072
    %v4159 = vunpack.c.l.b16 %v4073
    %v4160 = vunpack.c.h.b16 %v4073
    %v4161 = vunpack.c.l.b16 %v4074
    %v4162 = vunpack.c.h.b16 %v4074
    %v4163 = vunpack.c.l.b16 %v4075
    %v4164 = vunpack.c.h.b16 %v4075
    %v4165 = vunpack.c.l.b16 %v4076
    %v4166 = vunpack.c.h.b16 %v4076
    %v4167 = vunpack.c.l.b16 %v4077
    %v4168 = vunpack.c.h.b16 %v4077
    %v4169 = vunpack.c.l.b16 %v4078
    %v4170 = vunpack.c.h.b16 %v4078
    %v4171 = vunpack.c.l.b16 %v4079
    %v4172 = vunpack.c.h.b16 %v4079
    %v4173 = vunpack.c.l.b16 %v4080
    %v4174 = vunpack.c.h.b16 %v4080
    %v4175 = vunpack.c.l.b16 %v4081
    %v4176 = vunpack.c.h.b16 %v4081
    %v4177 = vunpack.c.l.b16 %v4082
    %v4178 = vunpack.c.h.b16 %v4082
    %v4179 = vpack.c.b16 %v4117, %v4115
    %v4180 = vpack.c.b16 %v4118, %v4116
    %v4181 = vpack.c.b16 %v4121, %v4119
    %v4182 = vpack.c.b16 %v4122, %v4120
    %v4183 = vpack.c.b16 %v4125, %v4123
    %v4184 = vpack.c.b16 %v4126, %v4124
    %v4185 = vpack.c.b16 %v4129, %v4127
    %v4186 = vpack.c.b16 %v4130, %v4128
    %v4187 = vpack.c.b16 %v4133, %v4131
    %v4188 = vpack.c.b16 %v4134, %v4132
    %v4189 = vpack.c.b16 %v4137, %v4135
    %v4190 = vpack.c.b16 %v4138, %v4136
    %v4191 = vpack.c.b16 %v4141, %v4139
    %v4192 = vpack.c.b16 %v4142, %v4140
    %v4193 = vpack.c.b16 %v4145, %v4143
    %v4194 = vpack.c.b16 %v4146, %v4144
    %v4195 = vpack.c.b16 %v4149, %v4147
    %v4196 = vpack.c.b16 %v4150, %v4148
    %v4197 = vpack.c.b16 %v4153, %v4151
    %v4198 = vpack.c.b16 %v4154, %v4152
    %v4199 = vpack.c.b16 %v4157, %v4155
    %v4200 = vpack.c.b16 %v4158, %v4156
    %v4201 = vpack.c.b16 %v4161, %v4159
    %v4202 = vpack.c.b16 %v4162, %v4160
    %v4203 = vpack.c.b16 %v4165, %v4163
    %v4204 = vpack.c.b16 %v4166, %v4164
    %v4205 = vpack.c.b16 %v4169, %v4167
    %v4206 = vpack.c.b16 %v4170, %v4168
    %v4207 = vpack.c.b16 %v4173, %v4171
    %v4208 = vpack.c.b16 %v4174, %v4172
    %v4209 = vpack.c.b16 %v4177, %v4175
    %v4210 = vpack.c.b16 %v4178, %v4176
    %4243 = vmatpush.bf16.msra.mxu0 %v4193
    %4244 = vmatpush.bf16.msra.mxu0 %v4191
    %4245 = vmatpush.bf16.msra.mxu0 %v4189
    %4246 = vmatpush.bf16.msra.mxu0 %v4187
    %4247 = vmatpush.bf16.msra.mxu0 %v4185
    %4248 = vmatpush.bf16.msra.mxu0 %v4183
    %4249 = vmatpush.bf16.msra.mxu0 %v4181
    %4250 = vmatpush.bf16.msra.mxu0 %v4179
    %4251 = vmatmul.bf16.gmra.mxu0 %v4046
    %v4252 = vpop.f32.mrf.mxu0
    %v4253 = vadd.f32 0.0, %v4252
    %v4254 = vpop.f32.mrf.mxu0
    %v4255 = vadd.f32 0.0, %v4254
    %4256 = vmatmul.bf16.gmra.mxu0 %v4048
    %v4257 = vpop.f32.mrf.mxu0
    %v4258 = vadd.f32 0.0, %v4257
    %v4259 = vpop.f32.mrf.mxu0
    %v4260 = vadd.f32 0.0, %v4259
    %4261 = vdwg.mxu0
    %4262 = vmatpush.bf16.msra.mxu0 %v4209
    %4263 = vmatpush.bf16.msra.mxu0 %v4207
    %4264 = vmatpush.bf16.msra.mxu0 %v4205
    %4265 = vmatpush.bf16.msra.mxu0 %v4203
    %4266 = vmatpush.bf16.msra.mxu0 %v4201
    %4267 = vmatpush.bf16.msra.mxu0 %v4199
    %4268 = vmatpush.bf16.msra.mxu0 %v4197
    %4269 = vmatpush.bf16.msra.mxu0 %v4195
    %4270 = vmatmul.bf16.gmra.mxu0 %v4047
    %v4271 = vpop.f32.mrf.mxu0
    %v4272 = vadd.f32 %v4253, %v4271
    %v4273 = vpop.f32.mrf.mxu0
    %v4274 = vadd.f32 %v4255, %v4273
    %4275 = vmatmul.bf16.gmra.mxu0 %v4049
    %v4276 = vpop.f32.mrf.mxu0
    %v4277 = vadd.f32 %v4258, %v4276
    %v4278 = vpop.f32.mrf.mxu0
    %v4279 = vadd.f32 %v4260, %v4278
    %4280 = vdwg.mxu0
    %4281 = vmatpush.bf16.msra.mxu0 %v4194
    %4282 = vmatpush.bf16.msra.mxu0 %v4192
    %4283 = vmatpush.bf16.msra.mxu0 %v4190
    %4284 = vmatpush.bf16.msra.mxu0 %v4188
    %4285 = vmatpush.bf16.msra.mxu0 %v4186
    %4286 = vmatpush.bf16.msra.mxu0 %v4184
    %4287 = vmatpush.bf16.msra.mxu0 %v4182
    %4288 = vmatpush.bf16.msra.mxu0 %v4180
    %4289 = vmatmul.bf16.gmra.mxu0 %v4046
    %v4290 = vpop.f32.mrf.mxu0
    %v4291 = vadd.f32 0.0, %v4290
    %v4292 = vpop.f32.mrf.mxu0
    %v4293 = vadd.f32 0.0, %v4292
    %4294 = vmatmul.bf16.gmra.mxu0 %v4048
    %v4295 = vpop.f32.mrf.mxu0
    %v4296 = vadd.f32 0.0, %v4295
    %v4297 = vpop.f32.mrf.mxu0
    %v4298 = vadd.f32 0.0, %v4297
    %4299 = vdwg.mxu0
    %4300 = vmatpush.bf16.msra.mxu0 %v4210
    %4301 = vmatpush.bf16.msra.mxu0 %v4208
    %4302 = vmatpush.bf16.msra.mxu0 %v4206
    %4303 = vmatpush.bf16.msra.mxu0 %v4204
    %4304 = vmatpush.bf16.msra.mxu0 %v4202
    %4305 = vmatpush.bf16.msra.mxu0 %v4200
    %4306 = vmatpush.bf16.msra.mxu0 %v4198
    %4307 = vmatpush.bf16.msra.mxu0 %v4196
    %4308 = vmatmul.bf16.gmra.mxu0 %v4047
    %v4309 = vpop.f32.mrf.mxu0
    %v4310 = vadd.f32 %v4291, %v4309
    %v4311 = vpop.f32.mrf.mxu0
    %v4312 = vadd.f32 %v4293, %v4311
    %4313 = vmatmul.bf16.gmra.mxu0 %v4049
    %v4314 = vpop.f32.mrf.mxu0
    %v4315 = vadd.f32 %v4296, %v4314
    %v4316 = vpop.f32.mrf.mxu0
    %v4317 = vadd.f32 %v4298, %v4316
    %4318 = vdwg.mxu0
    %v4351 = vunpack.c.l.b16 %v3966
    %v4352 = vunpack.c.h.b16 %v3966
    %v4353 = vunpack.c.l.b16 %v3967
    %v4354 = vunpack.c.h.b16 %v3967
    %v4355 = vunpack.c.l.b16 %v3968
    %v4356 = vunpack.c.h.b16 %v3968
    %v4357 = vunpack.c.l.b16 %v3969
    %v4358 = vunpack.c.h.b16 %v3969
    %v4359 = vunpack.c.l.b16 %v3970
    %v4360 = vunpack.c.h.b16 %v3970
    %v4361 = vunpack.c.l.b16 %v3971
    %v4362 = vunpack.c.h.b16 %v3971
    %v4363 = vunpack.c.l.b16 %v3972
    %v4364 = vunpack.c.h.b16 %v3972
    %v4365 = vunpack.c.l.b16 %v3973
    %v4366 = vunpack.c.h.b16 %v3973
    %v4367 = vunpack.c.l.b16 %v3974
    %v4368 = vunpack.c.h.b16 %v3974
    %v4369 = vunpack.c.l.b16 %v3975
    %v4370 = vunpack.c.h.b16 %v3975
    %v4371 = vunpack.c.l.b16 %v3976
    %v4372 = vunpack.c.h.b16 %v3976
    %v4373 = vunpack.c.l.b16 %v3977
    %v4374 = vunpack.c.h.b16 %v3977
    %v4375 = vunpack.c.l.b16 %v3978
    %v4376 = vunpack.c.h.b16 %v3978
    %v4377 = vunpack.c.l.b16 %v3979
    %v4378 = vunpack.c.h.b16 %v3979
    %v4379 = vunpack.c.l.b16 %v3980
    %v4380 = vunpack.c.h.b16 %v3980
    %v4381 = vunpack.c.l.b16 %v3981
    %v4382 = vunpack.c.h.b16 %v3981
    %v4383 = vunpack.c.l.b16 %v3982
    %v4384 = vunpack.c.h.b16 %v3982
    %v4385 = vunpack.c.l.b16 %v3983
    %v4386 = vunpack.c.h.b16 %v3983
    %v4387 = vunpack.c.l.b16 %v3984
    %v4388 = vunpack.c.h.b16 %v3984
    %v4389 = vunpack.c.l.b16 %v3985
    %v4390 = vunpack.c.h.b16 %v3985
    %v4391 = vunpack.c.l.b16 %v3986
    %v4392 = vunpack.c.h.b16 %v3986
    %v4393 = vunpack.c.l.b16 %v3987
    %v4394 = vunpack.c.h.b16 %v3987
    %v4395 = vunpack.c.l.b16 %v3988
    %v4396 = vunpack.c.h.b16 %v3988
    %v4397 = vunpack.c.l.b16 %v3989
    %v4398 = vunpack.c.h.b16 %v3989
    %v4399 = vunpack.c.l.b16 %v3990
    %v4400 = vunpack.c.h.b16 %v3990
    %v4401 = vunpack.c.l.b16 %v3991
    %v4402 = vunpack.c.h.b16 %v3991
    %v4403 = vunpack.c.l.b16 %v3992
    %v4404 = vunpack.c.h.b16 %v3992
    %v4405 = vunpack.c.l.b16 %v3993
    %v4406 = vunpack.c.h.b16 %v3993
    %v4407 = vunpack.c.l.b16 %v3994
    %v4408 = vunpack.c.h.b16 %v3994
    %v4409 = vunpack.c.l.b16 %v3995
    %v4410 = vunpack.c.h.b16 %v3995
    %v4411 = vunpack.c.l.b16 %v3996
    %v4412 = vunpack.c.h.b16 %v3996
    %v4413 = vunpack.c.l.b16 %v3997
    %v4414 = vunpack.c.h.b16 %v3997
    %v4415 = vpack.c.b16 %v4353, %v4351
    %v4416 = vpack.c.b16 %v4354, %v4352
    %v4417 = vpack.c.b16 %v4357, %v4355
    %v4418 = vpack.c.b16 %v4358, %v4356
    %v4419 = vpack.c.b16 %v4361, %v4359
    %v4420 = vpack.c.b16 %v4362, %v4360
    %v4421 = vpack.c.b16 %v4365, %v4363
    %v4422 = vpack.c.b16 %v4366, %v4364
    %v4423 = vpack.c.b16 %v4369, %v4367
    %v4424 = vpack.c.b16 %v4370, %v4368
    %v4425 = vpack.c.b16 %v4373, %v4371
    %v4426 = vpack.c.b16 %v4374, %v4372
    %v4427 = vpack.c.b16 %v4377, %v4375
    %v4428 = vpack.c.b16 %v4378, %v4376
    %v4429 = vpack.c.b16 %v4381, %v4379
    %v4430 = vpack.c.b16 %v4382, %v4380
    %v4431 = vpack.c.b16 %v4385, %v4383
    %v4432 = vpack.c.b16 %v4386, %v4384
    %v4433 = vpack.c.b16 %v4389, %v4387
    %v4434 = vpack.c.b16 %v4390, %v4388
    %v4435 = vpack.c.b16 %v4393, %v4391
    %v4436 = vpack.c.b16 %v4394, %v4392
    %v4437 = vpack.c.b16 %v4397, %v4395
    %v4438 = vpack.c.b16 %v4398, %v4396
    %v4439 = vpack.c.b16 %v4401, %v4399
    %v4440 = vpack.c.b16 %v4402, %v4400
    %v4441 = vpack.c.b16 %v4405, %v4403
    %v4442 = vpack.c.b16 %v4406, %v4404
    %v4443 = vpack.c.b16 %v4409, %v4407
    %v4444 = vpack.c.b16 %v4410, %v4408
    %v4445 = vpack.c.b16 %v4413, %v4411
    %v4446 = vpack.c.b16 %v4414, %v4412
    %4479 = vmatpush.bf16.msra.mxu0 %v4429
    %4480 = vmatpush.bf16.msra.mxu0 %v4427
    %4481 = vmatpush.bf16.msra.mxu0 %v4425
    %4482 = vmatpush.bf16.msra.mxu0 %v4423
    %4483 = vmatpush.bf16.msra.mxu0 %v4421
    %4484 = vmatpush.bf16.msra.mxu0 %v4419
    %4485 = vmatpush.bf16.msra.mxu0 %v4417
    %4486 = vmatpush.bf16.msra.mxu0 %v4415
    %4487 = vmatmul.bf16.gmra.mxu0 %v3962
    %v4488 = vpop.f32.mrf.mxu0
    %v4489 = vadd.f32 %v4272, %v4488
    %v4490 = vpop.f32.mrf.mxu0
    %v4491 = vadd.f32 %v4274, %v4490
    %4492 = vmatmul.bf16.gmra.mxu0 %v3964
    %v4493 = vpop.f32.mrf.mxu0
    %v4494 = vadd.f32 %v4277, %v4493
    %v4495 = vpop.f32.mrf.mxu0
    %v4496 = vadd.f32 %v4279, %v4495
    %4497 = vdwg.mxu0
    %4498 = vmatpush.bf16.msra.mxu0 %v4445
    %4499 = vmatpush.bf16.msra.mxu0 %v4443
    %4500 = vmatpush.bf16.msra.mxu0 %v4441
    %4501 = vmatpush.bf16.msra.mxu0 %v4439
    %4502 = vmatpush.bf16.msra.mxu0 %v4437
    %4503 = vmatpush.bf16.msra.mxu0 %v4435
    %4504 = vmatpush.bf16.msra.mxu0 %v4433
    %4505 = vmatpush.bf16.msra.mxu0 %v4431
    %4506 = vmatmul.bf16.gmra.mxu0 %v3963
    %v4507 = vpop.f32.mrf.mxu0
    %v4508 = vadd.f32 %v4489, %v4507
    %v4509 = vpop.f32.mrf.mxu0
    %v4510 = vadd.f32 %v4491, %v4509
    %4511 = vmatmul.bf16.gmra.mxu0 %v3965
    %v4512 = vpop.f32.mrf.mxu0
    %v4513 = vadd.f32 %v4494, %v4512
    %v4514 = vpop.f32.mrf.mxu0
    %v4515 = vadd.f32 %v4496, %v4514
    %4516 = vdwg.mxu0
    %4517 = vmatpush.bf16.msra.mxu0 %v4430
    %4518 = vmatpush.bf16.msra.mxu0 %v4428
    %4519 = vmatpush.bf16.msra.mxu0 %v4426
    %4520 = vmatpush.bf16.msra.mxu0 %v4424
    %4521 = vmatpush.bf16.msra.mxu0 %v4422
    %4522 = vmatpush.bf16.msra.mxu0 %v4420
    %4523 = vmatpush.bf16.msra.mxu0 %v4418
    %4524 = vmatpush.bf16.msra.mxu0 %v4416
    %4525 = vmatmul.bf16.gmra.mxu0 %v3962
    %v4526 = vpop.f32.mrf.mxu0
    %v4527 = vadd.f32 %v4310, %v4526
    %v4528 = vpop.f32.mrf.mxu0
    %v4529 = vadd.f32 %v4312, %v4528
    %4530 = vmatmul.bf16.gmra.mxu0 %v3964
    %v4531 = vpop.f32.mrf.mxu0
    %v4532 = vadd.f32 %v4315, %v4531
    %v4533 = vpop.f32.mrf.mxu0
    %v4534 = vadd.f32 %v4317, %v4533
    %4535 = vdwg.mxu0
    %4536 = vmatpush.bf16.msra.mxu0 %v4446
    %4537 = vmatpush.bf16.msra.mxu0 %v4444
    %4538 = vmatpush.bf16.msra.mxu0 %v4442
    %4539 = vmatpush.bf16.msra.mxu0 %v4440
    %4540 = vmatpush.bf16.msra.mxu0 %v4438
    %4541 = vmatpush.bf16.msra.mxu0 %v4436
    %4542 = vmatpush.bf16.msra.mxu0 %v4434
    %4543 = vmatpush.bf16.msra.mxu0 %v4432
    %4544 = vmatmul.bf16.gmra.mxu0 %v3963
    %v4545 = vpop.f32.mrf.mxu0
    %v4546 = vadd.f32 %v4527, %v4545
    %v4547 = vpop.f32.mrf.mxu0
    %v4548 = vadd.f32 %v4529, %v4547
    %4549 = vmatmul.bf16.gmra.mxu0 %v3965
    %v4550 = vpop.f32.mrf.mxu0
    %v4551 = vadd.f32 %v4532, %v4550
    %v4552 = vpop.f32.mrf.mxu0
    %v4553 = vadd.f32 %v4534, %v4552
    %4554 = vdwg.mxu0
    %v4555 = vld [vmem:[#allocation4] sm:$0xfc]
    %v4556 = vld [vmem:[#allocation4 + $0x8] sm:$0xfc]
    %v4557 = vld [vmem:[#allocation4 + $0x20] sm:$0x3]
    %v4558 = vld [vmem:[#allocation4 + $0x28] sm:$0x3]
    %v4559 = vld [vmem:[#allocation4 + $0x30] sm:$0xfc]
    %v4560 = vld [vmem:[#allocation4 + $0x38] sm:$0xfc]
    %v4561 = vld [vmem:[#allocation4 + $0x50] sm:$0x3]
    %v4562 = vld [vmem:[#allocation4 + $0x58] sm:$0x3]
    %v4571 = vrot.slane %v4555, 2
    %v4572 = vrot.slane %v3956, 2
    %v4573 = vsel %vm1946, %v4571, %v4572
    %v4574 = vrot.slane %v4556, 2
    %v4575 = vrot.slane %v3957, 2
    %v4576 = vsel %vm1946, %v4574, %v4575
    %v4577 = vrot.slane %v4557, 2
    %v4578 = vsel %vm1946, %v4572, %v4577
    %v4579 = vrot.slane %v4558, 2
    %v4580 = vsel %vm1946, %v4575, %v4579
    %v4581 = vrot.slane %v4559, 2
    %v4582 = vrot.slane %v3960, 2
    %v4583 = vsel %vm1946, %v4581, %v4582
    %v4584 = vrot.slane %v4560, 2
    %v4585 = vrot.slane %v3961, 2
    %v4586 = vsel %vm1946, %v4584, %v4585
    %v4587 = vrot.slane %v4561, 2
    %v4588 = vsel %vm1946, %v4582, %v4587
    %v4589 = vrot.slane %v4562, 2
    %v4590 = vsel %vm1946, %v4585, %v4589
    %v4599 = vpack.c.bf16 %v4578, %v4573
    %v4600 = vpack.c.bf16 %v4580, %v4576
    %v4601 = vpack.c.bf16 %v4588, %v4583
    %v4602 = vpack.c.bf16 %v4590, %v4586
    %s4603 = scalar_lea.vmem [#allocation11], 512
    %v4604 = vld [vmem:[%s4603] sm:$0xff]
    %v4605 = vld [vmem:[%s4603 + $0x8] sm:$0xff]
    %v4606 = vld [vmem:[%s4603 + $0x10] sm:$0xff]
    %v4607 = vld [vmem:[%s4603 + $0x18] sm:$0xff]
    %v4608 = vld [vmem:[%s4603 + $0x20] sm:$0xff]
    %v4609 = vld [vmem:[%s4603 + $0x28] sm:$0xff]
    %v4610 = vld [vmem:[%s4603 + $0x30] sm:$0xff]
    %v4611 = vld [vmem:[%s4603 + $0x38] sm:$0xff]
    %v4612 = vld [vmem:[%s4603 + $0x40] sm:$0xff]
    %v4613 = vld [vmem:[%s4603 + $0x48] sm:$0xff]
    %v4614 = vld [vmem:[%s4603 + $0x50] sm:$0xff]
    %v4615 = vld [vmem:[%s4603 + $0x58] sm:$0xff]
    %v4616 = vld [vmem:[%s4603 + $0x60] sm:$0xff]
    %v4617 = vld [vmem:[%s4603 + $0x68] sm:$0xff]
    %v4618 = vld [vmem:[%s4603 + $0x70] sm:$0xff]
    %v4619 = vld [vmem:[%s4603 + $0x78] sm:$0xff]
    %v4620 = vld [vmem:[%s4603 + $0x80] sm:$0xff]
    %v4621 = vld [vmem:[%s4603 + $0x88] sm:$0xff]
    %v4622 = vld [vmem:[%s4603 + $0x90] sm:$0xff]
    %v4623 = vld [vmem:[%s4603 + $0x98] sm:$0xff]
    %v4624 = vld [vmem:[%s4603 + $0xa0] sm:$0xff]
    %v4625 = vld [vmem:[%s4603 + $0xa8] sm:$0xff]
    %v4626 = vld [vmem:[%s4603 + $0xb0] sm:$0xff]
    %v4627 = vld [vmem:[%s4603 + $0xb8] sm:$0xff]
    %v4628 = vld [vmem:[%s4603 + $0xc0] sm:$0xff]
    %v4629 = vld [vmem:[%s4603 + $0xc8] sm:$0xff]
    %v4630 = vld [vmem:[%s4603 + $0xd0] sm:$0xff]
    %v4631 = vld [vmem:[%s4603 + $0xd8] sm:$0xff]
    %v4632 = vld [vmem:[%s4603 + $0xe0] sm:$0xff]
    %v4633 = vld [vmem:[%s4603 + $0xe8] sm:$0xff]
    %v4634 = vld [vmem:[%s4603 + $0xf0] sm:$0xff]
    %v4635 = vld [vmem:[%s4603 + $0xf8] sm:$0xff]
    %v4668 = vunpack.c.l.b16 %v4604
    %v4669 = vunpack.c.h.b16 %v4604
    %v4670 = vunpack.c.l.b16 %v4605
    %v4671 = vunpack.c.h.b16 %v4605
    %v4672 = vunpack.c.l.b16 %v4606
    %v4673 = vunpack.c.h.b16 %v4606
    %v4674 = vunpack.c.l.b16 %v4607
    %v4675 = vunpack.c.h.b16 %v4607
    %v4676 = vunpack.c.l.b16 %v4608
    %v4677 = vunpack.c.h.b16 %v4608
    %v4678 = vunpack.c.l.b16 %v4609
    %v4679 = vunpack.c.h.b16 %v4609
    %v4680 = vunpack.c.l.b16 %v4610
    %v4681 = vunpack.c.h.b16 %v4610
    %v4682 = vunpack.c.l.b16 %v4611
    %v4683 = vunpack.c.h.b16 %v4611
    %v4684 = vunpack.c.l.b16 %v4612
    %v4685 = vunpack.c.h.b16 %v4612
    %v4686 = vunpack.c.l.b16 %v4613
    %v4687 = vunpack.c.h.b16 %v4613
    %v4688 = vunpack.c.l.b16 %v4614
    %v4689 = vunpack.c.h.b16 %v4614
    %v4690 = vunpack.c.l.b16 %v4615
    %v4691 = vunpack.c.h.b16 %v4615
    %v4692 = vunpack.c.l.b16 %v4616
    %v4693 = vunpack.c.h.b16 %v4616
    %v4694 = vunpack.c.l.b16 %v4617
    %v4695 = vunpack.c.h.b16 %v4617
    %v4696 = vunpack.c.l.b16 %v4618
    %v4697 = vunpack.c.h.b16 %v4618
    %v4698 = vunpack.c.l.b16 %v4619
    %v4699 = vunpack.c.h.b16 %v4619
    %v4700 = vunpack.c.l.b16 %v4620
    %v4701 = vunpack.c.h.b16 %v4620
    %v4702 = vunpack.c.l.b16 %v4621
    %v4703 = vunpack.c.h.b16 %v4621
    %v4704 = vunpack.c.l.b16 %v4622
    %v4705 = vunpack.c.h.b16 %v4622
    %v4706 = vunpack.c.l.b16 %v4623
    %v4707 = vunpack.c.h.b16 %v4623
    %v4708 = vunpack.c.l.b16 %v4624
    %v4709 = vunpack.c.h.b16 %v4624
    %v4710 = vunpack.c.l.b16 %v4625
    %v4711 = vunpack.c.h.b16 %v4625
    %v4712 = vunpack.c.l.b16 %v4626
    %v4713 = vunpack.c.h.b16 %v4626
    %v4714 = vunpack.c.l.b16 %v4627
    %v4715 = vunpack.c.h.b16 %v4627
    %v4716 = vunpack.c.l.b16 %v4628
    %v4717 = vunpack.c.h.b16 %v4628
    %v4718 = vunpack.c.l.b16 %v4629
    %v4719 = vunpack.c.h.b16 %v4629
    %v4720 = vunpack.c.l.b16 %v4630
    %v4721 = vunpack.c.h.b16 %v4630
    %v4722 = vunpack.c.l.b16 %v4631
    %v4723 = vunpack.c.h.b16 %v4631
    %v4724 = vunpack.c.l.b16 %v4632
    %v4725 = vunpack.c.h.b16 %v4632
    %v4726 = vunpack.c.l.b16 %v4633
    %v4727 = vunpack.c.h.b16 %v4633
    %v4728 = vunpack.c.l.b16 %v4634
    %v4729 = vunpack.c.h.b16 %v4634
    %v4730 = vunpack.c.l.b16 %v4635
    %v4731 = vunpack.c.h.b16 %v4635
    %v4732 = vpack.c.b16 %v4670, %v4668
    %v4733 = vpack.c.b16 %v4671, %v4669
    %v4734 = vpack.c.b16 %v4674, %v4672
    %v4735 = vpack.c.b16 %v4675, %v4673
    %v4736 = vpack.c.b16 %v4678, %v4676
    %v4737 = vpack.c.b16 %v4679, %v4677
    %v4738 = vpack.c.b16 %v4682, %v4680
    %v4739 = vpack.c.b16 %v4683, %v4681
    %v4740 = vpack.c.b16 %v4686, %v4684
    %v4741 = vpack.c.b16 %v4687, %v4685
    %v4742 = vpack.c.b16 %v4690, %v4688
    %v4743 = vpack.c.b16 %v4691, %v4689
    %v4744 = vpack.c.b16 %v4694, %v4692
    %v4745 = vpack.c.b16 %v4695, %v4693
    %v4746 = vpack.c.b16 %v4698, %v4696
    %v4747 = vpack.c.b16 %v4699, %v4697
    %v4748 = vpack.c.b16 %v4702, %v4700
    %v4749 = vpack.c.b16 %v4703, %v4701
    %v4750 = vpack.c.b16 %v4706, %v4704
    %v4751 = vpack.c.b16 %v4707, %v4705
    %v4752 = vpack.c.b16 %v4710, %v4708
    %v4753 = vpack.c.b16 %v4711, %v4709
    %v4754 = vpack.c.b16 %v4714, %v4712
    %v4755 = vpack.c.b16 %v4715, %v4713
    %v4756 = vpack.c.b16 %v4718, %v4716
    %v4757 = vpack.c.b16 %v4719, %v4717
    %v4758 = vpack.c.b16 %v4722, %v4720
    %v4759 = vpack.c.b16 %v4723, %v4721
    %v4760 = vpack.c.b16 %v4726, %v4724
    %v4761 = vpack.c.b16 %v4727, %v4725
    %v4762 = vpack.c.b16 %v4730, %v4728
    %v4763 = vpack.c.b16 %v4731, %v4729
    %4796 = vmatpush.bf16.msra.mxu0 %v4746
    %4797 = vmatpush.bf16.msra.mxu0 %v4744
    %4798 = vmatpush.bf16.msra.mxu0 %v4742
    %4799 = vmatpush.bf16.msra.mxu0 %v4740
    %4800 = vmatpush.bf16.msra.mxu0 %v4738
    %4801 = vmatpush.bf16.msra.mxu0 %v4736
    %4802 = vmatpush.bf16.msra.mxu0 %v4734
    %4803 = vmatpush.bf16.msra.mxu0 %v4732
    %4804 = vmatmul.bf16.gmra.mxu0 %v4599
    %v4805 = vpop.f32.mrf.mxu0
    %v4806 = vadd.f32 0.0, %v4805
    %v4807 = vpop.f32.mrf.mxu0
    %v4808 = vadd.f32 0.0, %v4807
    %4809 = vmatmul.bf16.gmra.mxu0 %v4601
    %v4810 = vpop.f32.mrf.mxu0
    %v4811 = vadd.f32 0.0, %v4810
    %v4812 = vpop.f32.mrf.mxu0
    %v4813 = vadd.f32 0.0, %v4812
    %4814 = vdwg.mxu0
    %4815 = vmatpush.bf16.msra.mxu0 %v4762
    %4816 = vmatpush.bf16.msra.mxu0 %v4760
    %4817 = vmatpush.bf16.msra.mxu0 %v4758
    %4818 = vmatpush.bf16.msra.mxu0 %v4756
    %4819 = vmatpush.bf16.msra.mxu0 %v4754
    %4820 = vmatpush.bf16.msra.mxu0 %v4752
    %4821 = vmatpush.bf16.msra.mxu0 %v4750
    %4822 = vmatpush.bf16.msra.mxu0 %v4748
    %4823 = vmatmul.bf16.gmra.mxu0 %v4600
    %v4824 = vpop.f32.mrf.mxu0
    %v4825 = vadd.f32 %v4806, %v4824
    %v4826 = vpop.f32.mrf.mxu0
    %v4827 = vadd.f32 %v4808, %v4826
    %4828 = vmatmul.bf16.gmra.mxu0 %v4602
    %v4829 = vpop.f32.mrf.mxu0
    %v4830 = vadd.f32 %v4811, %v4829
    %v4831 = vpop.f32.mrf.mxu0
    %v4832 = vadd.f32 %v4813, %v4831
    %4833 = vdwg.mxu0
    %4834 = vmatpush.bf16.msra.mxu0 %v4747
    %4835 = vmatpush.bf16.msra.mxu0 %v4745
    %4836 = vmatpush.bf16.msra.mxu0 %v4743
    %4837 = vmatpush.bf16.msra.mxu0 %v4741
    %4838 = vmatpush.bf16.msra.mxu0 %v4739
    %4839 = vmatpush.bf16.msra.mxu0 %v4737
    %4840 = vmatpush.bf16.msra.mxu0 %v4735
    %4841 = vmatpush.bf16.msra.mxu0 %v4733
    %4842 = vmatmul.bf16.gmra.mxu0 %v4599
    %v4843 = vpop.f32.mrf.mxu0
    %v4844 = vadd.f32 0.0, %v4843
    %v4845 = vpop.f32.mrf.mxu0
    %v4846 = vadd.f32 0.0, %v4845
    %4847 = vmatmul.bf16.gmra.mxu0 %v4601
    %v4848 = vpop.f32.mrf.mxu0
    %v4849 = vadd.f32 0.0, %v4848
    %v4850 = vpop.f32.mrf.mxu0
    %v4851 = vadd.f32 0.0, %v4850
    %4852 = vdwg.mxu0
    %4853 = vmatpush.bf16.msra.mxu0 %v4763
    %4854 = vmatpush.bf16.msra.mxu0 %v4761
    %4855 = vmatpush.bf16.msra.mxu0 %v4759
    %4856 = vmatpush.bf16.msra.mxu0 %v4757
    %4857 = vmatpush.bf16.msra.mxu0 %v4755
    %4858 = vmatpush.bf16.msra.mxu0 %v4753
    %4859 = vmatpush.bf16.msra.mxu0 %v4751
    %4860 = vmatpush.bf16.msra.mxu0 %v4749
    %4861 = vmatmul.bf16.gmra.mxu0 %v4600
    %v4862 = vpop.f32.mrf.mxu0
    %v4863 = vadd.f32 %v4844, %v4862
    %v4864 = vpop.f32.mrf.mxu0
    %v4865 = vadd.f32 %v4846, %v4864
    %4866 = vmatmul.bf16.gmra.mxu0 %v4602
    %v4867 = vpop.f32.mrf.mxu0
    %v4868 = vadd.f32 %v4849, %v4867
    %v4869 = vpop.f32.mrf.mxu0
    %v4870 = vadd.f32 %v4851, %v4869
    %4871 = vdwg.mxu0
    %v4872 = vadd.f32 %v4508, %v4825
    %v4873 = vadd.f32 %v4546, %v4863
    %v4874 = vadd.f32 %v4510, %v4827
    %v4875 = vadd.f32 %v4548, %v4865
    %v4876 = vadd.f32 %v4513, %v4830
    %v4877 = vadd.f32 %v4551, %v4868
    %v4878 = vadd.f32 %v4515, %v4832
    %v4879 = vadd.f32 %v4553, %v4870
    %s4880 = scalar_lea.vmem %s5, 3
    %v4881 = vld [vmem:[%s4880] ss:$4 sm:$0x3]
    %v4883 = vperm.slane %v4881, 0
    %v4884 = vperm.slane %v4881, 1
    %v4887 = vadd.f32 %v4872, %v4883
    %v4888 = vadd.f32 %v4873, %v4884
    %v4889 = vadd.f32 %v4874, %v4883
    %v4890 = vadd.f32 %v4875, %v4884
    %v4891 = vadd.f32 %v4876, %v4883
    %v4892 = vadd.f32 %v4877, %v4884
    %v4893 = vadd.f32 %v4878, %v4883
    %v4894 = vadd.f32 %v4879, %v4884
    %v4895 = vadd.f32 %v4887, %v4889
    %v4896 = vadd.f32 %v4895, %v4891
    %v4897 = vadd.f32 %v4896, %v4893
    %v4898 = vrot.slane %v4897, 4
    %v4899 = vadd.f32 %v4897, %v4898
    %v4900 = vrot.slane %v4899, 2
    %v4901 = vadd.f32 %v4899, %v4900
    %v4902 = vrot.slane %v4901, 1
    %v4903 = vadd.f32 %v4901, %v4902
    %v4904 = vadd.f32 %v4888, %v4890
    %v4905 = vadd.f32 %v4904, %v4892
    %v4906 = vadd.f32 %v4905, %v4894
    %v4907 = vrot.slane %v4906, 4
    %v4908 = vadd.f32 %v4906, %v4907
    %v4909 = vrot.slane %v4908, 2
    %v4910 = vadd.f32 %v4908, %v4909
    %v4911 = vrot.slane %v4910, 1
    %v4912 = vadd.f32 %v4910, %v4911
    %v4913 = vmul.f32 %v4887, %v4887
    %v4914 = vmul.f32 %v4888, %v4888
    %v4915 = vmul.f32 %v4889, %v4889
    %v4916 = vmul.f32 %v4890, %v4890
    %v4917 = vmul.f32 %v4891, %v4891
    %v4918 = vmul.f32 %v4892, %v4892
    %v4919 = vmul.f32 %v4893, %v4893
    %v4920 = vmul.f32 %v4894, %v4894
    %v4921 = vadd.f32 %v4913, %v4915
    %v4922 = vadd.f32 %v4921, %v4917
    %v4923 = vadd.f32 %v4922, %v4919
    %v4924 = vrot.slane %v4923, 4
    %v4925 = vadd.f32 %v4923, %v4924
    %v4926 = vrot.slane %v4925, 2
    %v4927 = vadd.f32 %v4925, %v4926
    %v4928 = vrot.slane %v4927, 1
    %v4929 = vadd.f32 %v4927, %v4928
    %v4930 = vadd.f32 %v4914, %v4916
    %v4931 = vadd.f32 %v4930, %v4918
    %v4932 = vadd.f32 %v4931, %v4920
    %v4933 = vrot.slane %v4932, 4
    %v4934 = vadd.f32 %v4932, %v4933
    %v4935 = vrot.slane %v4934, 2
    %v4936 = vadd.f32 %v4934, %v4935
    %v4937 = vrot.slane %v4936, 1
    %v4938 = vadd.f32 %v4936, %v4937
    %v4939 = vld [vmem:[#allocation14] sm:$0xff]
    %v4940 = vld [vmem:[#allocation14 + $0x8] sm:$0xff]
    %v4941 = vld [vmem:[#allocation14 + $0x10] sm:$0xff]
    %v4942 = vld [vmem:[#allocation14 + $0x18] sm:$0xff]
    %v4943 = vld [vmem:[#allocation14 + $0x20] sm:$0xff]
    %v4944 = vld [vmem:[#allocation14 + $0x28] sm:$0xff]
    %v4945 = vld [vmem:[#allocation14 + $0x30] sm:$0xff]
    %v4946 = vld [vmem:[#allocation14 + $0x38] sm:$0xff]
    %v4947 = vld [vmem:[#allocation14 + $0x40] sm:$0xff]
    %v4948 = vld [vmem:[#allocation14 + $0x48] sm:$0xff]
    %v4949 = vld [vmem:[#allocation14 + $0x50] sm:$0xff]
    %v4950 = vld [vmem:[#allocation14 + $0x58] sm:$0xff]
    %v4951 = vld [vmem:[#allocation14 + $0x60] sm:$0xff]
    %v4952 = vld [vmem:[#allocation14 + $0x68] sm:$0xff]
    %v4953 = vld [vmem:[#allocation14 + $0x70] sm:$0xff]
    %v4954 = vld [vmem:[#allocation14 + $0x78] sm:$0xff]
    %v4955 = vld [vmem:[#allocation14 + $0x80] sm:$0xff]
    %v4956 = vld [vmem:[#allocation14 + $0x88] sm:$0xff]
    %v4957 = vld [vmem:[#allocation14 + $0x90] sm:$0xff]
    %v4958 = vld [vmem:[#allocation14 + $0x98] sm:$0xff]
    %v4959 = vld [vmem:[#allocation14 + $0xa0] sm:$0xff]
    %v4960 = vld [vmem:[#allocation14 + $0xa8] sm:$0xff]
    %v4961 = vld [vmem:[#allocation14 + $0xb0] sm:$0xff]
    %v4962 = vld [vmem:[#allocation14 + $0xb8] sm:$0xff]
    %v4963 = vld [vmem:[#allocation14 + $0xc0] sm:$0xff]
    %v4964 = vld [vmem:[#allocation14 + $0xc8] sm:$0xff]
    %v4965 = vld [vmem:[#allocation14 + $0xd0] sm:$0xff]
    %v4966 = vld [vmem:[#allocation14 + $0xd8] sm:$0xff]
    %v4967 = vld [vmem:[#allocation14 + $0xe0] sm:$0xff]
    %v4968 = vld [vmem:[#allocation14 + $0xe8] sm:$0xff]
    %v4969 = vld [vmem:[#allocation14 + $0xf0] sm:$0xff]
    %v4970 = vld [vmem:[#allocation14 + $0xf8] sm:$0xff]
    %v4971 = vld [vmem:[#allocation14 + $0x100] sm:$0xff]
    %v4972 = vld [vmem:[#allocation14 + $0x108] sm:$0xff]
    %v4973 = vld [vmem:[#allocation14 + $0x110] sm:$0xff]
    %v4974 = vld [vmem:[#allocation14 + $0x118] sm:$0xff]
    %v4975 = vld [vmem:[#allocation14 + $0x120] sm:$0xff]
    %v4976 = vld [vmem:[#allocation14 + $0x128] sm:$0xff]
    %v4977 = vld [vmem:[#allocation14 + $0x130] sm:$0xff]
    %v4978 = vld [vmem:[#allocation14 + $0x138] sm:$0xff]
    %v4979 = vld [vmem:[#allocation14 + $0x140] sm:$0xff]
    %v4980 = vld [vmem:[#allocation14 + $0x148] sm:$0xff]
    %v4981 = vld [vmem:[#allocation14 + $0x150] sm:$0xff]
    %v4982 = vld [vmem:[#allocation14 + $0x158] sm:$0xff]
    %v4983 = vld [vmem:[#allocation14 + $0x160] sm:$0xff]
    %v4984 = vld [vmem:[#allocation14 + $0x168] sm:$0xff]
    %v4985 = vld [vmem:[#allocation14 + $0x170] sm:$0xff]
    %v4986 = vld [vmem:[#allocation14 + $0x178] sm:$0xff]
    %v4987 = vld [vmem:[#allocation14 + $0x180] sm:$0xff]
    %v4988 = vld [vmem:[#allocation14 + $0x188] sm:$0xff]
    %v4989 = vld [vmem:[#allocation14 + $0x190] sm:$0xff]
    %v4990 = vld [vmem:[#allocation14 + $0x198] sm:$0xff]
    %v4991 = vld [vmem:[#allocation14 + $0x1a0] sm:$0xff]
    %v4992 = vld [vmem:[#allocation14 + $0x1a8] sm:$0xff]
    %v4993 = vld [vmem:[#allocation14 + $0x1b0] sm:$0xff]
    %v4994 = vld [vmem:[#allocation14 + $0x1b8] sm:$0xff]
    %v4995 = vld [vmem:[#allocation14 + $0x1c0] sm:$0xff]
    %v4996 = vld [vmem:[#allocation14 + $0x1c8] sm:$0xff]
    %v4997 = vld [vmem:[#allocation14 + $0x1d0] sm:$0xff]
    %v4998 = vld [vmem:[#allocation14 + $0x1d8] sm:$0xff]
    %v4999 = vld [vmem:[#allocation14 + $0x1e0] sm:$0xff]
    %v5000 = vld [vmem:[#allocation14 + $0x1e8] sm:$0xff]
    %v5001 = vld [vmem:[#allocation14 + $0x1f0] sm:$0xff]
    %v5002 = vld [vmem:[#allocation14 + $0x1f8] sm:$0xff]
    %5003 = vmatpush.msra.mxu0 %v4969
    %5004 = vmatpush.msra.mxu0 %v4967
    %5005 = vmatpush.msra.mxu0 %v4965
    %5006 = vmatpush.msra.mxu0 %v4963
    %5007 = vmatpush.msra.mxu0 %v4961
    %5008 = vmatpush.msra.mxu0 %v4959
    %5009 = vmatpush.msra.mxu0 %v4957
    %5010 = vmatpush.msra.mxu0 %v4955
    %5011 = vmatpush.msra.mxu0 %v4953
    %5012 = vmatpush.msra.mxu0 %v4951
    %5013 = vmatpush.msra.mxu0 %v4949
    %5014 = vmatpush.msra.mxu0 %v4947
    %5015 = vmatpush.msra.mxu0 %v4945
    %5016 = vmatpush.msra.mxu0 %v4943
    %5017 = vmatpush.msra.mxu0 %v4941
    %5018 = vmatpush.msra.mxu0 %v4939
    %5019 = vmatmul.f32.gmra.mxu0 %v4903
    %v5020 = vpop.f32.mrf.mxu0
    %v5021 = vadd.f32 0.0, %v5020
    %5022 = vdwg.mxu0
    %5023 = vmatpush.msra.mxu0 %v5001
    %5024 = vmatpush.msra.mxu0 %v4999
    %5025 = vmatpush.msra.mxu0 %v4997
    %5026 = vmatpush.msra.mxu0 %v4995
    %5027 = vmatpush.msra.mxu0 %v4993
    %5028 = vmatpush.msra.mxu0 %v4991
    %5029 = vmatpush.msra.mxu0 %v4989
    %5030 = vmatpush.msra.mxu0 %v4987
    %5031 = vmatpush.msra.mxu0 %v4985
    %5032 = vmatpush.msra.mxu0 %v4983
    %5033 = vmatpush.msra.mxu0 %v4981
    %5034 = vmatpush.msra.mxu0 %v4979
    %5035 = vmatpush.msra.mxu0 %v4977
    %5036 = vmatpush.msra.mxu0 %v4975
    %5037 = vmatpush.msra.mxu0 %v4973
    %5038 = vmatpush.msra.mxu0 %v4971
    %5039 = vmatmul.f32.gmra.mxu0 %v4912
    %v5040 = vpop.f32.mrf.mxu0
    %v5041 = vadd.f32 %v5021, %v5040
    %5042 = vdwg.mxu0
    %5043 = vmatpush.msra.mxu0 %v4970
    %5044 = vmatpush.msra.mxu0 %v4968
    %5045 = vmatpush.msra.mxu0 %v4966
    %5046 = vmatpush.msra.mxu0 %v4964
    %5047 = vmatpush.msra.mxu0 %v4962
    %5048 = vmatpush.msra.mxu0 %v4960
    %5049 = vmatpush.msra.mxu0 %v4958
    %5050 = vmatpush.msra.mxu0 %v4956
    %5051 = vmatpush.msra.mxu0 %v4954
    %5052 = vmatpush.msra.mxu0 %v4952
    %5053 = vmatpush.msra.mxu0 %v4950
    %5054 = vmatpush.msra.mxu0 %v4948
    %5055 = vmatpush.msra.mxu0 %v4946
    %5056 = vmatpush.msra.mxu0 %v4944
    %5057 = vmatpush.msra.mxu0 %v4942
    %5058 = vmatpush.msra.mxu0 %v4940
    %5059 = vmatmul.f32.gmra.mxu0 %v4903
    %v5060 = vpop.f32.mrf.mxu0
    %v5061 = vadd.f32 0.0, %v5060
    %5062 = vdwg.mxu0
    %5063 = vmatpush.msra.mxu0 %v5002
    %5064 = vmatpush.msra.mxu0 %v5000
    %5065 = vmatpush.msra.mxu0 %v4998
    %5066 = vmatpush.msra.mxu0 %v4996
    %5067 = vmatpush.msra.mxu0 %v4994
    %5068 = vmatpush.msra.mxu0 %v4992
    %5069 = vmatpush.msra.mxu0 %v4990
    %5070 = vmatpush.msra.mxu0 %v4988
    %5071 = vmatpush.msra.mxu0 %v4986
    %5072 = vmatpush.msra.mxu0 %v4984
    %5073 = vmatpush.msra.mxu0 %v4982
    %5074 = vmatpush.msra.mxu0 %v4980
    %5075 = vmatpush.msra.mxu0 %v4978
    %5076 = vmatpush.msra.mxu0 %v4976
    %5077 = vmatpush.msra.mxu0 %v4974
    %5078 = vmatpush.msra.mxu0 %v4972
    %5079 = vmatmul.f32.gmra.mxu0 %v4912
    %v5080 = vpop.f32.mrf.mxu0
    %v5081 = vadd.f32 %v5061, %v5080
    %5082 = vdwg.mxu0
    %v5083 = vmul.f32 %v5041, 0.001953125
    %v5084 = vmul.f32 %v5081, 0.001953125
    %5085 = vmatpush.msra.mxu0 %v4969
    %5086 = vmatpush.msra.mxu0 %v4967
    %5087 = vmatpush.msra.mxu0 %v4965
    %5088 = vmatpush.msra.mxu0 %v4963
    %5089 = vmatpush.msra.mxu0 %v4961
    %5090 = vmatpush.msra.mxu0 %v4959
    %5091 = vmatpush.msra.mxu0 %v4957
    %5092 = vmatpush.msra.mxu0 %v4955
    %5093 = vmatpush.msra.mxu0 %v4953
    %5094 = vmatpush.msra.mxu0 %v4951
    %5095 = vmatpush.msra.mxu0 %v4949
    %5096 = vmatpush.msra.mxu0 %v4947
    %5097 = vmatpush.msra.mxu0 %v4945
    %5098 = vmatpush.msra.mxu0 %v4943
    %5099 = vmatpush.msra.mxu0 %v4941
    %5100 = vmatpush.msra.mxu0 %v4939
    %5101 = vmatmul.f32.gmra.mxu0 %v4929
    %v5102 = vpop.f32.mrf.mxu0
    %v5103 = vadd.f32 0.0, %v5102
    %5104 = vdwg.mxu0
    %5105 = vmatpush.msra.mxu0 %v5001
    %5106 = vmatpush.msra.mxu0 %v4999
    %5107 = vmatpush.msra.mxu0 %v4997
    %5108 = vmatpush.msra.mxu0 %v4995
    %5109 = vmatpush.msra.mxu0 %v4993
    %5110 = vmatpush.msra.mxu0 %v4991
    %5111 = vmatpush.msra.mxu0 %v4989
    %5112 = vmatpush.msra.mxu0 %v4987
    %5113 = vmatpush.msra.mxu0 %v4985
    %5114 = vmatpush.msra.mxu0 %v4983
    %5115 = vmatpush.msra.mxu0 %v4981
    %5116 = vmatpush.msra.mxu0 %v4979
    %5117 = vmatpush.msra.mxu0 %v4977
    %5118 = vmatpush.msra.mxu0 %v4975
    %5119 = vmatpush.msra.mxu0 %v4973
    %5120 = vmatpush.msra.mxu0 %v4971
    %5121 = vmatmul.f32.gmra.mxu0 %v4938
    %v5122 = vpop.f32.mrf.mxu0
    %v5123 = vadd.f32 %v5103, %v5122
    %5124 = vdwg.mxu0
    %5125 = vmatpush.msra.mxu0 %v4970
    %5126 = vmatpush.msra.mxu0 %v4968
    %5127 = vmatpush.msra.mxu0 %v4966
    %5128 = vmatpush.msra.mxu0 %v4964
    %5129 = vmatpush.msra.mxu0 %v4962
    %5130 = vmatpush.msra.mxu0 %v4960
    %5131 = vmatpush.msra.mxu0 %v4958
    %5132 = vmatpush.msra.mxu0 %v4956
    %5133 = vmatpush.msra.mxu0 %v4954
    %5134 = vmatpush.msra.mxu0 %v4952
    %5135 = vmatpush.msra.mxu0 %v4950
    %5136 = vmatpush.msra.mxu0 %v4948
    %5137 = vmatpush.msra.mxu0 %v4946
    %5138 = vmatpush.msra.mxu0 %v4944
    %5139 = vmatpush.msra.mxu0 %v4942
    %5140 = vmatpush.msra.mxu0 %v4940
    %5141 = vmatmul.f32.gmra.mxu0 %v4929
    %v5142 = vpop.f32.mrf.mxu0
    %v5143 = vadd.f32 0.0, %v5142
    %5144 = vdwg.mxu0
    %5145 = vmatpush.msra.mxu0 %v5002
    %5146 = vmatpush.msra.mxu0 %v5000
    %5147 = vmatpush.msra.mxu0 %v4998
    %5148 = vmatpush.msra.mxu0 %v4996
    %5149 = vmatpush.msra.mxu0 %v4994
    %5150 = vmatpush.msra.mxu0 %v4992
    %5151 = vmatpush.msra.mxu0 %v4990
    %5152 = vmatpush.msra.mxu0 %v4988
    %5153 = vmatpush.msra.mxu0 %v4986
    %5154 = vmatpush.msra.mxu0 %v4984
    %5155 = vmatpush.msra.mxu0 %v4982
    %5156 = vmatpush.msra.mxu0 %v4980
    %5157 = vmatpush.msra.mxu0 %v4978
    %5158 = vmatpush.msra.mxu0 %v4976
    %5159 = vmatpush.msra.mxu0 %v4974
    %5160 = vmatpush.msra.mxu0 %v4972
    %5161 = vmatmul.f32.gmra.mxu0 %v4938
    %v5162 = vpop.f32.mrf.mxu0
    %v5163 = vadd.f32 %v5143, %v5162
    %5164 = vdwg.mxu0
    %v5165 = vmul.f32 %v5123, 0.001953125
    %v5166 = vmul.f32 %v5163, 0.001953125
    %v5167 = vmul.f32 %v5083, %v5083
    %v5168 = vmul.f32 %v5084, %v5084
    %v5169 = vsub.f32 %v5165, %v5167
    %v5170 = vsub.f32 %v5166, %v5168
    %v5171 = vadd.f32 %v5169, 1e-05
    %v5172 = vadd.f32 %v5170, 1e-05
    %v5173 = vrsqrt.pop %v5171
    %v5174 = vmul.f32 %v5173, %v5171
    %v5175 = vmul.f32 %v5174, %v5173
    %v5176 = vmul.f32 0.5, %v5175
    %v5177 = vsub.f32 1.5, %v5176
    %v5178 = vmul.f32 %v5173, %v5177
    %vm5179 = vweird.f32 %v5171
    %vm5180 = vweird.f32 %v5173
    %vm5181 = vmor %vm5179, %vm5180
    %v5182 = vsel %vm5181, %v5173, %v5178
    %v5183 = vrsqrt.pop %v5172
    %v5184 = vmul.f32 %v5183, %v5172
    %v5185 = vmul.f32 %v5184, %v5183
    %v5186 = vmul.f32 0.5, %v5185
    %v5187 = vsub.f32 1.5, %v5186
    %v5188 = vmul.f32 %v5183, %v5187
    %vm5189 = vweird.f32 %v5172
    %vm5190 = vweird.f32 %v5183
    %vm5191 = vmor %vm5189, %vm5190
    %v5192 = vsel %vm5191, %v5183, %v5188
    %s5193 = scalar_lea.vmem %s6, 3
    %v5194 = vld [vmem:[%s5193] ss:$4 sm:$0x3]
    %v5197 = vrot.slane %v5192, 7
    %v5198 = vsel %vm1030, %v5182, %v5197
    %v5200 = vmul.f32 %v5194, %v5198
    %s5201 = scalar_lea.vmem %s7, 3
    %v5202 = vld [vmem:[%s5201] ss:$4 sm:$0x3]
    %v5204 = vperm.slane %v5200, 0
    %v5205 = vperm.slane %v5200, 1
    %v5208 = vmul.f32 %v5083, %v5204
    %v5209 = vmul.f32 %v5084, %v5205
    %v5212 = vrot.slane %v5209, 7
    %v5213 = vsel %vm1030, %v5208, %v5212
    %v5215 = vsub.f32 %v5202, %v5213
    %v5216 = vmul.f32 %v4887, %v5204
    %v5217 = vmul.f32 %v4888, %v5205
    %v5218 = vmul.f32 %v4889, %v5204
    %v5219 = vmul.f32 %v4890, %v5205
    %v5220 = vmul.f32 %v4891, %v5204
    %v5221 = vmul.f32 %v4892, %v5205
    %v5222 = vmul.f32 %v4893, %v5204
    %v5223 = vmul.f32 %v4894, %v5205
    %v5225 = vperm.slane %v5215, 0
    %v5226 = vperm.slane %v5215, 1
    %v5229 = vadd.f32 %v5216, %v5225
    %v5230 = vadd.f32 %v5217, %v5226
    %v5231 = vadd.f32 %v5218, %v5225
    %v5232 = vadd.f32 %v5219, %v5226
    %v5233 = vadd.f32 %v5220, %v5225
    %v5234 = vadd.f32 %v5221, %v5226
    %v5235 = vadd.f32 %v5222, %v5225
    %v5236 = vadd.f32 %v5223, %v5226
    %v5237 = vmax.f32 %v5229, 0.0
    %v5238 = vmax.f32 %v5230, 0.0
    %v5239 = vmax.f32 %v5231, 0.0
    %v5240 = vmax.f32 %v5232, 0.0
    %v5241 = vmax.f32 %v5233, 0.0
    %v5242 = vmax.f32 %v5234, 0.0
    %v5243 = vmax.f32 %v5235, 0.0
    %v5244 = vmax.f32 %v5236, 0.0
    %v5245 = vld [vmem:[%s11] sm:$0xff]
    %v5246 = vld [vmem:[%s11 + $0x8] sm:$0xff]
    %vm5247 = vcmask 261120
    %v5249 = vsel %vm5247, %v5245, 0
    %v5252 = vsel %vm5247, %v5246, 0
    %5254 = vmatpush.msra.mxu0 0.0
    %5255 = vmatpush.msra.mxu0 0.0
    %5256 = vmatpush.msra.mxu0 0.0
    %5257 = vmatpush.msra.mxu0 0.0
    %5258 = vmatpush.msra.mxu0 0.0
    %5259 = vmatpush.msra.mxu0 0.0
    %5260 = vmatpush.msra.mxu0 0.0
    %5261 = vmatpush.msra.mxu0 0.0
    %5262 = vmatpush.msra.mxu0 0.0
    %5263 = vmatpush.msra.mxu0 0.0
    %5264 = vmatpush.msra.mxu0 0.0
    %5265 = vmatpush.msra.mxu0 0.0
    %5266 = vmatpush.msra.mxu0 %v5243
    %5267 = vmatpush.msra.mxu0 %v5241
    %5268 = vmatpush.msra.mxu0 %v5239
    %5269 = vmatpush.msra.mxu0 %v5237
    %5270 = vmatmul.f32.gmra.mxu0 %v5249
    %v5271 = vpop.f32.mrf.mxu0
    %v5272 = vadd.f32 0.0, %v5271
    %5273 = vmatmul.f32.gmra.mxu0 %v5252
    %v5274 = vpop.f32.mrf.mxu0
    %v5275 = vadd.f32 0.0, %v5274
    %5276 = vdwg.mxu0
    %5277 = vmatpush.msra.mxu0 0.0
    %5278 = vmatpush.msra.mxu0 0.0
    %5279 = vmatpush.msra.mxu0 0.0
    %5280 = vmatpush.msra.mxu0 0.0
    %5281 = vmatpush.msra.mxu0 0.0
    %5282 = vmatpush.msra.mxu0 0.0
    %5283 = vmatpush.msra.mxu0 0.0
    %5284 = vmatpush.msra.mxu0 0.0
    %5285 = vmatpush.msra.mxu0 0.0
    %5286 = vmatpush.msra.mxu0 0.0
    %5287 = vmatpush.msra.mxu0 0.0
    %5288 = vmatpush.msra.mxu0 0.0
    %5289 = vmatpush.msra.mxu0 %v5244
    %5290 = vmatpush.msra.mxu0 %v5242
    %5291 = vmatpush.msra.mxu0 %v5240
    %5292 = vmatpush.msra.mxu0 %v5238
    %5293 = vmatmul.f32.gmra.mxu0 %v5249
    %v5294 = vpop.f32.mrf.mxu0
    %v5295 = vadd.f32 0.0, %v5294
    %5296 = vmatmul.f32.gmra.mxu0 %v5252
    %v5297 = vpop.f32.mrf.mxu0
    %v5298 = vadd.f32 0.0, %v5297
    %5299 = vdwg.mxu0
    %s5300 = scalar_lea.vmem %s11, 16
    %v5301 = vld [vmem:[%s5300] sm:$0xff]
    %v5302 = vld [vmem:[%s5300 + $0x8] sm:$0xff]
    %v5304 = vsel %vm5247, %v5301, 0
    %v5307 = vsel %vm5247, %v5302, 0
    %5309 = vmatpush.msra.mxu0 0.0
    %5310 = vmatpush.msra.mxu0 0.0
    %5311 = vmatpush.msra.mxu0 0.0
    %5312 = vmatpush.msra.mxu0 0.0
    %5313 = vmatpush.msra.mxu0 0.0
    %5314 = vmatpush.msra.mxu0 0.0
    %5315 = vmatpush.msra.mxu0 0.0
    %5316 = vmatpush.msra.mxu0 0.0
    %5317 = vmatpush.msra.mxu0 0.0
    %5318 = vmatpush.msra.mxu0 0.0
    %5319 = vmatpush.msra.mxu0 0.0
    %5320 = vmatpush.msra.mxu0 0.0
    %5321 = vmatpush.msra.mxu0 %v5243
    %5322 = vmatpush.msra.mxu0 %v5241
    %5323 = vmatpush.msra.mxu0 %v5239
    %5324 = vmatpush.msra.mxu0 %v5237
    %5325 = vmatmul.f32.gmra.mxu0 %v5304
    %v5326 = vpop.f32.mrf.mxu0
    %v5327 = vadd.f32 0.0, %v5326
    %5328 = vmatmul.f32.gmra.mxu0 %v5307
    %v5329 = vpop.f32.mrf.mxu0
    %v5330 = vadd.f32 0.0, %v5329
    %5331 = vdwg.mxu0
    %5332 = vmatpush.msra.mxu0 0.0
    %5333 = vmatpush.msra.mxu0 0.0
    %5334 = vmatpush.msra.mxu0 0.0
    %5335 = vmatpush.msra.mxu0 0.0
    %5336 = vmatpush.msra.mxu0 0.0
    %5337 = vmatpush.msra.mxu0 0.0
    %5338 = vmatpush.msra.mxu0 0.0
    %5339 = vmatpush.msra.mxu0 0.0
    %5340 = vmatpush.msra.mxu0 0.0
    %5341 = vmatpush.msra.mxu0 0.0
    %5342 = vmatpush.msra.mxu0 0.0
    %5343 = vmatpush.msra.mxu0 0.0
    %5344 = vmatpush.msra.mxu0 %v5244
    %5345 = vmatpush.msra.mxu0 %v5242
    %5346 = vmatpush.msra.mxu0 %v5240
    %5347 = vmatpush.msra.mxu0 %v5238
    %5348 = vmatmul.f32.gmra.mxu0 %v5304
    %v5349 = vpop.f32.mrf.mxu0
    %v5350 = vadd.f32 0.0, %v5349
    %5351 = vmatmul.f32.gmra.mxu0 %v5307
    %v5352 = vpop.f32.mrf.mxu0
    %v5353 = vadd.f32 0.0, %v5352
    %5354 = vdwg.mxu0
    %v5355 = vmax.f32 %v5272, %v5327
    %v5356 = vmax.f32 %v5295, %v5350
    %v5357 = vmax.f32 %v5275, %v5330
    %v5358 = vmax.f32 %v5298, %v5353
    %v5359 = vld [vmem:[#allocation17] sm:$0xff]
    %v5360 = vld [vmem:[#allocation17 + $0x8] sm:$0xff]
    %v5361 = vld [vmem:[#allocation17 + $0x10] sm:$0xff]
    %v5362 = vld [vmem:[#allocation17 + $0x18] sm:$0xff]
    %v5363 = vld [vmem:[#allocation17 + $0x20] sm:$0xff]
    %v5364 = vld [vmem:[#allocation17 + $0x28] sm:$0xff]
    %v5365 = vld [vmem:[#allocation17 + $0x30] sm:$0xff]
    %v5366 = vld [vmem:[#allocation17 + $0x38] sm:$0xff]
    %v5367 = vld [vmem:[#allocation17 + $0x40] sm:$0xff]
    %v5368 = vld [vmem:[#allocation17 + $0x48] sm:$0xff]
    %v5369 = vld [vmem:[#allocation17 + $0x50] sm:$0xff]
    %v5370 = vld [vmem:[#allocation17 + $0x58] sm:$0xff]
    %v5371 = vld [vmem:[#allocation17 + $0x60] sm:$0xff]
    %v5372 = vld [vmem:[#allocation17 + $0x68] sm:$0xff]
    %v5373 = vld [vmem:[#allocation17 + $0x70] sm:$0xff]
    %v5374 = vld [vmem:[#allocation17 + $0x78] sm:$0xff]
    %v5375 = vld [vmem:[#allocation17 + $0x80] sm:$0xff]
    %v5376 = vld [vmem:[#allocation17 + $0x88] sm:$0xff]
    %v5377 = vld [vmem:[#allocation17 + $0x90] sm:$0xff]
    %v5378 = vld [vmem:[#allocation17 + $0x98] sm:$0xff]
    %v5379 = vld [vmem:[#allocation17 + $0xa0] sm:$0xff]
    %v5380 = vld [vmem:[#allocation17 + $0xa8] sm:$0xff]
    %v5381 = vld [vmem:[#allocation17 + $0xb0] sm:$0xff]
    %v5382 = vld [vmem:[#allocation17 + $0xb8] sm:$0xff]
    %v5383 = vld [vmem:[#allocation17 + $0xc0] sm:$0xff]
    %v5384 = vld [vmem:[#allocation17 + $0xc8] sm:$0xff]
    %v5385 = vld [vmem:[#allocation17 + $0xd0] sm:$0xff]
    %v5386 = vld [vmem:[#allocation17 + $0xd8] sm:$0xff]
    %v5387 = vld [vmem:[#allocation17 + $0xe0] sm:$0xff]
    %v5388 = vld [vmem:[#allocation17 + $0xe8] sm:$0xff]
    %v5389 = vld [vmem:[#allocation17 + $0xf0] sm:$0xff]
    %v5390 = vld [vmem:[#allocation17 + $0xf8] sm:$0xff]
    %5391 = vmatpush.msra.mxu0 %v5374
    %5392 = vmatpush.msra.mxu0 %v5373
    %5393 = vmatpush.msra.mxu0 %v5372
    %5394 = vmatpush.msra.mxu0 %v5371
    %5395 = vmatpush.msra.mxu0 %v5370
    %5396 = vmatpush.msra.mxu0 %v5369
    %5397 = vmatpush.msra.mxu0 %v5368
    %5398 = vmatpush.msra.mxu0 %v5367
    %5399 = vmatpush.msra.mxu0 %v5366
    %5400 = vmatpush.msra.mxu0 %v5365
    %5401 = vmatpush.msra.mxu0 %v5364
    %5402 = vmatpush.msra.mxu0 %v5363
    %5403 = vmatpush.msra.mxu0 %v5362
    %5404 = vmatpush.msra.mxu0 %v5361
    %5405 = vmatpush.msra.mxu0 %v5360
    %5406 = vmatpush.msra.mxu0 %v5359
    %5407 = vmatmul.f32.gmra.mxu0 %v5355
    %v5408 = vpop.f32.mrf.mxu0
    %v5409 = vadd.f32 0.0, %v5408
    %5410 = vmatmul.f32.gmra.mxu0 %v5357
    %v5411 = vpop.f32.mrf.mxu0
    %v5412 = vadd.f32 0.0, %v5411
    %5413 = vdwg.mxu0
    %5414 = vmatpush.msra.mxu0 %v5390
    %5415 = vmatpush.msra.mxu0 %v5389
    %5416 = vmatpush.msra.mxu0 %v5388
    %5417 = vmatpush.msra.mxu0 %v5387
    %5418 = vmatpush.msra.mxu0 %v5386
    %5419 = vmatpush.msra.mxu0 %v5385
    %5420 = vmatpush.msra.mxu0 %v5384
    %5421 = vmatpush.msra.mxu0 %v5383
    %5422 = vmatpush.msra.mxu0 %v5382
    %5423 = vmatpush.msra.mxu0 %v5381
    %5424 = vmatpush.msra.mxu0 %v5380
    %5425 = vmatpush.msra.mxu0 %v5379
    %5426 = vmatpush.msra.mxu0 %v5378
    %5427 = vmatpush.msra.mxu0 %v5377
    %5428 = vmatpush.msra.mxu0 %v5376
    %5429 = vmatpush.msra.mxu0 %v5375
    %5430 = vmatmul.f32.gmra.mxu0 %v5356
    %v5431 = vpop.f32.mrf.mxu0
    %v5432 = vadd.f32 %v5409, %v5431
    %5433 = vmatmul.f32.gmra.mxu0 %v5358
    %v5434 = vpop.f32.mrf.mxu0
    %v5435 = vadd.f32 %v5412, %v5434
    %5436 = vdwg.mxu0
    %s5437 = scalar_lea.vmem [#allocation17], 256
    %v5438 = vld [vmem:[%s5437] sm:$0xff]
    %v5439 = vld [vmem:[%s5437 + $0x8] sm:$0xff]
    %v5440 = vld [vmem:[%s5437 + $0x10] sm:$0xff]
    %v5441 = vld [vmem:[%s5437 + $0x18] sm:$0xff]
    %v5442 = vld [vmem:[%s5437 + $0x20] sm:$0xff]
    %v5443 = vld [vmem:[%s5437 + $0x28] sm:$0xff]
    %v5444 = vld [vmem:[%s5437 + $0x30] sm:$0xff]
    %v5445 = vld [vmem:[%s5437 + $0x38] sm:$0xff]
    %v5446 = vld [vmem:[%s5437 + $0x40] sm:$0xff]
    %v5447 = vld [vmem:[%s5437 + $0x48] sm:$0xff]
    %v5448 = vld [vmem:[%s5437 + $0x50] sm:$0xff]
    %v5449 = vld [vmem:[%s5437 + $0x58] sm:$0xff]
    %v5450 = vld [vmem:[%s5437 + $0x60] sm:$0xff]
    %v5451 = vld [vmem:[%s5437 + $0x68] sm:$0xff]
    %v5452 = vld [vmem:[%s5437 + $0x70] sm:$0xff]
    %v5453 = vld [vmem:[%s5437 + $0x78] sm:$0xff]
    %v5454 = vld [vmem:[%s5437 + $0x80] sm:$0xff]
    %v5455 = vld [vmem:[%s5437 + $0x88] sm:$0xff]
    %v5456 = vld [vmem:[%s5437 + $0x90] sm:$0xff]
    %v5457 = vld [vmem:[%s5437 + $0x98] sm:$0xff]
    %v5458 = vld [vmem:[%s5437 + $0xa0] sm:$0xff]
    %v5459 = vld [vmem:[%s5437 + $0xa8] sm:$0xff]
    %v5460 = vld [vmem:[%s5437 + $0xb0] sm:$0xff]
    %v5461 = vld [vmem:[%s5437 + $0xb8] sm:$0xff]
    %v5462 = vld [vmem:[%s5437 + $0xc0] sm:$0xff]
    %v5463 = vld [vmem:[%s5437 + $0xc8] sm:$0xff]
    %v5464 = vld [vmem:[%s5437 + $0xd0] sm:$0xff]
    %v5465 = vld [vmem:[%s5437 + $0xd8] sm:$0xff]
    %v5466 = vld [vmem:[%s5437 + $0xe0] sm:$0xff]
    %v5467 = vld [vmem:[%s5437 + $0xe8] sm:$0xff]
    %v5468 = vld [vmem:[%s5437 + $0xf0] sm:$0xff]
    %v5469 = vld [vmem:[%s5437 + $0xf8] sm:$0xff]
    %5470 = vmatpush.msra.mxu0 %v5453
    %5471 = vmatpush.msra.mxu0 %v5452
    %5472 = vmatpush.msra.mxu0 %v5451
    %5473 = vmatpush.msra.mxu0 %v5450
    %5474 = vmatpush.msra.mxu0 %v5449
    %5475 = vmatpush.msra.mxu0 %v5448
    %5476 = vmatpush.msra.mxu0 %v5447
    %5477 = vmatpush.msra.mxu0 %v5446
    %5478 = vmatpush.msra.mxu0 %v5445
    %5479 = vmatpush.msra.mxu0 %v5444
    %5480 = vmatpush.msra.mxu0 %v5443
    %5481 = vmatpush.msra.mxu0 %v5442
    %5482 = vmatpush.msra.mxu0 %v5441
    %5483 = vmatpush.msra.mxu0 %v5440
    %5484 = vmatpush.msra.mxu0 %v5439
    %5485 = vmatpush.msra.mxu0 %v5438
    %5486 = vmatmul.f32.gmra.mxu0 %v5355
    %v5487 = vpop.f32.mrf.mxu0
    %v5488 = vadd.f32 0.0, %v5487
    %5489 = vmatmul.f32.gmra.mxu0 %v5357
    %v5490 = vpop.f32.mrf.mxu0
    %v5491 = vadd.f32 0.0, %v5490
    %5492 = vdwg.mxu0
    %5493 = vmatpush.msra.mxu0 %v5469
    %5494 = vmatpush.msra.mxu0 %v5468
    %5495 = vmatpush.msra.mxu0 %v5467
    %5496 = vmatpush.msra.mxu0 %v5466
    %5497 = vmatpush.msra.mxu0 %v5465
    %5498 = vmatpush.msra.mxu0 %v5464
    %5499 = vmatpush.msra.mxu0 %v5463
    %5500 = vmatpush.msra.mxu0 %v5462
    %5501 = vmatpush.msra.mxu0 %v5461
    %5502 = vmatpush.msra.mxu0 %v5460
    %5503 = vmatpush.msra.mxu0 %v5459
    %5504 = vmatpush.msra.mxu0 %v5458
    %5505 = vmatpush.msra.mxu0 %v5457
    %5506 = vmatpush.msra.mxu0 %v5456
    %5507 = vmatpush.msra.mxu0 %v5455
    %5508 = vmatpush.msra.mxu0 %v5454
    %5509 = vmatmul.f32.gmra.mxu0 %v5356
    %v5510 = vpop.f32.mrf.mxu0
    %v5511 = vadd.f32 %v5488, %v5510
    %5512 = vmatmul.f32.gmra.mxu0 %v5358
    %v5513 = vpop.f32.mrf.mxu0
    %v5514 = vadd.f32 %v5491, %v5513
    %5515 = vdwg.mxu0
    %v5516 = vmax.f32 %v5432, %v5511
    %v5517 = vmax.f32 %v5435, %v5514
    %v5518 = vld [vmem:[#allocation19] sm:$0xff]
    %v5519 = vld [vmem:[#allocation19 + $0x8] sm:$0xff]
    %v5520 = vld [vmem:[#allocation19 + $0x10] sm:$0xff]
    %v5521 = vld [vmem:[#allocation19 + $0x18] sm:$0xff]
    %v5522 = vld [vmem:[#allocation19 + $0x20] sm:$0xff]
    %v5523 = vld [vmem:[#allocation19 + $0x28] sm:$0xff]
    %v5524 = vld [vmem:[#allocation19 + $0x30] sm:$0xff]
    %v5525 = vld [vmem:[#allocation19 + $0x38] sm:$0xff]
    %v5526 = vld [vmem:[#allocation19 + $0x40] sm:$0xff]
    %v5527 = vld [vmem:[#allocation19 + $0x48] sm:$0xff]
    %v5528 = vld [vmem:[#allocation19 + $0x50] sm:$0xff]
    %v5529 = vld [vmem:[#allocation19 + $0x58] sm:$0xff]
    %v5530 = vld [vmem:[#allocation19 + $0x60] sm:$0xff]
    %v5531 = vld [vmem:[#allocation19 + $0x68] sm:$0xff]
    %v5532 = vld [vmem:[#allocation19 + $0x70] sm:$0xff]
    %v5533 = vld [vmem:[#allocation19 + $0x78] sm:$0xff]
    %s5534 = scalar_lea.vmem [#allocation19], 128
    %v5535 = vld [vmem:[%s5534] sm:$0xff]
    %v5536 = vld [vmem:[%s5534 + $0x8] sm:$0xff]
    %v5537 = vld [vmem:[%s5534 + $0x10] sm:$0xff]
    %v5538 = vld [vmem:[%s5534 + $0x18] sm:$0xff]
    %v5539 = vld [vmem:[%s5534 + $0x20] sm:$0xff]
    %v5540 = vld [vmem:[%s5534 + $0x28] sm:$0xff]
    %v5541 = vld [vmem:[%s5534 + $0x30] sm:$0xff]
    %v5542 = vld [vmem:[%s5534 + $0x38] sm:$0xff]
    %v5543 = vld [vmem:[%s5534 + $0x40] sm:$0xff]
    %v5544 = vld [vmem:[%s5534 + $0x48] sm:$0xff]
    %v5545 = vld [vmem:[%s5534 + $0x50] sm:$0xff]
    %v5546 = vld [vmem:[%s5534 + $0x58] sm:$0xff]
    %v5547 = vld [vmem:[%s5534 + $0x60] sm:$0xff]
    %v5548 = vld [vmem:[%s5534 + $0x68] sm:$0xff]
    %v5549 = vld [vmem:[%s5534 + $0x70] sm:$0xff]
    %v5550 = vld [vmem:[%s5534 + $0x78] sm:$0xff]
    %v5553 = vrot.slane %v5516, 1
    %vm5554 = vcmask 1041409
    %v5555 = vsel %vm5554, %v5517, %v5553
    %5557 = vmatpush.msra.mxu0 %v5550
    %5558 = vmatpush.msra.mxu0 %v5549
    %5559 = vmatpush.msra.mxu0 %v5548
    %5560 = vmatpush.msra.mxu0 %v5547
    %5561 = vmatpush.msra.mxu0 %v5546
    %5562 = vmatpush.msra.mxu0 %v5545
    %5563 = vmatpush.msra.mxu0 %v5544
    %5564 = vmatpush.msra.mxu0 %v5543
    %5565 = vmatpush.msra.mxu0 %v5542
    %5566 = vmatpush.msra.mxu0 %v5541
    %5567 = vmatpush.msra.mxu0 %v5540
    %5568 = vmatpush.msra.mxu0 %v5539
    %5569 = vmatpush.msra.mxu0 %v5538
    %5570 = vmatpush.msra.mxu0 %v5537
    %5571 = vmatpush.msra.mxu0 %v5536
    %5572 = vmatpush.msra.mxu0 %v5535
    %5573 = vmatmul.f32.gmra.mxu0 %v5555
    %v5574 = vpop.f32.mrf.mxu0
    %v5575 = vadd.f32 0.0, %v5574
    %5576 = vdwg.mxu0
    %v5577 = vrot.slane %v5517, 7
    %v5578 = vsel %vm5554, %v5577, %v5516
    %5580 = vmatpush.msra.mxu0 %v5533
    %5581 = vmatpush.msra.mxu0 %v5532
    %5582 = vmatpush.msra.mxu0 %v5531
    %5583 = vmatpush.msra.mxu0 %v5530
    %5584 = vmatpush.msra.mxu0 %v5529
    %5585 = vmatpush.msra.mxu0 %v5528
    %5586 = vmatpush.msra.mxu0 %v5527
    %5587 = vmatpush.msra.mxu0 %v5526
    %5588 = vmatpush.msra.mxu0 %v5525
    %5589 = vmatpush.msra.mxu0 %v5524
    %5590 = vmatpush.msra.mxu0 %v5523
    %5591 = vmatpush.msra.mxu0 %v5522
    %5592 = vmatpush.msra.mxu0 %v5521
    %5593 = vmatpush.msra.mxu0 %v5520
    %5594 = vmatpush.msra.mxu0 %v5519
    %5595 = vmatpush.msra.mxu0 %v5518
    %5596 = vmatmul.f32.gmra.mxu0 %v5578
    %v5597 = vpop.f32.mrf.mxu0
    %v5598 = vadd.f32 %v5575, %v5597
    %5599 = vdwg.mxu0
    %s5600 = scalar_lea.vmem [#allocation19], 256
    %v5601 = vld [vmem:[%s5600] sm:$0xff]
    %v5602 = vld [vmem:[%s5600 + $0x8] sm:$0xff]
    %v5603 = vld [vmem:[%s5600 + $0x10] sm:$0xff]
    %v5604 = vld [vmem:[%s5600 + $0x18] sm:$0xff]
    %v5605 = vld [vmem:[%s5600 + $0x20] sm:$0xff]
    %v5606 = vld [vmem:[%s5600 + $0x28] sm:$0xff]
    %v5607 = vld [vmem:[%s5600 + $0x30] sm:$0xff]
    %v5608 = vld [vmem:[%s5600 + $0x38] sm:$0xff]
    %v5609 = vld [vmem:[%s5600 + $0x40] sm:$0xff]
    %v5610 = vld [vmem:[%s5600 + $0x48] sm:$0xff]
    %v5611 = vld [vmem:[%s5600 + $0x50] sm:$0xff]
    %v5612 = vld [vmem:[%s5600 + $0x58] sm:$0xff]
    %v5613 = vld [vmem:[%s5600 + $0x60] sm:$0xff]
    %v5614 = vld [vmem:[%s5600 + $0x68] sm:$0xff]
    %v5615 = vld [vmem:[%s5600 + $0x70] sm:$0xff]
    %v5616 = vld [vmem:[%s5600 + $0x78] sm:$0xff]
    %v5617 = vrot.slane %v5516, 2
    %v5618 = vrot.slane %v5517, 1
    %v5619 = vsel %vm5554, %v5618, %v5617
    %5621 = vmatpush.msra.mxu0 %v5616
    %5622 = vmatpush.msra.mxu0 %v5615
    %5623 = vmatpush.msra.mxu0 %v5614
    %5624 = vmatpush.msra.mxu0 %v5613
    %5625 = vmatpush.msra.mxu0 %v5612
    %5626 = vmatpush.msra.mxu0 %v5611
    %5627 = vmatpush.msra.mxu0 %v5610
    %5628 = vmatpush.msra.mxu0 %v5609
    %5629 = vmatpush.msra.mxu0 %v5608
    %5630 = vmatpush.msra.mxu0 %v5607
    %5631 = vmatpush.msra.mxu0 %v5606
    %5632 = vmatpush.msra.mxu0 %v5605
    %5633 = vmatpush.msra.mxu0 %v5604
    %5634 = vmatpush.msra.mxu0 %v5603
    %5635 = vmatpush.msra.mxu0 %v5602
    %5636 = vmatpush.msra.mxu0 %v5601
    %5637 = vmatmul.f32.gmra.mxu0 %v5619
    %v5638 = vpop.f32.mrf.mxu0
    %v5639 = vadd.f32 0.0, %v5638
    %5640 = vdwg.mxu0
    %v5641 = vadd.f32 %v5598, %v5639
    %s5642 = scalar_lea.vmem [#allocation19], 384
    %v5643 = vld [vmem:[%s5642] sm:$0xff]
    %v5644 = vld [vmem:[%s5642 + $0x8] sm:$0xff]
    %v5645 = vld [vmem:[%s5642 + $0x10] sm:$0xff]
    %v5646 = vld [vmem:[%s5642 + $0x18] sm:$0xff]
    %v5647 = vld [vmem:[%s5642 + $0x20] sm:$0xff]
    %v5648 = vld [vmem:[%s5642 + $0x28] sm:$0xff]
    %v5649 = vld [vmem:[%s5642 + $0x30] sm:$0xff]
    %v5650 = vld [vmem:[%s5642 + $0x38] sm:$0xff]
    %v5651 = vld [vmem:[%s5642 + $0x40] sm:$0xff]
    %v5652 = vld [vmem:[%s5642 + $0x48] sm:$0xff]
    %v5653 = vld [vmem:[%s5642 + $0x50] sm:$0xff]
    %v5654 = vld [vmem:[%s5642 + $0x58] sm:$0xff]
    %v5655 = vld [vmem:[%s5642 + $0x60] sm:$0xff]
    %v5656 = vld [vmem:[%s5642 + $0x68] sm:$0xff]
    %v5657 = vld [vmem:[%s5642 + $0x70] sm:$0xff]
    %v5658 = vld [vmem:[%s5642 + $0x78] sm:$0xff]
    %v5659 = vrot.slane %v5516, 3
    %v5660 = vrot.slane %v5517, 2
    %v5661 = vsel %vm5554, %v5660, %v5659
    %5663 = vmatpush.msra.mxu0 %v5658
    %5664 = vmatpush.msra.mxu0 %v5657
    %5665 = vmatpush.msra.mxu0 %v5656
    %5666 = vmatpush.msra.mxu0 %v5655
    %5667 = vmatpush.msra.mxu0 %v5654
    %5668 = vmatpush.msra.mxu0 %v5653
    %5669 = vmatpush.msra.mxu0 %v5652
    %5670 = vmatpush.msra.mxu0 %v5651
    %5671 = vmatpush.msra.mxu0 %v5650
    %5672 = vmatpush.msra.mxu0 %v5649
    %5673 = vmatpush.msra.mxu0 %v5648
    %5674 = vmatpush.msra.mxu0 %v5647
    %5675 = vmatpush.msra.mxu0 %v5646
    %5676 = vmatpush.msra.mxu0 %v5645
    %5677 = vmatpush.msra.mxu0 %v5644
    %5678 = vmatpush.msra.mxu0 %v5643
    %5679 = vmatmul.f32.gmra.mxu0 %v5661
    %v5680 = vpop.f32.mrf.mxu0
    %v5681 = vadd.f32 0.0, %v5680
    %5682 = vdwg.mxu0
    %v5683 = vadd.f32 %v5641, %v5681
    %s5684 = scalar_lea.vmem [#allocation19], 512
    %v5685 = vld [vmem:[%s5684] sm:$0xff]
    %v5686 = vld [vmem:[%s5684 + $0x8] sm:$0xff]
    %v5687 = vld [vmem:[%s5684 + $0x10] sm:$0xff]
    %v5688 = vld [vmem:[%s5684 + $0x18] sm:$0xff]
    %v5689 = vld [vmem:[%s5684 + $0x20] sm:$0xff]
    %v5690 = vld [vmem:[%s5684 + $0x28] sm:$0xff]
    %v5691 = vld [vmem:[%s5684 + $0x30] sm:$0xff]
    %v5692 = vld [vmem:[%s5684 + $0x38] sm:$0xff]
    %v5693 = vld [vmem:[%s5684 + $0x40] sm:$0xff]
    %v5694 = vld [vmem:[%s5684 + $0x48] sm:$0xff]
    %v5695 = vld [vmem:[%s5684 + $0x50] sm:$0xff]
    %v5696 = vld [vmem:[%s5684 + $0x58] sm:$0xff]
    %v5697 = vld [vmem:[%s5684 + $0x60] sm:$0xff]
    %v5698 = vld [vmem:[%s5684 + $0x68] sm:$0xff]
    %v5699 = vld [vmem:[%s5684 + $0x70] sm:$0xff]
    %v5700 = vld [vmem:[%s5684 + $0x78] sm:$0xff]
    %v5701 = vrot.slane %v5516, 4
    %v5702 = vrot.slane %v5517, 3
    %v5703 = vsel %vm5554, %v5702, %v5701
    %5705 = vmatpush.msra.mxu0 %v5700
    %5706 = vmatpush.msra.mxu0 %v5699
    %5707 = vmatpush.msra.mxu0 %v5698
    %5708 = vmatpush.msra.mxu0 %v5697
    %5709 = vmatpush.msra.mxu0 %v5696
    %5710 = vmatpush.msra.mxu0 %v5695
    %5711 = vmatpush.msra.mxu0 %v5694
    %5712 = vmatpush.msra.mxu0 %v5693
    %5713 = vmatpush.msra.mxu0 %v5692
    %5714 = vmatpush.msra.mxu0 %v5691
    %5715 = vmatpush.msra.mxu0 %v5690
    %5716 = vmatpush.msra.mxu0 %v5689
    %5717 = vmatpush.msra.mxu0 %v5688
    %5718 = vmatpush.msra.mxu0 %v5687
    %5719 = vmatpush.msra.mxu0 %v5686
    %5720 = vmatpush.msra.mxu0 %v5685
    %5721 = vmatmul.f32.gmra.mxu0 %v5703
    %v5722 = vpop.f32.mrf.mxu0
    %v5723 = vadd.f32 0.0, %v5722
    %5724 = vdwg.mxu0
    %v5725 = vadd.f32 %v5683, %v5723
    %s5726 = scalar_lea.vmem [#allocation19], 640
    %v5727 = vld [vmem:[%s5726] sm:$0xff]
    %v5728 = vld [vmem:[%s5726 + $0x8] sm:$0xff]
    %v5729 = vld [vmem:[%s5726 + $0x10] sm:$0xff]
    %v5730 = vld [vmem:[%s5726 + $0x18] sm:$0xff]
    %v5731 = vld [vmem:[%s5726 + $0x20] sm:$0xff]
    %v5732 = vld [vmem:[%s5726 + $0x28] sm:$0xff]
    %v5733 = vld [vmem:[%s5726 + $0x30] sm:$0xff]
    %v5734 = vld [vmem:[%s5726 + $0x38] sm:$0xff]
    %v5735 = vld [vmem:[%s5726 + $0x40] sm:$0xff]
    %v5736 = vld [vmem:[%s5726 + $0x48] sm:$0xff]
    %v5737 = vld [vmem:[%s5726 + $0x50] sm:$0xff]
    %v5738 = vld [vmem:[%s5726 + $0x58] sm:$0xff]
    %v5739 = vld [vmem:[%s5726 + $0x60] sm:$0xff]
    %v5740 = vld [vmem:[%s5726 + $0x68] sm:$0xff]
    %v5741 = vld [vmem:[%s5726 + $0x70] sm:$0xff]
    %v5742 = vld [vmem:[%s5726 + $0x78] sm:$0xff]
    %v5743 = vrot.slane %v5516, 5
    %v5744 = vrot.slane %v5517, 4
    %v5745 = vsel %vm5554, %v5744, %v5743
    %5747 = vmatpush.msra.mxu0 %v5742
    %5748 = vmatpush.msra.mxu0 %v5741
    %5749 = vmatpush.msra.mxu0 %v5740
    %5750 = vmatpush.msra.mxu0 %v5739
    %5751 = vmatpush.msra.mxu0 %v5738
    %5752 = vmatpush.msra.mxu0 %v5737
    %5753 = vmatpush.msra.mxu0 %v5736
    %5754 = vmatpush.msra.mxu0 %v5735
    %5755 = vmatpush.msra.mxu0 %v5734
    %5756 = vmatpush.msra.mxu0 %v5733
    %5757 = vmatpush.msra.mxu0 %v5732
    %5758 = vmatpush.msra.mxu0 %v5731
    %5759 = vmatpush.msra.mxu0 %v5730
    %5760 = vmatpush.msra.mxu0 %v5729
    %5761 = vmatpush.msra.mxu0 %v5728
    %5762 = vmatpush.msra.mxu0 %v5727
    %5763 = vmatmul.f32.gmra.mxu0 %v5745
    %v5764 = vpop.f32.mrf.mxu0
    %v5765 = vadd.f32 0.0, %v5764
    %5766 = vdwg.mxu0
    %v5767 = vadd.f32 %v5725, %v5765
    %s5768 = scalar_lea.vmem [#allocation19], 768
    %v5769 = vld [vmem:[%s5768] sm:$0xff]
    %v5770 = vld [vmem:[%s5768 + $0x8] sm:$0xff]
    %v5771 = vld [vmem:[%s5768 + $0x10] sm:$0xff]
    %v5772 = vld [vmem:[%s5768 + $0x18] sm:$0xff]
    %v5773 = vld [vmem:[%s5768 + $0x20] sm:$0xff]
    %v5774 = vld [vmem:[%s5768 + $0x28] sm:$0xff]
    %v5775 = vld [vmem:[%s5768 + $0x30] sm:$0xff]
    %v5776 = vld [vmem:[%s5768 + $0x38] sm:$0xff]
    %v5777 = vld [vmem:[%s5768 + $0x40] sm:$0xff]
    %v5778 = vld [vmem:[%s5768 + $0x48] sm:$0xff]
    %v5779 = vld [vmem:[%s5768 + $0x50] sm:$0xff]
    %v5780 = vld [vmem:[%s5768 + $0x58] sm:$0xff]
    %v5781 = vld [vmem:[%s5768 + $0x60] sm:$0xff]
    %v5782 = vld [vmem:[%s5768 + $0x68] sm:$0xff]
    %v5783 = vld [vmem:[%s5768 + $0x70] sm:$0xff]
    %v5784 = vld [vmem:[%s5768 + $0x78] sm:$0xff]
    %v5785 = vrot.slane %v5516, 6
    %v5786 = vrot.slane %v5517, 5
    %v5787 = vsel %vm5554, %v5786, %v5785
    %5789 = vmatpush.msra.mxu0 %v5784
    %5790 = vmatpush.msra.mxu0 %v5783
    %5791 = vmatpush.msra.mxu0 %v5782
    %5792 = vmatpush.msra.mxu0 %v5781
    %5793 = vmatpush.msra.mxu0 %v5780
    %5794 = vmatpush.msra.mxu0 %v5779
    %5795 = vmatpush.msra.mxu0 %v5778
    %5796 = vmatpush.msra.mxu0 %v5777
    %5797 = vmatpush.msra.mxu0 %v5776
    %5798 = vmatpush.msra.mxu0 %v5775
    %5799 = vmatpush.msra.mxu0 %v5774
    %5800 = vmatpush.msra.mxu0 %v5773
    %5801 = vmatpush.msra.mxu0 %v5772
    %5802 = vmatpush.msra.mxu0 %v5771
    %5803 = vmatpush.msra.mxu0 %v5770
    %5804 = vmatpush.msra.mxu0 %v5769
    %5805 = vmatmul.f32.gmra.mxu0 %v5787
    %v5806 = vpop.f32.mrf.mxu0
    %v5807 = vadd.f32 0.0, %v5806
    %5808 = vdwg.mxu0
    %v5809 = vadd.f32 %v5767, %v5807
    %s5810 = scalar_lea.vmem [#allocation19], 896
    %v5811 = vld [vmem:[%s5810] sm:$0xff]
    %v5812 = vld [vmem:[%s5810 + $0x8] sm:$0xff]
    %v5813 = vld [vmem:[%s5810 + $0x10] sm:$0xff]
    %v5814 = vld [vmem:[%s5810 + $0x18] sm:$0xff]
    %v5815 = vld [vmem:[%s5810 + $0x20] sm:$0xff]
    %v5816 = vld [vmem:[%s5810 + $0x28] sm:$0xff]
    %v5817 = vld [vmem:[%s5810 + $0x30] sm:$0xff]
    %v5818 = vld [vmem:[%s5810 + $0x38] sm:$0xff]
    %v5819 = vld [vmem:[%s5810 + $0x40] sm:$0xff]
    %v5820 = vld [vmem:[%s5810 + $0x48] sm:$0xff]
    %v5821 = vld [vmem:[%s5810 + $0x50] sm:$0xff]
    %v5822 = vld [vmem:[%s5810 + $0x58] sm:$0xff]
    %v5823 = vld [vmem:[%s5810 + $0x60] sm:$0xff]
    %v5824 = vld [vmem:[%s5810 + $0x68] sm:$0xff]
    %v5825 = vld [vmem:[%s5810 + $0x70] sm:$0xff]
    %v5826 = vld [vmem:[%s5810 + $0x78] sm:$0xff]
    %v5827 = vrot.slane %v5516, 7
    %v5828 = vrot.slane %v5517, 6
    %v5829 = vsel %vm5554, %v5828, %v5827
    %5831 = vmatpush.msra.mxu0 %v5826
    %5832 = vmatpush.msra.mxu0 %v5825
    %5833 = vmatpush.msra.mxu0 %v5824
    %5834 = vmatpush.msra.mxu0 %v5823
    %5835 = vmatpush.msra.mxu0 %v5822
    %5836 = vmatpush.msra.mxu0 %v5821
    %5837 = vmatpush.msra.mxu0 %v5820
    %5838 = vmatpush.msra.mxu0 %v5819
    %5839 = vmatpush.msra.mxu0 %v5818
    %5840 = vmatpush.msra.mxu0 %v5817
    %5841 = vmatpush.msra.mxu0 %v5816
    %5842 = vmatpush.msra.mxu0 %v5815
    %5843 = vmatpush.msra.mxu0 %v5814
    %5844 = vmatpush.msra.mxu0 %v5813
    %5845 = vmatpush.msra.mxu0 %v5812
    %5846 = vmatpush.msra.mxu0 %v5811
    %5847 = vmatmul.f32.gmra.mxu0 %v5829
    %v5848 = vpop.f32.mrf.mxu0
    %v5849 = vadd.f32 0.0, %v5848
    %5850 = vdwg.mxu0
    %v5851 = vadd.f32 %v5809, %v5849
    %v5852 = vld [vmem:[%s15] sm:$0x1]
    %v5854 = vperm.slane %v5852, 0
    %v5856 = vadd.f32 %v5851, %v5854
    %v5857 = vmax.f32 %v5856, 0.0
    %v5858 = vld [vmem:[%s16] sm:$0xff]
    %v5859 = vld [vmem:[%s16 + $0x8] sm:$0xff]
    %v5860 = vld [vmem:[%s16 + $0x10] sm:$0xff]
    %v5861 = vld [vmem:[%s16 + $0x18] sm:$0xff]
    %v5862 = vld [vmem:[%s16 + $0x20] sm:$0xff]
    %v5863 = vld [vmem:[%s16 + $0x28] sm:$0xff]
    %v5864 = vld [vmem:[%s16 + $0x30] sm:$0xff]
    %v5865 = vld [vmem:[%s16 + $0x38] sm:$0xff]
    %v5866 = vld [vmem:[%s16 + $0x40] sm:$0xff]
    %v5867 = vld [vmem:[%s16 + $0x48] sm:$0xff]
    %v5868 = vld [vmem:[%s16 + $0x50] sm:$0xff]
    %v5869 = vld [vmem:[%s16 + $0x58] sm:$0xff]
    %v5870 = vld [vmem:[%s16 + $0x60] sm:$0xff]
    %v5871 = vld [vmem:[%s16 + $0x68] sm:$0xff]
    %v5872 = vld [vmem:[%s16 + $0x70] sm:$0xff]
    %v5873 = vld [vmem:[%s16 + $0x78] sm:$0xff]
    %v5874 = vld [vmem:[%s17] sm:$0x1]
    %v5876 = vperm.slane %v5874, 0
    %5878 = vmatpush.msra.mxu0 %v5873
    %5879 = vmatpush.msra.mxu0 %v5872
    %5880 = vmatpush.msra.mxu0 %v5871
    %5881 = vmatpush.msra.mxu0 %v5870
    %5882 = vmatpush.msra.mxu0 %v5869
    %5883 = vmatpush.msra.mxu0 %v5868
    %5884 = vmatpush.msra.mxu0 %v5867
    %5885 = vmatpush.msra.mxu0 %v5866
    %5886 = vmatpush.msra.mxu0 %v5865
    %5887 = vmatpush.msra.mxu0 %v5864
    %5888 = vmatpush.msra.mxu0 %v5863
    %5889 = vmatpush.msra.mxu0 %v5862
    %5890 = vmatpush.msra.mxu0 %v5861
    %5891 = vmatpush.msra.mxu0 %v5860
    %5892 = vmatpush.msra.mxu0 %v5859
    %5893 = vmatpush.msra.mxu0 %v5858
    %5894 = vmatmul.f32.gmra.mxu0 %v5857
    %v5895 = vpop.f32.mrf.mxu0
    %v5896 = vadd.f32 %v5876, %v5895
    %5897 = vdwg.mxu0
    %vm5898 = vcmask 74752
    %5899 = vst.msk [vmem:[#allocation20] sm:$0x3] %vm5898, %v5896
    // Predicated region
    $region110: #{tpu_custom_call.1} parent=1 // pred_check
      _
    $region111: #{tpu_custom_call.1} parent=1 // pred_check_branch
      %5901 = sbr.rel (0) target = $region113
    $region112: #{tpu_custom_call.1} parent=1 // pred_region
      %5903 = vsyncadd [#allocation7], 0
      %s5905 = sshll.u32 [#allocation20], 4
      %s5906 = int_to_ptr.vmem [resolvable:$true] %s5905
      %s5907 = sshll.u32 %s18, 4
      %s5908 = int_to_ptr.hbm [resolvable:$true] %s5907
      %5910 = dma.vmem_to_hbm [thread:$0]  %s5906, 32, %s5908, [#allocation7]
    $region113: #{tpu_custom_call.1} parent=1 // pred_fallthru
      _
    // Predicated region
    $region114: #{tpu_custom_call.1} parent=1 // pred_check
      _
    $region115: #{tpu_custom_call.1} parent=1 // pred_check_branch
      %5912 = sbr.rel (0) target = $region117
    $region116: #{tpu_custom_call.1} parent=1 // pred_region
      %5914 = dma.done [#allocation7], 32
    $region117: #{tpu_custom_call.1} parent=1 // pred_fallthru
      _
    %5915 = vsyncpa [#allocation6], 1
    %5916 = vsyncpa [#allocation9], 1
    %5917 = vsyncpa [#allocation12], 1
    %5918 = vsyncpa [#allocation15], 1
    %5919 = vsyncpa [#allocation18], 1
    %5920 = vsyncpa [#allocation7], 1

</llo_original>
